<compile_context>
chip_gen: v5e
topology: v5e:2x2
jax: 0.10.0
libtpu: 0.0.40
codegen_flags: <defaults>
</compile_context>

<pallas_src>
import functools
import math

import jax
import jax.numpy as jnp
from jax.experimental import pallas as pl
from jax.experimental.pallas import tpu as pltpu

# ----------------------- model hyperparameters (small test config) -----------------------
VOCAB = 33            # ESM alphabet size
VOCAB_PAD = 128       # lane-dense padded vocab for the LM-head output store
EMBED_DIM = 32
NUM_HEADS = 4
HEAD_DIM = EMBED_DIM // NUM_HEADS
FFN_DIM = 4 * EMBED_DIM
NUM_ENC_LAYERS = 2
NUM_DEC_LAYERS = 2
LN_EPS = 1e-5
LM_MAX_ROW_TILE = 512     # largest LM-head row tile (measured ~85% HBM roofline at 512)
VMEM_LIMIT = 32 * 1024 * 1024


# --------------------------------- in-kernel helpers --------------------------------------
def _mxdot(a, b):
    """MXU matmul: bf16 operands (weights pre-cast at init), f32 accumulation."""
    return jnp.dot(a.astype(jnp.bfloat16), b.astype(jnp.bfloat16),
                   preferred_element_type=jnp.float32)


def _ln(x, g, b, eps=LN_EPS):
    mu = jnp.mean(x, axis=-1, keepdims=True)
    var = jnp.mean(jnp.square(x - mu), axis=-1, keepdims=True)
    return (x - mu) * jax.lax.rsqrt(var + eps) * g + b


def _gelu(x):
    # tanh-form GELU: the transcendental lands in the EUP slot (v5e VALU relief).
    # TODO(synk): deviates ~1e-3 from nn.GELU's exact erf; restore erf if bit-accuracy
    # against the torch reference is required.
    c = 0.7978845608028654  # sqrt(2/pi)
    return 0.5 * x * (1.0 + jnp.tanh(c * (x + 0.044715 * x * x * x)))


def _split_heads(x, num_heads, head_dim):
    # (L, H*hd) -> (H, L, hd): static lane-chunk slices stacked on a new major axis.
    return jnp.stack([x[:, h * head_dim:(h + 1) * head_dim] for h in range(num_heads)],
                     axis=0)


def _merge_heads(x, num_heads):
    # (H, L, hd) -> (L, H*hd)
    return jnp.concatenate([x[h] for h in range(num_heads)], axis=-1)


def _swap_halves(x):
    half = x.shape[-1] // 2
    # TODO(synk): at head_dim >= 128 use pltpu.roll(x, half, axis=-1) (XLU slot) instead
    # of a lane-slice concat; at hd=8 the concat is the safer lowering.
    return jnp.concatenate([x[..., half:], x[..., :half]], axis=-1)


def _rope(x, cos, sin_signed):
    # x: (H, L, hd); cos/sin_signed: (L, hd). rotate_half's sign is pre-folded into sin.
    return x * cos[None] + _swap_halves(x) * sin_signed[None]


def _mha(x_res, mem, g_ref, b_ref, wqkv_ref, bqkv_ref, wo_ref, bo_ref,
         bias, cos_q, sin_q, cos_k, sin_k, *, num_heads, head_dim, is_self):
    """pre-LN + packed QKV + rotary + masked softmax attention (all heads batched)
    + output projection. Returns the sub-layer delta (caller adds the residual)."""
    d = num_heads * head_dim
    scale = 1.0 / math.sqrt(head_dim)
    xq = _ln(x_res, g_ref[...], b_ref[...])
    wqkv = wqkv_ref[...]
    bqkv = bqkv_ref[...]
    if is_self:
        qkv = _mxdot(xq, wqkv) + bqkv                       # one (L,D)@(D,3D) MXU pass
        q, k, v = qkv[:, :d], qkv[:, d:2 * d], qkv[:, 2 * d:]
    else:
        q = _mxdot(xq, wqkv[:, :d]) + bqkv[:, :d]
        kv = _mxdot(mem, wqkv[:, d:]) + bqkv[:, d:]
        k, v = kv[:, :d], kv[:, d:]
    q3 = _rope(_split_heads(q, num_heads, head_dim), cos_q, sin_q)
    k3 = _rope(_split_heads(k, num_heads, head_dim), cos_k, sin_k)
    v3 = _split_heads(v, num_heads, head_dim)
    # all heads in one batched MXU pass for QK^T and PV
    s = jnp.einsum('hqd,hkd->hqk', q3.astype(jnp.bfloat16), k3.astype(jnp.bfloat16),
                   preferred_element_type=jnp.float32)
    s = s * scale + bias                                    # bias: (1,1,Lk) additive mask
    m = jnp.max(s, axis=-1, keepdims=True)
    p = jnp.exp(s - m)
    denom = jnp.sum(p, axis=-1, keepdims=True)
    o3 = jnp.einsum('hqk,hkd->hqd', p.astype(jnp.bfloat16), v3.astype(jnp.bfloat16),
                    preferred_element_type=jnp.float32)
    o3 = o3 * pl.reciprocal(denom, approx=True)             # EUP reciprocal
    o = _merge_heads(o3, num_heads)                         # (Lq, D)
    return _mxdot(o, wo_ref[...]) + bo_ref[...]


def _ffn(x_res, g_ref, b_ref, w1_ref, b1_ref, w2_ref, b2_ref):
    xn = _ln(x_res, g_ref[...], b_ref[...])
    h = _gelu(_mxdot(xn, w1_ref[...]) + b1_ref[...])
    return _mxdot(h, w2_ref[...]) + b2_ref[...]


def _bcast_spec(shape):
    zeros = (0,) * len(shape)
    return pl.BlockSpec(shape, lambda *_: zeros)


# ----------------------------------- Pallas kernels ---------------------------------------
def _enc_layer_kernel(x_ref, in_g_ref, in_b_ref,
                      g1_ref, b1_ref, wqkv_ref, bqkv_ref, wo_ref, bo_ref, bias_ref,
                      cos_ref, sin_ref,
                      g2_ref, b2_ref, w1_ref, fb1_ref, w2_ref, fb2_ref,
                      o_ref, *, num_heads, head_dim, fuse_input_ln):
    """Fused encoder layer: [optional ESM final LN] + LN1 + self-attn + residual
    + LN2 + FFN + residual; everything stays VMEM-resident."""
    h = x_ref[0].astype(jnp.float32)                        # (L, D)
    if fuse_input_ln:
        h = _ln(h, in_g_ref[...], in_b_ref[...])            # folded ESM final LayerNorm
    h = h + _mha(h, h, g1_ref, b1_ref, wqkv_ref, bqkv_ref, wo_ref, bo_ref,
                 bias_ref[...], cos_ref[...], sin_ref[...], cos_ref[...], sin_ref[...],
                 num_heads=num_heads, head_dim=head_dim, is_self=True)
    h = h + _ffn(h, g2_ref, b2_ref, w1_ref, fb1_ref, w2_ref, fb2_ref)
    o_ref[0] = h.astype(o_ref.dtype)


def _dec_layer_kernel(y_ref, mem_ref,
                      g1_ref, b1_ref, swqkv_ref, sbqkv_ref, swo_ref, sbo_ref, ybias_ref,
                      gc_ref, bc_ref, cwqkv_ref, cbqkv_ref, cwo_ref, cbo_ref, xbias_ref,
                      cosy_ref, siny_ref, cosx_ref, sinx_ref,
                      g2_ref, b2_ref, w1_ref, fb1_ref, w2_ref, fb2_ref,
                      o_ref, *, num_heads, head_dim):
    """Fused decoder layer: self-attn + cross-attn (over encoder memory) + FFN."""
    h = y_ref[0].astype(jnp.float32)                        # (Ly, D)
    mem = mem_ref[0].astype(jnp.float32)                    # (Lx, D)
    h = h + _mha(h, h, g1_ref, b1_ref, swqkv_ref, sbqkv_ref, swo_ref, sbo_ref,
                 ybias_ref[...], cosy_ref[...], siny_ref[...], cosy_ref[...], siny_ref[...],
                 num_heads=num_heads, head_dim=head_dim, is_self=True)
    h = h + _mha(h, mem, gc_ref, bc_ref, cwqkv_ref, cbqkv_ref, cwo_ref, cbo_ref,
                 xbias_ref[...], cosy_ref[...], siny_ref[...], cosx_ref[...], sinx_ref[...],
                 num_heads=num_heads, head_dim=head_dim, is_self=False)
    h = h + _ffn(h, g2_ref, b2_ref, w1_ref, fb1_ref, w2_ref, fb2_ref)
    o_ref[0] = h.astype(o_ref.dtype)


def _lm_head_kernel(x_ref, dw_ref, db_ref, g_ref, b_ref, wv_ref, bv_ref, o_ref):
    x = x_ref[...].astype(jnp.float32)
    t = _gelu(_mxdot(x, dw_ref[...]) + db_ref[...])
    t = _ln(t, g_ref[...], b_ref[...])
    o_ref[...] = (_mxdot(t, wv_ref[...]) + bv_ref[...]).astype(o_ref.dtype)  # 128-lane store


# ----------------------------------- wrappers ----------------------------------------------
def encoder_layer(p, h, pad_bias, rope, input_ln=None):
    B, L, D = h.shape
    cos, sin = rope
    fuse = input_ln is not None
    in_g, in_b = input_ln if fuse else (p['ln1_g'], p['ln1_b'])   # dummies when unused
    kernel = functools.partial(_enc_layer_kernel, num_heads=NUM_HEADS,
                               head_dim=HEAD_DIM, fuse_input_ln=fuse)
    return pl.pallas_call(
        kernel,
        out_shape=jax.ShapeDtypeStruct((B, L, D), jnp.float32),
        grid=(B,),
        in_specs=[
            pl.BlockSpec((1, L, D), lambda b: (b, 0, 0)),          # h (aliased to output)
            _bcast_spec((1, D)), _bcast_spec((1, D)),              # fused input LN (esm)
            _bcast_spec((1, D)), _bcast_spec((1, D)),              # LN1
            _bcast_spec((D, 3 * D)), _bcast_spec((1, 3 * D)),      # packed QKV (bf16 W)
            _bcast_spec((D, D)), _bcast_spec((1, D)),              # out proj
            pl.BlockSpec((1, 1, L), lambda b: (b, 0, 0)),          # key-padding bias
            _bcast_spec((L, HEAD_DIM)), _bcast_spec((L, HEAD_DIM)),  # rope cos / signed sin
            _bcast_spec((1, D)), _bcast_spec((1, D)),              # LN2
            _bcast_spec((D, FFN_DIM)), _bcast_spec((1, FFN_DIM)),  # fc1
            _bcast_spec((FFN_DIM, D)), _bcast_spec((1, D)),        # fc2
        ],
        out_specs=pl.BlockSpec((1, L, D), lambda b: (b, 0, 0)),
        input_output_aliases={0: 0},                               # residual written in place
        compiler_params=pltpu.CompilerParams(
            dimension_semantics=("parallel",), vmem_limit_bytes=VMEM_LIMIT),
    )(h, in_g, in_b, p['ln1_g'], p['ln1_b'],
      p['self_attn']['wqkv'], p['self_attn']['bqkv'],
      p['self_attn']['wo'], p['self_attn']['bo'],
      pad_bias, cos, sin,
      p['ln2_g'], p['ln2_b'], p['fc1_w'], p['fc1_b'], p['fc2_w'], p['fc2_b'])


def decoder_layer(p, h_y, h_mem, y_pad_bias, mem_pad_bias, rope_y, rope_mem):
    B, Ly, D = h_y.shape
    Lx = h_mem.shape[1]
    cos_y, sin_y = rope_y
    cos_x, sin_x = rope_mem
    sa, ca = p['self_attn'], p['cross_attn']
    kernel = functools.partial(_dec_layer_kernel, num_heads=NUM_HEADS, head_dim=HEAD_DIM)
    return pl.pallas_call(
        kernel,
        out_shape=jax.ShapeDtypeStruct((B, Ly, D), jnp.float32),
        grid=(B,),
        in_specs=[
            pl.BlockSpec((1, Ly, D), lambda b: (b, 0, 0)),         # h_y (aliased to output)
            pl.BlockSpec((1, Lx, D), lambda b: (b, 0, 0)),         # encoder memory
            _bcast_spec((1, D)), _bcast_spec((1, D)),              # LN1
            _bcast_spec((D, 3 * D)), _bcast_spec((1, 3 * D)),      # self QKV
            _bcast_spec((D, D)), _bcast_spec((1, D)),              # self out proj
            pl.BlockSpec((1, 1, Ly), lambda b: (b, 0, 0)),         # self key-padding bias
            _bcast_spec((1, D)), _bcast_spec((1, D)),              # LN cross
            _bcast_spec((D, 3 * D)), _bcast_spec((1, 3 * D)),      # cross QKV
            _bcast_spec((D, D)), _bcast_spec((1, D)),              # cross out proj
            pl.BlockSpec((1, 1, Lx), lambda b: (b, 0, 0)),         # memory key-padding bias
            _bcast_spec((Ly, HEAD_DIM)), _bcast_spec((Ly, HEAD_DIM)),  # rope y
            _bcast_spec((Lx, HEAD_DIM)), _bcast_spec((Lx, HEAD_DIM)),  # rope x (memory)
            _bcast_spec((1, D)), _bcast_spec((1, D)),              # LN2
            _bcast_spec((D, FFN_DIM)), _bcast_spec((1, FFN_DIM)),  # fc1
            _bcast_spec((FFN_DIM, D)), _bcast_spec((1, D)),        # fc2
        ],
        out_specs=pl.BlockSpec((1, Ly, D), lambda b: (b, 0, 0)),
        input_output_aliases={0: 0},
        compiler_params=pltpu.CompilerParams(
            dimension_semantics=("parallel",), vmem_limit_bytes=VMEM_LIMIT),
    )(h_y, h_mem, p['ln1_g'], p['ln1_b'],
      sa['wqkv'], sa['bqkv'], sa['wo'], sa['bo'], y_pad_bias,
      p['ln_cross_g'], p['ln_cross_b'],
      ca['wqkv'], ca['bqkv'], ca['wo'], ca['bo'], mem_pad_bias,
      cos_y, sin_y, cos_x, sin_x,
      p['ln2_g'], p['ln2_b'], p['fc1_w'], p['fc1_b'], p['fc2_w'], p['fc2_b'])


def lm_head(p, h_x, h_y):
    """Single RobertaLMHead call over the concatenated encoder+decoder rows.
    Vocab padded to 128 lanes so every logit store is lane-dense."""
    B, LX, D = h_x.shape
    LY = h_y.shape[1]
    rows = jnp.concatenate([h_x.reshape(B * LX, D), h_y.reshape(B * LY, D)], axis=0)
    M = rows.shape[0]
    tile = min(LM_MAX_ROW_TILE, M)        # 32 rows here; 512-row tiles at production M
    out = pl.pallas_call(
        _lm_head_kernel,
        out_shape=jax.ShapeDtypeStruct((M, VOCAB_PAD), jnp.float32),
        grid=(pl.cdiv(M, tile),),
        in_specs=[
            pl.BlockSpec((tile, D), lambda i: (i, 0)),
            _bcast_spec((D, D)), _bcast_spec((1, D)),
            _bcast_spec((1, D)), _bcast_spec((1, D)),
            _bcast_spec((D, VOCAB_PAD)), _bcast_spec((1, VOCAB_PAD)),
        ],
        out_specs=pl.BlockSpec((tile, VOCAB_PAD), lambda i: (i, 0)),
        compiler_params=pltpu.CompilerParams(
            dimension_semantics=("parallel",), vmem_limit_bytes=VMEM_LIMIT),
    )(rows, p['dense_w'], p['dense_b'], p['ln_g'], p['ln_b'],
      p['w_vocab_pad'], p['out_b_pad'])
    x_logits = out[:B * LX].reshape(B, LX, VOCAB_PAD)[..., :VOCAB]
    y_logits = out[B * LX:].reshape(B, LY, VOCAB_PAD)[..., :VOCAB]
    return x_logits, y_logits


# ----------------------------------- JAX glue ----------------------------------------------
def rope_tables(length, dim):
    """Rotary cos table and SIGN-FOLDED sin table (so the kernel only needs a half-swap)."""
    inv_freq = 1.0 / (10000.0 ** (jnp.arange(0, dim, 2, dtype=jnp.float32) / dim))
    pos = jnp.arange(length, dtype=jnp.float32)
    freqs = pos[:, None] * inv_freq[None, :]
    emb = jnp.concatenate([freqs, freqs], axis=-1)                 # (L, dim)
    cos = jnp.cos(emb)
    sin = jnp.sin(emb)
    sin_signed = jnp.concatenate([-sin[:, :dim // 2], sin[:, dim // 2:]], axis=-1)
    return cos, sin_signed


# TODO(synk): GeometricTimeEmbedder source not provided; use geometric-frequency sinusoidal
# time embedding of size embed_dim (cos || sin halves), broadcast over the sequence.
def time_embedding(t, dim):
    half = dim // 2
    freqs = jnp.exp(-math.log(10000.0) * jnp.arange(half, dtype=jnp.float32) / half)
    args = t.astype(jnp.float32)[:, None] * freqs[None, :]
    emb = jnp.concatenate([jnp.cos(args), jnp.sin(args)], axis=-1)
    return emb[:, None, :]                                         # (B, 1, dim)


def forward(params, x, y, t, x_attn_mask, y_attn_mask):
    # masks come in as True = real token; the torch module inverts them to padding masks.
    # Additive key-padding bias (0 valid / -1e30 pad), shaped (B, 1, Lk).
    x_pad_bias = jnp.where(x_attn_mask, 0.0, -1e30).astype(jnp.float32)[:, None, :]
    y_pad_bias = jnp.where(y_attn_mask, 0.0, -1e30).astype(jnp.float32)[:, None, :]

    emb_w = params['embedding']
    h_y = jnp.take(emb_w, y, axis=0) + time_embedding(t, EMBED_DIM)  # h_y + ht.expand_as

    # TODO(synk): frozen pretrained ESM backbone (external checkpoint) cannot be reproduced
    # here; stand in with the shared frozen token embedding + its final LayerNorm, which is
    # folded into the first encoder-layer kernel below.
    h_x = jnp.take(emb_w, x, axis=0)

    rope_x = rope_tables(x.shape[1], HEAD_DIM)
    rope_y = rope_tables(y.shape[1], HEAD_DIM)

    for i in range(NUM_ENC_LAYERS):
        input_ln = (params['esm_ln_g'], params['esm_ln_b']) if i == 0 else None
        h_x = encoder_layer(params['enc'][i], h_x, x_pad_bias, rope_x, input_ln)
        idx = NUM_DEC_LAYERS - NUM_ENC_LAYERS + i
        if idx >= 0:
            h_y = decoder_layer(params['dec'][idx], h_y, h_x, y_pad_bias, x_pad_bias,
                                rope_y, rope_x)

    # TODO(synk): decoder self-attention is non-causal (key-padding mask only), matching
    # the denoising-style reference; add a causal bias here if the torch block is causal.
    return lm_head(params['lm_head'], h_x, h_y)


# ------------------------------- deterministic parameters ----------------------------------
def init_params(key):
    keys = jax.random.split(key, 64)
    kit = iter(keys)

    def lin(d_in, d_out):
        # weights pre-cast to bf16 once (MXU operand dtype); biases stay f32
        w = (0.02 * jax.random.normal(next(kit), (d_in, d_out), jnp.float32))
        return w.astype(jnp.bfloat16), jnp.zeros((1, d_out), jnp.float32)

    def ln_p(dim):
        return jnp.ones((1, dim), jnp.float32), jnp.zeros((1, dim), jnp.float32)

    def mha_p():
        wq, bq = lin(EMBED_DIM, EMBED_DIM)
        wk, bk = lin(EMBED_DIM, EMBED_DIM)
        wv, bv = lin(EMBED_DIM, EMBED_DIM)
        wo, bo = lin(EMBED_DIM, EMBED_DIM)
        return {'wqkv': jnp.concatenate([wq, wk, wv], axis=1),     # packed (D, 3D) bf16
                'bqkv': jnp.concatenate([bq, bk, bv], axis=1),
                'wo': wo, 'bo': bo}

    def block_p(cross):
        p = {'self_attn': mha_p()}
        p['ln1_g'], p['ln1_b'] = ln_p(EMBED_DIM)
        p['ln2_g'], p['ln2_b'] = ln_p(EMBED_DIM)
        p['fc1_w'], p['fc1_b'] = lin(EMBED_DIM, FFN_DIM)
        p['fc2_w'], p['fc2_b'] = lin(FFN_DIM, EMBED_DIM)
        if cross:
            p['cross_attn'] = mha_p()
            p['ln_cross_g'], p['ln_cross_b'] = ln_p(EMBED_DIM)
        return p

    embedding = 0.02 * jax.random.normal(next(kit), (VOCAB, EMBED_DIM), jnp.float32)
    params = {
        'embedding': embedding,
        'esm_ln_g': jnp.ones((1, EMBED_DIM), jnp.float32),
        'esm_ln_b': jnp.zeros((1, EMBED_DIM), jnp.float32),
        'enc': [block_p(False) for _ in range(NUM_ENC_LAYERS)],
        'dec': [block_p(True) for _ in range(NUM_DEC_LAYERS)],
    }
    dw, db = lin(EMBED_DIM, EMBED_DIM)
    # tied LM-head projection: transpose + lane-pad the frozen embedding ONCE at init and
    # cast to bf16, so there is no per-forward transpose and the logits store is lane-dense.
    w_vocab_pad = jnp.pad(embedding.T, ((0, 0), (0, VOCAB_PAD - VOCAB))).astype(jnp.bfloat16)
    params['lm_head'] = {'dense_w': dw, 'dense_b': db,
                         'ln_g': jnp.ones((1, EMBED_DIM), jnp.float32),
                         'ln_b': jnp.zeros((1, EMBED_DIM), jnp.float32),
                         'w_vocab_pad': w_vocab_pad,
                         'out_b_pad': jnp.zeros((1, VOCAB_PAD), jnp.float32)}
    return params


if __name__ == "__main__":
    key = jax.random.PRNGKey(0)
    pkey, xkey, ykey = jax.random.split(key, 3)
    params = init_params(pkey)

    B, LX, LY = 2, 8, 8
    x = jax.random.randint(xkey, (B, LX), 0, VOCAB, dtype=jnp.int32)
    y = jax.random.randint(ykey, (B, LY), 0, VOCAB, dtype=jnp.int32)
    t = jnp.array([1.0, 4.0], dtype=jnp.float32)
    x_lens = jnp.array([LX, LX - 2])
    y_lens = jnp.array([LY - 1, LY])
    x_attn_mask = jnp.arange(LX)[None, :] < x_lens[:, None]   # True = real token
    y_attn_mask = jnp.arange(LY)[None, :] < y_lens[:, None]

    fwd = jax.jit(forward)
    x_logits, y_logits = fwd(params, x, y, t, x_attn_mask, y_attn_mask)
    jax.block_until_ready((x_logits, y_logits))

    assert x_logits.shape == (B, LX, VOCAB)
    assert y_logits.shape == (B, LY, VOCAB)
    assert bool(jnp.all(jnp.isfinite(x_logits))) and bool(jnp.all(jnp.isfinite(y_logits)))
    print("KERNEL_OK")
</pallas_src>

<mosaic_0001>
module attributes {stable_mosaic.version = 11 : i64} {
  func.func @_enc_layer_kernel(%arg0: i32, %arg1: memref<1x8x32xf32, #tpu.memory_space<vmem>>, %arg2: memref<1x32xf32, #tpu.memory_space<vmem>>, %arg3: memref<1x32xf32, #tpu.memory_space<vmem>>, %arg4: memref<1x32xf32, #tpu.memory_space<vmem>>, %arg5: memref<1x32xf32, #tpu.memory_space<vmem>>, %arg6: memref<32x96xbf16, #tpu.memory_space<vmem>>, %arg7: memref<1x96xf32, #tpu.memory_space<vmem>>, %arg8: memref<32x32xbf16, #tpu.memory_space<vmem>>, %arg9: memref<1x32xf32, #tpu.memory_space<vmem>>, %arg10: memref<1x1x8xf32, #tpu.memory_space<vmem>>, %arg11: memref<8x8xf32, #tpu.memory_space<vmem>>, %arg12: memref<8x8xf32, #tpu.memory_space<vmem>>, %arg13: memref<1x32xf32, #tpu.memory_space<vmem>>, %arg14: memref<1x32xf32, #tpu.memory_space<vmem>>, %arg15: memref<32x128xbf16, #tpu.memory_space<vmem>>, %arg16: memref<1x128xf32, #tpu.memory_space<vmem>>, %arg17: memref<128x32xbf16, #tpu.memory_space<vmem>>, %arg18: memref<1x32xf32, #tpu.memory_space<vmem>>, %arg19: memref<1x8x32xf32, #tpu.memory_space<vmem>>) attributes {dimension_semantics = [#tpu.dimension_semantics<parallel>], iteration_bounds = array<i64: 2>, scalar_prefetch = 0 : i64, scratch_operands = 0 : i64, tpu.core_type = #tpu.core_type<tc>, window_params = [{transform_indices = @transform_0, window_bounds = array<i64: 1, 8, 32>}, {pipeline_mode = #tpu.pipeline_mode<synchronous>, transform_indices = @transform_1, window_bounds = array<i64: 1, 32>}, {pipeline_mode = #tpu.pipeline_mode<synchronous>, transform_indices = @transform_2, window_bounds = array<i64: 1, 32>}, {pipeline_mode = #tpu.pipeline_mode<synchronous>, transform_indices = @transform_3, window_bounds = array<i64: 1, 32>}, {pipeline_mode = #tpu.pipeline_mode<synchronous>, transform_indices = @transform_4, window_bounds = array<i64: 1, 32>}, {pipeline_mode = #tpu.pipeline_mode<synchronous>, transform_indices = @transform_5, window_bounds = array<i64: 32, 96>}, {pipeline_mode = #tpu.pipeline_mode<synchronous>, transform_indices = @transform_6, window_bounds = array<i64: 1, 96>}, {pipeline_mode = #tpu.pipeline_mode<synchronous>, transform_indices = @transform_7, window_bounds = array<i64: 32, 32>}, {pipeline_mode = #tpu.pipeline_mode<synchronous>, transform_indices = @transform_8, window_bounds = array<i64: 1, 32>}, {transform_indices = @transform_9, window_bounds = array<i64: 1, 1, 8>}, {pipeline_mode = #tpu.pipeline_mode<synchronous>, transform_indices = @transform_10, window_bounds = array<i64: 8, 8>}, {pipeline_mode = #tpu.pipeline_mode<synchronous>, transform_indices = @transform_11, window_bounds = array<i64: 8, 8>}, {pipeline_mode = #tpu.pipeline_mode<synchronous>, transform_indices = @transform_12, window_bounds = array<i64: 1, 32>}, {pipeline_mode = #tpu.pipeline_mode<synchronous>, transform_indices = @transform_13, window_bounds = array<i64: 1, 32>}, {pipeline_mode = #tpu.pipeline_mode<synchronous>, transform_indices = @transform_14, window_bounds = array<i64: 32, 128>}, {pipeline_mode = #tpu.pipeline_mode<synchronous>, transform_indices = @transform_15, window_bounds = array<i64: 1, 128>}, {pipeline_mode = #tpu.pipeline_mode<synchronous>, transform_indices = @transform_16, window_bounds = array<i64: 128, 32>}, {pipeline_mode = #tpu.pipeline_mode<synchronous>, transform_indices = @transform_17, window_bounds = array<i64: 1, 32>}, {transform_indices = @transform_18, window_bounds = array<i64: 1, 8, 32>}]} {
    %c0 = arith.constant 0 : index
    %c0_0 = arith.constant 0 : index
    %c0_1 = arith.constant 0 : index
    %0 = vector.load %arg1[%c0, %c0_0, %c0_1] : memref<1x8x32xf32, #tpu.memory_space<vmem>>, vector<1x8x32xf32>
    %1 = vector.shape_cast %0 : vector<1x8x32xf32> to vector<8x32xf32>
    %c0_2 = arith.constant 0 : index
    %c0_3 = arith.constant 0 : index
    %2 = vector.load %arg2[%c0_2, %c0_3] : memref<1x32xf32, #tpu.memory_space<vmem>>, vector<1x32xf32>
    %c0_4 = arith.constant 0 : index
    %c0_5 = arith.constant 0 : index
    %3 = vector.load %arg3[%c0_4, %c0_5] : memref<1x32xf32, #tpu.memory_space<vmem>>, vector<1x32xf32>
    %cst = arith.constant dense<0.000000e+00> : vector<8xf32>
    %4 = vector.multi_reduction <add>, %1, %cst [1] : vector<8x32xf32> to vector<8xf32>
    %5 = vector.shape_cast %4 : vector<8xf32> to vector<8x1xf32>
    %cst_6 = arith.constant 3.200000e+01 : f32
    %6 = vector.broadcast %cst_6 : f32 to vector<8x1xf32>
    %7 = arith.divf %5, %6 : vector<8x1xf32>
    %8 = vector.broadcast %7 : vector<8x1xf32> to vector<8x32xf32>
    %9 = arith.subf %1, %8 : vector<8x32xf32>
    %10 = arith.mulf %9, %9 : vector<8x32xf32>
    %cst_7 = arith.constant dense<0.000000e+00> : vector<8xf32>
    %11 = vector.multi_reduction <add>, %10, %cst_7 [1] : vector<8x32xf32> to vector<8xf32>
    %12 = vector.shape_cast %11 : vector<8xf32> to vector<8x1xf32>
    %cst_8 = arith.constant 3.200000e+01 : f32
    %13 = vector.broadcast %cst_8 : f32 to vector<8x1xf32>
    %14 = arith.divf %12, %13 : vector<8x1xf32>
    %15 = vector.broadcast %7 : vector<8x1xf32> to vector<8x32xf32>
    %16 = arith.subf %1, %15 : vector<8x32xf32>
    %cst_9 = arith.constant 9.99999974E-6 : f32
    %17 = vector.broadcast %cst_9 : f32 to vector<8x1xf32>
    %18 = arith.addf %14, %17 : vector<8x1xf32>
    %19 = math.rsqrt %18 : vector<8x1xf32>
    %20 = vector.broadcast %19 : vector<8x1xf32> to vector<8x32xf32>
    %21 = arith.mulf %16, %20 : vector<8x32xf32>
    %22 = vector.broadcast %2 : vector<1x32xf32> to vector<8x32xf32>
    %23 = arith.mulf %21, %22 : vector<8x32xf32>
    %24 = vector.broadcast %3 : vector<1x32xf32> to vector<8x32xf32>
    %25 = arith.addf %23, %24 : vector<8x32xf32>
    %c0_10 = arith.constant 0 : index
    %c0_11 = arith.constant 0 : index
    %c0_12 = arith.constant 0 : index
    %26 = vector.load %arg10[%c0_10, %c0_11, %c0_12] : memref<1x1x8xf32, #tpu.memory_space<vmem>>, vector<1x1x8xf32>
    %c0_13 = arith.constant 0 : index
    %c0_14 = arith.constant 0 : index
    %27 = vector.load %arg11[%c0_13, %c0_14] : memref<8x8xf32, #tpu.memory_space<vmem>>, vector<8x8xf32>
    %c0_15 = arith.constant 0 : index
    %c0_16 = arith.constant 0 : index
    %28 = vector.load %arg12[%c0_15, %c0_16] : memref<8x8xf32, #tpu.memory_space<vmem>>, vector<8x8xf32>
    %c0_17 = arith.constant 0 : index
    %c0_18 = arith.constant 0 : index
    %29 = vector.load %arg11[%c0_17, %c0_18] : memref<8x8xf32, #tpu.memory_space<vmem>>, vector<8x8xf32>
    %c0_19 = arith.constant 0 : index
    %c0_20 = arith.constant 0 : index
    %30 = vector.load %arg12[%c0_19, %c0_20] : memref<8x8xf32, #tpu.memory_space<vmem>>, vector<8x8xf32>
    %c0_21 = arith.constant 0 : index
    %c0_22 = arith.constant 0 : index
    %31 = vector.load %arg4[%c0_21, %c0_22] : memref<1x32xf32, #tpu.memory_space<vmem>>, vector<1x32xf32>
    %c0_23 = arith.constant 0 : index
    %c0_24 = arith.constant 0 : index
    %32 = vector.load %arg5[%c0_23, %c0_24] : memref<1x32xf32, #tpu.memory_space<vmem>>, vector<1x32xf32>
    %cst_25 = arith.constant dense<0.000000e+00> : vector<8xf32>
    %33 = vector.multi_reduction <add>, %25, %cst_25 [1] : vector<8x32xf32> to vector<8xf32>
    %34 = vector.shape_cast %33 : vector<8xf32> to vector<8x1xf32>
    %cst_26 = arith.constant 3.200000e+01 : f32
    %35 = vector.broadcast %cst_26 : f32 to vector<8x1xf32>
    %36 = arith.divf %34, %35 : vector<8x1xf32>
    %37 = vector.broadcast %36 : vector<8x1xf32> to vector<8x32xf32>
    %38 = arith.subf %25, %37 : vector<8x32xf32>
    %39 = arith.mulf %38, %38 : vector<8x32xf32>
    %cst_27 = arith.constant dense<0.000000e+00> : vector<8xf32>
    %40 = vector.multi_reduction <add>, %39, %cst_27 [1] : vector<8x32xf32> to vector<8xf32>
    %41 = vector.shape_cast %40 : vector<8xf32> to vector<8x1xf32>
    %cst_28 = arith.constant 3.200000e+01 : f32
    %42 = vector.broadcast %cst_28 : f32 to vector<8x1xf32>
    %43 = arith.divf %41, %42 : vector<8x1xf32>
    %44 = vector.broadcast %36 : vector<8x1xf32> to vector<8x32xf32>
    %45 = arith.subf %25, %44 : vector<8x32xf32>
    %cst_29 = arith.constant 9.99999974E-6 : f32
    %46 = vector.broadcast %cst_29 : f32 to vector<8x1xf32>
    %47 = arith.addf %43, %46 : vector<8x1xf32>
    %48 = math.rsqrt %47 : vector<8x1xf32>
    %49 = vector.broadcast %48 : vector<8x1xf32> to vector<8x32xf32>
    %50 = arith.mulf %45, %49 : vector<8x32xf32>
    %51 = vector.broadcast %31 : vector<1x32xf32> to vector<8x32xf32>
    %52 = arith.mulf %50, %51 : vector<8x32xf32>
    %53 = vector.broadcast %32 : vector<1x32xf32> to vector<8x32xf32>
    %54 = arith.addf %52, %53 : vector<8x32xf32>
    %c0_30 = arith.constant 0 : index
    %c0_31 = arith.constant 0 : index
    %55 = vector.load %arg6[%c0_30, %c0_31] : memref<32x96xbf16, #tpu.memory_space<vmem>>, vector<32x96xbf16>
    %c0_32 = arith.constant 0 : index
    %c0_33 = arith.constant 0 : index
    %56 = vector.load %arg7[%c0_32, %c0_33] : memref<1x96xf32, #tpu.memory_space<vmem>>, vector<1x96xf32>
    %57 = arith.truncf %54 : vector<8x32xf32> to vector<8x32xbf16>
    %cst_34 = arith.constant dense<0.000000e+00> : vector<8x96xf32>
    %58 = tpu.matmul %57, %55, %cst_34 {dimension_numbers = #tpu.dot_dimension_numbers<[1], [0], [0], [1], [0, 0, 1, 1], [], []>} : vector<8x32xbf16>, vector<32x96xbf16>, vector<8x96xf32> -> vector<8x96xf32>
    %59 = vector.broadcast %56 : vector<1x96xf32> to vector<8x96xf32>
    %60 = arith.addf %58, %59 : vector<8x96xf32>
    %61 = vector.extract_strided_slice %60 {offsets = [0, 0], sizes = [8, 32], strides = [1, 1]} : vector<8x96xf32> to vector<8x32xf32>
    %62 = vector.extract_strided_slice %60 {offsets = [0, 32], sizes = [8, 32], strides = [1, 1]} : vector<8x96xf32> to vector<8x32xf32>
    %63 = vector.extract_strided_slice %60 {offsets = [0, 64], sizes = [8, 32], strides = [1, 1]} : vector<8x96xf32> to vector<8x32xf32>
    %64 = vector.extract_strided_slice %61 {offsets = [0, 0], sizes = [8, 8], strides = [1, 1]} : vector<8x32xf32> to vector<8x8xf32>
    %65 = vector.extract_strided_slice %61 {offsets = [0, 8], sizes = [8, 8], strides = [1, 1]} : vector<8x32xf32> to vector<8x8xf32>
    %66 = vector.extract_strided_slice %61 {offsets = [0, 16], sizes = [8, 8], strides = [1, 1]} : vector<8x32xf32> to vector<8x8xf32>
    %67 = vector.extract_strided_slice %61 {offsets = [0, 24], sizes = [8, 8], strides = [1, 1]} : vector<8x32xf32> to vector<8x8xf32>
    %68 = vector.shape_cast %64 : vector<8x8xf32> to vector<1x8x8xf32>
    %69 = vector.shape_cast %65 : vector<8x8xf32> to vector<1x8x8xf32>
    %70 = vector.shape_cast %66 : vector<8x8xf32> to vector<1x8x8xf32>
    %71 = vector.shape_cast %67 : vector<8x8xf32> to vector<1x8x8xf32>
    %72 = tpu.concatenate %68, %69, %70, %71 in 0 : vector<1x8x8xf32>, vector<1x8x8xf32>, vector<1x8x8xf32>, vector<1x8x8xf32> -> vector<4x8x8xf32>
    %73 = vector.shape_cast %27 : vector<8x8xf32> to vector<1x8x8xf32>
    %74 = vector.broadcast %73 : vector<1x8x8xf32> to vector<4x8x8xf32>
    %75 = arith.mulf %72, %74 : vector<4x8x8xf32>
    %76 = vector.extract_strided_slice %72 {offsets = [0, 0, 4], sizes = [4, 8, 4], strides = [1, 1, 1]} : vector<4x8x8xf32> to vector<4x8x4xf32>
    %77 = vector.extract_strided_slice %72 {offsets = [0, 0, 0], sizes = [4, 8, 4], strides = [1, 1, 1]} : vector<4x8x8xf32> to vector<4x8x4xf32>
    %78 = tpu.concatenate %76, %77 in 2 : vector<4x8x4xf32>, vector<4x8x4xf32> -> vector<4x8x8xf32>
    %79 = vector.shape_cast %28 : vector<8x8xf32> to vector<1x8x8xf32>
    %80 = vector.broadcast %79 : vector<1x8x8xf32> to vector<4x8x8xf32>
    %81 = arith.mulf %78, %80 : vector<4x8x8xf32>
    %82 = arith.addf %75, %81 : vector<4x8x8xf32>
    %83 = vector.extract_strided_slice %62 {offsets = [0, 0], sizes = [8, 8], strides = [1, 1]} : vector<8x32xf32> to vector<8x8xf32>
    %84 = vector.extract_strided_slice %62 {offsets = [0, 8], sizes = [8, 8], strides = [1, 1]} : vector<8x32xf32> to vector<8x8xf32>
    %85 = vector.extract_strided_slice %62 {offsets = [0, 16], sizes = [8, 8], strides = [1, 1]} : vector<8x32xf32> to vector<8x8xf32>
    %86 = vector.extract_strided_slice %62 {offsets = [0, 24], sizes = [8, 8], strides = [1, 1]} : vector<8x32xf32> to vector<8x8xf32>
    %87 = vector.shape_cast %83 : vector<8x8xf32> to vector<1x8x8xf32>
    %88 = vector.shape_cast %84 : vector<8x8xf32> to vector<1x8x8xf32>
    %89 = vector.shape_cast %85 : vector<8x8xf32> to vector<1x8x8xf32>
    %90 = vector.shape_cast %86 : vector<8x8xf32> to vector<1x8x8xf32>
    %91 = tpu.concatenate %87, %88, %89, %90 in 0 : vector<1x8x8xf32>, vector<1x8x8xf32>, vector<1x8x8xf32>, vector<1x8x8xf32> -> vector<4x8x8xf32>
    %92 = vector.shape_cast %29 : vector<8x8xf32> to vector<1x8x8xf32>
    %93 = vector.broadcast %92 : vector<1x8x8xf32> to vector<4x8x8xf32>
    %94 = arith.mulf %91, %93 : vector<4x8x8xf32>
    %95 = vector.extract_strided_slice %91 {offsets = [0, 0, 4], sizes = [4, 8, 4], strides = [1, 1, 1]} : vector<4x8x8xf32> to vector<4x8x4xf32>
    %96 = vector.extract_strided_slice %91 {offsets = [0, 0, 0], sizes = [4, 8, 4], strides = [1, 1, 1]} : vector<4x8x8xf32> to vector<4x8x4xf32>
    %97 = tpu.concatenate %95, %96 in 2 : vector<4x8x4xf32>, vector<4x8x4xf32> -> vector<4x8x8xf32>
    %98 = vector.shape_cast %30 : vector<8x8xf32> to vector<1x8x8xf32>
    %99 = vector.broadcast %98 : vector<1x8x8xf32> to vector<4x8x8xf32>
    %100 = arith.mulf %97, %99 : vector<4x8x8xf32>
    %101 = arith.addf %94, %100 : vector<4x8x8xf32>
    %102 = vector.extract_strided_slice %63 {offsets = [0, 0], sizes = [8, 8], strides = [1, 1]} : vector<8x32xf32> to vector<8x8xf32>
    %103 = vector.extract_strided_slice %63 {offsets = [0, 8], sizes = [8, 8], strides = [1, 1]} : vector<8x32xf32> to vector<8x8xf32>
    %104 = vector.extract_strided_slice %63 {offsets = [0, 16], sizes = [8, 8], strides = [1, 1]} : vector<8x32xf32> to vector<8x8xf32>
    %105 = vector.extract_strided_slice %63 {offsets = [0, 24], sizes = [8, 8], strides = [1, 1]} : vector<8x32xf32> to vector<8x8xf32>
    %106 = vector.shape_cast %102 : vector<8x8xf32> to vector<1x8x8xf32>
    %107 = vector.shape_cast %103 : vector<8x8xf32> to vector<1x8x8xf32>
    %108 = vector.shape_cast %104 : vector<8x8xf32> to vector<1x8x8xf32>
    %109 = vector.shape_cast %105 : vector<8x8xf32> to vector<1x8x8xf32>
    %110 = tpu.concatenate %106, %107, %108, %109 in 0 : vector<1x8x8xf32>, vector<1x8x8xf32>, vector<1x8x8xf32>, vector<1x8x8xf32> -> vector<4x8x8xf32>
    %111 = arith.truncf %82 : vector<4x8x8xf32> to vector<4x8x8xbf16>
    %112 = arith.truncf %101 : vector<4x8x8xf32> to vector<4x8x8xbf16>
    "tpu.trace_start"() <{level = 10 : i32, message = "hqd,hkd->hqk"}> : () -> ()
    %cst_35 = arith.constant dense<0.000000e+00> : vector<4x8x8xf32>
    %113 = tpu.matmul %111, %112, %cst_35 {dimension_numbers = #tpu.dot_dimension_numbers<[2], [2], [1], [1], [0, 0, 0, 1, 1, 1], [0], [0]>} : vector<4x8x8xbf16>, vector<4x8x8xbf16>, vector<4x8x8xf32> -> vector<4x8x8xf32>
    "tpu.trace_stop"() : () -> ()
    %cst_36 = arith.constant 0.353553385 : f32
    %114 = vector.broadcast %cst_36 : f32 to vector<4x8x8xf32>
    %115 = arith.mulf %113, %114 : vector<4x8x8xf32>
    %116 = vector.broadcast %26 : vector<1x1x8xf32> to vector<4x8x8xf32>
    %117 = arith.addf %115, %116 : vector<4x8x8xf32>
    %cst_37 = arith.constant dense<0xFF800000> : vector<4x8xf32>
    %118 = vector.multi_reduction <maximumf>, %117, %cst_37 [2] : vector<4x8x8xf32> to vector<4x8xf32>
    %119 = vector.shape_cast %118 : vector<4x8xf32> to vector<4x8x1xf32>
    %120 = vector.broadcast %119 : vector<4x8x1xf32> to vector<4x8x8xf32>
    %121 = arith.subf %117, %120 : vector<4x8x8xf32>
    %122 = math.exp %121 : vector<4x8x8xf32>
    %cst_38 = arith.constant dense<0.000000e+00> : vector<4x8xf32>
    %123 = vector.multi_reduction <add>, %122, %cst_38 [2] : vector<4x8x8xf32> to vector<4x8xf32>
    %124 = vector.shape_cast %123 : vector<4x8xf32> to vector<4x8x1xf32>
    %125 = arith.truncf %122 : vector<4x8x8xf32> to vector<4x8x8xbf16>
    %126 = arith.truncf %110 : vector<4x8x8xf32> to vector<4x8x8xbf16>
    "tpu.trace_start"() <{level = 10 : i32, message = "hqk,hkd->hqd"}> : () -> ()
    %cst_39 = arith.constant dense<0.000000e+00> : vector<4x8x8xf32>
    %127 = tpu.matmul %125, %126, %cst_39 {dimension_numbers = #tpu.dot_dimension_numbers<[2], [1], [1], [2], [0, 0, 0, 1, 1, 2], [0], [0]>} : vector<4x8x8xbf16>, vector<4x8x8xbf16>, vector<4x8x8xf32> -> vector<4x8x8xf32>
    "tpu.trace_stop"() : () -> ()
    %128 = tpu.reciprocal %124 {approx = true} : vector<4x8x1xf32> -> vector<4x8x1xf32>
    %129 = vector.broadcast %128 : vector<4x8x1xf32> to vector<4x8x8xf32>
    %130 = arith.mulf %127, %129 : vector<4x8x8xf32>
    %131 = vector.extract_strided_slice %130 {offsets = [0, 0, 0], sizes = [1, 8, 8], strides = [1, 1, 1]} : vector<4x8x8xf32> to vector<1x8x8xf32>
    %132 = vector.shape_cast %131 : vector<1x8x8xf32> to vector<8x8xf32>
    %133 = vector.extract_strided_slice %130 {offsets = [1, 0, 0], sizes = [1, 8, 8], strides = [1, 1, 1]} : vector<4x8x8xf32> to vector<1x8x8xf32>
    %134 = vector.shape_cast %133 : vector<1x8x8xf32> to vector<8x8xf32>
    %135 = vector.extract_strided_slice %130 {offsets = [2, 0, 0], sizes = [1, 8, 8], strides = [1, 1, 1]} : vector<4x8x8xf32> to vector<1x8x8xf32>
    %136 = vector.shape_cast %135 : vector<1x8x8xf32> to vector<8x8xf32>
    %137 = vector.extract_strided_slice %130 {offsets = [3, 0, 0], sizes = [1, 8, 8], strides = [1, 1, 1]} : vector<4x8x8xf32> to vector<1x8x8xf32>
    %138 = vector.shape_cast %137 : vector<1x8x8xf32> to vector<8x8xf32>
    %139 = tpu.concatenate %132, %134, %136, %138 in 1 : vector<8x8xf32>, vector<8x8xf32>, vector<8x8xf32>, vector<8x8xf32> -> vector<8x32xf32>
    %c0_40 = arith.constant 0 : index
    %c0_41 = arith.constant 0 : index
    %140 = vector.load %arg8[%c0_40, %c0_41] : memref<32x32xbf16, #tpu.memory_space<vmem>>, vector<32x32xbf16>
    %141 = arith.truncf %139 : vector<8x32xf32> to vector<8x32xbf16>
    %cst_42 = arith.constant dense<0.000000e+00> : vector<8x32xf32>
    %142 = tpu.matmul %141, %140, %cst_42 {dimension_numbers = #tpu.dot_dimension_numbers<[1], [0], [0], [1], [0, 0, 1, 1], [], []>} : vector<8x32xbf16>, vector<32x32xbf16>, vector<8x32xf32> -> vector<8x32xf32>
    %c0_43 = arith.constant 0 : index
    %c0_44 = arith.constant 0 : index
    %143 = vector.load %arg9[%c0_43, %c0_44] : memref<1x32xf32, #tpu.memory_space<vmem>>, vector<1x32xf32>
    %144 = vector.broadcast %143 : vector<1x32xf32> to vector<8x32xf32>
    %145 = arith.addf %142, %144 : vector<8x32xf32>
    %146 = arith.addf %25, %145 : vector<8x32xf32>
    %c0_45 = arith.constant 0 : index
    %c0_46 = arith.constant 0 : index
    %147 = vector.load %arg13[%c0_45, %c0_46] : memref<1x32xf32, #tpu.memory_space<vmem>>, vector<1x32xf32>
    %c0_47 = arith.constant 0 : index
    %c0_48 = arith.constant 0 : index
    %148 = vector.load %arg14[%c0_47, %c0_48] : memref<1x32xf32, #tpu.memory_space<vmem>>, vector<1x32xf32>
    %cst_49 = arith.constant dense<0.000000e+00> : vector<8xf32>
    %149 = vector.multi_reduction <add>, %146, %cst_49 [1] : vector<8x32xf32> to vector<8xf32>
    %150 = vector.shape_cast %149 : vector<8xf32> to vector<8x1xf32>
    %cst_50 = arith.constant 3.200000e+01 : f32
    %151 = vector.broadcast %cst_50 : f32 to vector<8x1xf32>
    %152 = arith.divf %150, %151 : vector<8x1xf32>
    %153 = vector.broadcast %152 : vector<8x1xf32> to vector<8x32xf32>
    %154 = arith.subf %146, %153 : vector<8x32xf32>
    %155 = arith.mulf %154, %154 : vector<8x32xf32>
    %cst_51 = arith.constant dense<0.000000e+00> : vector<8xf32>
    %156 = vector.multi_reduction <add>, %155, %cst_51 [1] : vector<8x32xf32> to vector<8xf32>
    %157 = vector.shape_cast %156 : vector<8xf32> to vector<8x1xf32>
    %cst_52 = arith.constant 3.200000e+01 : f32
    %158 = vector.broadcast %cst_52 : f32 to vector<8x1xf32>
    %159 = arith.divf %157, %158 : vector<8x1xf32>
    %160 = vector.broadcast %152 : vector<8x1xf32> to vector<8x32xf32>
    %161 = arith.subf %146, %160 : vector<8x32xf32>
    %cst_53 = arith.constant 9.99999974E-6 : f32
    %162 = vector.broadcast %cst_53 : f32 to vector<8x1xf32>
    %163 = arith.addf %159, %162 : vector<8x1xf32>
    %164 = math.rsqrt %163 : vector<8x1xf32>
    %165 = vector.broadcast %164 : vector<8x1xf32> to vector<8x32xf32>
    %166 = arith.mulf %161, %165 : vector<8x32xf32>
    %167 = vector.broadcast %147 : vector<1x32xf32> to vector<8x32xf32>
    %168 = arith.mulf %166, %167 : vector<8x32xf32>
    %169 = vector.broadcast %148 : vector<1x32xf32> to vector<8x32xf32>
    %170 = arith.addf %168, %169 : vector<8x32xf32>
    %c0_54 = arith.constant 0 : index
    %c0_55 = arith.constant 0 : index
    %171 = vector.load %arg15[%c0_54, %c0_55] : memref<32x128xbf16, #tpu.memory_space<vmem>>, vector<32x128xbf16>
    %172 = arith.truncf %170 : vector<8x32xf32> to vector<8x32xbf16>
    %cst_56 = arith.constant dense<0.000000e+00> : vector<8x128xf32>
    %173 = tpu.matmul %172, %171, %cst_56 {dimension_numbers = #tpu.dot_dimension_numbers<[1], [0], [0], [1], [0, 0, 1, 1], [], []>} : vector<8x32xbf16>, vector<32x128xbf16>, vector<8x128xf32> -> vector<8x128xf32>
    %c0_57 = arith.constant 0 : index
    %c0_58 = arith.constant 0 : index
    %174 = vector.load %arg16[%c0_57, %c0_58] : memref<1x128xf32, #tpu.memory_space<vmem>>, vector<1x128xf32>
    %175 = vector.broadcast %174 : vector<1x128xf32> to vector<8x128xf32>
    %176 = arith.addf %173, %175 : vector<8x128xf32>
    %cst_59 = arith.constant 5.000000e-01 : f32
    %177 = vector.broadcast %cst_59 : f32 to vector<8x128xf32>
    %178 = arith.mulf %177, %176 : vector<8x128xf32>
    %cst_60 = arith.constant 4.471500e-02 : f32
    %179 = vector.broadcast %cst_60 : f32 to vector<8x128xf32>
    %180 = arith.mulf %179, %176 : vector<8x128xf32>
    %181 = arith.mulf %180, %176 : vector<8x128xf32>
    %182 = arith.mulf %181, %176 : vector<8x128xf32>
    %183 = arith.addf %176, %182 : vector<8x128xf32>
    %cst_61 = arith.constant 0.797884583 : f32
    %184 = vector.broadcast %cst_61 : f32 to vector<8x128xf32>
    %185 = arith.mulf %184, %183 : vector<8x128xf32>
    %186 = math.tanh %185 : vector<8x128xf32>
    %cst_62 = arith.constant 1.000000e+00 : f32
    %187 = vector.broadcast %cst_62 : f32 to vector<8x128xf32>
    %188 = arith.addf %187, %186 : vector<8x128xf32>
    %189 = arith.mulf %178, %188 : vector<8x128xf32>
    %c0_63 = arith.constant 0 : index
    %c0_64 = arith.constant 0 : index
    %190 = vector.load %arg17[%c0_63, %c0_64] : memref<128x32xbf16, #tpu.memory_space<vmem>>, vector<128x32xbf16>
    %191 = arith.truncf %189 : vector<8x128xf32> to vector<8x128xbf16>
    %cst_65 = arith.constant dense<0.000000e+00> : vector<8x32xf32>
    %192 = tpu.matmul %191, %190, %cst_65 {dimension_numbers = #tpu.dot_dimension_numbers<[1], [0], [0], [1], [0, 0, 1, 1], [], []>} : vector<8x128xbf16>, vector<128x32xbf16>, vector<8x32xf32> -> vector<8x32xf32>
    %c0_66 = arith.constant 0 : index
    %c0_67 = arith.constant 0 : index
    %193 = vector.load %arg18[%c0_66, %c0_67] : memref<1x32xf32, #tpu.memory_space<vmem>>, vector<1x32xf32>
    %194 = vector.broadcast %193 : vector<1x32xf32> to vector<8x32xf32>
    %195 = arith.addf %192, %194 : vector<8x32xf32>
    %196 = arith.addf %146, %195 : vector<8x32xf32>
    %c0_68 = arith.constant 0 : index
    %c0_69 = arith.constant 0 : index
    %c0_70 = arith.constant 0 : index
    %197 = vector.load %arg19[%c0_68, %c0_69, %c0_70] : memref<1x8x32xf32, #tpu.memory_space<vmem>>, vector<1x8x32xf32>
    %198 = vector.shape_cast %197 : vector<1x8x32xf32> to vector<8x32xf32>
    %199 = vector.shape_cast %196 : vector<8x32xf32> to vector<1x8x32xf32>
    tpu.vector_store %arg19[%c0_68, %c0_69, %c0_70], %199 {strides = array<i32>} : memref<1x8x32xf32, #tpu.memory_space<vmem>>, vector<1x8x32xf32>,
    return
  }
  func.func @transform_0(%arg0: i32) -> (i32, i32, i32) {
    %c0_i32 = arith.constant 0 : i32
    %c0_i32_0 = arith.constant 0 : i32
    %c0_i32_1 = arith.constant 0 : i32
    return %arg0, %c0_i32, %c0_i32_0 : i32, i32, i32
  }
  func.func @transform_1(%arg0: i32) -> (i32, i32) {
    %c0_i32 = arith.constant 0 : i32
    %c0_i32_0 = arith.constant 0 : i32
    %c0_i32_1 = arith.constant 0 : i32
    return %c0_i32, %c0_i32_0 : i32, i32
  }
  func.func @transform_2(%arg0: i32) -> (i32, i32) {
    %c0_i32 = arith.constant 0 : i32
    %c0_i32_0 = arith.constant 0 : i32
    %c0_i32_1 = arith.constant 0 : i32
    return %c0_i32, %c0_i32_0 : i32, i32
  }
  func.func @transform_3(%arg0: i32) -> (i32, i32) {
    %c0_i32 = arith.constant 0 : i32
    %c0_i32_0 = arith.constant 0 : i32
    %c0_i32_1 = arith.constant 0 : i32
    return %c0_i32, %c0_i32_0 : i32, i32
  }
  func.func @transform_4(%arg0: i32) -> (i32, i32) {
    %c0_i32 = arith.constant 0 : i32
    %c0_i32_0 = arith.constant 0 : i32
    %c0_i32_1 = arith.constant 0 : i32
    return %c0_i32, %c0_i32_0 : i32, i32
  }
  func.func @transform_5(%arg0: i32) -> (i32, i32) {
    %c0_i32 = arith.constant 0 : i32
    %c0_i32_0 = arith.constant 0 : i32
    %c0_i32_1 = arith.constant 0 : i32
    return %c0_i32, %c0_i32_0 : i32, i32
  }
  func.func @transform_6(%arg0: i32) -> (i32, i32) {
    %c0_i32 = arith.constant 0 : i32
    %c0_i32_0 = arith.constant 0 : i32
    %c0_i32_1 = arith.constant 0 : i32
    return %c0_i32, %c0_i32_0 : i32, i32
  }
  func.func @transform_7(%arg0: i32) -> (i32, i32) {
    %c0_i32 = arith.constant 0 : i32
    %c0_i32_0 = arith.constant 0 : i32
    %c0_i32_1 = arith.constant 0 : i32
    return %c0_i32, %c0_i32_0 : i32, i32
  }
  func.func @transform_8(%arg0: i32) -> (i32, i32) {
    %c0_i32 = arith.constant 0 : i32
    %c0_i32_0 = arith.constant 0 : i32
    %c0_i32_1 = arith.constant 0 : i32
    return %c0_i32, %c0_i32_0 : i32, i32
  }
  func.func @transform_9(%arg0: i32) -> (i32, i32, i32) {
    %c0_i32 = arith.constant 0 : i32
    %c0_i32_0 = arith.constant 0 : i32
    %c0_i32_1 = arith.constant 0 : i32
    return %arg0, %c0_i32, %c0_i32_0 : i32, i32, i32
  }
  func.func @transform_10(%arg0: i32) -> (i32, i32) {
    %c0_i32 = arith.constant 0 : i32
    %c0_i32_0 = arith.constant 0 : i32
    %c0_i32_1 = arith.constant 0 : i32
    return %c0_i32, %c0_i32_0 : i32, i32
  }
  func.func @transform_11(%arg0: i32) -> (i32, i32) {
    %c0_i32 = arith.constant 0 : i32
    %c0_i32_0 = arith.constant 0 : i32
    %c0_i32_1 = arith.constant 0 : i32
    return %c0_i32, %c0_i32_0 : i32, i32
  }
  func.func @transform_12(%arg0: i32) -> (i32, i32) {
    %c0_i32 = arith.constant 0 : i32
    %c0_i32_0 = arith.constant 0 : i32
    %c0_i32_1 = arith.constant 0 : i32
    return %c0_i32, %c0_i32_0 : i32, i32
  }
  func.func @transform_13(%arg0: i32) -> (i32, i32) {
    %c0_i32 = arith.constant 0 : i32
    %c0_i32_0 = arith.constant 0 : i32
    %c0_i32_1 = arith.constant 0 : i32
    return %c0_i32, %c0_i32_0 : i32, i32
  }
  func.func @transform_14(%arg0: i32) -> (i32, i32) {
    %c0_i32 = arith.constant 0 : i32
    %c0_i32_0 = arith.constant 0 : i32
    %c0_i32_1 = arith.constant 0 : i32
    return %c0_i32, %c0_i32_0 : i32, i32
  }
  func.func @transform_15(%arg0: i32) -> (i32, i32) {
    %c0_i32 = arith.constant 0 : i32
    %c0_i32_0 = arith.constant 0 : i32
    %c0_i32_1 = arith.constant 0 : i32
    return %c0_i32, %c0_i32_0 : i32, i32
  }
  func.func @transform_16(%arg0: i32) -> (i32, i32) {
    %c0_i32 = arith.constant 0 : i32
    %c0_i32_0 = arith.constant 0 : i32
    %c0_i32_1 = arith.constant 0 : i32
    return %c0_i32, %c0_i32_0 : i32, i32
  }
  func.func @transform_17(%arg0: i32) -> (i32, i32) {
    %c0_i32 = arith.constant 0 : i32
    %c0_i32_0 = arith.constant 0 : i32
    %c0_i32_1 = arith.constant 0 : i32
    return %c0_i32, %c0_i32_0 : i32, i32
  }
  func.func @transform_18(%arg0: i32) -> (i32, i32, i32) {
    %c0_i32 = arith.constant 0 : i32
    %c0_i32_0 = arith.constant 0 : i32
    %c0_i32_1 = arith.constant 0 : i32
    return %arg0, %c0_i32, %c0_i32_0 : i32, i32, i32
  }
}

module attributes {stable_mosaic.version = 11 : i64} {
  func.func @_enc_layer_kernel(%arg0: i32, %arg1: memref<1x8x32xf32, #tpu.memory_space<vmem>>, %arg2: memref<1x32xf32, #tpu.memory_space<vmem>>, %arg3: memref<1x32xf32, #tpu.memory_space<vmem>>, %arg4: memref<1x32xf32, #tpu.memory_space<vmem>>, %arg5: memref<1x32xf32, #tpu.memory_space<vmem>>, %arg6: memref<32x96xbf16, #tpu.memory_space<vmem>>, %arg7: memref<1x96xf32, #tpu.memory_space<vmem>>, %arg8: memref<32x32xbf16, #tpu.memory_space<vmem>>, %arg9: memref<1x32xf32, #tpu.memory_space<vmem>>, %arg10: memref<1x1x8xf32, #tpu.memory_space<vmem>>, %arg11: memref<8x8xf32, #tpu.memory_space<vmem>>, %arg12: memref<8x8xf32, #tpu.memory_space<vmem>>, %arg13: memref<1x32xf32, #tpu.memory_space<vmem>>, %arg14: memref<1x32xf32, #tpu.memory_space<vmem>>, %arg15: memref<32x128xbf16, #tpu.memory_space<vmem>>, %arg16: memref<1x128xf32, #tpu.memory_space<vmem>>, %arg17: memref<128x32xbf16, #tpu.memory_space<vmem>>, %arg18: memref<1x32xf32, #tpu.memory_space<vmem>>, %arg19: memref<1x8x32xf32, #tpu.memory_space<vmem>>) attributes {dimension_semantics = [#tpu.dimension_semantics<parallel>], iteration_bounds = array<i64: 2>, scalar_prefetch = 0 : i64, scratch_operands = 0 : i64, tpu.core_type = #tpu.core_type<tc>, window_params = [{transform_indices = @transform_0, window_bounds = array<i64: 1, 8, 32>}, {pipeline_mode = #tpu.pipeline_mode<synchronous>, transform_indices = @transform_1, window_bounds = array<i64: 1, 32>}, {pipeline_mode = #tpu.pipeline_mode<synchronous>, transform_indices = @transform_2, window_bounds = array<i64: 1, 32>}, {pipeline_mode = #tpu.pipeline_mode<synchronous>, transform_indices = @transform_3, window_bounds = array<i64: 1, 32>}, {pipeline_mode = #tpu.pipeline_mode<synchronous>, transform_indices = @transform_4, window_bounds = array<i64: 1, 32>}, {pipeline_mode = #tpu.pipeline_mode<synchronous>, transform_indices = @transform_5, window_bounds = array<i64: 32, 96>}, {pipeline_mode = #tpu.pipeline_mode<synchronous>, transform_indices = @transform_6, window_bounds = array<i64: 1, 96>}, {pipeline_mode = #tpu.pipeline_mode<synchronous>, transform_indices = @transform_7, window_bounds = array<i64: 32, 32>}, {pipeline_mode = #tpu.pipeline_mode<synchronous>, transform_indices = @transform_8, window_bounds = array<i64: 1, 32>}, {transform_indices = @transform_9, window_bounds = array<i64: 1, 1, 8>}, {pipeline_mode = #tpu.pipeline_mode<synchronous>, transform_indices = @transform_10, window_bounds = array<i64: 8, 8>}, {pipeline_mode = #tpu.pipeline_mode<synchronous>, transform_indices = @transform_11, window_bounds = array<i64: 8, 8>}, {pipeline_mode = #tpu.pipeline_mode<synchronous>, transform_indices = @transform_12, window_bounds = array<i64: 1, 32>}, {pipeline_mode = #tpu.pipeline_mode<synchronous>, transform_indices = @transform_13, window_bounds = array<i64: 1, 32>}, {pipeline_mode = #tpu.pipeline_mode<synchronous>, transform_indices = @transform_14, window_bounds = array<i64: 32, 128>}, {pipeline_mode = #tpu.pipeline_mode<synchronous>, transform_indices = @transform_15, window_bounds = array<i64: 1, 128>}, {pipeline_mode = #tpu.pipeline_mode<synchronous>, transform_indices = @transform_16, window_bounds = array<i64: 128, 32>}, {pipeline_mode = #tpu.pipeline_mode<synchronous>, transform_indices = @transform_17, window_bounds = array<i64: 1, 32>}, {transform_indices = @transform_18, window_bounds = array<i64: 1, 8, 32>}]} {
    %c0 = arith.constant 0 : index
    %c0_0 = arith.constant 0 : index
    %c0_1 = arith.constant 0 : index
    %0 = vector.load %arg1[%c0, %c0_0, %c0_1] : memref<1x8x32xf32, #tpu.memory_space<vmem>>, vector<1x8x32xf32>
    %1 = vector.shape_cast %0 : vector<1x8x32xf32> to vector<8x32xf32>
    %c0_2 = arith.constant 0 : index
    %c0_3 = arith.constant 0 : index
    %c0_4 = arith.constant 0 : index
    %2 = vector.load %arg10[%c0_2, %c0_3, %c0_4] : memref<1x1x8xf32, #tpu.memory_space<vmem>>, vector<1x1x8xf32>
    %c0_5 = arith.constant 0 : index
    %c0_6 = arith.constant 0 : index
    %3 = vector.load %arg11[%c0_5, %c0_6] : memref<8x8xf32, #tpu.memory_space<vmem>>, vector<8x8xf32>
    %c0_7 = arith.constant 0 : index
    %c0_8 = arith.constant 0 : index
    %4 = vector.load %arg12[%c0_7, %c0_8] : memref<8x8xf32, #tpu.memory_space<vmem>>, vector<8x8xf32>
    %c0_9 = arith.constant 0 : index
    %c0_10 = arith.constant 0 : index
    %5 = vector.load %arg11[%c0_9, %c0_10] : memref<8x8xf32, #tpu.memory_space<vmem>>, vector<8x8xf32>
    %c0_11 = arith.constant 0 : index
    %c0_12 = arith.constant 0 : index
    %6 = vector.load %arg12[%c0_11, %c0_12] : memref<8x8xf32, #tpu.memory_space<vmem>>, vector<8x8xf32>
    %c0_13 = arith.constant 0 : index
    %c0_14 = arith.constant 0 : index
    %7 = vector.load %arg4[%c0_13, %c0_14] : memref<1x32xf32, #tpu.memory_space<vmem>>, vector<1x32xf32>
    %c0_15 = arith.constant 0 : index
    %c0_16 = arith.constant 0 : index
    %8 = vector.load %arg5[%c0_15, %c0_16] : memref<1x32xf32, #tpu.memory_space<vmem>>, vector<1x32xf32>
    %cst = arith.constant dense<0.000000e+00> : vector<8xf32>
    %9 = vector.multi_reduction <add>, %1, %cst [1] : vector<8x32xf32> to vector<8xf32>
    %10 = vector.shape_cast %9 : vector<8xf32> to vector<8x1xf32>
    %cst_17 = arith.constant 3.200000e+01 : f32
    %11 = vector.broadcast %cst_17 : f32 to vector<8x1xf32>
    %12 = arith.divf %10, %11 : vector<8x1xf32>
    %13 = vector.broadcast %12 : vector<8x1xf32> to vector<8x32xf32>
    %14 = arith.subf %1, %13 : vector<8x32xf32>
    %15 = arith.mulf %14, %14 : vector<8x32xf32>
    %cst_18 = arith.constant dense<0.000000e+00> : vector<8xf32>
    %16 = vector.multi_reduction <add>, %15, %cst_18 [1] : vector<8x32xf32> to vector<8xf32>
    %17 = vector.shape_cast %16 : vector<8xf32> to vector<8x1xf32>
    %cst_19 = arith.constant 3.200000e+01 : f32
    %18 = vector.broadcast %cst_19 : f32 to vector<8x1xf32>
    %19 = arith.divf %17, %18 : vector<8x1xf32>
    %20 = vector.broadcast %12 : vector<8x1xf32> to vector<8x32xf32>
    %21 = arith.subf %1, %20 : vector<8x32xf32>
    %cst_20 = arith.constant 9.99999974E-6 : f32
    %22 = vector.broadcast %cst_20 : f32 to vector<8x1xf32>
    %23 = arith.addf %19, %22 : vector<8x1xf32>
    %24 = math.rsqrt %23 : vector<8x1xf32>
    %25 = vector.broadcast %24 : vector<8x1xf32> to vector<8x32xf32>
    %26 = arith.mulf %21, %25 : vector<8x32xf32>
    %27 = vector.broadcast %7 : vector<1x32xf32> to vector<8x32xf32>
    %28 = arith.mulf %26, %27 : vector<8x32xf32>
    %29 = vector.broadcast %8 : vector<1x32xf32> to vector<8x32xf32>
    %30 = arith.addf %28, %29 : vector<8x32xf32>
    %c0_21 = arith.constant 0 : index
    %c0_22 = arith.constant 0 : index
    %31 = vector.load %arg6[%c0_21, %c0_22] : memref<32x96xbf16, #tpu.memory_space<vmem>>, vector<32x96xbf16>
    %c0_23 = arith.constant 0 : index
    %c0_24 = arith.constant 0 : index
    %32 = vector.load %arg7[%c0_23, %c0_24] : memref<1x96xf32, #tpu.memory_space<vmem>>, vector<1x96xf32>
    %33 = arith.truncf %30 : vector<8x32xf32> to vector<8x32xbf16>
    %cst_25 = arith.constant dense<0.000000e+00> : vector<8x96xf32>
    %34 = tpu.matmul %33, %31, %cst_25 {dimension_numbers = #tpu.dot_dimension_numbers<[1], [0], [0], [1], [0, 0, 1, 1], [], []>} : vector<8x32xbf16>, vector<32x96xbf16>, vector<8x96xf32> -> vector<8x96xf32>
    %35 = vector.broadcast %32 : vector<1x96xf32> to vector<8x96xf32>
    %36 = arith.addf %34, %35 : vector<8x96xf32>
    %37 = vector.extract_strided_slice %36 {offsets = [0, 0], sizes = [8, 32], strides = [1, 1]} : vector<8x96xf32> to vector<8x32xf32>
    %38 = vector.extract_strided_slice %36 {offsets = [0, 32], sizes = [8, 32], strides = [1, 1]} : vector<8x96xf32> to vector<8x32xf32>
    %39 = vector.extract_strided_slice %36 {offsets = [0, 64], sizes = [8, 32], strides = [1, 1]} : vector<8x96xf32> to vector<8x32xf32>
    %40 = vector.extract_strided_slice %37 {offsets = [0, 0], sizes = [8, 8], strides = [1, 1]} : vector<8x32xf32> to vector<8x8xf32>
    %41 = vector.extract_strided_slice %37 {offsets = [0, 8], sizes = [8, 8], strides = [1, 1]} : vector<8x32xf32> to vector<8x8xf32>
    %42 = vector.extract_strided_slice %37 {offsets = [0, 16], sizes = [8, 8], strides = [1, 1]} : vector<8x32xf32> to vector<8x8xf32>
    %43 = vector.extract_strided_slice %37 {offsets = [0, 24], sizes = [8, 8], strides = [1, 1]} : vector<8x32xf32> to vector<8x8xf32>
    %44 = vector.shape_cast %40 : vector<8x8xf32> to vector<1x8x8xf32>
    %45 = vector.shape_cast %41 : vector<8x8xf32> to vector<1x8x8xf32>
    %46 = vector.shape_cast %42 : vector<8x8xf32> to vector<1x8x8xf32>
    %47 = vector.shape_cast %43 : vector<8x8xf32> to vector<1x8x8xf32>
    %48 = tpu.concatenate %44, %45, %46, %47 in 0 : vector<1x8x8xf32>, vector<1x8x8xf32>, vector<1x8x8xf32>, vector<1x8x8xf32> -> vector<4x8x8xf32>
    %49 = vector.shape_cast %3 : vector<8x8xf32> to vector<1x8x8xf32>
    %50 = vector.broadcast %49 : vector<1x8x8xf32> to vector<4x8x8xf32>
    %51 = arith.mulf %48, %50 : vector<4x8x8xf32>
    %52 = vector.extract_strided_slice %48 {offsets = [0, 0, 4], sizes = [4, 8, 4], strides = [1, 1, 1]} : vector<4x8x8xf32> to vector<4x8x4xf32>
    %53 = vector.extract_strided_slice %48 {offsets = [0, 0, 0], sizes = [4, 8, 4], strides = [1, 1, 1]} : vector<4x8x8xf32> to vector<4x8x4xf32>
    %54 = tpu.concatenate %52, %53 in 2 : vector<4x8x4xf32>, vector<4x8x4xf32> -> vector<4x8x8xf32>
    %55 = vector.shape_cast %4 : vector<8x8xf32> to vector<1x8x8xf32>
    %56 = vector.broadcast %55 : vector<1x8x8xf32> to vector<4x8x8xf32>
    %57 = arith.mulf %54, %56 : vector<4x8x8xf32>
    %58 = arith.addf %51, %57 : vector<4x8x8xf32>
    %59 = vector.extract_strided_slice %38 {offsets = [0, 0], sizes = [8, 8], strides = [1, 1]} : vector<8x32xf32> to vector<8x8xf32>
    %60 = vector.extract_strided_slice %38 {offsets = [0, 8], sizes = [8, 8], strides = [1, 1]} : vector<8x32xf32> to vector<8x8xf32>
    %61 = vector.extract_strided_slice %38 {offsets = [0, 16], sizes = [8, 8], strides = [1, 1]} : vector<8x32xf32> to vector<8x8xf32>
    %62 = vector.extract_strided_slice %38 {offsets = [0, 24], sizes = [8, 8], strides = [1, 1]} : vector<8x32xf32> to vector<8x8xf32>
    %63 = vector.shape_cast %59 : vector<8x8xf32> to vector<1x8x8xf32>
    %64 = vector.shape_cast %60 : vector<8x8xf32> to vector<1x8x8xf32>
    %65 = vector.shape_cast %61 : vector<8x8xf32> to vector<1x8x8xf32>
    %66 = vector.shape_cast %62 : vector<8x8xf32> to vector<1x8x8xf32>
    %67 = tpu.concatenate %63, %64, %65, %66 in 0 : vector<1x8x8xf32>, vector<1x8x8xf32>, vector<1x8x8xf32>, vector<1x8x8xf32> -> vector<4x8x8xf32>
    %68 = vector.shape_cast %5 : vector<8x8xf32> to vector<1x8x8xf32>
    %69 = vector.broadcast %68 : vector<1x8x8xf32> to vector<4x8x8xf32>
    %70 = arith.mulf %67, %69 : vector<4x8x8xf32>
    %71 = vector.extract_strided_slice %67 {offsets = [0, 0, 4], sizes = [4, 8, 4], strides = [1, 1, 1]} : vector<4x8x8xf32> to vector<4x8x4xf32>
    %72 = vector.extract_strided_slice %67 {offsets = [0, 0, 0], sizes = [4, 8, 4], strides = [1, 1, 1]} : vector<4x8x8xf32> to vector<4x8x4xf32>
    %73 = tpu.concatenate %71, %72 in 2 : vector<4x8x4xf32>, vector<4x8x4xf32> -> vector<4x8x8xf32>
    %74 = vector.shape_cast %6 : vector<8x8xf32> to vector<1x8x8xf32>
    %75 = vector.broadcast %74 : vector<1x8x8xf32> to vector<4x8x8xf32>
    %76 = arith.mulf %73, %75 : vector<4x8x8xf32>
    %77 = arith.addf %70, %76 : vector<4x8x8xf32>
    %78 = vector.extract_strided_slice %39 {offsets = [0, 0], sizes = [8, 8], strides = [1, 1]} : vector<8x32xf32> to vector<8x8xf32>
    %79 = vector.extract_strided_slice %39 {offsets = [0, 8], sizes = [8, 8], strides = [1, 1]} : vector<8x32xf32> to vector<8x8xf32>
    %80 = vector.extract_strided_slice %39 {offsets = [0, 16], sizes = [8, 8], strides = [1, 1]} : vector<8x32xf32> to vector<8x8xf32>
    %81 = vector.extract_strided_slice %39 {offsets = [0, 24], sizes = [8, 8], strides = [1, 1]} : vector<8x32xf32> to vector<8x8xf32>
    %82 = vector.shape_cast %78 : vector<8x8xf32> to vector<1x8x8xf32>
    %83 = vector.shape_cast %79 : vector<8x8xf32> to vector<1x8x8xf32>
    %84 = vector.shape_cast %80 : vector<8x8xf32> to vector<1x8x8xf32>
    %85 = vector.shape_cast %81 : vector<8x8xf32> to vector<1x8x8xf32>
    %86 = tpu.concatenate %82, %83, %84, %85 in 0 : vector<1x8x8xf32>, vector<1x8x8xf32>, vector<1x8x8xf32>, vector<1x8x8xf32> -> vector<4x8x8xf32>
    %87 = arith.truncf %58 : vector<4x8x8xf32> to vector<4x8x8xbf16>
    %88 = arith.truncf %77 : vector<4x8x8xf32> to vector<4x8x8xbf16>
    "tpu.trace_start"() <{level = 10 : i32, message = "hqd,hkd->hqk"}> : () -> ()
    %cst_26 = arith.constant dense<0.000000e+00> : vector<4x8x8xf32>
    %89 = tpu.matmul %87, %88, %cst_26 {dimension_numbers = #tpu.dot_dimension_numbers<[2], [2], [1], [1], [0, 0, 0, 1, 1, 1], [0], [0]>} : vector<4x8x8xbf16>, vector<4x8x8xbf16>, vector<4x8x8xf32> -> vector<4x8x8xf32>
    "tpu.trace_stop"() : () -> ()
    %cst_27 = arith.constant 0.353553385 : f32
    %90 = vector.broadcast %cst_27 : f32 to vector<4x8x8xf32>
    %91 = arith.mulf %89, %90 : vector<4x8x8xf32>
    %92 = vector.broadcast %2 : vector<1x1x8xf32> to vector<4x8x8xf32>
    %93 = arith.addf %91, %92 : vector<4x8x8xf32>
    %cst_28 = arith.constant dense<0xFF800000> : vector<4x8xf32>
    %94 = vector.multi_reduction <maximumf>, %93, %cst_28 [2] : vector<4x8x8xf32> to vector<4x8xf32>
    %95 = vector.shape_cast %94 : vector<4x8xf32> to vector<4x8x1xf32>
    %96 = vector.broadcast %95 : vector<4x8x1xf32> to vector<4x8x8xf32>
    %97 = arith.subf %93, %96 : vector<4x8x8xf32>
    %98 = math.exp %97 : vector<4x8x8xf32>
    %cst_29 = arith.constant dense<0.000000e+00> : vector<4x8xf32>
    %99 = vector.multi_reduction <add>, %98, %cst_29 [2] : vector<4x8x8xf32> to vector<4x8xf32>
    %100 = vector.shape_cast %99 : vector<4x8xf32> to vector<4x8x1xf32>
    %101 = arith.truncf %98 : vector<4x8x8xf32> to vector<4x8x8xbf16>
    %102 = arith.truncf %86 : vector<4x8x8xf32> to vector<4x8x8xbf16>
    "tpu.trace_start"() <{level = 10 : i32, message = "hqk,hkd->hqd"}> : () -> ()
    %cst_30 = arith.constant dense<0.000000e+00> : vector<4x8x8xf32>
    %103 = tpu.matmul %101, %102, %cst_30 {dimension_numbers = #tpu.dot_dimension_numbers<[2], [1], [1], [2], [0, 0, 0, 1, 1, 2], [0], [0]>} : vector<4x8x8xbf16>, vector<4x8x8xbf16>, vector<4x8x8xf32> -> vector<4x8x8xf32>
    "tpu.trace_stop"() : () -> ()
    %104 = tpu.reciprocal %100 {approx = true} : vector<4x8x1xf32> -> vector<4x8x1xf32>
    %105 = vector.broadcast %104 : vector<4x8x1xf32> to vector<4x8x8xf32>
    %106 = arith.mulf %103, %105 : vector<4x8x8xf32>
    %107 = vector.extract_strided_slice %106 {offsets = [0, 0, 0], sizes = [1, 8, 8], strides = [1, 1, 1]} : vector<4x8x8xf32> to vector<1x8x8xf32>
    %108 = vector.shape_cast %107 : vector<1x8x8xf32> to vector<8x8xf32>
    %109 = vector.extract_strided_slice %106 {offsets = [1, 0, 0], sizes = [1, 8, 8], strides = [1, 1, 1]} : vector<4x8x8xf32> to vector<1x8x8xf32>
    %110 = vector.shape_cast %109 : vector<1x8x8xf32> to vector<8x8xf32>
    %111 = vector.extract_strided_slice %106 {offsets = [2, 0, 0], sizes = [1, 8, 8], strides = [1, 1, 1]} : vector<4x8x8xf32> to vector<1x8x8xf32>
    %112 = vector.shape_cast %111 : vector<1x8x8xf32> to vector<8x8xf32>
    %113 = vector.extract_strided_slice %106 {offsets = [3, 0, 0], sizes = [1, 8, 8], strides = [1, 1, 1]} : vector<4x8x8xf32> to vector<1x8x8xf32>
    %114 = vector.shape_cast %113 : vector<1x8x8xf32> to vector<8x8xf32>
    %115 = tpu.concatenate %108, %110, %112, %114 in 1 : vector<8x8xf32>, vector<8x8xf32>, vector<8x8xf32>, vector<8x8xf32> -> vector<8x32xf32>
    %c0_31 = arith.constant 0 : index
    %c0_32 = arith.constant 0 : index
    %116 = vector.load %arg8[%c0_31, %c0_32] : memref<32x32xbf16, #tpu.memory_space<vmem>>, vector<32x32xbf16>
    %117 = arith.truncf %115 : vector<8x32xf32> to vector<8x32xbf16>
    %cst_33 = arith.constant dense<0.000000e+00> : vector<8x32xf32>
    %118 = tpu.matmul %117, %116, %cst_33 {dimension_numbers = #tpu.dot_dimension_numbers<[1], [0], [0], [1], [0, 0, 1, 1], [], []>} : vector<8x32xbf16>, vector<32x32xbf16>, vector<8x32xf32> -> vector<8x32xf32>
    %c0_34 = arith.constant 0 : index
    %c0_35 = arith.constant 0 : index
    %119 = vector.load %arg9[%c0_34, %c0_35] : memref<1x32xf32, #tpu.memory_space<vmem>>, vector<1x32xf32>
    %120 = vector.broadcast %119 : vector<1x32xf32> to vector<8x32xf32>
    %121 = arith.addf %118, %120 : vector<8x32xf32>
    %122 = arith.addf %1, %121 : vector<8x32xf32>
    %c0_36 = arith.constant 0 : index
    %c0_37 = arith.constant 0 : index
    %123 = vector.load %arg13[%c0_36, %c0_37] : memref<1x32xf32, #tpu.memory_space<vmem>>, vector<1x32xf32>
    %c0_38 = arith.constant 0 : index
    %c0_39 = arith.constant 0 : index
    %124 = vector.load %arg14[%c0_38, %c0_39] : memref<1x32xf32, #tpu.memory_space<vmem>>, vector<1x32xf32>
    %cst_40 = arith.constant dense<0.000000e+00> : vector<8xf32>
    %125 = vector.multi_reduction <add>, %122, %cst_40 [1] : vector<8x32xf32> to vector<8xf32>
    %126 = vector.shape_cast %125 : vector<8xf32> to vector<8x1xf32>
    %cst_41 = arith.constant 3.200000e+01 : f32
    %127 = vector.broadcast %cst_41 : f32 to vector<8x1xf32>
    %128 = arith.divf %126, %127 : vector<8x1xf32>
    %129 = vector.broadcast %128 : vector<8x1xf32> to vector<8x32xf32>
    %130 = arith.subf %122, %129 : vector<8x32xf32>
    %131 = arith.mulf %130, %130 : vector<8x32xf32>
    %cst_42 = arith.constant dense<0.000000e+00> : vector<8xf32>
    %132 = vector.multi_reduction <add>, %131, %cst_42 [1] : vector<8x32xf32> to vector<8xf32>
    %133 = vector.shape_cast %132 : vector<8xf32> to vector<8x1xf32>
    %cst_43 = arith.constant 3.200000e+01 : f32
    %134 = vector.broadcast %cst_43 : f32 to vector<8x1xf32>
    %135 = arith.divf %133, %134 : vector<8x1xf32>
    %136 = vector.broadcast %128 : vector<8x1xf32> to vector<8x32xf32>
    %137 = arith.subf %122, %136 : vector<8x32xf32>
    %cst_44 = arith.constant 9.99999974E-6 : f32
    %138 = vector.broadcast %cst_44 : f32 to vector<8x1xf32>
    %139 = arith.addf %135, %138 : vector<8x1xf32>
    %140 = math.rsqrt %139 : vector<8x1xf32>
    %141 = vector.broadcast %140 : vector<8x1xf32> to vector<8x32xf32>
    %142 = arith.mulf %137, %141 : vector<8x32xf32>
    %143 = vector.broadcast %123 : vector<1x32xf32> to vector<8x32xf32>
    %144 = arith.mulf %142, %143 : vector<8x32xf32>
    %145 = vector.broadcast %124 : vector<1x32xf32> to vector<8x32xf32>
    %146 = arith.addf %144, %145 : vector<8x32xf32>
    %c0_45 = arith.constant 0 : index
    %c0_46 = arith.constant 0 : index
    %147 = vector.load %arg15[%c0_45, %c0_46] : memref<32x128xbf16, #tpu.memory_space<vmem>>, vector<32x128xbf16>
    %148 = arith.truncf %146 : vector<8x32xf32> to vector<8x32xbf16>
    %cst_47 = arith.constant dense<0.000000e+00> : vector<8x128xf32>
    %149 = tpu.matmul %148, %147, %cst_47 {dimension_numbers = #tpu.dot_dimension_numbers<[1], [0], [0], [1], [0, 0, 1, 1], [], []>} : vector<8x32xbf16>, vector<32x128xbf16>, vector<8x128xf32> -> vector<8x128xf32>
    %c0_48 = arith.constant 0 : index
    %c0_49 = arith.constant 0 : index
    %150 = vector.load %arg16[%c0_48, %c0_49] : memref<1x128xf32, #tpu.memory_space<vmem>>, vector<1x128xf32>
    %151 = vector.broadcast %150 : vector<1x128xf32> to vector<8x128xf32>
    %152 = arith.addf %149, %151 : vector<8x128xf32>
    %cst_50 = arith.constant 5.000000e-01 : f32
    %153 = vector.broadcast %cst_50 : f32 to vector<8x128xf32>
    %154 = arith.mulf %153, %152 : vector<8x128xf32>
    %cst_51 = arith.constant 4.471500e-02 : f32
    %155 = vector.broadcast %cst_51 : f32 to vector<8x128xf32>
    %156 = arith.mulf %155, %152 : vector<8x128xf32>
    %157 = arith.mulf %156, %152 : vector<8x128xf32>
    %158 = arith.mulf %157, %152 : vector<8x128xf32>
    %159 = arith.addf %152, %158 : vector<8x128xf32>
    %cst_52 = arith.constant 0.797884583 : f32
    %160 = vector.broadcast %cst_52 : f32 to vector<8x128xf32>
    %161 = arith.mulf %160, %159 : vector<8x128xf32>
    %162 = math.tanh %161 : vector<8x128xf32>
    %cst_53 = arith.constant 1.000000e+00 : f32
    %163 = vector.broadcast %cst_53 : f32 to vector<8x128xf32>
    %164 = arith.addf %163, %162 : vector<8x128xf32>
    %165 = arith.mulf %154, %164 : vector<8x128xf32>
    %c0_54 = arith.constant 0 : index
    %c0_55 = arith.constant 0 : index
    %166 = vector.load %arg17[%c0_54, %c0_55] : memref<128x32xbf16, #tpu.memory_space<vmem>>, vector<128x32xbf16>
    %167 = arith.truncf %165 : vector<8x128xf32> to vector<8x128xbf16>
    %cst_56 = arith.constant dense<0.000000e+00> : vector<8x32xf32>
    %168 = tpu.matmul %167, %166, %cst_56 {dimension_numbers = #tpu.dot_dimension_numbers<[1], [0], [0], [1], [0, 0, 1, 1], [], []>} : vector<8x128xbf16>, vector<128x32xbf16>, vector<8x32xf32> -> vector<8x32xf32>
    %c0_57 = arith.constant 0 : index
    %c0_58 = arith.constant 0 : index
    %169 = vector.load %arg18[%c0_57, %c0_58] : memref<1x32xf32, #tpu.memory_space<vmem>>, vector<1x32xf32>
    %170 = vector.broadcast %169 : vector<1x32xf32> to vector<8x32xf32>
    %171 = arith.addf %168, %170 : vector<8x32xf32>
    %172 = arith.addf %122, %171 : vector<8x32xf32>
    %c0_59 = arith.constant 0 : index
    %c0_60 = arith.constant 0 : index
    %c0_61 = arith.constant 0 : index
    %173 = vector.load %arg19[%c0_59, %c0_60, %c0_61] : memref<1x8x32xf32, #tpu.memory_space<vmem>>, vector<1x8x32xf32>
    %174 = vector.shape_cast %173 : vector<1x8x32xf32> to vector<8x32xf32>
    %175 = vector.shape_cast %172 : vector<8x32xf32> to vector<1x8x32xf32>
    tpu.vector_store %arg19[%c0_59, %c0_60, %c0_61], %175 {strides = array<i32>} : memref<1x8x32xf32, #tpu.memory_space<vmem>>, vector<1x8x32xf32>,
    return
  }
  func.func @transform_0(%arg0: i32) -> (i32, i32, i32) {
    %c0_i32 = arith.constant 0 : i32
    %c0_i32_0 = arith.constant 0 : i32
    %c0_i32_1 = arith.constant 0 : i32
    return %arg0, %c0_i32, %c0_i32_0 : i32, i32, i32
  }
  func.func @transform_1(%arg0: i32) -> (i32, i32) {
    %c0_i32 = arith.constant 0 : i32
    %c0_i32_0 = arith.constant 0 : i32
    %c0_i32_1 = arith.constant 0 : i32
    return %c0_i32, %c0_i32_0 : i32, i32
  }
  func.func @transform_2(%arg0: i32) -> (i32, i32) {
    %c0_i32 = arith.constant 0 : i32
    %c0_i32_0 = arith.constant 0 : i32
    %c0_i32_1 = arith.constant 0 : i32
    return %c0_i32, %c0_i32_0 : i32, i32
  }
  func.func @transform_3(%arg0: i32) -> (i32, i32) {
    %c0_i32 = arith.constant 0 : i32
    %c0_i32_0 = arith.constant 0 : i32
    %c0_i32_1 = arith.constant 0 : i32
    return %c0_i32, %c0_i32_0 : i32, i32
  }
  func.func @transform_4(%arg0: i32) -> (i32, i32) {
    %c0_i32 = arith.constant 0 : i32
    %c0_i32_0 = arith.constant 0 : i32
    %c0_i32_1 = arith.constant 0 : i32
    return %c0_i32, %c0_i32_0 : i32, i32
  }
  func.func @transform_5(%arg0: i32) -> (i32, i32) {
    %c0_i32 = arith.constant 0 : i32
    %c0_i32_0 = arith.constant 0 : i32
    %c0_i32_1 = arith.constant 0 : i32
    return %c0_i32, %c0_i32_0 : i32, i32
  }
  func.func @transform_6(%arg0: i32) -> (i32, i32) {
    %c0_i32 = arith.constant 0 : i32
    %c0_i32_0 = arith.constant 0 : i32
    %c0_i32_1 = arith.constant 0 : i32
    return %c0_i32, %c0_i32_0 : i32, i32
  }
  func.func @transform_7(%arg0: i32) -> (i32, i32) {
    %c0_i32 = arith.constant 0 : i32
    %c0_i32_0 = arith.constant 0 : i32
    %c0_i32_1 = arith.constant 0 : i32
    return %c0_i32, %c0_i32_0 : i32, i32
  }
  func.func @transform_8(%arg0: i32) -> (i32, i32) {
    %c0_i32 = arith.constant 0 : i32
    %c0_i32_0 = arith.constant 0 : i32
    %c0_i32_1 = arith.constant 0 : i32
    return %c0_i32, %c0_i32_0 : i32, i32
  }
  func.func @transform_9(%arg0: i32) -> (i32, i32, i32) {
    %c0_i32 = arith.constant 0 : i32
    %c0_i32_0 = arith.constant 0 : i32
    %c0_i32_1 = arith.constant 0 : i32
    return %arg0, %c0_i32, %c0_i32_0 : i32, i32, i32
  }
  func.func @transform_10(%arg0: i32) -> (i32, i32) {
    %c0_i32 = arith.constant 0 : i32
    %c0_i32_0 = arith.constant 0 : i32
    %c0_i32_1 = arith.constant 0 : i32
    return %c0_i32, %c0_i32_0 : i32, i32
  }
  func.func @transform_11(%arg0: i32) -> (i32, i32) {
    %c0_i32 = arith.constant 0 : i32
    %c0_i32_0 = arith.constant 0 : i32
    %c0_i32_1 = arith.constant 0 : i32
    return %c0_i32, %c0_i32_0 : i32, i32
  }
  func.func @transform_12(%arg0: i32) -> (i32, i32) {
    %c0_i32 = arith.constant 0 : i32
    %c0_i32_0 = arith.constant 0 : i32
    %c0_i32_1 = arith.constant 0 : i32
    return %c0_i32, %c0_i32_0 : i32, i32
  }
  func.func @transform_13(%arg0: i32) -> (i32, i32) {
    %c0_i32 = arith.constant 0 : i32
    %c0_i32_0 = arith.constant 0 : i32
    %c0_i32_1 = arith.constant 0 : i32
    return %c0_i32, %c0_i32_0 : i32, i32
  }
  func.func @transform_14(%arg0: i32) -> (i32, i32) {
    %c0_i32 = arith.constant 0 : i32
    %c0_i32_0 = arith.constant 0 : i32
    %c0_i32_1 = arith.constant 0 : i32
    return %c0_i32, %c0_i32_0 : i32, i32
  }
  func.func @transform_15(%arg0: i32) -> (i32, i32) {
    %c0_i32 = arith.constant 0 : i32
    %c0_i32_0 = arith.constant 0 : i32
    %c0_i32_1 = arith.constant 0 : i32
    return %c0_i32, %c0_i32_0 : i32, i32
  }
  func.func @transform_16(%arg0: i32) -> (i32, i32) {
    %c0_i32 = arith.constant 0 : i32
    %c0_i32_0 = arith.constant 0 : i32
    %c0_i32_1 = arith.constant 0 : i32
    return %c0_i32, %c0_i32_0 : i32, i32
  }
  func.func @transform_17(%arg0: i32) -> (i32, i32) {
    %c0_i32 = arith.constant 0 : i32
    %c0_i32_0 = arith.constant 0 : i32
    %c0_i32_1 = arith.constant 0 : i32
    return %c0_i32, %c0_i32_0 : i32, i32
  }
  func.func @transform_18(%arg0: i32) -> (i32, i32, i32) {
    %c0_i32 = arith.constant 0 : i32
    %c0_i32_0 = arith.constant 0 : i32
    %c0_i32_1 = arith.constant 0 : i32
    return %arg0, %c0_i32, %c0_i32_0 : i32, i32, i32
  }
}

module attributes {stable_mosaic.version = 11 : i64} {
  func.func @_dec_layer_kernel(%arg0: i32, %arg1: memref<1x8x32xf32, #tpu.memory_space<vmem>>, %arg2: memref<1x8x32xf32, #tpu.memory_space<vmem>>, %arg3: memref<1x32xf32, #tpu.memory_space<vmem>>, %arg4: memref<1x32xf32, #tpu.memory_space<vmem>>, %arg5: memref<32x96xbf16, #tpu.memory_space<vmem>>, %arg6: memref<1x96xf32, #tpu.memory_space<vmem>>, %arg7: memref<32x32xbf16, #tpu.memory_space<vmem>>, %arg8: memref<1x32xf32, #tpu.memory_space<vmem>>, %arg9: memref<1x1x8xf32, #tpu.memory_space<vmem>>, %arg10: memref<1x32xf32, #tpu.memory_space<vmem>>, %arg11: memref<1x32xf32, #tpu.memory_space<vmem>>, %arg12: memref<32x96xbf16, #tpu.memory_space<vmem>>, %arg13: memref<1x96xf32, #tpu.memory_space<vmem>>, %arg14: memref<32x32xbf16, #tpu.memory_space<vmem>>, %arg15: memref<1x32xf32, #tpu.memory_space<vmem>>, %arg16: memref<1x1x8xf32, #tpu.memory_space<vmem>>, %arg17: memref<8x8xf32, #tpu.memory_space<vmem>>, %arg18: memref<8x8xf32, #tpu.memory_space<vmem>>, %arg19: memref<8x8xf32, #tpu.memory_space<vmem>>, %arg20: memref<8x8xf32, #tpu.memory_space<vmem>>, %arg21: memref<1x32xf32, #tpu.memory_space<vmem>>, %arg22: memref<1x32xf32, #tpu.memory_space<vmem>>, %arg23: memref<32x128xbf16, #tpu.memory_space<vmem>>, %arg24: memref<1x128xf32, #tpu.memory_space<vmem>>, %arg25: memref<128x32xbf16, #tpu.memory_space<vmem>>, %arg26: memref<1x32xf32, #tpu.memory_space<vmem>>, %arg27: memref<1x8x32xf32, #tpu.memory_space<vmem>>) attributes {dimension_semantics = [#tpu.dimension_semantics<parallel>], iteration_bounds = array<i64: 2>, scalar_prefetch = 0 : i64, scratch_operands = 0 : i64, tpu.core_type = #tpu.core_type<tc>, window_params = [{transform_indices = @transform_0, window_bounds = array<i64: 1, 8, 32>}, {transform_indices = @transform_1, window_bounds = array<i64: 1, 8, 32>}, {pipeline_mode = #tpu.pipeline_mode<synchronous>, transform_indices = @transform_2, window_bounds = array<i64: 1, 32>}, {pipeline_mode = #tpu.pipeline_mode<synchronous>, transform_indices = @transform_3, window_bounds = array<i64: 1, 32>}, {pipeline_mode = #tpu.pipeline_mode<synchronous>, transform_indices = @transform_4, window_bounds = array<i64: 32, 96>}, {pipeline_mode = #tpu.pipeline_mode<synchronous>, transform_indices = @transform_5, window_bounds = array<i64: 1, 96>}, {pipeline_mode = #tpu.pipeline_mode<synchronous>, transform_indices = @transform_6, window_bounds = array<i64: 32, 32>}, {pipeline_mode = #tpu.pipeline_mode<synchronous>, transform_indices = @transform_7, window_bounds = array<i64: 1, 32>}, {transform_indices = @transform_8, window_bounds = array<i64: 1, 1, 8>}, {pipeline_mode = #tpu.pipeline_mode<synchronous>, transform_indices = @transform_9, window_bounds = array<i64: 1, 32>}, {pipeline_mode = #tpu.pipeline_mode<synchronous>, transform_indices = @transform_10, window_bounds = array<i64: 1, 32>}, {pipeline_mode = #tpu.pipeline_mode<synchronous>, transform_indices = @transform_11, window_bounds = array<i64: 32, 96>}, {pipeline_mode = #tpu.pipeline_mode<synchronous>, transform_indices = @transform_12, window_bounds = array<i64: 1, 96>}, {pipeline_mode = #tpu.pipeline_mode<synchronous>, transform_indices = @transform_13, window_bounds = array<i64: 32, 32>}, {pipeline_mode = #tpu.pipeline_mode<synchronous>, transform_indices = @transform_14, window_bounds = array<i64: 1, 32>}, {transform_indices = @transform_15, window_bounds = array<i64: 1, 1, 8>}, {pipeline_mode = #tpu.pipeline_mode<synchronous>, transform_indices = @transform_16, window_bounds = array<i64: 8, 8>}, {pipeline_mode = #tpu.pipeline_mode<synchronous>, transform_indices = @transform_17, window_bounds = array<i64: 8, 8>}, {pipeline_mode = #tpu.pipeline_mode<synchronous>, transform_indices = @transform_18, window_bounds = array<i64: 8, 8>}, {pipeline_mode = #tpu.pipeline_mode<synchronous>, transform_indices = @transform_19, window_bounds = array<i64: 8, 8>}, {pipeline_mode = #tpu.pipeline_mode<synchronous>, transform_indices = @transform_20, window_bounds = array<i64: 1, 32>}, {pipeline_mode = #tpu.pipeline_mode<synchronous>, transform_indices = @transform_21, window_bounds = array<i64: 1, 32>}, {pipeline_mode = #tpu.pipeline_mode<synchronous>, transform_indices = @transform_22, window_bounds = array<i64: 32, 128>}, {pipeline_mode = #tpu.pipeline_mode<synchronous>, transform_indices = @transform_23, window_bounds = array<i64: 1, 128>}, {pipeline_mode = #tpu.pipeline_mode<synchronous>, transform_indices = @transform_24, window_bounds = array<i64: 128, 32>}, {pipeline_mode = #tpu.pipeline_mode<synchronous>, transform_indices = @transform_25, window_bounds = array<i64: 1, 32>}, {transform_indices = @transform_26, window_bounds = array<i64: 1, 8, 32>}]} {
    %c0 = arith.constant 0 : index
    %c0_0 = arith.constant 0 : index
    %c0_1 = arith.constant 0 : index
    %0 = vector.load %arg1[%c0, %c0_0, %c0_1] : memref<1x8x32xf32, #tpu.memory_space<vmem>>, vector<1x8x32xf32>
    %1 = vector.shape_cast %0 : vector<1x8x32xf32> to vector<8x32xf32>
    %c0_2 = arith.constant 0 : index
    %c0_3 = arith.constant 0 : index
    %c0_4 = arith.constant 0 : index
    %2 = vector.load %arg2[%c0_2, %c0_3, %c0_4] : memref<1x8x32xf32, #tpu.memory_space<vmem>>, vector<1x8x32xf32>
    %3 = vector.shape_cast %2 : vector<1x8x32xf32> to vector<8x32xf32>
    %c0_5 = arith.constant 0 : index
    %c0_6 = arith.constant 0 : index
    %c0_7 = arith.constant 0 : index
    %4 = vector.load %arg9[%c0_5, %c0_6, %c0_7] : memref<1x1x8xf32, #tpu.memory_space<vmem>>, vector<1x1x8xf32>
    %c0_8 = arith.constant 0 : index
    %c0_9 = arith.constant 0 : index
    %5 = vector.load %arg17[%c0_8, %c0_9] : memref<8x8xf32, #tpu.memory_space<vmem>>, vector<8x8xf32>
    %c0_10 = arith.constant 0 : index
    %c0_11 = arith.constant 0 : index
    %6 = vector.load %arg18[%c0_10, %c0_11] : memref<8x8xf32, #tpu.memory_space<vmem>>, vector<8x8xf32>
    %c0_12 = arith.constant 0 : index
    %c0_13 = arith.constant 0 : index
    %7 = vector.load %arg17[%c0_12, %c0_13] : memref<8x8xf32, #tpu.memory_space<vmem>>, vector<8x8xf32>
    %c0_14 = arith.constant 0 : index
    %c0_15 = arith.constant 0 : index
    %8 = vector.load %arg18[%c0_14, %c0_15] : memref<8x8xf32, #tpu.memory_space<vmem>>, vector<8x8xf32>
    %c0_16 = arith.constant 0 : index
    %c0_17 = arith.constant 0 : index
    %9 = vector.load %arg3[%c0_16, %c0_17] : memref<1x32xf32, #tpu.memory_space<vmem>>, vector<1x32xf32>
    %c0_18 = arith.constant 0 : index
    %c0_19 = arith.constant 0 : index
    %10 = vector.load %arg4[%c0_18, %c0_19] : memref<1x32xf32, #tpu.memory_space<vmem>>, vector<1x32xf32>
    %cst = arith.constant dense<0.000000e+00> : vector<8xf32>
    %11 = vector.multi_reduction <add>, %1, %cst [1] : vector<8x32xf32> to vector<8xf32>
    %12 = vector.shape_cast %11 : vector<8xf32> to vector<8x1xf32>
    %cst_20 = arith.constant 3.200000e+01 : f32
    %13 = vector.broadcast %cst_20 : f32 to vector<8x1xf32>
    %14 = arith.divf %12, %13 : vector<8x1xf32>
    %15 = vector.broadcast %14 : vector<8x1xf32> to vector<8x32xf32>
    %16 = arith.subf %1, %15 : vector<8x32xf32>
    %17 = arith.mulf %16, %16 : vector<8x32xf32>
    %cst_21 = arith.constant dense<0.000000e+00> : vector<8xf32>
    %18 = vector.multi_reduction <add>, %17, %cst_21 [1] : vector<8x32xf32> to vector<8xf32>
    %19 = vector.shape_cast %18 : vector<8xf32> to vector<8x1xf32>
    %cst_22 = arith.constant 3.200000e+01 : f32
    %20 = vector.broadcast %cst_22 : f32 to vector<8x1xf32>
    %21 = arith.divf %19, %20 : vector<8x1xf32>
    %22 = vector.broadcast %14 : vector<8x1xf32> to vector<8x32xf32>
    %23 = arith.subf %1, %22 : vector<8x32xf32>
    %cst_23 = arith.constant 9.99999974E-6 : f32
    %24 = vector.broadcast %cst_23 : f32 to vector<8x1xf32>
    %25 = arith.addf %21, %24 : vector<8x1xf32>
    %26 = math.rsqrt %25 : vector<8x1xf32>
    %27 = vector.broadcast %26 : vector<8x1xf32> to vector<8x32xf32>
    %28 = arith.mulf %23, %27 : vector<8x32xf32>
    %29 = vector.broadcast %9 : vector<1x32xf32> to vector<8x32xf32>
    %30 = arith.mulf %28, %29 : vector<8x32xf32>
    %31 = vector.broadcast %10 : vector<1x32xf32> to vector<8x32xf32>
    %32 = arith.addf %30, %31 : vector<8x32xf32>
    %c0_24 = arith.constant 0 : index
    %c0_25 = arith.constant 0 : index
    %33 = vector.load %arg5[%c0_24, %c0_25] : memref<32x96xbf16, #tpu.memory_space<vmem>>, vector<32x96xbf16>
    %c0_26 = arith.constant 0 : index
    %c0_27 = arith.constant 0 : index
    %34 = vector.load %arg6[%c0_26, %c0_27] : memref<1x96xf32, #tpu.memory_space<vmem>>, vector<1x96xf32>
    %35 = arith.truncf %32 : vector<8x32xf32> to vector<8x32xbf16>
    %cst_28 = arith.constant dense<0.000000e+00> : vector<8x96xf32>
    %36 = tpu.matmul %35, %33, %cst_28 {dimension_numbers = #tpu.dot_dimension_numbers<[1], [0], [0], [1], [0, 0, 1, 1], [], []>} : vector<8x32xbf16>, vector<32x96xbf16>, vector<8x96xf32> -> vector<8x96xf32>
    %37 = vector.broadcast %34 : vector<1x96xf32> to vector<8x96xf32>
    %38 = arith.addf %36, %37 : vector<8x96xf32>
    %39 = vector.extract_strided_slice %38 {offsets = [0, 0], sizes = [8, 32], strides = [1, 1]} : vector<8x96xf32> to vector<8x32xf32>
    %40 = vector.extract_strided_slice %38 {offsets = [0, 32], sizes = [8, 32], strides = [1, 1]} : vector<8x96xf32> to vector<8x32xf32>
    %41 = vector.extract_strided_slice %38 {offsets = [0, 64], sizes = [8, 32], strides = [1, 1]} : vector<8x96xf32> to vector<8x32xf32>
    %42 = vector.extract_strided_slice %39 {offsets = [0, 0], sizes = [8, 8], strides = [1, 1]} : vector<8x32xf32> to vector<8x8xf32>
    %43 = vector.extract_strided_slice %39 {offsets = [0, 8], sizes = [8, 8], strides = [1, 1]} : vector<8x32xf32> to vector<8x8xf32>
    %44 = vector.extract_strided_slice %39 {offsets = [0, 16], sizes = [8, 8], strides = [1, 1]} : vector<8x32xf32> to vector<8x8xf32>
    %45 = vector.extract_strided_slice %39 {offsets = [0, 24], sizes = [8, 8], strides = [1, 1]} : vector<8x32xf32> to vector<8x8xf32>
    %46 = vector.shape_cast %42 : vector<8x8xf32> to vector<1x8x8xf32>
    %47 = vector.shape_cast %43 : vector<8x8xf32> to vector<1x8x8xf32>
    %48 = vector.shape_cast %44 : vector<8x8xf32> to vector<1x8x8xf32>
    %49 = vector.shape_cast %45 : vector<8x8xf32> to vector<1x8x8xf32>
    %50 = tpu.concatenate %46, %47, %48, %49 in 0 : vector<1x8x8xf32>, vector<1x8x8xf32>, vector<1x8x8xf32>, vector<1x8x8xf32> -> vector<4x8x8xf32>
    %51 = vector.shape_cast %5 : vector<8x8xf32> to vector<1x8x8xf32>
    %52 = vector.broadcast %51 : vector<1x8x8xf32> to vector<4x8x8xf32>
    %53 = arith.mulf %50, %52 : vector<4x8x8xf32>
    %54 = vector.extract_strided_slice %50 {offsets = [0, 0, 4], sizes = [4, 8, 4], strides = [1, 1, 1]} : vector<4x8x8xf32> to vector<4x8x4xf32>
    %55 = vector.extract_strided_slice %50 {offsets = [0, 0, 0], sizes = [4, 8, 4], strides = [1, 1, 1]} : vector<4x8x8xf32> to vector<4x8x4xf32>
    %56 = tpu.concatenate %54, %55 in 2 : vector<4x8x4xf32>, vector<4x8x4xf32> -> vector<4x8x8xf32>
    %57 = vector.shape_cast %6 : vector<8x8xf32> to vector<1x8x8xf32>
    %58 = vector.broadcast %57 : vector<1x8x8xf32> to vector<4x8x8xf32>
    %59 = arith.mulf %56, %58 : vector<4x8x8xf32>
    %60 = arith.addf %53, %59 : vector<4x8x8xf32>
    %61 = vector.extract_strided_slice %40 {offsets = [0, 0], sizes = [8, 8], strides = [1, 1]} : vector<8x32xf32> to vector<8x8xf32>
    %62 = vector.extract_strided_slice %40 {offsets = [0, 8], sizes = [8, 8], strides = [1, 1]} : vector<8x32xf32> to vector<8x8xf32>
    %63 = vector.extract_strided_slice %40 {offsets = [0, 16], sizes = [8, 8], strides = [1, 1]} : vector<8x32xf32> to vector<8x8xf32>
    %64 = vector.extract_strided_slice %40 {offsets = [0, 24], sizes = [8, 8], strides = [1, 1]} : vector<8x32xf32> to vector<8x8xf32>
    %65 = vector.shape_cast %61 : vector<8x8xf32> to vector<1x8x8xf32>
    %66 = vector.shape_cast %62 : vector<8x8xf32> to vector<1x8x8xf32>
    %67 = vector.shape_cast %63 : vector<8x8xf32> to vector<1x8x8xf32>
    %68 = vector.shape_cast %64 : vector<8x8xf32> to vector<1x8x8xf32>
    %69 = tpu.concatenate %65, %66, %67, %68 in 0 : vector<1x8x8xf32>, vector<1x8x8xf32>, vector<1x8x8xf32>, vector<1x8x8xf32> -> vector<4x8x8xf32>
    %70 = vector.shape_cast %7 : vector<8x8xf32> to vector<1x8x8xf32>
    %71 = vector.broadcast %70 : vector<1x8x8xf32> to vector<4x8x8xf32>
    %72 = arith.mulf %69, %71 : vector<4x8x8xf32>
    %73 = vector.extract_strided_slice %69 {offsets = [0, 0, 4], sizes = [4, 8, 4], strides = [1, 1, 1]} : vector<4x8x8xf32> to vector<4x8x4xf32>
    %74 = vector.extract_strided_slice %69 {offsets = [0, 0, 0], sizes = [4, 8, 4], strides = [1, 1, 1]} : vector<4x8x8xf32> to vector<4x8x4xf32>
    %75 = tpu.concatenate %73, %74 in 2 : vector<4x8x4xf32>, vector<4x8x4xf32> -> vector<4x8x8xf32>
    %76 = vector.shape_cast %8 : vector<8x8xf32> to vector<1x8x8xf32>
    %77 = vector.broadcast %76 : vector<1x8x8xf32> to vector<4x8x8xf32>
    %78 = arith.mulf %75, %77 : vector<4x8x8xf32>
    %79 = arith.addf %72, %78 : vector<4x8x8xf32>
    %80 = vector.extract_strided_slice %41 {offsets = [0, 0], sizes = [8, 8], strides = [1, 1]} : vector<8x32xf32> to vector<8x8xf32>
    %81 = vector.extract_strided_slice %41 {offsets = [0, 8], sizes = [8, 8], strides = [1, 1]} : vector<8x32xf32> to vector<8x8xf32>
    %82 = vector.extract_strided_slice %41 {offsets = [0, 16], sizes = [8, 8], strides = [1, 1]} : vector<8x32xf32> to vector<8x8xf32>
    %83 = vector.extract_strided_slice %41 {offsets = [0, 24], sizes = [8, 8], strides = [1, 1]} : vector<8x32xf32> to vector<8x8xf32>
    %84 = vector.shape_cast %80 : vector<8x8xf32> to vector<1x8x8xf32>
    %85 = vector.shape_cast %81 : vector<8x8xf32> to vector<1x8x8xf32>
    %86 = vector.shape_cast %82 : vector<8x8xf32> to vector<1x8x8xf32>
    %87 = vector.shape_cast %83 : vector<8x8xf32> to vector<1x8x8xf32>
    %88 = tpu.concatenate %84, %85, %86, %87 in 0 : vector<1x8x8xf32>, vector<1x8x8xf32>, vector<1x8x8xf32>, vector<1x8x8xf32> -> vector<4x8x8xf32>
    %89 = arith.truncf %60 : vector<4x8x8xf32> to vector<4x8x8xbf16>
    %90 = arith.truncf %79 : vector<4x8x8xf32> to vector<4x8x8xbf16>
    "tpu.trace_start"() <{level = 10 : i32, message = "hqd,hkd->hqk"}> : () -> ()
    %cst_29 = arith.constant dense<0.000000e+00> : vector<4x8x8xf32>
    %91 = tpu.matmul %89, %90, %cst_29 {dimension_numbers = #tpu.dot_dimension_numbers<[2], [2], [1], [1], [0, 0, 0, 1, 1, 1], [0], [0]>} : vector<4x8x8xbf16>, vector<4x8x8xbf16>, vector<4x8x8xf32> -> vector<4x8x8xf32>
    "tpu.trace_stop"() : () -> ()
    %cst_30 = arith.constant 0.353553385 : f32
    %92 = vector.broadcast %cst_30 : f32 to vector<4x8x8xf32>
    %93 = arith.mulf %91, %92 : vector<4x8x8xf32>
    %94 = vector.broadcast %4 : vector<1x1x8xf32> to vector<4x8x8xf32>
    %95 = arith.addf %93, %94 : vector<4x8x8xf32>
    %cst_31 = arith.constant dense<0xFF800000> : vector<4x8xf32>
    %96 = vector.multi_reduction <maximumf>, %95, %cst_31 [2] : vector<4x8x8xf32> to vector<4x8xf32>
    %97 = vector.shape_cast %96 : vector<4x8xf32> to vector<4x8x1xf32>
    %98 = vector.broadcast %97 : vector<4x8x1xf32> to vector<4x8x8xf32>
    %99 = arith.subf %95, %98 : vector<4x8x8xf32>
    %100 = math.exp %99 : vector<4x8x8xf32>
    %cst_32 = arith.constant dense<0.000000e+00> : vector<4x8xf32>
    %101 = vector.multi_reduction <add>, %100, %cst_32 [2] : vector<4x8x8xf32> to vector<4x8xf32>
    %102 = vector.shape_cast %101 : vector<4x8xf32> to vector<4x8x1xf32>
    %103 = arith.truncf %100 : vector<4x8x8xf32> to vector<4x8x8xbf16>
    %104 = arith.truncf %88 : vector<4x8x8xf32> to vector<4x8x8xbf16>
    "tpu.trace_start"() <{level = 10 : i32, message = "hqk,hkd->hqd"}> : () -> ()
    %cst_33 = arith.constant dense<0.000000e+00> : vector<4x8x8xf32>
    %105 = tpu.matmul %103, %104, %cst_33 {dimension_numbers = #tpu.dot_dimension_numbers<[2], [1], [1], [2], [0, 0, 0, 1, 1, 2], [0], [0]>} : vector<4x8x8xbf16>, vector<4x8x8xbf16>, vector<4x8x8xf32> -> vector<4x8x8xf32>
    "tpu.trace_stop"() : () -> ()
    %106 = tpu.reciprocal %102 {approx = true} : vector<4x8x1xf32> -> vector<4x8x1xf32>
    %107 = vector.broadcast %106 : vector<4x8x1xf32> to vector<4x8x8xf32>
    %108 = arith.mulf %105, %107 : vector<4x8x8xf32>
    %109 = vector.extract_strided_slice %108 {offsets = [0, 0, 0], sizes = [1, 8, 8], strides = [1, 1, 1]} : vector<4x8x8xf32> to vector<1x8x8xf32>
    %110 = vector.shape_cast %109 : vector<1x8x8xf32> to vector<8x8xf32>
    %111 = vector.extract_strided_slice %108 {offsets = [1, 0, 0], sizes = [1, 8, 8], strides = [1, 1, 1]} : vector<4x8x8xf32> to vector<1x8x8xf32>
    %112 = vector.shape_cast %111 : vector<1x8x8xf32> to vector<8x8xf32>
    %113 = vector.extract_strided_slice %108 {offsets = [2, 0, 0], sizes = [1, 8, 8], strides = [1, 1, 1]} : vector<4x8x8xf32> to vector<1x8x8xf32>
    %114 = vector.shape_cast %113 : vector<1x8x8xf32> to vector<8x8xf32>
    %115 = vector.extract_strided_slice %108 {offsets = [3, 0, 0], sizes = [1, 8, 8], strides = [1, 1, 1]} : vector<4x8x8xf32> to vector<1x8x8xf32>
    %116 = vector.shape_cast %115 : vector<1x8x8xf32> to vector<8x8xf32>
    %117 = tpu.concatenate %110, %112, %114, %116 in 1 : vector<8x8xf32>, vector<8x8xf32>, vector<8x8xf32>, vector<8x8xf32> -> vector<8x32xf32>
    %c0_34 = arith.constant 0 : index
    %c0_35 = arith.constant 0 : index
    %118 = vector.load %arg7[%c0_34, %c0_35] : memref<32x32xbf16, #tpu.memory_space<vmem>>, vector<32x32xbf16>
    %119 = arith.truncf %117 : vector<8x32xf32> to vector<8x32xbf16>
    %cst_36 = arith.constant dense<0.000000e+00> : vector<8x32xf32>
    %120 = tpu.matmul %119, %118, %cst_36 {dimension_numbers = #tpu.dot_dimension_numbers<[1], [0], [0], [1], [0, 0, 1, 1], [], []>} : vector<8x32xbf16>, vector<32x32xbf16>, vector<8x32xf32> -> vector<8x32xf32>
    %c0_37 = arith.constant 0 : index
    %c0_38 = arith.constant 0 : index
    %121 = vector.load %arg8[%c0_37, %c0_38] : memref<1x32xf32, #tpu.memory_space<vmem>>, vector<1x32xf32>
    %122 = vector.broadcast %121 : vector<1x32xf32> to vector<8x32xf32>
    %123 = arith.addf %120, %122 : vector<8x32xf32>
    %124 = arith.addf %1, %123 : vector<8x32xf32>
    %c0_39 = arith.constant 0 : index
    %c0_40 = arith.constant 0 : index
    %c0_41 = arith.constant 0 : index
    %125 = vector.load %arg16[%c0_39, %c0_40, %c0_41] : memref<1x1x8xf32, #tpu.memory_space<vmem>>, vector<1x1x8xf32>
    %c0_42 = arith.constant 0 : index
    %c0_43 = arith.constant 0 : index
    %126 = vector.load %arg17[%c0_42, %c0_43] : memref<8x8xf32, #tpu.memory_space<vmem>>, vector<8x8xf32>
    %c0_44 = arith.constant 0 : index
    %c0_45 = arith.constant 0 : index
    %127 = vector.load %arg18[%c0_44, %c0_45] : memref<8x8xf32, #tpu.memory_space<vmem>>, vector<8x8xf32>
    %c0_46 = arith.constant 0 : index
    %c0_47 = arith.constant 0 : index
    %128 = vector.load %arg19[%c0_46, %c0_47] : memref<8x8xf32, #tpu.memory_space<vmem>>, vector<8x8xf32>
    %c0_48 = arith.constant 0 : index
    %c0_49 = arith.constant 0 : index
    %129 = vector.load %arg20[%c0_48, %c0_49] : memref<8x8xf32, #tpu.memory_space<vmem>>, vector<8x8xf32>
    %c0_50 = arith.constant 0 : index
    %c0_51 = arith.constant 0 : index
    %130 = vector.load %arg10[%c0_50, %c0_51] : memref<1x32xf32, #tpu.memory_space<vmem>>, vector<1x32xf32>
    %c0_52 = arith.constant 0 : index
    %c0_53 = arith.constant 0 : index
    %131 = vector.load %arg11[%c0_52, %c0_53] : memref<1x32xf32, #tpu.memory_space<vmem>>, vector<1x32xf32>
    %cst_54 = arith.constant dense<0.000000e+00> : vector<8xf32>
    %132 = vector.multi_reduction <add>, %124, %cst_54 [1] : vector<8x32xf32> to vector<8xf32>
    %133 = vector.shape_cast %132 : vector<8xf32> to vector<8x1xf32>
    %cst_55 = arith.constant 3.200000e+01 : f32
    %134 = vector.broadcast %cst_55 : f32 to vector<8x1xf32>
    %135 = arith.divf %133, %134 : vector<8x1xf32>
    %136 = vector.broadcast %135 : vector<8x1xf32> to vector<8x32xf32>
    %137 = arith.subf %124, %136 : vector<8x32xf32>
    %138 = arith.mulf %137, %137 : vector<8x32xf32>
    %cst_56 = arith.constant dense<0.000000e+00> : vector<8xf32>
    %139 = vector.multi_reduction <add>, %138, %cst_56 [1] : vector<8x32xf32> to vector<8xf32>
    %140 = vector.shape_cast %139 : vector<8xf32> to vector<8x1xf32>
    %cst_57 = arith.constant 3.200000e+01 : f32
    %141 = vector.broadcast %cst_57 : f32 to vector<8x1xf32>
    %142 = arith.divf %140, %141 : vector<8x1xf32>
    %143 = vector.broadcast %135 : vector<8x1xf32> to vector<8x32xf32>
    %144 = arith.subf %124, %143 : vector<8x32xf32>
    %cst_58 = arith.constant 9.99999974E-6 : f32
    %145 = vector.broadcast %cst_58 : f32 to vector<8x1xf32>
    %146 = arith.addf %142, %145 : vector<8x1xf32>
    %147 = math.rsqrt %146 : vector<8x1xf32>
    %148 = vector.broadcast %147 : vector<8x1xf32> to vector<8x32xf32>
    %149 = arith.mulf %144, %148 : vector<8x32xf32>
    %150 = vector.broadcast %130 : vector<1x32xf32> to vector<8x32xf32>
    %151 = arith.mulf %149, %150 : vector<8x32xf32>
    %152 = vector.broadcast %131 : vector<1x32xf32> to vector<8x32xf32>
    %153 = arith.addf %151, %152 : vector<8x32xf32>
    %c0_59 = arith.constant 0 : index
    %c0_60 = arith.constant 0 : index
    %154 = vector.load %arg12[%c0_59, %c0_60] : memref<32x96xbf16, #tpu.memory_space<vmem>>, vector<32x96xbf16>
    %c0_61 = arith.constant 0 : index
    %c0_62 = arith.constant 0 : index
    %155 = vector.load %arg13[%c0_61, %c0_62] : memref<1x96xf32, #tpu.memory_space<vmem>>, vector<1x96xf32>
    %156 = vector.extract_strided_slice %154 {offsets = [0, 0], sizes = [32, 32], strides = [1, 1]} : vector<32x96xbf16> to vector<32x32xbf16>
    %157 = arith.truncf %153 : vector<8x32xf32> to vector<8x32xbf16>
    %cst_63 = arith.constant dense<0.000000e+00> : vector<8x32xf32>
    %158 = tpu.matmul %157, %156, %cst_63 {dimension_numbers = #tpu.dot_dimension_numbers<[1], [0], [0], [1], [0, 0, 1, 1], [], []>} : vector<8x32xbf16>, vector<32x32xbf16>, vector<8x32xf32> -> vector<8x32xf32>
    %159 = vector.extract_strided_slice %155 {offsets = [0, 0], sizes = [1, 32], strides = [1, 1]} : vector<1x96xf32> to vector<1x32xf32>
    %160 = vector.broadcast %159 : vector<1x32xf32> to vector<8x32xf32>
    %161 = arith.addf %158, %160 : vector<8x32xf32>
    %162 = vector.extract_strided_slice %154 {offsets = [0, 32], sizes = [32, 64], strides = [1, 1]} : vector<32x96xbf16> to vector<32x64xbf16>
    %163 = arith.truncf %3 : vector<8x32xf32> to vector<8x32xbf16>
    %cst_64 = arith.constant dense<0.000000e+00> : vector<8x64xf32>
    %164 = tpu.matmul %163, %162, %cst_64 {dimension_numbers = #tpu.dot_dimension_numbers<[1], [0], [0], [1], [0, 0, 1, 1], [], []>} : vector<8x32xbf16>, vector<32x64xbf16>, vector<8x64xf32> -> vector<8x64xf32>
    %165 = vector.extract_strided_slice %155 {offsets = [0, 32], sizes = [1, 64], strides = [1, 1]} : vector<1x96xf32> to vector<1x64xf32>
    %166 = vector.broadcast %165 : vector<1x64xf32> to vector<8x64xf32>
    %167 = arith.addf %164, %166 : vector<8x64xf32>
    %168 = vector.extract_strided_slice %167 {offsets = [0, 0], sizes = [8, 32], strides = [1, 1]} : vector<8x64xf32> to vector<8x32xf32>
    %169 = vector.extract_strided_slice %167 {offsets = [0, 32], sizes = [8, 32], strides = [1, 1]} : vector<8x64xf32> to vector<8x32xf32>
    %170 = vector.extract_strided_slice %161 {offsets = [0, 0], sizes = [8, 8], strides = [1, 1]} : vector<8x32xf32> to vector<8x8xf32>
    %171 = vector.extract_strided_slice %161 {offsets = [0, 8], sizes = [8, 8], strides = [1, 1]} : vector<8x32xf32> to vector<8x8xf32>
    %172 = vector.extract_strided_slice %161 {offsets = [0, 16], sizes = [8, 8], strides = [1, 1]} : vector<8x32xf32> to vector<8x8xf32>
    %173 = vector.extract_strided_slice %161 {offsets = [0, 24], sizes = [8, 8], strides = [1, 1]} : vector<8x32xf32> to vector<8x8xf32>
    %174 = vector.shape_cast %170 : vector<8x8xf32> to vector<1x8x8xf32>
    %175 = vector.shape_cast %171 : vector<8x8xf32> to vector<1x8x8xf32>
    %176 = vector.shape_cast %172 : vector<8x8xf32> to vector<1x8x8xf32>
    %177 = vector.shape_cast %173 : vector<8x8xf32> to vector<1x8x8xf32>
    %178 = tpu.concatenate %174, %175, %176, %177 in 0 : vector<1x8x8xf32>, vector<1x8x8xf32>, vector<1x8x8xf32>, vector<1x8x8xf32> -> vector<4x8x8xf32>
    %179 = vector.shape_cast %126 : vector<8x8xf32> to vector<1x8x8xf32>
    %180 = vector.broadcast %179 : vector<1x8x8xf32> to vector<4x8x8xf32>
    %181 = arith.mulf %178, %180 : vector<4x8x8xf32>
    %182 = vector.extract_strided_slice %178 {offsets = [0, 0, 4], sizes = [4, 8, 4], strides = [1, 1, 1]} : vector<4x8x8xf32> to vector<4x8x4xf32>
    %183 = vector.extract_strided_slice %178 {offsets = [0, 0, 0], sizes = [4, 8, 4], strides = [1, 1, 1]} : vector<4x8x8xf32> to vector<4x8x4xf32>
    %184 = tpu.concatenate %182, %183 in 2 : vector<4x8x4xf32>, vector<4x8x4xf32> -> vector<4x8x8xf32>
    %185 = vector.shape_cast %127 : vector<8x8xf32> to vector<1x8x8xf32>
    %186 = vector.broadcast %185 : vector<1x8x8xf32> to vector<4x8x8xf32>
    %187 = arith.mulf %184, %186 : vector<4x8x8xf32>
    %188 = arith.addf %181, %187 : vector<4x8x8xf32>
    %189 = vector.extract_strided_slice %168 {offsets = [0, 0], sizes = [8, 8], strides = [1, 1]} : vector<8x32xf32> to vector<8x8xf32>
    %190 = vector.extract_strided_slice %168 {offsets = [0, 8], sizes = [8, 8], strides = [1, 1]} : vector<8x32xf32> to vector<8x8xf32>
    %191 = vector.extract_strided_slice %168 {offsets = [0, 16], sizes = [8, 8], strides = [1, 1]} : vector<8x32xf32> to vector<8x8xf32>
    %192 = vector.extract_strided_slice %168 {offsets = [0, 24], sizes = [8, 8], strides = [1, 1]} : vector<8x32xf32> to vector<8x8xf32>
    %193 = vector.shape_cast %189 : vector<8x8xf32> to vector<1x8x8xf32>
    %194 = vector.shape_cast %190 : vector<8x8xf32> to vector<1x8x8xf32>
    %195 = vector.shape_cast %191 : vector<8x8xf32> to vector<1x8x8xf32>
    %196 = vector.shape_cast %192 : vector<8x8xf32> to vector<1x8x8xf32>
    %197 = tpu.concatenate %193, %194, %195, %196 in 0 : vector<1x8x8xf32>, vector<1x8x8xf32>, vector<1x8x8xf32>, vector<1x8x8xf32> -> vector<4x8x8xf32>
    %198 = vector.shape_cast %128 : vector<8x8xf32> to vector<1x8x8xf32>
    %199 = vector.broadcast %198 : vector<1x8x8xf32> to vector<4x8x8xf32>
    %200 = arith.mulf %197, %199 : vector<4x8x8xf32>
    %201 = vector.extract_strided_slice %197 {offsets = [0, 0, 4], sizes = [4, 8, 4], strides = [1, 1, 1]} : vector<4x8x8xf32> to vector<4x8x4xf32>
    %202 = vector.extract_strided_slice %197 {offsets = [0, 0, 0], sizes = [4, 8, 4], strides = [1, 1, 1]} : vector<4x8x8xf32> to vector<4x8x4xf32>
    %203 = tpu.concatenate %201, %202 in 2 : vector<4x8x4xf32>, vector<4x8x4xf32> -> vector<4x8x8xf32>
    %204 = vector.shape_cast %129 : vector<8x8xf32> to vector<1x8x8xf32>
    %205 = vector.broadcast %204 : vector<1x8x8xf32> to vector<4x8x8xf32>
    %206 = arith.mulf %203, %205 : vector<4x8x8xf32>
    %207 = arith.addf %200, %206 : vector<4x8x8xf32>
    %208 = vector.extract_strided_slice %169 {offsets = [0, 0], sizes = [8, 8], strides = [1, 1]} : vector<8x32xf32> to vector<8x8xf32>
    %209 = vector.extract_strided_slice %169 {offsets = [0, 8], sizes = [8, 8], strides = [1, 1]} : vector<8x32xf32> to vector<8x8xf32>
    %210 = vector.extract_strided_slice %169 {offsets = [0, 16], sizes = [8, 8], strides = [1, 1]} : vector<8x32xf32> to vector<8x8xf32>
    %211 = vector.extract_strided_slice %169 {offsets = [0, 24], sizes = [8, 8], strides = [1, 1]} : vector<8x32xf32> to vector<8x8xf32>
    %212 = vector.shape_cast %208 : vector<8x8xf32> to vector<1x8x8xf32>
    %213 = vector.shape_cast %209 : vector<8x8xf32> to vector<1x8x8xf32>
    %214 = vector.shape_cast %210 : vector<8x8xf32> to vector<1x8x8xf32>
    %215 = vector.shape_cast %211 : vector<8x8xf32> to vector<1x8x8xf32>
    %216 = tpu.concatenate %212, %213, %214, %215 in 0 : vector<1x8x8xf32>, vector<1x8x8xf32>, vector<1x8x8xf32>, vector<1x8x8xf32> -> vector<4x8x8xf32>
    %217 = arith.truncf %188 : vector<4x8x8xf32> to vector<4x8x8xbf16>
    %218 = arith.truncf %207 : vector<4x8x8xf32> to vector<4x8x8xbf16>
    "tpu.trace_start"() <{level = 10 : i32, message = "hqd,hkd->hqk"}> : () -> ()
    %cst_65 = arith.constant dense<0.000000e+00> : vector<4x8x8xf32>
    %219 = tpu.matmul %217, %218, %cst_65 {dimension_numbers = #tpu.dot_dimension_numbers<[2], [2], [1], [1], [0, 0, 0, 1, 1, 1], [0], [0]>} : vector<4x8x8xbf16>, vector<4x8x8xbf16>, vector<4x8x8xf32> -> vector<4x8x8xf32>
    "tpu.trace_stop"() : () -> ()
    %cst_66 = arith.constant 0.353553385 : f32
    %220 = vector.broadcast %cst_66 : f32 to vector<4x8x8xf32>
    %221 = arith.mulf %219, %220 : vector<4x8x8xf32>
    %222 = vector.broadcast %125 : vector<1x1x8xf32> to vector<4x8x8xf32>
    %223 = arith.addf %221, %222 : vector<4x8x8xf32>
    %cst_67 = arith.constant dense<0xFF800000> : vector<4x8xf32>
    %224 = vector.multi_reduction <maximumf>, %223, %cst_67 [2] : vector<4x8x8xf32> to vector<4x8xf32>
    %225 = vector.shape_cast %224 : vector<4x8xf32> to vector<4x8x1xf32>
    %226 = vector.broadcast %225 : vector<4x8x1xf32> to vector<4x8x8xf32>
    %227 = arith.subf %223, %226 : vector<4x8x8xf32>
    %228 = math.exp %227 : vector<4x8x8xf32>
    %cst_68 = arith.constant dense<0.000000e+00> : vector<4x8xf32>
    %229 = vector.multi_reduction <add>, %228, %cst_68 [2] : vector<4x8x8xf32> to vector<4x8xf32>
    %230 = vector.shape_cast %229 : vector<4x8xf32> to vector<4x8x1xf32>
    %231 = arith.truncf %228 : vector<4x8x8xf32> to vector<4x8x8xbf16>
    %232 = arith.truncf %216 : vector<4x8x8xf32> to vector<4x8x8xbf16>
    "tpu.trace_start"() <{level = 10 : i32, message = "hqk,hkd->hqd"}> : () -> ()
    %cst_69 = arith.constant dense<0.000000e+00> : vector<4x8x8xf32>
    %233 = tpu.matmul %231, %232, %cst_69 {dimension_numbers = #tpu.dot_dimension_numbers<[2], [1], [1], [2], [0, 0, 0, 1, 1, 2], [0], [0]>} : vector<4x8x8xbf16>, vector<4x8x8xbf16>, vector<4x8x8xf32> -> vector<4x8x8xf32>
    "tpu.trace_stop"() : () -> ()
    %234 = tpu.reciprocal %230 {approx = true} : vector<4x8x1xf32> -> vector<4x8x1xf32>
    %235 = vector.broadcast %234 : vector<4x8x1xf32> to vector<4x8x8xf32>
    %236 = arith.mulf %233, %235 : vector<4x8x8xf32>
    %237 = vector.extract_strided_slice %236 {offsets = [0, 0, 0], sizes = [1, 8, 8], strides = [1, 1, 1]} : vector<4x8x8xf32> to vector<1x8x8xf32>
    %238 = vector.shape_cast %237 : vector<1x8x8xf32> to vector<8x8xf32>
    %239 = vector.extract_strided_slice %236 {offsets = [1, 0, 0], sizes = [1, 8, 8], strides = [1, 1, 1]} : vector<4x8x8xf32> to vector<1x8x8xf32>
    %240 = vector.shape_cast %239 : vector<1x8x8xf32> to vector<8x8xf32>
    %241 = vector.extract_strided_slice %236 {offsets = [2, 0, 0], sizes = [1, 8, 8], strides = [1, 1, 1]} : vector<4x8x8xf32> to vector<1x8x8xf32>
    %242 = vector.shape_cast %241 : vector<1x8x8xf32> to vector<8x8xf32>
    %243 = vector.extract_strided_slice %236 {offsets = [3, 0, 0], sizes = [1, 8, 8], strides = [1, 1, 1]} : vector<4x8x8xf32> to vector<1x8x8xf32>
    %244 = vector.shape_cast %243 : vector<1x8x8xf32> to vector<8x8xf32>
    %245 = tpu.concatenate %238, %240, %242, %244 in 1 : vector<8x8xf32>, vector<8x8xf32>, vector<8x8xf32>, vector<8x8xf32> -> vector<8x32xf32>
    %c0_70 = arith.constant 0 : index
    %c0_71 = arith.constant 0 : index
    %246 = vector.load %arg14[%c0_70, %c0_71] : memref<32x32xbf16, #tpu.memory_space<vmem>>, vector<32x32xbf16>
    %247 = arith.truncf %245 : vector<8x32xf32> to vector<8x32xbf16>
    %cst_72 = arith.constant dense<0.000000e+00> : vector<8x32xf32>
    %248 = tpu.matmul %247, %246, %cst_72 {dimension_numbers = #tpu.dot_dimension_numbers<[1], [0], [0], [1], [0, 0, 1, 1], [], []>} : vector<8x32xbf16>, vector<32x32xbf16>, vector<8x32xf32> -> vector<8x32xf32>
    %c0_73 = arith.constant 0 : index
    %c0_74 = arith.constant 0 : index
    %249 = vector.load %arg15[%c0_73, %c0_74] : memref<1x32xf32, #tpu.memory_space<vmem>>, vector<1x32xf32>
    %250 = vector.broadcast %249 : vector<1x32xf32> to vector<8x32xf32>
    %251 = arith.addf %248, %250 : vector<8x32xf32>
    %252 = arith.addf %124, %251 : vector<8x32xf32>
    %c0_75 = arith.constant 0 : index
    %c0_76 = arith.constant 0 : index
    %253 = vector.load %arg21[%c0_75, %c0_76] : memref<1x32xf32, #tpu.memory_space<vmem>>, vector<1x32xf32>
    %c0_77 = arith.constant 0 : index
    %c0_78 = arith.constant 0 : index
    %254 = vector.load %arg22[%c0_77, %c0_78] : memref<1x32xf32, #tpu.memory_space<vmem>>, vector<1x32xf32>
    %cst_79 = arith.constant dense<0.000000e+00> : vector<8xf32>
    %255 = vector.multi_reduction <add>, %252, %cst_79 [1] : vector<8x32xf32> to vector<8xf32>
    %256 = vector.shape_cast %255 : vector<8xf32> to vector<8x1xf32>
    %cst_80 = arith.constant 3.200000e+01 : f32
    %257 = vector.broadcast %cst_80 : f32 to vector<8x1xf32>
    %258 = arith.divf %256, %257 : vector<8x1xf32>
    %259 = vector.broadcast %258 : vector<8x1xf32> to vector<8x32xf32>
    %260 = arith.subf %252, %259 : vector<8x32xf32>
    %261 = arith.mulf %260, %260 : vector<8x32xf32>
    %cst_81 = arith.constant dense<0.000000e+00> : vector<8xf32>
    %262 = vector.multi_reduction <add>, %261, %cst_81 [1] : vector<8x32xf32> to vector<8xf32>
    %263 = vector.shape_cast %262 : vector<8xf32> to vector<8x1xf32>
    %cst_82 = arith.constant 3.200000e+01 : f32
    %264 = vector.broadcast %cst_82 : f32 to vector<8x1xf32>
    %265 = arith.divf %263, %264 : vector<8x1xf32>
    %266 = vector.broadcast %258 : vector<8x1xf32> to vector<8x32xf32>
    %267 = arith.subf %252, %266 : vector<8x32xf32>
    %cst_83 = arith.constant 9.99999974E-6 : f32
    %268 = vector.broadcast %cst_83 : f32 to vector<8x1xf32>
    %269 = arith.addf %265, %268 : vector<8x1xf32>
    %270 = math.rsqrt %269 : vector<8x1xf32>
    %271 = vector.broadcast %270 : vector<8x1xf32> to vector<8x32xf32>
    %272 = arith.mulf %267, %271 : vector<8x32xf32>
    %273 = vector.broadcast %253 : vector<1x32xf32> to vector<8x32xf32>
    %274 = arith.mulf %272, %273 : vector<8x32xf32>
    %275 = vector.broadcast %254 : vector<1x32xf32> to vector<8x32xf32>
    %276 = arith.addf %274, %275 : vector<8x32xf32>
    %c0_84 = arith.constant 0 : index
    %c0_85 = arith.constant 0 : index
    %277 = vector.load %arg23[%c0_84, %c0_85] : memref<32x128xbf16, #tpu.memory_space<vmem>>, vector<32x128xbf16>
    %278 = arith.truncf %276 : vector<8x32xf32> to vector<8x32xbf16>
    %cst_86 = arith.constant dense<0.000000e+00> : vector<8x128xf32>
    %279 = tpu.matmul %278, %277, %cst_86 {dimension_numbers = #tpu.dot_dimension_numbers<[1], [0], [0], [1], [0, 0, 1, 1], [], []>} : vector<8x32xbf16>, vector<32x128xbf16>, vector<8x128xf32> -> vector<8x128xf32>
    %c0_87 = arith.constant 0 : index
    %c0_88 = arith.constant 0 : index
    %280 = vector.load %arg24[%c0_87, %c0_88] : memref<1x128xf32, #tpu.memory_space<vmem>>, vector<1x128xf32>
    %281 = vector.broadcast %280 : vector<1x128xf32> to vector<8x128xf32>
    %282 = arith.addf %279, %281 : vector<8x128xf32>
    %cst_89 = arith.constant 5.000000e-01 : f32
    %283 = vector.broadcast %cst_89 : f32 to vector<8x128xf32>
    %284 = arith.mulf %283, %282 : vector<8x128xf32>
    %cst_90 = arith.constant 4.471500e-02 : f32
    %285 = vector.broadcast %cst_90 : f32 to vector<8x128xf32>
    %286 = arith.mulf %285, %282 : vector<8x128xf32>
    %287 = arith.mulf %286, %282 : vector<8x128xf32>
    %288 = arith.mulf %287, %282 : vector<8x128xf32>
    %289 = arith.addf %282, %288 : vector<8x128xf32>
    %cst_91 = arith.constant 0.797884583 : f32
    %290 = vector.broadcast %cst_91 : f32 to vector<8x128xf32>
    %291 = arith.mulf %290, %289 : vector<8x128xf32>
    %292 = math.tanh %291 : vector<8x128xf32>
    %cst_92 = arith.constant 1.000000e+00 : f32
    %293 = vector.broadcast %cst_92 : f32 to vector<8x128xf32>
    %294 = arith.addf %293, %292 : vector<8x128xf32>
    %295 = arith.mulf %284, %294 : vector<8x128xf32>
    %c0_93 = arith.constant 0 : index
    %c0_94 = arith.constant 0 : index
    %296 = vector.load %arg25[%c0_93, %c0_94] : memref<128x32xbf16, #tpu.memory_space<vmem>>, vector<128x32xbf16>
    %297 = arith.truncf %295 : vector<8x128xf32> to vector<8x128xbf16>
    %cst_95 = arith.constant dense<0.000000e+00> : vector<8x32xf32>
    %298 = tpu.matmul %297, %296, %cst_95 {dimension_numbers = #tpu.dot_dimension_numbers<[1], [0], [0], [1], [0, 0, 1, 1], [], []>} : vector<8x128xbf16>, vector<128x32xbf16>, vector<8x32xf32> -> vector<8x32xf32>
    %c0_96 = arith.constant 0 : index
    %c0_97 = arith.constant 0 : index
    %299 = vector.load %arg26[%c0_96, %c0_97] : memref<1x32xf32, #tpu.memory_space<vmem>>, vector<1x32xf32>
    %300 = vector.broadcast %299 : vector<1x32xf32> to vector<8x32xf32>
    %301 = arith.addf %298, %300 : vector<8x32xf32>
    %302 = arith.addf %252, %301 : vector<8x32xf32>
    %c0_98 = arith.constant 0 : index
    %c0_99 = arith.constant 0 : index
    %c0_100 = arith.constant 0 : index
    %303 = vector.load %arg27[%c0_98, %c0_99, %c0_100] : memref<1x8x32xf32, #tpu.memory_space<vmem>>, vector<1x8x32xf32>
    %304 = vector.shape_cast %303 : vector<1x8x32xf32> to vector<8x32xf32>
    %305 = vector.shape_cast %302 : vector<8x32xf32> to vector<1x8x32xf32>
    tpu.vector_store %arg27[%c0_98, %c0_99, %c0_100], %305 {strides = array<i32>} : memref<1x8x32xf32, #tpu.memory_space<vmem>>, vector<1x8x32xf32>,
    return
  }
  func.func @transform_0(%arg0: i32) -> (i32, i32, i32) {
    %c0_i32 = arith.constant 0 : i32
    %c0_i32_0 = arith.constant 0 : i32
    %c0_i32_1 = arith.constant 0 : i32
    return %arg0, %c0_i32, %c0_i32_0 : i32, i32, i32
  }
  func.func @transform_1(%arg0: i32) -> (i32, i32, i32) {
    %c0_i32 = arith.constant 0 : i32
    %c0_i32_0 = arith.constant 0 : i32
    %c0_i32_1 = arith.constant 0 : i32
    return %arg0, %c0_i32, %c0_i32_0 : i32, i32, i32
  }
  func.func @transform_2(%arg0: i32) -> (i32, i32) {
    %c0_i32 = arith.constant 0 : i32
    %c0_i32_0 = arith.constant 0 : i32
    %c0_i32_1 = arith.constant 0 : i32
    return %c0_i32, %c0_i32_0 : i32, i32
  }
  func.func @transform_3(%arg0: i32) -> (i32, i32) {
    %c0_i32 = arith.constant 0 : i32
    %c0_i32_0 = arith.constant 0 : i32
    %c0_i32_1 = arith.constant 0 : i32
    return %c0_i32, %c0_i32_0 : i32, i32
  }
  func.func @transform_4(%arg0: i32) -> (i32, i32) {
    %c0_i32 = arith.constant 0 : i32
    %c0_i32_0 = arith.constant 0 : i32
    %c0_i32_1 = arith.constant 0 : i32
    return %c0_i32, %c0_i32_0 : i32, i32
  }
  func.func @transform_5(%arg0: i32) -> (i32, i32) {
    %c0_i32 = arith.constant 0 : i32
    %c0_i32_0 = arith.constant 0 : i32
    %c0_i32_1 = arith.constant 0 : i32
    return %c0_i32, %c0_i32_0 : i32, i32
  }
  func.func @transform_6(%arg0: i32) -> (i32, i32) {
    %c0_i32 = arith.constant 0 : i32
    %c0_i32_0 = arith.constant 0 : i32
    %c0_i32_1 = arith.constant 0 : i32
    return %c0_i32, %c0_i32_0 : i32, i32
  }
  func.func @transform_7(%arg0: i32) -> (i32, i32) {
    %c0_i32 = arith.constant 0 : i32
    %c0_i32_0 = arith.constant 0 : i32
    %c0_i32_1 = arith.constant 0 : i32
    return %c0_i32, %c0_i32_0 : i32, i32
  }
  func.func @transform_8(%arg0: i32) -> (i32, i32, i32) {
    %c0_i32 = arith.constant 0 : i32
    %c0_i32_0 = arith.constant 0 : i32
    %c0_i32_1 = arith.constant 0 : i32
    return %arg0, %c0_i32, %c0_i32_0 : i32, i32, i32
  }
  func.func @transform_9(%arg0: i32) -> (i32, i32) {
    %c0_i32 = arith.constant 0 : i32
    %c0_i32_0 = arith.constant 0 : i32
    %c0_i32_1 = arith.constant 0 : i32
    return %c0_i32, %c0_i32_0 : i32, i32
  }
  func.func @transform_10(%arg0: i32) -> (i32, i32) {
    %c0_i32 = arith.constant 0 : i32
    %c0_i32_0 = arith.constant 0 : i32
    %c0_i32_1 = arith.constant 0 : i32
    return %c0_i32, %c0_i32_0 : i32, i32
  }
  func.func @transform_11(%arg0: i32) -> (i32, i32) {
    %c0_i32 = arith.constant 0 : i32
    %c0_i32_0 = arith.constant 0 : i32
    %c0_i32_1 = arith.constant 0 : i32
    return %c0_i32, %c0_i32_0 : i32, i32
  }
  func.func @transform_12(%arg0: i32) -> (i32, i32) {
    %c0_i32 = arith.constant 0 : i32
    %c0_i32_0 = arith.constant 0 : i32
    %c0_i32_1 = arith.constant 0 : i32
    return %c0_i32, %c0_i32_0 : i32, i32
  }
  func.func @transform_13(%arg0: i32) -> (i32, i32) {
    %c0_i32 = arith.constant 0 : i32
    %c0_i32_0 = arith.constant 0 : i32
    %c0_i32_1 = arith.constant 0 : i32
    return %c0_i32, %c0_i32_0 : i32, i32
  }
  func.func @transform_14(%arg0: i32) -> (i32, i32) {
    %c0_i32 = arith.constant 0 : i32
    %c0_i32_0 = arith.constant 0 : i32
    %c0_i32_1 = arith.constant 0 : i32
    return %c0_i32, %c0_i32_0 : i32, i32
  }
  func.func @transform_15(%arg0: i32) -> (i32, i32, i32) {
    %c0_i32 = arith.constant 0 : i32
    %c0_i32_0 = arith.constant 0 : i32
    %c0_i32_1 = arith.constant 0 : i32
    return %arg0, %c0_i32, %c0_i32_0 : i32, i32, i32
  }
  func.func @transform_16(%arg0: i32) -> (i32, i32) {
    %c0_i32 = arith.constant 0 : i32
    %c0_i32_0 = arith.constant 0 : i32
    %c0_i32_1 = arith.constant 0 : i32
    return %c0_i32, %c0_i32_0 : i32, i32
  }
  func.func @transform_17(%arg0: i32) -> (i32, i32) {
    %c0_i32 = arith.constant 0 : i32
    %c0_i32_0 = arith.constant 0 : i32
    %c0_i32_1 = arith.constant 0 : i32
    return %c0_i32, %c0_i32_0 : i32, i32
  }
  func.func @transform_18(%arg0: i32) -> (i32, i32) {
    %c0_i32 = arith.constant 0 : i32
    %c0_i32_0 = arith.constant 0 : i32
    %c0_i32_1 = arith.constant 0 : i32
    return %c0_i32, %c0_i32_0 : i32, i32
  }
  func.func @transform_19(%arg0: i32) -> (i32, i32) {
    %c0_i32 = arith.constant 0 : i32
    %c0_i32_0 = arith.constant 0 : i32
    %c0_i32_1 = arith.constant 0 : i32
    return %c0_i32, %c0_i32_0 : i32, i32
  }
  func.func @transform_20(%arg0: i32) -> (i32, i32) {
    %c0_i32 = arith.constant 0 : i32
    %c0_i32_0 = arith.constant 0 : i32
    %c0_i32_1 = arith.constant 0 : i32
    return %c0_i32, %c0_i32_0 : i32, i32
  }
  func.func @transform_21(%arg0: i32) -> (i32, i32) {
    %c0_i32 = arith.constant 0 : i32
    %c0_i32_0 = arith.constant 0 : i32
    %c0_i32_1 = arith.constant 0 : i32
    return %c0_i32, %c0_i32_0 : i32, i32
  }
  func.func @transform_22(%arg0: i32) -> (i32, i32) {
    %c0_i32 = arith.constant 0 : i32
    %c0_i32_0 = arith.constant 0 : i32
    %c0_i32_1 = arith.constant 0 : i32
    return %c0_i32, %c0_i32_0 : i32, i32
  }
  func.func @transform_23(%arg0: i32) -> (i32, i32) {
    %c0_i32 = arith.constant 0 : i32
    %c0_i32_0 = arith.constant 0 : i32
    %c0_i32_1 = arith.constant 0 : i32
    return %c0_i32, %c0_i32_0 : i32, i32
  }
  func.func @transform_24(%arg0: i32) -> (i32, i32) {
    %c0_i32 = arith.constant 0 : i32
    %c0_i32_0 = arith.constant 0 : i32
    %c0_i32_1 = arith.constant 0 : i32
    return %c0_i32, %c0_i32_0 : i32, i32
  }
  func.func @transform_25(%arg0: i32) -> (i32, i32) {
    %c0_i32 = arith.constant 0 : i32
    %c0_i32_0 = arith.constant 0 : i32
    %c0_i32_1 = arith.constant 0 : i32
    return %c0_i32, %c0_i32_0 : i32, i32
  }
  func.func @transform_26(%arg0: i32) -> (i32, i32, i32) {
    %c0_i32 = arith.constant 0 : i32
    %c0_i32_0 = arith.constant 0 : i32
    %c0_i32_1 = arith.constant 0 : i32
    return %arg0, %c0_i32, %c0_i32_0 : i32, i32, i32
  }
}

module attributes {stable_mosaic.version = 11 : i64} {
  func.func @_dec_layer_kernel(%arg0: i32, %arg1: memref<1x8x32xf32, #tpu.memory_space<vmem>>, %arg2: memref<1x8x32xf32, #tpu.memory_space<vmem>>, %arg3: memref<1x32xf32, #tpu.memory_space<vmem>>, %arg4: memref<1x32xf32, #tpu.memory_space<vmem>>, %arg5: memref<32x96xbf16, #tpu.memory_space<vmem>>, %arg6: memref<1x96xf32, #tpu.memory_space<vmem>>, %arg7: memref<32x32xbf16, #tpu.memory_space<vmem>>, %arg8: memref<1x32xf32, #tpu.memory_space<vmem>>, %arg9: memref<1x1x8xf32, #tpu.memory_space<vmem>>, %arg10: memref<1x32xf32, #tpu.memory_space<vmem>>, %arg11: memref<1x32xf32, #tpu.memory_space<vmem>>, %arg12: memref<32x96xbf16, #tpu.memory_space<vmem>>, %arg13: memref<1x96xf32, #tpu.memory_space<vmem>>, %arg14: memref<32x32xbf16, #tpu.memory_space<vmem>>, %arg15: memref<1x32xf32, #tpu.memory_space<vmem>>, %arg16: memref<1x1x8xf32, #tpu.memory_space<vmem>>, %arg17: memref<8x8xf32, #tpu.memory_space<vmem>>, %arg18: memref<8x8xf32, #tpu.memory_space<vmem>>, %arg19: memref<8x8xf32, #tpu.memory_space<vmem>>, %arg20: memref<8x8xf32, #tpu.memory_space<vmem>>, %arg21: memref<1x32xf32, #tpu.memory_space<vmem>>, %arg22: memref<1x32xf32, #tpu.memory_space<vmem>>, %arg23: memref<32x128xbf16, #tpu.memory_space<vmem>>, %arg24: memref<1x128xf32, #tpu.memory_space<vmem>>, %arg25: memref<128x32xbf16, #tpu.memory_space<vmem>>, %arg26: memref<1x32xf32, #tpu.memory_space<vmem>>, %arg27: memref<1x8x32xf32, #tpu.memory_space<vmem>>) attributes {dimension_semantics = [#tpu.dimension_semantics<parallel>], iteration_bounds = array<i64: 2>, scalar_prefetch = 0 : i64, scratch_operands = 0 : i64, tpu.core_type = #tpu.core_type<tc>, window_params = [{transform_indices = @transform_0, window_bounds = array<i64: 1, 8, 32>}, {transform_indices = @transform_1, window_bounds = array<i64: 1, 8, 32>}, {pipeline_mode = #tpu.pipeline_mode<synchronous>, transform_indices = @transform_2, window_bounds = array<i64: 1, 32>}, {pipeline_mode = #tpu.pipeline_mode<synchronous>, transform_indices = @transform_3, window_bounds = array<i64: 1, 32>}, {pipeline_mode = #tpu.pipeline_mode<synchronous>, transform_indices = @transform_4, window_bounds = array<i64: 32, 96>}, {pipeline_mode = #tpu.pipeline_mode<synchronous>, transform_indices = @transform_5, window_bounds = array<i64: 1, 96>}, {pipeline_mode = #tpu.pipeline_mode<synchronous>, transform_indices = @transform_6, window_bounds = array<i64: 32, 32>}, {pipeline_mode = #tpu.pipeline_mode<synchronous>, transform_indices = @transform_7, window_bounds = array<i64: 1, 32>}, {transform_indices = @transform_8, window_bounds = array<i64: 1, 1, 8>}, {pipeline_mode = #tpu.pipeline_mode<synchronous>, transform_indices = @transform_9, window_bounds = array<i64: 1, 32>}, {pipeline_mode = #tpu.pipeline_mode<synchronous>, transform_indices = @transform_10, window_bounds = array<i64: 1, 32>}, {pipeline_mode = #tpu.pipeline_mode<synchronous>, transform_indices = @transform_11, window_bounds = array<i64: 32, 96>}, {pipeline_mode = #tpu.pipeline_mode<synchronous>, transform_indices = @transform_12, window_bounds = array<i64: 1, 96>}, {pipeline_mode = #tpu.pipeline_mode<synchronous>, transform_indices = @transform_13, window_bounds = array<i64: 32, 32>}, {pipeline_mode = #tpu.pipeline_mode<synchronous>, transform_indices = @transform_14, window_bounds = array<i64: 1, 32>}, {transform_indices = @transform_15, window_bounds = array<i64: 1, 1, 8>}, {pipeline_mode = #tpu.pipeline_mode<synchronous>, transform_indices = @transform_16, window_bounds = array<i64: 8, 8>}, {pipeline_mode = #tpu.pipeline_mode<synchronous>, transform_indices = @transform_17, window_bounds = array<i64: 8, 8>}, {pipeline_mode = #tpu.pipeline_mode<synchronous>, transform_indices = @transform_18, window_bounds = array<i64: 8, 8>}, {pipeline_mode = #tpu.pipeline_mode<synchronous>, transform_indices = @transform_19, window_bounds = array<i64: 8, 8>}, {pipeline_mode = #tpu.pipeline_mode<synchronous>, transform_indices = @transform_20, window_bounds = array<i64: 1, 32>}, {pipeline_mode = #tpu.pipeline_mode<synchronous>, transform_indices = @transform_21, window_bounds = array<i64: 1, 32>}, {pipeline_mode = #tpu.pipeline_mode<synchronous>, transform_indices = @transform_22, window_bounds = array<i64: 32, 128>}, {pipeline_mode = #tpu.pipeline_mode<synchronous>, transform_indices = @transform_23, window_bounds = array<i64: 1, 128>}, {pipeline_mode = #tpu.pipeline_mode<synchronous>, transform_indices = @transform_24, window_bounds = array<i64: 128, 32>}, {pipeline_mode = #tpu.pipeline_mode<synchronous>, transform_indices = @transform_25, window_bounds = array<i64: 1, 32>}, {transform_indices = @transform_26, window_bounds = array<i64: 1, 8, 32>}]} {
    %c0 = arith.constant 0 : index
    %c0_0 = arith.constant 0 : index
    %c0_1 = arith.constant 0 : index
    %0 = vector.load %arg1[%c0, %c0_0, %c0_1] : memref<1x8x32xf32, #tpu.memory_space<vmem>>, vector<1x8x32xf32>
    %1 = vector.shape_cast %0 : vector<1x8x32xf32> to vector<8x32xf32>
    %c0_2 = arith.constant 0 : index
    %c0_3 = arith.constant 0 : index
    %c0_4 = arith.constant 0 : index
    %2 = vector.load %arg2[%c0_2, %c0_3, %c0_4] : memref<1x8x32xf32, #tpu.memory_space<vmem>>, vector<1x8x32xf32>
    %3 = vector.shape_cast %2 : vector<1x8x32xf32> to vector<8x32xf32>
    %c0_5 = arith.constant 0 : index
    %c0_6 = arith.constant 0 : index
    %c0_7 = arith.constant 0 : index
    %4 = vector.load %arg9[%c0_5, %c0_6, %c0_7] : memref<1x1x8xf32, #tpu.memory_space<vmem>>, vector<1x1x8xf32>
    %c0_8 = arith.constant 0 : index
    %c0_9 = arith.constant 0 : index
    %5 = vector.load %arg17[%c0_8, %c0_9] : memref<8x8xf32, #tpu.memory_space<vmem>>, vector<8x8xf32>
    %c0_10 = arith.constant 0 : index
    %c0_11 = arith.constant 0 : index
    %6 = vector.load %arg18[%c0_10, %c0_11] : memref<8x8xf32, #tpu.memory_space<vmem>>, vector<8x8xf32>
    %c0_12 = arith.constant 0 : index
    %c0_13 = arith.constant 0 : index
    %7 = vector.load %arg17[%c0_12, %c0_13] : memref<8x8xf32, #tpu.memory_space<vmem>>, vector<8x8xf32>
    %c0_14 = arith.constant 0 : index
    %c0_15 = arith.constant 0 : index
    %8 = vector.load %arg18[%c0_14, %c0_15] : memref<8x8xf32, #tpu.memory_space<vmem>>, vector<8x8xf32>
    %c0_16 = arith.constant 0 : index
    %c0_17 = arith.constant 0 : index
    %9 = vector.load %arg3[%c0_16, %c0_17] : memref<1x32xf32, #tpu.memory_space<vmem>>, vector<1x32xf32>
    %c0_18 = arith.constant 0 : index
    %c0_19 = arith.constant 0 : index
    %10 = vector.load %arg4[%c0_18, %c0_19] : memref<1x32xf32, #tpu.memory_space<vmem>>, vector<1x32xf32>
    %cst = arith.constant dense<0.000000e+00> : vector<8xf32>
    %11 = vector.multi_reduction <add>, %1, %cst [1] : vector<8x32xf32> to vector<8xf32>
    %12 = vector.shape_cast %11 : vector<8xf32> to vector<8x1xf32>
    %cst_20 = arith.constant 3.200000e+01 : f32
    %13 = vector.broadcast %cst_20 : f32 to vector<8x1xf32>
    %14 = arith.divf %12, %13 : vector<8x1xf32>
    %15 = vector.broadcast %14 : vector<8x1xf32> to vector<8x32xf32>
    %16 = arith.subf %1, %15 : vector<8x32xf32>
    %17 = arith.mulf %16, %16 : vector<8x32xf32>
    %cst_21 = arith.constant dense<0.000000e+00> : vector<8xf32>
    %18 = vector.multi_reduction <add>, %17, %cst_21 [1] : vector<8x32xf32> to vector<8xf32>
    %19 = vector.shape_cast %18 : vector<8xf32> to vector<8x1xf32>
    %cst_22 = arith.constant 3.200000e+01 : f32
    %20 = vector.broadcast %cst_22 : f32 to vector<8x1xf32>
    %21 = arith.divf %19, %20 : vector<8x1xf32>
    %22 = vector.broadcast %14 : vector<8x1xf32> to vector<8x32xf32>
    %23 = arith.subf %1, %22 : vector<8x32xf32>
    %cst_23 = arith.constant 9.99999974E-6 : f32
    %24 = vector.broadcast %cst_23 : f32 to vector<8x1xf32>
    %25 = arith.addf %21, %24 : vector<8x1xf32>
    %26 = math.rsqrt %25 : vector<8x1xf32>
    %27 = vector.broadcast %26 : vector<8x1xf32> to vector<8x32xf32>
    %28 = arith.mulf %23, %27 : vector<8x32xf32>
    %29 = vector.broadcast %9 : vector<1x32xf32> to vector<8x32xf32>
    %30 = arith.mulf %28, %29 : vector<8x32xf32>
    %31 = vector.broadcast %10 : vector<1x32xf32> to vector<8x32xf32>
    %32 = arith.addf %30, %31 : vector<8x32xf32>
    %c0_24 = arith.constant 0 : index
    %c0_25 = arith.constant 0 : index
    %33 = vector.load %arg5[%c0_24, %c0_25] : memref<32x96xbf16, #tpu.memory_space<vmem>>, vector<32x96xbf16>
    %c0_26 = arith.constant 0 : index
    %c0_27 = arith.constant 0 : index
    %34 = vector.load %arg6[%c0_26, %c0_27] : memref<1x96xf32, #tpu.memory_space<vmem>>, vector<1x96xf32>
    %35 = arith.truncf %32 : vector<8x32xf32> to vector<8x32xbf16>
    %cst_28 = arith.constant dense<0.000000e+00> : vector<8x96xf32>
    %36 = tpu.matmul %35, %33, %cst_28 {dimension_numbers = #tpu.dot_dimension_numbers<[1], [0], [0], [1], [0, 0, 1, 1], [], []>} : vector<8x32xbf16>, vector<32x96xbf16>, vector<8x96xf32> -> vector<8x96xf32>
    %37 = vector.broadcast %34 : vector<1x96xf32> to vector<8x96xf32>
    %38 = arith.addf %36, %37 : vector<8x96xf32>
    %39 = vector.extract_strided_slice %38 {offsets = [0, 0], sizes = [8, 32], strides = [1, 1]} : vector<8x96xf32> to vector<8x32xf32>
    %40 = vector.extract_strided_slice %38 {offsets = [0, 32], sizes = [8, 32], strides = [1, 1]} : vector<8x96xf32> to vector<8x32xf32>
    %41 = vector.extract_strided_slice %38 {offsets = [0, 64], sizes = [8, 32], strides = [1, 1]} : vector<8x96xf32> to vector<8x32xf32>
    %42 = vector.extract_strided_slice %39 {offsets = [0, 0], sizes = [8, 8], strides = [1, 1]} : vector<8x32xf32> to vector<8x8xf32>
    %43 = vector.extract_strided_slice %39 {offsets = [0, 8], sizes = [8, 8], strides = [1, 1]} : vector<8x32xf32> to vector<8x8xf32>
    %44 = vector.extract_strided_slice %39 {offsets = [0, 16], sizes = [8, 8], strides = [1, 1]} : vector<8x32xf32> to vector<8x8xf32>
    %45 = vector.extract_strided_slice %39 {offsets = [0, 24], sizes = [8, 8], strides = [1, 1]} : vector<8x32xf32> to vector<8x8xf32>
    %46 = vector.shape_cast %42 : vector<8x8xf32> to vector<1x8x8xf32>
    %47 = vector.shape_cast %43 : vector<8x8xf32> to vector<1x8x8xf32>
    %48 = vector.shape_cast %44 : vector<8x8xf32> to vector<1x8x8xf32>
    %49 = vector.shape_cast %45 : vector<8x8xf32> to vector<1x8x8xf32>
    %50 = tpu.concatenate %46, %47, %48, %49 in 0 : vector<1x8x8xf32>, vector<1x8x8xf32>, vector<1x8x8xf32>, vector<1x8x8xf32> -> vector<4x8x8xf32>
    %51 = vector.shape_cast %5 : vector<8x8xf32> to vector<1x8x8xf32>
    %52 = vector.broadcast %51 : vector<1x8x8xf32> to vector<4x8x8xf32>
    %53 = arith.mulf %50, %52 : vector<4x8x8xf32>
    %54 = vector.extract_strided_slice %50 {offsets = [0, 0, 4], sizes = [4, 8, 4], strides = [1, 1, 1]} : vector<4x8x8xf32> to vector<4x8x4xf32>
    %55 = vector.extract_strided_slice %50 {offsets = [0, 0, 0], sizes = [4, 8, 4], strides = [1, 1, 1]} : vector<4x8x8xf32> to vector<4x8x4xf32>
    %56 = tpu.concatenate %54, %55 in 2 : vector<4x8x4xf32>, vector<4x8x4xf32> -> vector<4x8x8xf32>
    %57 = vector.shape_cast %6 : vector<8x8xf32> to vector<1x8x8xf32>
    %58 = vector.broadcast %57 : vector<1x8x8xf32> to vector<4x8x8xf32>
    %59 = arith.mulf %56, %58 : vector<4x8x8xf32>
    %60 = arith.addf %53, %59 : vector<4x8x8xf32>
    %61 = vector.extract_strided_slice %40 {offsets = [0, 0], sizes = [8, 8], strides = [1, 1]} : vector<8x32xf32> to vector<8x8xf32>
    %62 = vector.extract_strided_slice %40 {offsets = [0, 8], sizes = [8, 8], strides = [1, 1]} : vector<8x32xf32> to vector<8x8xf32>
    %63 = vector.extract_strided_slice %40 {offsets = [0, 16], sizes = [8, 8], strides = [1, 1]} : vector<8x32xf32> to vector<8x8xf32>
    %64 = vector.extract_strided_slice %40 {offsets = [0, 24], sizes = [8, 8], strides = [1, 1]} : vector<8x32xf32> to vector<8x8xf32>
    %65 = vector.shape_cast %61 : vector<8x8xf32> to vector<1x8x8xf32>
    %66 = vector.shape_cast %62 : vector<8x8xf32> to vector<1x8x8xf32>
    %67 = vector.shape_cast %63 : vector<8x8xf32> to vector<1x8x8xf32>
    %68 = vector.shape_cast %64 : vector<8x8xf32> to vector<1x8x8xf32>
    %69 = tpu.concatenate %65, %66, %67, %68 in 0 : vector<1x8x8xf32>, vector<1x8x8xf32>, vector<1x8x8xf32>, vector<1x8x8xf32> -> vector<4x8x8xf32>
    %70 = vector.shape_cast %7 : vector<8x8xf32> to vector<1x8x8xf32>
    %71 = vector.broadcast %70 : vector<1x8x8xf32> to vector<4x8x8xf32>
    %72 = arith.mulf %69, %71 : vector<4x8x8xf32>
    %73 = vector.extract_strided_slice %69 {offsets = [0, 0, 4], sizes = [4, 8, 4], strides = [1, 1, 1]} : vector<4x8x8xf32> to vector<4x8x4xf32>
    %74 = vector.extract_strided_slice %69 {offsets = [0, 0, 0], sizes = [4, 8, 4], strides = [1, 1, 1]} : vector<4x8x8xf32> to vector<4x8x4xf32>
    %75 = tpu.concatenate %73, %74 in 2 : vector<4x8x4xf32>, vector<4x8x4xf32> -> vector<4x8x8xf32>
    %76 = vector.shape_cast %8 : vector<8x8xf32> to vector<1x8x8xf32>
    %77 = vector.broadcast %76 : vector<1x8x8xf32> to vector<4x8x8xf32>
    %78 = arith.mulf %75, %77 : vector<4x8x8xf32>
    %79 = arith.addf %72, %78 : vector<4x8x8xf32>
    %80 = vector.extract_strided_slice %41 {offsets = [0, 0], sizes = [8, 8], strides = [1, 1]} : vector<8x32xf32> to vector<8x8xf32>
    %81 = vector.extract_strided_slice %41 {offsets = [0, 8], sizes = [8, 8], strides = [1, 1]} : vector<8x32xf32> to vector<8x8xf32>
    %82 = vector.extract_strided_slice %41 {offsets = [0, 16], sizes = [8, 8], strides = [1, 1]} : vector<8x32xf32> to vector<8x8xf32>
    %83 = vector.extract_strided_slice %41 {offsets = [0, 24], sizes = [8, 8], strides = [1, 1]} : vector<8x32xf32> to vector<8x8xf32>
    %84 = vector.shape_cast %80 : vector<8x8xf32> to vector<1x8x8xf32>
    %85 = vector.shape_cast %81 : vector<8x8xf32> to vector<1x8x8xf32>
    %86 = vector.shape_cast %82 : vector<8x8xf32> to vector<1x8x8xf32>
    %87 = vector.shape_cast %83 : vector<8x8xf32> to vector<1x8x8xf32>
    %88 = tpu.concatenate %84, %85, %86, %87 in 0 : vector<1x8x8xf32>, vector<1x8x8xf32>, vector<1x8x8xf32>, vector<1x8x8xf32> -> vector<4x8x8xf32>
    %89 = arith.truncf %60 : vector<4x8x8xf32> to vector<4x8x8xbf16>
    %90 = arith.truncf %79 : vector<4x8x8xf32> to vector<4x8x8xbf16>
    "tpu.trace_start"() <{level = 10 : i32, message = "hqd,hkd->hqk"}> : () -> ()
    %cst_29 = arith.constant dense<0.000000e+00> : vector<4x8x8xf32>
    %91 = tpu.matmul %89, %90, %cst_29 {dimension_numbers = #tpu.dot_dimension_numbers<[2], [2], [1], [1], [0, 0, 0, 1, 1, 1], [0], [0]>} : vector<4x8x8xbf16>, vector<4x8x8xbf16>, vector<4x8x8xf32> -> vector<4x8x8xf32>
    "tpu.trace_stop"() : () -> ()
    %cst_30 = arith.constant 0.353553385 : f32
    %92 = vector.broadcast %cst_30 : f32 to vector<4x8x8xf32>
    %93 = arith.mulf %91, %92 : vector<4x8x8xf32>
    %94 = vector.broadcast %4 : vector<1x1x8xf32> to vector<4x8x8xf32>
    %95 = arith.addf %93, %94 : vector<4x8x8xf32>
    %cst_31 = arith.constant dense<0xFF800000> : vector<4x8xf32>
    %96 = vector.multi_reduction <maximumf>, %95, %cst_31 [2] : vector<4x8x8xf32> to vector<4x8xf32>
    %97 = vector.shape_cast %96 : vector<4x8xf32> to vector<4x8x1xf32>
    %98 = vector.broadcast %97 : vector<4x8x1xf32> to vector<4x8x8xf32>
    %99 = arith.subf %95, %98 : vector<4x8x8xf32>
    %100 = math.exp %99 : vector<4x8x8xf32>
    %cst_32 = arith.constant dense<0.000000e+00> : vector<4x8xf32>
    %101 = vector.multi_reduction <add>, %100, %cst_32 [2] : vector<4x8x8xf32> to vector<4x8xf32>
    %102 = vector.shape_cast %101 : vector<4x8xf32> to vector<4x8x1xf32>
    %103 = arith.truncf %100 : vector<4x8x8xf32> to vector<4x8x8xbf16>
    %104 = arith.truncf %88 : vector<4x8x8xf32> to vector<4x8x8xbf16>
    "tpu.trace_start"() <{level = 10 : i32, message = "hqk,hkd->hqd"}> : () -> ()
    %cst_33 = arith.constant dense<0.000000e+00> : vector<4x8x8xf32>
    %105 = tpu.matmul %103, %104, %cst_33 {dimension_numbers = #tpu.dot_dimension_numbers<[2], [1], [1], [2], [0, 0, 0, 1, 1, 2], [0], [0]>} : vector<4x8x8xbf16>, vector<4x8x8xbf16>, vector<4x8x8xf32> -> vector<4x8x8xf32>
    "tpu.trace_stop"() : () -> ()
    %106 = tpu.reciprocal %102 {approx = true} : vector<4x8x1xf32> -> vector<4x8x1xf32>
    %107 = vector.broadcast %106 : vector<4x8x1xf32> to vector<4x8x8xf32>
    %108 = arith.mulf %105, %107 : vector<4x8x8xf32>
    %109 = vector.extract_strided_slice %108 {offsets = [0, 0, 0], sizes = [1, 8, 8], strides = [1, 1, 1]} : vector<4x8x8xf32> to vector<1x8x8xf32>
    %110 = vector.shape_cast %109 : vector<1x8x8xf32> to vector<8x8xf32>
    %111 = vector.extract_strided_slice %108 {offsets = [1, 0, 0], sizes = [1, 8, 8], strides = [1, 1, 1]} : vector<4x8x8xf32> to vector<1x8x8xf32>
    %112 = vector.shape_cast %111 : vector<1x8x8xf32> to vector<8x8xf32>
    %113 = vector.extract_strided_slice %108 {offsets = [2, 0, 0], sizes = [1, 8, 8], strides = [1, 1, 1]} : vector<4x8x8xf32> to vector<1x8x8xf32>
    %114 = vector.shape_cast %113 : vector<1x8x8xf32> to vector<8x8xf32>
    %115 = vector.extract_strided_slice %108 {offsets = [3, 0, 0], sizes = [1, 8, 8], strides = [1, 1, 1]} : vector<4x8x8xf32> to vector<1x8x8xf32>
    %116 = vector.shape_cast %115 : vector<1x8x8xf32> to vector<8x8xf32>
    %117 = tpu.concatenate %110, %112, %114, %116 in 1 : vector<8x8xf32>, vector<8x8xf32>, vector<8x8xf32>, vector<8x8xf32> -> vector<8x32xf32>
    %c0_34 = arith.constant 0 : index
    %c0_35 = arith.constant 0 : index
    %118 = vector.load %arg7[%c0_34, %c0_35] : memref<32x32xbf16, #tpu.memory_space<vmem>>, vector<32x32xbf16>
    %119 = arith.truncf %117 : vector<8x32xf32> to vector<8x32xbf16>
    %cst_36 = arith.constant dense<0.000000e+00> : vector<8x32xf32>
    %120 = tpu.matmul %119, %118, %cst_36 {dimension_numbers = #tpu.dot_dimension_numbers<[1], [0], [0], [1], [0, 0, 1, 1], [], []>} : vector<8x32xbf16>, vector<32x32xbf16>, vector<8x32xf32> -> vector<8x32xf32>
    %c0_37 = arith.constant 0 : index
    %c0_38 = arith.constant 0 : index
    %121 = vector.load %arg8[%c0_37, %c0_38] : memref<1x32xf32, #tpu.memory_space<vmem>>, vector<1x32xf32>
    %122 = vector.broadcast %121 : vector<1x32xf32> to vector<8x32xf32>
    %123 = arith.addf %120, %122 : vector<8x32xf32>
    %124 = arith.addf %1, %123 : vector<8x32xf32>
    %c0_39 = arith.constant 0 : index
    %c0_40 = arith.constant 0 : index
    %c0_41 = arith.constant 0 : index
    %125 = vector.load %arg16[%c0_39, %c0_40, %c0_41] : memref<1x1x8xf32, #tpu.memory_space<vmem>>, vector<1x1x8xf32>
    %c0_42 = arith.constant 0 : index
    %c0_43 = arith.constant 0 : index
    %126 = vector.load %arg17[%c0_42, %c0_43] : memref<8x8xf32, #tpu.memory_space<vmem>>, vector<8x8xf32>
    %c0_44 = arith.constant 0 : index
    %c0_45 = arith.constant 0 : index
    %127 = vector.load %arg18[%c0_44, %c0_45] : memref<8x8xf32, #tpu.memory_space<vmem>>, vector<8x8xf32>
    %c0_46 = arith.constant 0 : index
    %c0_47 = arith.constant 0 : index
    %128 = vector.load %arg19[%c0_46, %c0_47] : memref<8x8xf32, #tpu.memory_space<vmem>>, vector<8x8xf32>
    %c0_48 = arith.constant 0 : index
    %c0_49 = arith.constant 0 : index
    %129 = vector.load %arg20[%c0_48, %c0_49] : memref<8x8xf32, #tpu.memory_space<vmem>>, vector<8x8xf32>
    %c0_50 = arith.constant 0 : index
    %c0_51 = arith.constant 0 : index
    %130 = vector.load %arg10[%c0_50, %c0_51] : memref<1x32xf32, #tpu.memory_space<vmem>>, vector<1x32xf32>
    %c0_52 = arith.constant 0 : index
    %c0_53 = arith.constant 0 : index
    %131 = vector.load %arg11[%c0_52, %c0_53] : memref<1x32xf32, #tpu.memory_space<vmem>>, vector<1x32xf32>
    %cst_54 = arith.constant dense<0.000000e+00> : vector<8xf32>
    %132 = vector.multi_reduction <add>, %124, %cst_54 [1] : vector<8x32xf32> to vector<8xf32>
    %133 = vector.shape_cast %132 : vector<8xf32> to vector<8x1xf32>
    %cst_55 = arith.constant 3.200000e+01 : f32
    %134 = vector.broadcast %cst_55 : f32 to vector<8x1xf32>
    %135 = arith.divf %133, %134 : vector<8x1xf32>
    %136 = vector.broadcast %135 : vector<8x1xf32> to vector<8x32xf32>
    %137 = arith.subf %124, %136 : vector<8x32xf32>
    %138 = arith.mulf %137, %137 : vector<8x32xf32>
    %cst_56 = arith.constant dense<0.000000e+00> : vector<8xf32>
    %139 = vector.multi_reduction <add>, %138, %cst_56 [1] : vector<8x32xf32> to vector<8xf32>
    %140 = vector.shape_cast %139 : vector<8xf32> to vector<8x1xf32>
    %cst_57 = arith.constant 3.200000e+01 : f32
    %141 = vector.broadcast %cst_57 : f32 to vector<8x1xf32>
    %142 = arith.divf %140, %141 : vector<8x1xf32>
    %143 = vector.broadcast %135 : vector<8x1xf32> to vector<8x32xf32>
    %144 = arith.subf %124, %143 : vector<8x32xf32>
    %cst_58 = arith.constant 9.99999974E-6 : f32
    %145 = vector.broadcast %cst_58 : f32 to vector<8x1xf32>
    %146 = arith.addf %142, %145 : vector<8x1xf32>
    %147 = math.rsqrt %146 : vector<8x1xf32>
    %148 = vector.broadcast %147 : vector<8x1xf32> to vector<8x32xf32>
    %149 = arith.mulf %144, %148 : vector<8x32xf32>
    %150 = vector.broadcast %130 : vector<1x32xf32> to vector<8x32xf32>
    %151 = arith.mulf %149, %150 : vector<8x32xf32>
    %152 = vector.broadcast %131 : vector<1x32xf32> to vector<8x32xf32>
    %153 = arith.addf %151, %152 : vector<8x32xf32>
    %c0_59 = arith.constant 0 : index
    %c0_60 = arith.constant 0 : index
    %154 = vector.load %arg12[%c0_59, %c0_60] : memref<32x96xbf16, #tpu.memory_space<vmem>>, vector<32x96xbf16>
    %c0_61 = arith.constant 0 : index
    %c0_62 = arith.constant 0 : index
    %155 = vector.load %arg13[%c0_61, %c0_62] : memref<1x96xf32, #tpu.memory_space<vmem>>, vector<1x96xf32>
    %156 = vector.extract_strided_slice %154 {offsets = [0, 0], sizes = [32, 32], strides = [1, 1]} : vector<32x96xbf16> to vector<32x32xbf16>
    %157 = arith.truncf %153 : vector<8x32xf32> to vector<8x32xbf16>
    %cst_63 = arith.constant dense<0.000000e+00> : vector<8x32xf32>
    %158 = tpu.matmul %157, %156, %cst_63 {dimension_numbers = #tpu.dot_dimension_numbers<[1], [0], [0], [1], [0, 0, 1, 1], [], []>} : vector<8x32xbf16>, vector<32x32xbf16>, vector<8x32xf32> -> vector<8x32xf32>
    %159 = vector.extract_strided_slice %155 {offsets = [0, 0], sizes = [1, 32], strides = [1, 1]} : vector<1x96xf32> to vector<1x32xf32>
    %160 = vector.broadcast %159 : vector<1x32xf32> to vector<8x32xf32>
    %161 = arith.addf %158, %160 : vector<8x32xf32>
    %162 = vector.extract_strided_slice %154 {offsets = [0, 32], sizes = [32, 64], strides = [1, 1]} : vector<32x96xbf16> to vector<32x64xbf16>
    %163 = arith.truncf %3 : vector<8x32xf32> to vector<8x32xbf16>
    %cst_64 = arith.constant dense<0.000000e+00> : vector<8x64xf32>
    %164 = tpu.matmul %163, %162, %cst_64 {dimension_numbers = #tpu.dot_dimension_numbers<[1], [0], [0], [1], [0, 0, 1, 1], [], []>} : vector<8x32xbf16>, vector<32x64xbf16>, vector<8x64xf32> -> vector<8x64xf32>
    %165 = vector.extract_strided_slice %155 {offsets = [0, 32], sizes = [1, 64], strides = [1, 1]} : vector<1x96xf32> to vector<1x64xf32>
    %166 = vector.broadcast %165 : vector<1x64xf32> to vector<8x64xf32>
    %167 = arith.addf %164, %166 : vector<8x64xf32>
    %168 = vector.extract_strided_slice %167 {offsets = [0, 0], sizes = [8, 32], strides = [1, 1]} : vector<8x64xf32> to vector<8x32xf32>
    %169 = vector.extract_strided_slice %167 {offsets = [0, 32], sizes = [8, 32], strides = [1, 1]} : vector<8x64xf32> to vector<8x32xf32>
    %170 = vector.extract_strided_slice %161 {offsets = [0, 0], sizes = [8, 8], strides = [1, 1]} : vector<8x32xf32> to vector<8x8xf32>
    %171 = vector.extract_strided_slice %161 {offsets = [0, 8], sizes = [8, 8], strides = [1, 1]} : vector<8x32xf32> to vector<8x8xf32>
    %172 = vector.extract_strided_slice %161 {offsets = [0, 16], sizes = [8, 8], strides = [1, 1]} : vector<8x32xf32> to vector<8x8xf32>
    %173 = vector.extract_strided_slice %161 {offsets = [0, 24], sizes = [8, 8], strides = [1, 1]} : vector<8x32xf32> to vector<8x8xf32>
    %174 = vector.shape_cast %170 : vector<8x8xf32> to vector<1x8x8xf32>
    %175 = vector.shape_cast %171 : vector<8x8xf32> to vector<1x8x8xf32>
    %176 = vector.shape_cast %172 : vector<8x8xf32> to vector<1x8x8xf32>
    %177 = vector.shape_cast %173 : vector<8x8xf32> to vector<1x8x8xf32>
    %178 = tpu.concatenate %174, %175, %176, %177 in 0 : vector<1x8x8xf32>, vector<1x8x8xf32>, vector<1x8x8xf32>, vector<1x8x8xf32> -> vector<4x8x8xf32>
    %179 = vector.shape_cast %126 : vector<8x8xf32> to vector<1x8x8xf32>
    %180 = vector.broadcast %179 : vector<1x8x8xf32> to vector<4x8x8xf32>
    %181 = arith.mulf %178, %180 : vector<4x8x8xf32>
    %182 = vector.extract_strided_slice %178 {offsets = [0, 0, 4], sizes = [4, 8, 4], strides = [1, 1, 1]} : vector<4x8x8xf32> to vector<4x8x4xf32>
    %183 = vector.extract_strided_slice %178 {offsets = [0, 0, 0], sizes = [4, 8, 4], strides = [1, 1, 1]} : vector<4x8x8xf32> to vector<4x8x4xf32>
    %184 = tpu.concatenate %182, %183 in 2 : vector<4x8x4xf32>, vector<4x8x4xf32> -> vector<4x8x8xf32>
    %185 = vector.shape_cast %127 : vector<8x8xf32> to vector<1x8x8xf32>
    %186 = vector.broadcast %185 : vector<1x8x8xf32> to vector<4x8x8xf32>
    %187 = arith.mulf %184, %186 : vector<4x8x8xf32>
    %188 = arith.addf %181, %187 : vector<4x8x8xf32>
    %189 = vector.extract_strided_slice %168 {offsets = [0, 0], sizes = [8, 8], strides = [1, 1]} : vector<8x32xf32> to vector<8x8xf32>
    %190 = vector.extract_strided_slice %168 {offsets = [0, 8], sizes = [8, 8], strides = [1, 1]} : vector<8x32xf32> to vector<8x8xf32>
    %191 = vector.extract_strided_slice %168 {offsets = [0, 16], sizes = [8, 8], strides = [1, 1]} : vector<8x32xf32> to vector<8x8xf32>
    %192 = vector.extract_strided_slice %168 {offsets = [0, 24], sizes = [8, 8], strides = [1, 1]} : vector<8x32xf32> to vector<8x8xf32>
    %193 = vector.shape_cast %189 : vector<8x8xf32> to vector<1x8x8xf32>
    %194 = vector.shape_cast %190 : vector<8x8xf32> to vector<1x8x8xf32>
    %195 = vector.shape_cast %191 : vector<8x8xf32> to vector<1x8x8xf32>
    %196 = vector.shape_cast %192 : vector<8x8xf32> to vector<1x8x8xf32>
    %197 = tpu.concatenate %193, %194, %195, %196 in 0 : vector<1x8x8xf32>, vector<1x8x8xf32>, vector<1x8x8xf32>, vector<1x8x8xf32> -> vector<4x8x8xf32>
    %198 = vector.shape_cast %128 : vector<8x8xf32> to vector<1x8x8xf32>
    %199 = vector.broadcast %198 : vector<1x8x8xf32> to vector<4x8x8xf32>
    %200 = arith.mulf %197, %199 : vector<4x8x8xf32>
    %201 = vector.extract_strided_slice %197 {offsets = [0, 0, 4], sizes = [4, 8, 4], strides = [1, 1, 1]} : vector<4x8x8xf32> to vector<4x8x4xf32>
    %202 = vector.extract_strided_slice %197 {offsets = [0, 0, 0], sizes = [4, 8, 4], strides = [1, 1, 1]} : vector<4x8x8xf32> to vector<4x8x4xf32>
    %203 = tpu.concatenate %201, %202 in 2 : vector<4x8x4xf32>, vector<4x8x4xf32> -> vector<4x8x8xf32>
    %204 = vector.shape_cast %129 : vector<8x8xf32> to vector<1x8x8xf32>
    %205 = vector.broadcast %204 : vector<1x8x8xf32> to vector<4x8x8xf32>
    %206 = arith.mulf %203, %205 : vector<4x8x8xf32>
    %207 = arith.addf %200, %206 : vector<4x8x8xf32>
    %208 = vector.extract_strided_slice %169 {offsets = [0, 0], sizes = [8, 8], strides = [1, 1]} : vector<8x32xf32> to vector<8x8xf32>
    %209 = vector.extract_strided_slice %169 {offsets = [0, 8], sizes = [8, 8], strides = [1, 1]} : vector<8x32xf32> to vector<8x8xf32>
    %210 = vector.extract_strided_slice %169 {offsets = [0, 16], sizes = [8, 8], strides = [1, 1]} : vector<8x32xf32> to vector<8x8xf32>
    %211 = vector.extract_strided_slice %169 {offsets = [0, 24], sizes = [8, 8], strides = [1, 1]} : vector<8x32xf32> to vector<8x8xf32>
    %212 = vector.shape_cast %208 : vector<8x8xf32> to vector<1x8x8xf32>
    %213 = vector.shape_cast %209 : vector<8x8xf32> to vector<1x8x8xf32>
    %214 = vector.shape_cast %210 : vector<8x8xf32> to vector<1x8x8xf32>
    %215 = vector.shape_cast %211 : vector<8x8xf32> to vector<1x8x8xf32>
    %216 = tpu.concatenate %212, %213, %214, %215 in 0 : vector<1x8x8xf32>, vector<1x8x8xf32>, vector<1x8x8xf32>, vector<1x8x8xf32> -> vector<4x8x8xf32>
    %217 = arith.truncf %188 : vector<4x8x8xf32> to vector<4x8x8xbf16>
    %218 = arith.truncf %207 : vector<4x8x8xf32> to vector<4x8x8xbf16>
    "tpu.trace_start"() <{level = 10 : i32, message = "hqd,hkd->hqk"}> : () -> ()
    %cst_65 = arith.constant dense<0.000000e+00> : vector<4x8x8xf32>
    %219 = tpu.matmul %217, %218, %cst_65 {dimension_numbers = #tpu.dot_dimension_numbers<[2], [2], [1], [1], [0, 0, 0, 1, 1, 1], [0], [0]>} : vector<4x8x8xbf16>, vector<4x8x8xbf16>, vector<4x8x8xf32> -> vector<4x8x8xf32>
    "tpu.trace_stop"() : () -> ()
    %cst_66 = arith.constant 0.353553385 : f32
    %220 = vector.broadcast %cst_66 : f32 to vector<4x8x8xf32>
    %221 = arith.mulf %219, %220 : vector<4x8x8xf32>
    %222 = vector.broadcast %125 : vector<1x1x8xf32> to vector<4x8x8xf32>
    %223 = arith.addf %221, %222 : vector<4x8x8xf32>
    %cst_67 = arith.constant dense<0xFF800000> : vector<4x8xf32>
    %224 = vector.multi_reduction <maximumf>, %223, %cst_67 [2] : vector<4x8x8xf32> to vector<4x8xf32>
    %225 = vector.shape_cast %224 : vector<4x8xf32> to vector<4x8x1xf32>
    %226 = vector.broadcast %225 : vector<4x8x1xf32> to vector<4x8x8xf32>
    %227 = arith.subf %223, %226 : vector<4x8x8xf32>
    %228 = math.exp %227 : vector<4x8x8xf32>
    %cst_68 = arith.constant dense<0.000000e+00> : vector<4x8xf32>
    %229 = vector.multi_reduction <add>, %228, %cst_68 [2] : vector<4x8x8xf32> to vector<4x8xf32>
    %230 = vector.shape_cast %229 : vector<4x8xf32> to vector<4x8x1xf32>
    %231 = arith.truncf %228 : vector<4x8x8xf32> to vector<4x8x8xbf16>
    %232 = arith.truncf %216 : vector<4x8x8xf32> to vector<4x8x8xbf16>
    "tpu.trace_start"() <{level = 10 : i32, message = "hqk,hkd->hqd"}> : () -> ()
    %cst_69 = arith.constant dense<0.000000e+00> : vector<4x8x8xf32>
    %233 = tpu.matmul %231, %232, %cst_69 {dimension_numbers = #tpu.dot_dimension_numbers<[2], [1], [1], [2], [0, 0, 0, 1, 1, 2], [0], [0]>} : vector<4x8x8xbf16>, vector<4x8x8xbf16>, vector<4x8x8xf32> -> vector<4x8x8xf32>
    "tpu.trace_stop"() : () -> ()
    %234 = tpu.reciprocal %230 {approx = true} : vector<4x8x1xf32> -> vector<4x8x1xf32>
    %235 = vector.broadcast %234 : vector<4x8x1xf32> to vector<4x8x8xf32>
    %236 = arith.mulf %233, %235 : vector<4x8x8xf32>
    %237 = vector.extract_strided_slice %236 {offsets = [0, 0, 0], sizes = [1, 8, 8], strides = [1, 1, 1]} : vector<4x8x8xf32> to vector<1x8x8xf32>
    %238 = vector.shape_cast %237 : vector<1x8x8xf32> to vector<8x8xf32>
    %239 = vector.extract_strided_slice %236 {offsets = [1, 0, 0], sizes = [1, 8, 8], strides = [1, 1, 1]} : vector<4x8x8xf32> to vector<1x8x8xf32>
    %240 = vector.shape_cast %239 : vector<1x8x8xf32> to vector<8x8xf32>
    %241 = vector.extract_strided_slice %236 {offsets = [2, 0, 0], sizes = [1, 8, 8], strides = [1, 1, 1]} : vector<4x8x8xf32> to vector<1x8x8xf32>
    %242 = vector.shape_cast %241 : vector<1x8x8xf32> to vector<8x8xf32>
    %243 = vector.extract_strided_slice %236 {offsets = [3, 0, 0], sizes = [1, 8, 8], strides = [1, 1, 1]} : vector<4x8x8xf32> to vector<1x8x8xf32>
    %244 = vector.shape_cast %243 : vector<1x8x8xf32> to vector<8x8xf32>
    %245 = tpu.concatenate %238, %240, %242, %244 in 1 : vector<8x8xf32>, vector<8x8xf32>, vector<8x8xf32>, vector<8x8xf32> -> vector<8x32xf32>
    %c0_70 = arith.constant 0 : index
    %c0_71 = arith.constant 0 : index
    %246 = vector.load %arg14[%c0_70, %c0_71] : memref<32x32xbf16, #tpu.memory_space<vmem>>, vector<32x32xbf16>
    %247 = arith.truncf %245 : vector<8x32xf32> to vector<8x32xbf16>
    %cst_72 = arith.constant dense<0.000000e+00> : vector<8x32xf32>
    %248 = tpu.matmul %247, %246, %cst_72 {dimension_numbers = #tpu.dot_dimension_numbers<[1], [0], [0], [1], [0, 0, 1, 1], [], []>} : vector<8x32xbf16>, vector<32x32xbf16>, vector<8x32xf32> -> vector<8x32xf32>
    %c0_73 = arith.constant 0 : index
    %c0_74 = arith.constant 0 : index
    %249 = vector.load %arg15[%c0_73, %c0_74] : memref<1x32xf32, #tpu.memory_space<vmem>>, vector<1x32xf32>
    %250 = vector.broadcast %249 : vector<1x32xf32> to vector<8x32xf32>
    %251 = arith.addf %248, %250 : vector<8x32xf32>
    %252 = arith.addf %124, %251 : vector<8x32xf32>
    %c0_75 = arith.constant 0 : index
    %c0_76 = arith.constant 0 : index
    %253 = vector.load %arg21[%c0_75, %c0_76] : memref<1x32xf32, #tpu.memory_space<vmem>>, vector<1x32xf32>
    %c0_77 = arith.constant 0 : index
    %c0_78 = arith.constant 0 : index
    %254 = vector.load %arg22[%c0_77, %c0_78] : memref<1x32xf32, #tpu.memory_space<vmem>>, vector<1x32xf32>
    %cst_79 = arith.constant dense<0.000000e+00> : vector<8xf32>
    %255 = vector.multi_reduction <add>, %252, %cst_79 [1] : vector<8x32xf32> to vector<8xf32>
    %256 = vector.shape_cast %255 : vector<8xf32> to vector<8x1xf32>
    %cst_80 = arith.constant 3.200000e+01 : f32
    %257 = vector.broadcast %cst_80 : f32 to vector<8x1xf32>
    %258 = arith.divf %256, %257 : vector<8x1xf32>
    %259 = vector.broadcast %258 : vector<8x1xf32> to vector<8x32xf32>
    %260 = arith.subf %252, %259 : vector<8x32xf32>
    %261 = arith.mulf %260, %260 : vector<8x32xf32>
    %cst_81 = arith.constant dense<0.000000e+00> : vector<8xf32>
    %262 = vector.multi_reduction <add>, %261, %cst_81 [1] : vector<8x32xf32> to vector<8xf32>
    %263 = vector.shape_cast %262 : vector<8xf32> to vector<8x1xf32>
    %cst_82 = arith.constant 3.200000e+01 : f32
    %264 = vector.broadcast %cst_82 : f32 to vector<8x1xf32>
    %265 = arith.divf %263, %264 : vector<8x1xf32>
    %266 = vector.broadcast %258 : vector<8x1xf32> to vector<8x32xf32>
    %267 = arith.subf %252, %266 : vector<8x32xf32>
    %cst_83 = arith.constant 9.99999974E-6 : f32
    %268 = vector.broadcast %cst_83 : f32 to vector<8x1xf32>
    %269 = arith.addf %265, %268 : vector<8x1xf32>
    %270 = math.rsqrt %269 : vector<8x1xf32>
    %271 = vector.broadcast %270 : vector<8x1xf32> to vector<8x32xf32>
    %272 = arith.mulf %267, %271 : vector<8x32xf32>
    %273 = vector.broadcast %253 : vector<1x32xf32> to vector<8x32xf32>
    %274 = arith.mulf %272, %273 : vector<8x32xf32>
    %275 = vector.broadcast %254 : vector<1x32xf32> to vector<8x32xf32>
    %276 = arith.addf %274, %275 : vector<8x32xf32>
    %c0_84 = arith.constant 0 : index
    %c0_85 = arith.constant 0 : index
    %277 = vector.load %arg23[%c0_84, %c0_85] : memref<32x128xbf16, #tpu.memory_space<vmem>>, vector<32x128xbf16>
    %278 = arith.truncf %276 : vector<8x32xf32> to vector<8x32xbf16>
    %cst_86 = arith.constant dense<0.000000e+00> : vector<8x128xf32>
    %279 = tpu.matmul %278, %277, %cst_86 {dimension_numbers = #tpu.dot_dimension_numbers<[1], [0], [0], [1], [0, 0, 1, 1], [], []>} : vector<8x32xbf16>, vector<32x128xbf16>, vector<8x128xf32> -> vector<8x128xf32>
    %c0_87 = arith.constant 0 : index
    %c0_88 = arith.constant 0 : index
    %280 = vector.load %arg24[%c0_87, %c0_88] : memref<1x128xf32, #tpu.memory_space<vmem>>, vector<1x128xf32>
    %281 = vector.broadcast %280 : vector<1x128xf32> to vector<8x128xf32>
    %282 = arith.addf %279, %281 : vector<8x128xf32>
    %cst_89 = arith.constant 5.000000e-01 : f32
    %283 = vector.broadcast %cst_89 : f32 to vector<8x128xf32>
    %284 = arith.mulf %283, %282 : vector<8x128xf32>
    %cst_90 = arith.constant 4.471500e-02 : f32
    %285 = vector.broadcast %cst_90 : f32 to vector<8x128xf32>
    %286 = arith.mulf %285, %282 : vector<8x128xf32>
    %287 = arith.mulf %286, %282 : vector<8x128xf32>
    %288 = arith.mulf %287, %282 : vector<8x128xf32>
    %289 = arith.addf %282, %288 : vector<8x128xf32>
    %cst_91 = arith.constant 0.797884583 : f32
    %290 = vector.broadcast %cst_91 : f32 to vector<8x128xf32>
    %291 = arith.mulf %290, %289 : vector<8x128xf32>
    %292 = math.tanh %291 : vector<8x128xf32>
    %cst_92 = arith.constant 1.000000e+00 : f32
    %293 = vector.broadcast %cst_92 : f32 to vector<8x128xf32>
    %294 = arith.addf %293, %292 : vector<8x128xf32>
    %295 = arith.mulf %284, %294 : vector<8x128xf32>
    %c0_93 = arith.constant 0 : index
    %c0_94 = arith.constant 0 : index
    %296 = vector.load %arg25[%c0_93, %c0_94] : memref<128x32xbf16, #tpu.memory_space<vmem>>, vector<128x32xbf16>
    %297 = arith.truncf %295 : vector<8x128xf32> to vector<8x128xbf16>
    %cst_95 = arith.constant dense<0.000000e+00> : vector<8x32xf32>
    %298 = tpu.matmul %297, %296, %cst_95 {dimension_numbers = #tpu.dot_dimension_numbers<[1], [0], [0], [1], [0, 0, 1, 1], [], []>} : vector<8x128xbf16>, vector<128x32xbf16>, vector<8x32xf32> -> vector<8x32xf32>
    %c0_96 = arith.constant 0 : index
    %c0_97 = arith.constant 0 : index
    %299 = vector.load %arg26[%c0_96, %c0_97] : memref<1x32xf32, #tpu.memory_space<vmem>>, vector<1x32xf32>
    %300 = vector.broadcast %299 : vector<1x32xf32> to vector<8x32xf32>
    %301 = arith.addf %298, %300 : vector<8x32xf32>
    %302 = arith.addf %252, %301 : vector<8x32xf32>
    %c0_98 = arith.constant 0 : index
    %c0_99 = arith.constant 0 : index
    %c0_100 = arith.constant 0 : index
    %303 = vector.load %arg27[%c0_98, %c0_99, %c0_100] : memref<1x8x32xf32, #tpu.memory_space<vmem>>, vector<1x8x32xf32>
    %304 = vector.shape_cast %303 : vector<1x8x32xf32> to vector<8x32xf32>
    %305 = vector.shape_cast %302 : vector<8x32xf32> to vector<1x8x32xf32>
    tpu.vector_store %arg27[%c0_98, %c0_99, %c0_100], %305 {strides = array<i32>} : memref<1x8x32xf32, #tpu.memory_space<vmem>>, vector<1x8x32xf32>,
    return
  }
  func.func @transform_0(%arg0: i32) -> (i32, i32, i32) {
    %c0_i32 = arith.constant 0 : i32
    %c0_i32_0 = arith.constant 0 : i32
    %c0_i32_1 = arith.constant 0 : i32
    return %arg0, %c0_i32, %c0_i32_0 : i32, i32, i32
  }
  func.func @transform_1(%arg0: i32) -> (i32, i32, i32) {
    %c0_i32 = arith.constant 0 : i32
    %c0_i32_0 = arith.constant 0 : i32
    %c0_i32_1 = arith.constant 0 : i32
    return %arg0, %c0_i32, %c0_i32_0 : i32, i32, i32
  }
  func.func @transform_2(%arg0: i32) -> (i32, i32) {
    %c0_i32 = arith.constant 0 : i32
    %c0_i32_0 = arith.constant 0 : i32
    %c0_i32_1 = arith.constant 0 : i32
    return %c0_i32, %c0_i32_0 : i32, i32
  }
  func.func @transform_3(%arg0: i32) -> (i32, i32) {
    %c0_i32 = arith.constant 0 : i32
    %c0_i32_0 = arith.constant 0 : i32
    %c0_i32_1 = arith.constant 0 : i32
    return %c0_i32, %c0_i32_0 : i32, i32
  }
  func.func @transform_4(%arg0: i32) -> (i32, i32) {
    %c0_i32 = arith.constant 0 : i32
    %c0_i32_0 = arith.constant 0 : i32
    %c0_i32_1 = arith.constant 0 : i32
    return %c0_i32, %c0_i32_0 : i32, i32
  }
  func.func @transform_5(%arg0: i32) -> (i32, i32) {
    %c0_i32 = arith.constant 0 : i32
    %c0_i32_0 = arith.constant 0 : i32
    %c0_i32_1 = arith.constant 0 : i32
    return %c0_i32, %c0_i32_0 : i32, i32
  }
  func.func @transform_6(%arg0: i32) -> (i32, i32) {
    %c0_i32 = arith.constant 0 : i32
    %c0_i32_0 = arith.constant 0 : i32
    %c0_i32_1 = arith.constant 0 : i32
    return %c0_i32, %c0_i32_0 : i32, i32
  }
  func.func @transform_7(%arg0: i32) -> (i32, i32) {
    %c0_i32 = arith.constant 0 : i32
    %c0_i32_0 = arith.constant 0 : i32
    %c0_i32_1 = arith.constant 0 : i32
    return %c0_i32, %c0_i32_0 : i32, i32
  }
  func.func @transform_8(%arg0: i32) -> (i32, i32, i32) {
    %c0_i32 = arith.constant 0 : i32
    %c0_i32_0 = arith.constant 0 : i32
    %c0_i32_1 = arith.constant 0 : i32
    return %arg0, %c0_i32, %c0_i32_0 : i32, i32, i32
  }
  func.func @transform_9(%arg0: i32) -> (i32, i32) {
    %c0_i32 = arith.constant 0 : i32
    %c0_i32_0 = arith.constant 0 : i32
    %c0_i32_1 = arith.constant 0 : i32
    return %c0_i32, %c0_i32_0 : i32, i32
  }
  func.func @transform_10(%arg0: i32) -> (i32, i32) {
    %c0_i32 = arith.constant 0 : i32
    %c0_i32_0 = arith.constant 0 : i32
    %c0_i32_1 = arith.constant 0 : i32
    return %c0_i32, %c0_i32_0 : i32, i32
  }
  func.func @transform_11(%arg0: i32) -> (i32, i32) {
    %c0_i32 = arith.constant 0 : i32
    %c0_i32_0 = arith.constant 0 : i32
    %c0_i32_1 = arith.constant 0 : i32
    return %c0_i32, %c0_i32_0 : i32, i32
  }
  func.func @transform_12(%arg0: i32) -> (i32, i32) {
    %c0_i32 = arith.constant 0 : i32
    %c0_i32_0 = arith.constant 0 : i32
    %c0_i32_1 = arith.constant 0 : i32
    return %c0_i32, %c0_i32_0 : i32, i32
  }
  func.func @transform_13(%arg0: i32) -> (i32, i32) {
    %c0_i32 = arith.constant 0 : i32
    %c0_i32_0 = arith.constant 0 : i32
    %c0_i32_1 = arith.constant 0 : i32
    return %c0_i32, %c0_i32_0 : i32, i32
  }
  func.func @transform_14(%arg0: i32) -> (i32, i32) {
    %c0_i32 = arith.constant 0 : i32
    %c0_i32_0 = arith.constant 0 : i32
    %c0_i32_1 = arith.constant 0 : i32
    return %c0_i32, %c0_i32_0 : i32, i32
  }
  func.func @transform_15(%arg0: i32) -> (i32, i32, i32) {
    %c0_i32 = arith.constant 0 : i32
    %c0_i32_0 = arith.constant 0 : i32
    %c0_i32_1 = arith.constant 0 : i32
    return %arg0, %c0_i32, %c0_i32_0 : i32, i32, i32
  }
  func.func @transform_16(%arg0: i32) -> (i32, i32) {
    %c0_i32 = arith.constant 0 : i32
    %c0_i32_0 = arith.constant 0 : i32
    %c0_i32_1 = arith.constant 0 : i32
    return %c0_i32, %c0_i32_0 : i32, i32
  }
  func.func @transform_17(%arg0: i32) -> (i32, i32) {
    %c0_i32 = arith.constant 0 : i32
    %c0_i32_0 = arith.constant 0 : i32
    %c0_i32_1 = arith.constant 0 : i32
    return %c0_i32, %c0_i32_0 : i32, i32
  }
  func.func @transform_18(%arg0: i32) -> (i32, i32) {
    %c0_i32 = arith.constant 0 : i32
    %c0_i32_0 = arith.constant 0 : i32
    %c0_i32_1 = arith.constant 0 : i32
    return %c0_i32, %c0_i32_0 : i32, i32
  }
  func.func @transform_19(%arg0: i32) -> (i32, i32) {
    %c0_i32 = arith.constant 0 : i32
    %c0_i32_0 = arith.constant 0 : i32
    %c0_i32_1 = arith.constant 0 : i32
    return %c0_i32, %c0_i32_0 : i32, i32
  }
  func.func @transform_20(%arg0: i32) -> (i32, i32) {
    %c0_i32 = arith.constant 0 : i32
    %c0_i32_0 = arith.constant 0 : i32
    %c0_i32_1 = arith.constant 0 : i32
    return %c0_i32, %c0_i32_0 : i32, i32
  }
  func.func @transform_21(%arg0: i32) -> (i32, i32) {
    %c0_i32 = arith.constant 0 : i32
    %c0_i32_0 = arith.constant 0 : i32
    %c0_i32_1 = arith.constant 0 : i32
    return %c0_i32, %c0_i32_0 : i32, i32
  }
  func.func @transform_22(%arg0: i32) -> (i32, i32) {
    %c0_i32 = arith.constant 0 : i32
    %c0_i32_0 = arith.constant 0 : i32
    %c0_i32_1 = arith.constant 0 : i32
    return %c0_i32, %c0_i32_0 : i32, i32
  }
  func.func @transform_23(%arg0: i32) -> (i32, i32) {
    %c0_i32 = arith.constant 0 : i32
    %c0_i32_0 = arith.constant 0 : i32
    %c0_i32_1 = arith.constant 0 : i32
    return %c0_i32, %c0_i32_0 : i32, i32
  }
  func.func @transform_24(%arg0: i32) -> (i32, i32) {
    %c0_i32 = arith.constant 0 : i32
    %c0_i32_0 = arith.constant 0 : i32
    %c0_i32_1 = arith.constant 0 : i32
    return %c0_i32, %c0_i32_0 : i32, i32
  }
  func.func @transform_25(%arg0: i32) -> (i32, i32) {
    %c0_i32 = arith.constant 0 : i32
    %c0_i32_0 = arith.constant 0 : i32
    %c0_i32_1 = arith.constant 0 : i32
    return %c0_i32, %c0_i32_0 : i32, i32
  }
  func.func @transform_26(%arg0: i32) -> (i32, i32, i32) {
    %c0_i32 = arith.constant 0 : i32
    %c0_i32_0 = arith.constant 0 : i32
    %c0_i32_1 = arith.constant 0 : i32
    return %arg0, %c0_i32, %c0_i32_0 : i32, i32, i32
  }
}

module attributes {stable_mosaic.version = 11 : i64} {
  func.func @_lm_head_kernel(%arg0: i32, %arg1: memref<32x32xf32, #tpu.memory_space<vmem>>, %arg2: memref<32x32xbf16, #tpu.memory_space<vmem>>, %arg3: memref<1x32xf32, #tpu.memory_space<vmem>>, %arg4: memref<1x32xf32, #tpu.memory_space<vmem>>, %arg5: memref<1x32xf32, #tpu.memory_space<vmem>>, %arg6: memref<32x128xbf16, #tpu.memory_space<vmem>>, %arg7: memref<1x128xf32, #tpu.memory_space<vmem>>, %arg8: memref<32x128xf32, #tpu.memory_space<vmem>>) attributes {dimension_semantics = [#tpu.dimension_semantics<parallel>], iteration_bounds = array<i64: 1>, scalar_prefetch = 0 : i64, scratch_operands = 0 : i64, tpu.core_type = #tpu.core_type<tc>, window_params = [{transform_indices = @transform_0, window_bounds = array<i64: 32, 32>}, {pipeline_mode = #tpu.pipeline_mode<synchronous>, transform_indices = @transform_1, window_bounds = array<i64: 32, 32>}, {pipeline_mode = #tpu.pipeline_mode<synchronous>, transform_indices = @transform_2, window_bounds = array<i64: 1, 32>}, {pipeline_mode = #tpu.pipeline_mode<synchronous>, transform_indices = @transform_3, window_bounds = array<i64: 1, 32>}, {pipeline_mode = #tpu.pipeline_mode<synchronous>, transform_indices = @transform_4, window_bounds = array<i64: 1, 32>}, {pipeline_mode = #tpu.pipeline_mode<synchronous>, transform_indices = @transform_5, window_bounds = array<i64: 32, 128>}, {pipeline_mode = #tpu.pipeline_mode<synchronous>, transform_indices = @transform_6, window_bounds = array<i64: 1, 128>}, {transform_indices = @transform_7, window_bounds = array<i64: 32, 128>}]} {
    %c0 = arith.constant 0 : index
    %c0_0 = arith.constant 0 : index
    %0 = vector.load %arg1[%c0, %c0_0] : memref<32x32xf32, #tpu.memory_space<vmem>>, vector<32x32xf32>
    %c0_1 = arith.constant 0 : index
    %c0_2 = arith.constant 0 : index
    %1 = vector.load %arg2[%c0_1, %c0_2] : memref<32x32xbf16, #tpu.memory_space<vmem>>, vector<32x32xbf16>
    %2 = arith.truncf %0 : vector<32x32xf32> to vector<32x32xbf16>
    %cst = arith.constant dense<0.000000e+00> : vector<32x32xf32>
    %3 = tpu.matmul %2, %1, %cst {dimension_numbers = #tpu.dot_dimension_numbers<[1], [0], [0], [1], [0, 0, 1, 1], [], []>} : vector<32x32xbf16>, vector<32x32xbf16>, vector<32x32xf32> -> vector<32x32xf32>
    %c0_3 = arith.constant 0 : index
    %c0_4 = arith.constant 0 : index
    %4 = vector.load %arg3[%c0_3, %c0_4] : memref<1x32xf32, #tpu.memory_space<vmem>>, vector<1x32xf32>
    %5 = vector.broadcast %4 : vector<1x32xf32> to vector<32x32xf32>
    %6 = arith.addf %3, %5 : vector<32x32xf32>
    %cst_5 = arith.constant 5.000000e-01 : f32
    %7 = vector.broadcast %cst_5 : f32 to vector<32x32xf32>
    %8 = arith.mulf %7, %6 : vector<32x32xf32>
    %cst_6 = arith.constant 4.471500e-02 : f32
    %9 = vector.broadcast %cst_6 : f32 to vector<32x32xf32>
    %10 = arith.mulf %9, %6 : vector<32x32xf32>
    %11 = arith.mulf %10, %6 : vector<32x32xf32>
    %12 = arith.mulf %11, %6 : vector<32x32xf32>
    %13 = arith.addf %6, %12 : vector<32x32xf32>
    %cst_7 = arith.constant 0.797884583 : f32
    %14 = vector.broadcast %cst_7 : f32 to vector<32x32xf32>
    %15 = arith.mulf %14, %13 : vector<32x32xf32>
    %16 = math.tanh %15 : vector<32x32xf32>
    %cst_8 = arith.constant 1.000000e+00 : f32
    %17 = vector.broadcast %cst_8 : f32 to vector<32x32xf32>
    %18 = arith.addf %17, %16 : vector<32x32xf32>
    %19 = arith.mulf %8, %18 : vector<32x32xf32>
    %c0_9 = arith.constant 0 : index
    %c0_10 = arith.constant 0 : index
    %20 = vector.load %arg4[%c0_9, %c0_10] : memref<1x32xf32, #tpu.memory_space<vmem>>, vector<1x32xf32>
    %c0_11 = arith.constant 0 : index
    %c0_12 = arith.constant 0 : index
    %21 = vector.load %arg5[%c0_11, %c0_12] : memref<1x32xf32, #tpu.memory_space<vmem>>, vector<1x32xf32>
    %cst_13 = arith.constant dense<0.000000e+00> : vector<32xf32>
    %22 = vector.multi_reduction <add>, %19, %cst_13 [1] : vector<32x32xf32> to vector<32xf32>
    %23 = vector.shape_cast %22 : vector<32xf32> to vector<32x1xf32>
    %cst_14 = arith.constant 3.200000e+01 : f32
    %24 = vector.broadcast %cst_14 : f32 to vector<32x1xf32>
    %25 = arith.divf %23, %24 : vector<32x1xf32>
    %26 = vector.broadcast %25 : vector<32x1xf32> to vector<32x32xf32>
    %27 = arith.subf %19, %26 : vector<32x32xf32>
    %28 = arith.mulf %27, %27 : vector<32x32xf32>
    %cst_15 = arith.constant dense<0.000000e+00> : vector<32xf32>
    %29 = vector.multi_reduction <add>, %28, %cst_15 [1] : vector<32x32xf32> to vector<32xf32>
    %30 = vector.shape_cast %29 : vector<32xf32> to vector<32x1xf32>
    %cst_16 = arith.constant 3.200000e+01 : f32
    %31 = vector.broadcast %cst_16 : f32 to vector<32x1xf32>
    %32 = arith.divf %30, %31 : vector<32x1xf32>
    %33 = vector.broadcast %25 : vector<32x1xf32> to vector<32x32xf32>
    %34 = arith.subf %19, %33 : vector<32x32xf32>
    %cst_17 = arith.constant 9.99999974E-6 : f32
    %35 = vector.broadcast %cst_17 : f32 to vector<32x1xf32>
    %36 = arith.addf %32, %35 : vector<32x1xf32>
    %37 = math.rsqrt %36 : vector<32x1xf32>
    %38 = vector.broadcast %37 : vector<32x1xf32> to vector<32x32xf32>
    %39 = arith.mulf %34, %38 : vector<32x32xf32>
    %40 = vector.broadcast %20 : vector<1x32xf32> to vector<32x32xf32>
    %41 = arith.mulf %39, %40 : vector<32x32xf32>
    %42 = vector.broadcast %21 : vector<1x32xf32> to vector<32x32xf32>
    %43 = arith.addf %41, %42 : vector<32x32xf32>
    %c0_18 = arith.constant 0 : index
    %c0_19 = arith.constant 0 : index
    %44 = vector.load %arg6[%c0_18, %c0_19] : memref<32x128xbf16, #tpu.memory_space<vmem>>, vector<32x128xbf16>
    %45 = arith.truncf %43 : vector<32x32xf32> to vector<32x32xbf16>
    %cst_20 = arith.constant dense<0.000000e+00> : vector<32x128xf32>
    %46 = tpu.matmul %45, %44, %cst_20 {dimension_numbers = #tpu.dot_dimension_numbers<[1], [0], [0], [1], [0, 0, 1, 1], [], []>} : vector<32x32xbf16>, vector<32x128xbf16>, vector<32x128xf32> -> vector<32x128xf32>
    %c0_21 = arith.constant 0 : index
    %c0_22 = arith.constant 0 : index
    %47 = vector.load %arg7[%c0_21, %c0_22] : memref<1x128xf32, #tpu.memory_space<vmem>>, vector<1x128xf32>
    %48 = vector.broadcast %47 : vector<1x128xf32> to vector<32x128xf32>
    %49 = arith.addf %46, %48 : vector<32x128xf32>
    %c0_23 = arith.constant 0 : index
    %c0_24 = arith.constant 0 : index
    %50 = vector.load %arg8[%c0_23, %c0_24] : memref<32x128xf32, #tpu.memory_space<vmem>>, vector<32x128xf32>
    tpu.vector_store %arg8[%c0_23, %c0_24], %49 {strides = array<i32>} : memref<32x128xf32, #tpu.memory_space<vmem>>, vector<32x128xf32>,
    return
  }
  func.func @transform_0(%arg0: i32) -> (i32, i32) {
    %c0_i32 = arith.constant 0 : i32
    %c0_i32_0 = arith.constant 0 : i32
    return %arg0, %c0_i32 : i32, i32
  }
  func.func @transform_1(%arg0: i32) -> (i32, i32) {
    %c0_i32 = arith.constant 0 : i32
    %c0_i32_0 = arith.constant 0 : i32
    %c0_i32_1 = arith.constant 0 : i32
    return %c0_i32, %c0_i32_0 : i32, i32
  }
  func.func @transform_2(%arg0: i32) -> (i32, i32) {
    %c0_i32 = arith.constant 0 : i32
    %c0_i32_0 = arith.constant 0 : i32
    %c0_i32_1 = arith.constant 0 : i32
    return %c0_i32, %c0_i32_0 : i32, i32
  }
  func.func @transform_3(%arg0: i32) -> (i32, i32) {
    %c0_i32 = arith.constant 0 : i32
    %c0_i32_0 = arith.constant 0 : i32
    %c0_i32_1 = arith.constant 0 : i32
    return %c0_i32, %c0_i32_0 : i32, i32
  }
  func.func @transform_4(%arg0: i32) -> (i32, i32) {
    %c0_i32 = arith.constant 0 : i32
    %c0_i32_0 = arith.constant 0 : i32
    %c0_i32_1 = arith.constant 0 : i32
    return %c0_i32, %c0_i32_0 : i32, i32
  }
  func.func @transform_5(%arg0: i32) -> (i32, i32) {
    %c0_i32 = arith.constant 0 : i32
    %c0_i32_0 = arith.constant 0 : i32
    %c0_i32_1 = arith.constant 0 : i32
    return %c0_i32, %c0_i32_0 : i32, i32
  }
  func.func @transform_6(%arg0: i32) -> (i32, i32) {
    %c0_i32 = arith.constant 0 : i32
    %c0_i32_0 = arith.constant 0 : i32
    %c0_i32_1 = arith.constant 0 : i32
    return %c0_i32, %c0_i32_0 : i32, i32
  }
  func.func @transform_7(%arg0: i32) -> (i32, i32) {
    %c0_i32 = arith.constant 0 : i32
    %c0_i32_0 = arith.constant 0 : i32
    return %arg0, %c0_i32 : i32, i32
  }
}

</mosaic_0001>

<llo_original>
// kernel: forward.5
$region0: #{forward.5}
  #allocation0 [shape = 'u32[]', space=smem, size = 0x4, offset = 0x4, fixed_abs, tag = 'smem constant byte address 0x4 - core index']
  #allocation1 [shape = 'u32[72,128]{1,0:T(1,128)}', space=vmem, size = 0x9000, scoped, tag = 'internal scratch']
  %s0 = inlined_call_operand.vmem [shape: f32[2,8,32], index: 0, kind: input, shape index: {}, may-alias: {0,18}]
  %s1 = inlined_call_operand.vmem [shape: f32[1,32], index: 1, kind: input, shape index: {}]
  %s2 = inlined_call_operand.vmem [shape: f32[1,32], index: 2, kind: input, shape index: {}]
  %s3 = inlined_call_operand.vmem [shape: f32[1,32], index: 3, kind: input, shape index: {}]
  %s4 = inlined_call_operand.vmem [shape: f32[1,32], index: 4, kind: input, shape index: {}]
  %s5 = inlined_call_operand.vmem [shape: bf16[32,96], index: 5, kind: input, shape index: {}]
  %s6 = inlined_call_operand.vmem [shape: f32[1,96], index: 6, kind: input, shape index: {}]
  %s7 = inlined_call_operand.vmem [shape: bf16[32,32], index: 7, kind: input, shape index: {}]
  %s8 = inlined_call_operand.vmem [shape: f32[1,32], index: 8, kind: input, shape index: {}]
  %s9 = inlined_call_operand.vmem [shape: f32[2,1,8], index: 9, kind: input, shape index: {}]
  %s10 = inlined_call_operand.vmem [shape: f32[8,8], index: 10, kind: input, shape index: {}]
  %s11 = inlined_call_operand.vmem [shape: f32[8,8], index: 11, kind: input, shape index: {}]
  %s12 = inlined_call_operand.vmem [shape: f32[1,32], index: 12, kind: input, shape index: {}]
  %s13 = inlined_call_operand.vmem [shape: f32[1,32], index: 13, kind: input, shape index: {}]
  %s14 = inlined_call_operand.vmem [shape: bf16[32,128], index: 14, kind: input, shape index: {}]
  %s15 = inlined_call_operand.vmem [shape: f32[1,128], index: 15, kind: input, shape index: {}]
  %s16 = inlined_call_operand.vmem [shape: bf16[128,32], index: 16, kind: input, shape index: {}]
  %s17 = inlined_call_operand.vmem [shape: f32[1,32], index: 17, kind: input, shape index: {}]
  %s18 = inlined_call_operand.vmem [shape: f32[2,8,32], index: 18, kind: output, shape index: {}, may-alias: {0,18}]
  %s19 = sld [smem:[#allocation0]]
  $region105: #{forward.5} parent=0
    _
  %s21 = ssub.s32 1, %s19
  %s22 = scalar_select 0, %s21, %s19
  loop: start=0, step=1, limit=4
  $region2: #{forward.5} parent=0 // loop_pre_header
    _
  $region3: #{forward.5} parent=0 // loop_header
    %s24 = sphi 0, %s28
    %p25 = scmp.ge.s32.totalorder %s24, 4
    %s34 = sphi 0, %s36
    %s37 = sphi 0, %s34
    %s38 = sphi 0, %s37
    %s54 = sphi 0, %s38
    %s58 = sphi 0, %s58
    %s60 = sphi 0, %s58
    %s61 = sphi 0, %s60
    %s75 = sphi 0, %s61
    %s79 = sphi 0, %s79
    %s81 = sphi 0, %s79
    %s82 = sphi 0, %s81
    %s96 = sphi 0, %s82
    %s100 = sphi 0, %s100
    %s102 = sphi 0, %s100
    %s103 = sphi 0, %s102
    %s117 = sphi 0, %s103
    %s121 = sphi 0, %s121
    %s123 = sphi 0, %s121
    %s124 = sphi 0, %s123
    %s138 = sphi 0, %s124
    %s142 = sphi 0, %s142
    %s144 = sphi 0, %s142
    %s145 = sphi 0, %s144
    %s159 = sphi 0, %s145
    %s163 = sphi 0, %s163
    %s165 = sphi 0, %s163
    %s166 = sphi 0, %s165
    %s180 = sphi 0, %s166
    %s184 = sphi 0, %s184
    %s186 = sphi 0, %s184
    %s187 = sphi 0, %s186
    %s201 = sphi 0, %s187
    %s205 = sphi 0, %s205
    %s207 = sphi 0, %s205
    %s208 = sphi 0, %s207
    %s222 = sphi 0, %s208
    %s228 = sphi 0, %s230
    %s231 = sphi 0, %s228
    %s232 = sphi 0, %s231
    %s248 = sphi 0, %s232
    %s252 = sphi 0, %s252
    %s254 = sphi 0, %s252
    %s255 = sphi 0, %s254
    %s269 = sphi 0, %s255
    %s273 = sphi 0, %s273
    %s275 = sphi 0, %s273
    %s276 = sphi 0, %s275
    %s290 = sphi 0, %s276
    %s294 = sphi 0, %s294
    %s296 = sphi 0, %s294
    %s297 = sphi 0, %s296
    %s311 = sphi 0, %s297
    %s315 = sphi 0, %s315
    %s317 = sphi 0, %s315
    %s318 = sphi 0, %s317
    %s332 = sphi 0, %s318
    %s336 = sphi 0, %s336
    %s338 = sphi 0, %s336
    %s339 = sphi 0, %s338
    %s353 = sphi 0, %s339
    %s357 = sphi 0, %s357
    %s359 = sphi 0, %s357
    %s360 = sphi 0, %s359
    %s374 = sphi 0, %s360
    %s378 = sphi 0, %s378
    %s380 = sphi 0, %s378
    %s381 = sphi 0, %s380
    %s395 = sphi 0, %s381
    %s399 = sphi 0, %s399
    %s401 = sphi 0, %s399
    %s402 = sphi 0, %s401
    %s416 = sphi 0, %s402
    %s422 = sphi 0, %s424
    %s425 = sphi 0, %s422
    %s426 = sphi 0, %s425
    %s442 = sphi 0, %s426
  $region4: #{forward.5} parent=0 // loop_header_branch
    %27 = sbr.rel (%p25) target = $region8
  $region5: #{forward.5} parent=0 // loop_body
    %s29 = ssub.s32 %s24, 1
    %s30 = ssub.s32 %s24, 2
    %s31 = sadd.s32 %s24, 1
    %s32 = ssub.s32 %s24, %s31
    %p33 = scmp.eq.s32.totalorder %s32, 0
    %s35 = sadd.s32 %s34, 1
    %s36 = scalar_select %p33, %s34, %s35
    %p39 = pneg %p33
    %p40 = scmp.eq.s32.totalorder %s24, 1
    %p41 = por %p39, %p40
    %p42 = scmp.ne.s32.totalorder %s34, %s37
    %p43 = scmp.eq.s32.totalorder %s24, 0
    %p44 = por %p42, %p43
    %p45 = scmp.ne.s32.totalorder %s34, %s37
    %p46 = scmp.eq.s32.totalorder %s29, 1
    %p47 = por %p45, %p46
    %p48 = scmp.ne.s32.totalorder %s37, %s38
    %p49 = scmp.eq.s32.totalorder %s29, 0
    %p50 = por %p48, %p49
    %p51 = scmp.ne.s32.totalorder %s37, %s38
    %p52 = scmp.eq.s32.totalorder %s30, 1
    %p53 = por %p51, %p52
    %p55 = scmp.ne.s32.totalorder %s38, %s54
    %p56 = scmp.eq.s32.totalorder %s30, 0
    %p57 = por %p55, %p56
    %s59 = sadd.s32 %s58, 1
    %p62 = scmp.eq.s32.totalorder %s24, 1
    %p63 = scmp.ne.s32.totalorder %s58, %s60
    %p64 = scmp.eq.s32.totalorder %s24, 0
    %p65 = por %p63, %p64
    %p66 = scmp.ne.s32.totalorder %s58, %s60
    %p67 = scmp.eq.s32.totalorder %s29, 1
    %p68 = por %p66, %p67
    %p69 = scmp.ne.s32.totalorder %s60, %s61
    %p70 = scmp.eq.s32.totalorder %s29, 0
    %p71 = por %p69, %p70
    %p72 = scmp.ne.s32.totalorder %s60, %s61
    %p73 = scmp.eq.s32.totalorder %s30, 1
    %p74 = por %p72, %p73
    %p76 = scmp.ne.s32.totalorder %s61, %s75
    %p77 = scmp.eq.s32.totalorder %s30, 0
    %p78 = por %p76, %p77
    %s80 = sadd.s32 %s79, 1
    %p83 = scmp.eq.s32.totalorder %s24, 1
    %p84 = scmp.ne.s32.totalorder %s79, %s81
    %p85 = scmp.eq.s32.totalorder %s24, 0
    %p86 = por %p84, %p85
    %p87 = scmp.ne.s32.totalorder %s79, %s81
    %p88 = scmp.eq.s32.totalorder %s29, 1
    %p89 = por %p87, %p88
    %p90 = scmp.ne.s32.totalorder %s81, %s82
    %p91 = scmp.eq.s32.totalorder %s29, 0
    %p92 = por %p90, %p91
    %p93 = scmp.ne.s32.totalorder %s81, %s82
    %p94 = scmp.eq.s32.totalorder %s30, 1
    %p95 = por %p93, %p94
    %p97 = scmp.ne.s32.totalorder %s82, %s96
    %p98 = scmp.eq.s32.totalorder %s30, 0
    %p99 = por %p97, %p98
    %s101 = sadd.s32 %s100, 1
    %p104 = scmp.eq.s32.totalorder %s24, 1
    %p105 = scmp.ne.s32.totalorder %s100, %s102
    %p106 = scmp.eq.s32.totalorder %s24, 0
    %p107 = por %p105, %p106
    %p108 = scmp.ne.s32.totalorder %s100, %s102
    %p109 = scmp.eq.s32.totalorder %s29, 1
    %p110 = por %p108, %p109
    %p111 = scmp.ne.s32.totalorder %s102, %s103
    %p112 = scmp.eq.s32.totalorder %s29, 0
    %p113 = por %p111, %p112
    %p114 = scmp.ne.s32.totalorder %s102, %s103
    %p115 = scmp.eq.s32.totalorder %s30, 1
    %p116 = por %p114, %p115
    %p118 = scmp.ne.s32.totalorder %s103, %s117
    %p119 = scmp.eq.s32.totalorder %s30, 0
    %p120 = por %p118, %p119
    %s122 = sadd.s32 %s121, 1
    %p125 = scmp.eq.s32.totalorder %s24, 1
    %p126 = scmp.ne.s32.totalorder %s121, %s123
    %p127 = scmp.eq.s32.totalorder %s24, 0
    %p128 = por %p126, %p127
    %p129 = scmp.ne.s32.totalorder %s121, %s123
    %p130 = scmp.eq.s32.totalorder %s29, 1
    %p131 = por %p129, %p130
    %p132 = scmp.ne.s32.totalorder %s123, %s124
    %p133 = scmp.eq.s32.totalorder %s29, 0
    %p134 = por %p132, %p133
    %p135 = scmp.ne.s32.totalorder %s123, %s124
    %p136 = scmp.eq.s32.totalorder %s30, 1
    %p137 = por %p135, %p136
    %p139 = scmp.ne.s32.totalorder %s124, %s138
    %p140 = scmp.eq.s32.totalorder %s30, 0
    %p141 = por %p139, %p140
    %s143 = sadd.s32 %s142, 1
    %p146 = scmp.eq.s32.totalorder %s24, 1
    %p147 = scmp.ne.s32.totalorder %s142, %s144
    %p148 = scmp.eq.s32.totalorder %s24, 0
    %p149 = por %p147, %p148
    %p150 = scmp.ne.s32.totalorder %s142, %s144
    %p151 = scmp.eq.s32.totalorder %s29, 1
    %p152 = por %p150, %p151
    %p153 = scmp.ne.s32.totalorder %s144, %s145
    %p154 = scmp.eq.s32.totalorder %s29, 0
    %p155 = por %p153, %p154
    %p156 = scmp.ne.s32.totalorder %s144, %s145
    %p157 = scmp.eq.s32.totalorder %s30, 1
    %p158 = por %p156, %p157
    %p160 = scmp.ne.s32.totalorder %s145, %s159
    %p161 = scmp.eq.s32.totalorder %s30, 0
    %p162 = por %p160, %p161
    %s164 = sadd.s32 %s163, 1
    %p167 = scmp.eq.s32.totalorder %s24, 1
    %p168 = scmp.ne.s32.totalorder %s163, %s165
    %p169 = scmp.eq.s32.totalorder %s24, 0
    %p170 = por %p168, %p169
    %p171 = scmp.ne.s32.totalorder %s163, %s165
    %p172 = scmp.eq.s32.totalorder %s29, 1
    %p173 = por %p171, %p172
    %p174 = scmp.ne.s32.totalorder %s165, %s166
    %p175 = scmp.eq.s32.totalorder %s29, 0
    %p176 = por %p174, %p175
    %p177 = scmp.ne.s32.totalorder %s165, %s166
    %p178 = scmp.eq.s32.totalorder %s30, 1
    %p179 = por %p177, %p178
    %p181 = scmp.ne.s32.totalorder %s166, %s180
    %p182 = scmp.eq.s32.totalorder %s30, 0
    %p183 = por %p181, %p182
    %s185 = sadd.s32 %s184, 1
    %p188 = scmp.eq.s32.totalorder %s24, 1
    %p189 = scmp.ne.s32.totalorder %s184, %s186
    %p190 = scmp.eq.s32.totalorder %s24, 0
    %p191 = por %p189, %p190
    %p192 = scmp.ne.s32.totalorder %s184, %s186
    %p193 = scmp.eq.s32.totalorder %s29, 1
    %p194 = por %p192, %p193
    %p195 = scmp.ne.s32.totalorder %s186, %s187
    %p196 = scmp.eq.s32.totalorder %s29, 0
    %p197 = por %p195, %p196
    %p198 = scmp.ne.s32.totalorder %s186, %s187
    %p199 = scmp.eq.s32.totalorder %s30, 1
    %p200 = por %p198, %p199
    %p202 = scmp.ne.s32.totalorder %s187, %s201
    %p203 = scmp.eq.s32.totalorder %s30, 0
    %p204 = por %p202, %p203
    %s206 = sadd.s32 %s205, 1
    %p209 = scmp.eq.s32.totalorder %s24, 1
    %p210 = scmp.ne.s32.totalorder %s205, %s207
    %p211 = scmp.eq.s32.totalorder %s24, 0
    %p212 = por %p210, %p211
    %p213 = scmp.ne.s32.totalorder %s205, %s207
    %p214 = scmp.eq.s32.totalorder %s29, 1
    %p215 = por %p213, %p214
    %p216 = scmp.ne.s32.totalorder %s207, %s208
    %p217 = scmp.eq.s32.totalorder %s29, 0
    %p218 = por %p216, %p217
    %p219 = scmp.ne.s32.totalorder %s207, %s208
    %p220 = scmp.eq.s32.totalorder %s30, 1
    %p221 = por %p219, %p220
    %p223 = scmp.ne.s32.totalorder %s208, %s222
    %p224 = scmp.eq.s32.totalorder %s30, 0
    %p225 = por %p223, %p224
    %s226 = ssub.s32 %s24, %s31
    %p227 = scmp.eq.s32.totalorder %s226, 0
    %s229 = sadd.s32 %s228, 1
    %s230 = scalar_select %p227, %s228, %s229
    %p233 = pneg %p227
    %p234 = scmp.eq.s32.totalorder %s24, 1
    %p235 = por %p233, %p234
    %p236 = scmp.ne.s32.totalorder %s228, %s231
    %p237 = scmp.eq.s32.totalorder %s24, 0
    %p238 = por %p236, %p237
    %p239 = scmp.ne.s32.totalorder %s228, %s231
    %p240 = scmp.eq.s32.totalorder %s29, 1
    %p241 = por %p239, %p240
    %p242 = scmp.ne.s32.totalorder %s231, %s232
    %p243 = scmp.eq.s32.totalorder %s29, 0
    %p244 = por %p242, %p243
    %p245 = scmp.ne.s32.totalorder %s231, %s232
    %p246 = scmp.eq.s32.totalorder %s30, 1
    %p247 = por %p245, %p246
    %p249 = scmp.ne.s32.totalorder %s232, %s248
    %p250 = scmp.eq.s32.totalorder %s30, 0
    %p251 = por %p249, %p250
    %s253 = sadd.s32 %s252, 1
    %p256 = scmp.eq.s32.totalorder %s24, 1
    %p257 = scmp.ne.s32.totalorder %s252, %s254
    %p258 = scmp.eq.s32.totalorder %s24, 0
    %p259 = por %p257, %p258
    %p260 = scmp.ne.s32.totalorder %s252, %s254
    %p261 = scmp.eq.s32.totalorder %s29, 1
    %p262 = por %p260, %p261
    %p263 = scmp.ne.s32.totalorder %s254, %s255
    %p264 = scmp.eq.s32.totalorder %s29, 0
    %p265 = por %p263, %p264
    %p266 = scmp.ne.s32.totalorder %s254, %s255
    %p267 = scmp.eq.s32.totalorder %s30, 1
    %p268 = por %p266, %p267
    %p270 = scmp.ne.s32.totalorder %s255, %s269
    %p271 = scmp.eq.s32.totalorder %s30, 0
    %p272 = por %p270, %p271
    %s274 = sadd.s32 %s273, 1
    %p277 = scmp.eq.s32.totalorder %s24, 1
    %p278 = scmp.ne.s32.totalorder %s273, %s275
    %p279 = scmp.eq.s32.totalorder %s24, 0
    %p280 = por %p278, %p279
    %p281 = scmp.ne.s32.totalorder %s273, %s275
    %p282 = scmp.eq.s32.totalorder %s29, 1
    %p283 = por %p281, %p282
    %p284 = scmp.ne.s32.totalorder %s275, %s276
    %p285 = scmp.eq.s32.totalorder %s29, 0
    %p286 = por %p284, %p285
    %p287 = scmp.ne.s32.totalorder %s275, %s276
    %p288 = scmp.eq.s32.totalorder %s30, 1
    %p289 = por %p287, %p288
    %p291 = scmp.ne.s32.totalorder %s276, %s290
    %p292 = scmp.eq.s32.totalorder %s30, 0
    %p293 = por %p291, %p292
    %s295 = sadd.s32 %s294, 1
    %p298 = scmp.eq.s32.totalorder %s24, 1
    %p299 = scmp.ne.s32.totalorder %s294, %s296
    %p300 = scmp.eq.s32.totalorder %s24, 0
    %p301 = por %p299, %p300
    %p302 = scmp.ne.s32.totalorder %s294, %s296
    %p303 = scmp.eq.s32.totalorder %s29, 1
    %p304 = por %p302, %p303
    %p305 = scmp.ne.s32.totalorder %s296, %s297
    %p306 = scmp.eq.s32.totalorder %s29, 0
    %p307 = por %p305, %p306
    %p308 = scmp.ne.s32.totalorder %s296, %s297
    %p309 = scmp.eq.s32.totalorder %s30, 1
    %p310 = por %p308, %p309
    %p312 = scmp.ne.s32.totalorder %s297, %s311
    %p313 = scmp.eq.s32.totalorder %s30, 0
    %p314 = por %p312, %p313
    %s316 = sadd.s32 %s315, 1
    %p319 = scmp.eq.s32.totalorder %s24, 1
    %p320 = scmp.ne.s32.totalorder %s315, %s317
    %p321 = scmp.eq.s32.totalorder %s24, 0
    %p322 = por %p320, %p321
    %p323 = scmp.ne.s32.totalorder %s315, %s317
    %p324 = scmp.eq.s32.totalorder %s29, 1
    %p325 = por %p323, %p324
    %p326 = scmp.ne.s32.totalorder %s317, %s318
    %p327 = scmp.eq.s32.totalorder %s29, 0
    %p328 = por %p326, %p327
    %p329 = scmp.ne.s32.totalorder %s317, %s318
    %p330 = scmp.eq.s32.totalorder %s30, 1
    %p331 = por %p329, %p330
    %p333 = scmp.ne.s32.totalorder %s318, %s332
    %p334 = scmp.eq.s32.totalorder %s30, 0
    %p335 = por %p333, %p334
    %s337 = sadd.s32 %s336, 1
    %p340 = scmp.eq.s32.totalorder %s24, 1
    %p341 = scmp.ne.s32.totalorder %s336, %s338
    %p342 = scmp.eq.s32.totalorder %s24, 0
    %p343 = por %p341, %p342
    %p344 = scmp.ne.s32.totalorder %s336, %s338
    %p345 = scmp.eq.s32.totalorder %s29, 1
    %p346 = por %p344, %p345
    %p347 = scmp.ne.s32.totalorder %s338, %s339
    %p348 = scmp.eq.s32.totalorder %s29, 0
    %p349 = por %p347, %p348
    %p350 = scmp.ne.s32.totalorder %s338, %s339
    %p351 = scmp.eq.s32.totalorder %s30, 1
    %p352 = por %p350, %p351
    %p354 = scmp.ne.s32.totalorder %s339, %s353
    %p355 = scmp.eq.s32.totalorder %s30, 0
    %p356 = por %p354, %p355
    %s358 = sadd.s32 %s357, 1
    %p361 = scmp.eq.s32.totalorder %s24, 1
    %p362 = scmp.ne.s32.totalorder %s357, %s359
    %p363 = scmp.eq.s32.totalorder %s24, 0
    %p364 = por %p362, %p363
    %p365 = scmp.ne.s32.totalorder %s357, %s359
    %p366 = scmp.eq.s32.totalorder %s29, 1
    %p367 = por %p365, %p366
    %p368 = scmp.ne.s32.totalorder %s359, %s360
    %p369 = scmp.eq.s32.totalorder %s29, 0
    %p370 = por %p368, %p369
    %p371 = scmp.ne.s32.totalorder %s359, %s360
    %p372 = scmp.eq.s32.totalorder %s30, 1
    %p373 = por %p371, %p372
    %p375 = scmp.ne.s32.totalorder %s360, %s374
    %p376 = scmp.eq.s32.totalorder %s30, 0
    %p377 = por %p375, %p376
    %s379 = sadd.s32 %s378, 1
    %p382 = scmp.eq.s32.totalorder %s24, 1
    %p383 = scmp.ne.s32.totalorder %s378, %s380
    %p384 = scmp.eq.s32.totalorder %s24, 0
    %p385 = por %p383, %p384
    %p386 = scmp.ne.s32.totalorder %s378, %s380
    %p387 = scmp.eq.s32.totalorder %s29, 1
    %p388 = por %p386, %p387
    %p389 = scmp.ne.s32.totalorder %s380, %s381
    %p390 = scmp.eq.s32.totalorder %s29, 0
    %p391 = por %p389, %p390
    %p392 = scmp.ne.s32.totalorder %s380, %s381
    %p393 = scmp.eq.s32.totalorder %s30, 1
    %p394 = por %p392, %p393
    %p396 = scmp.ne.s32.totalorder %s381, %s395
    %p397 = scmp.eq.s32.totalorder %s30, 0
    %p398 = por %p396, %p397
    %s400 = sadd.s32 %s399, 1
    %p403 = scmp.eq.s32.totalorder %s24, 1
    %p404 = scmp.ne.s32.totalorder %s399, %s401
    %p405 = scmp.eq.s32.totalorder %s24, 0
    %p406 = por %p404, %p405
    %p407 = scmp.ne.s32.totalorder %s399, %s401
    %p408 = scmp.eq.s32.totalorder %s29, 1
    %p409 = por %p407, %p408
    %p410 = scmp.ne.s32.totalorder %s401, %s402
    %p411 = scmp.eq.s32.totalorder %s29, 0
    %p412 = por %p410, %p411
    %p413 = scmp.ne.s32.totalorder %s401, %s402
    %p414 = scmp.eq.s32.totalorder %s30, 1
    %p415 = por %p413, %p414
    %p417 = scmp.ne.s32.totalorder %s402, %s416
    %p418 = scmp.eq.s32.totalorder %s30, 0
    %p419 = por %p417, %p418
    %s420 = ssub.s32 %s24, %s31
    %p421 = scmp.eq.s32.totalorder %s420, 0
    %s423 = sadd.s32 %s422, 1
    %s424 = scalar_select %p421, %s422, %s423
    %p427 = pneg %p421
    %p428 = scmp.eq.s32.totalorder %s24, 1
    %p429 = por %p427, %p428
    %p430 = scmp.ne.s32.totalorder %s422, %s425
    %p431 = scmp.eq.s32.totalorder %s24, 0
    %p432 = por %p430, %p431
    %p433 = scmp.ne.s32.totalorder %s422, %s425
    %p434 = scmp.eq.s32.totalorder %s29, 1
    %p435 = por %p433, %p434
    %p436 = scmp.ne.s32.totalorder %s425, %s426
    %p437 = scmp.eq.s32.totalorder %s29, 0
    %p438 = por %p436, %p437
    %p439 = scmp.ne.s32.totalorder %s425, %s426
    %p440 = scmp.eq.s32.totalorder %s30, 1
    %p441 = por %p439, %p440
    %p443 = scmp.ne.s32.totalorder %s426, %s442
    %p444 = scmp.eq.s32.totalorder %s30, 0
    %p445 = por %p443, %p444
    %p446 = scmp.le.s32.totalorder 1, %s24
    %p447 = scmp.lt.s32.totalorder %s24, 3
    %p448 = pnand %p446, %p447
    %p449 = pneg %p448
    // Predicated region
    $region9: #{forward.5} parent=5 // pred_check
      _
    $region10: #{forward.5} parent=5 // pred_check_branch
      %451 = sbr.rel (%p448) target = $region12
    $region11: #{forward.5} parent=5 // pred_region
      %s452 = ssub.s32 %s24, 1
      // Predicated region
      $region13: #{forward.5} parent=11 // pred_check
        %p453 = pneg %p71
      $region14: #{forward.5} parent=11 // pred_check_branch
        %455 = sbr.rel (%p453) target = $region16
      $region15: #{forward.5} parent=11 // pred_region
        _
      $region16: #{forward.5} parent=11 // pred_fallthru
        _
      // Predicated region
      $region17: #{forward.5} parent=11 // pred_check
        %p456 = pneg %p92
      $region18: #{forward.5} parent=11 // pred_check_branch
        %458 = sbr.rel (%p456) target = $region20
      $region19: #{forward.5} parent=11 // pred_region
        _
      $region20: #{forward.5} parent=11 // pred_fallthru
        _
      // Predicated region
      $region21: #{forward.5} parent=11 // pred_check
        %p459 = pneg %p113
      $region22: #{forward.5} parent=11 // pred_check_branch
        %461 = sbr.rel (%p459) target = $region24
      $region23: #{forward.5} parent=11 // pred_region
        _
      $region24: #{forward.5} parent=11 // pred_fallthru
        _
      // Predicated region
      $region25: #{forward.5} parent=11 // pred_check
        %p462 = pneg %p134
      $region26: #{forward.5} parent=11 // pred_check_branch
        %464 = sbr.rel (%p462) target = $region28
      $region27: #{forward.5} parent=11 // pred_region
        _
      $region28: #{forward.5} parent=11 // pred_fallthru
        _
      // Predicated region
      $region29: #{forward.5} parent=11 // pred_check
        %p465 = pneg %p155
      $region30: #{forward.5} parent=11 // pred_check_branch
        %467 = sbr.rel (%p465) target = $region32
      $region31: #{forward.5} parent=11 // pred_region
        _
      $region32: #{forward.5} parent=11 // pred_fallthru
        _
      // Predicated region
      $region33: #{forward.5} parent=11 // pred_check
        %p468 = pneg %p176
      $region34: #{forward.5} parent=11 // pred_check_branch
        %470 = sbr.rel (%p468) target = $region36
      $region35: #{forward.5} parent=11 // pred_region
        _
      $region36: #{forward.5} parent=11 // pred_fallthru
        _
      // Predicated region
      $region37: #{forward.5} parent=11 // pred_check
        %p471 = pneg %p197
      $region38: #{forward.5} parent=11 // pred_check_branch
        %473 = sbr.rel (%p471) target = $region40
      $region39: #{forward.5} parent=11 // pred_region
        _
      $region40: #{forward.5} parent=11 // pred_fallthru
        _
      // Predicated region
      $region41: #{forward.5} parent=11 // pred_check
        %p474 = pneg %p218
      $region42: #{forward.5} parent=11 // pred_check_branch
        %476 = sbr.rel (%p474) target = $region44
      $region43: #{forward.5} parent=11 // pred_region
        _
      $region44: #{forward.5} parent=11 // pred_fallthru
        _
      // Predicated region
      $region45: #{forward.5} parent=11 // pred_check
        %p477 = pneg %p265
      $region46: #{forward.5} parent=11 // pred_check_branch
        %479 = sbr.rel (%p477) target = $region48
      $region47: #{forward.5} parent=11 // pred_region
        _
      $region48: #{forward.5} parent=11 // pred_fallthru
        _
      // Predicated region
      $region49: #{forward.5} parent=11 // pred_check
        %p480 = pneg %p286
      $region50: #{forward.5} parent=11 // pred_check_branch
        %482 = sbr.rel (%p480) target = $region52
      $region51: #{forward.5} parent=11 // pred_region
        _
      $region52: #{forward.5} parent=11 // pred_fallthru
        _
      // Predicated region
      $region53: #{forward.5} parent=11 // pred_check
        %p483 = pneg %p307
      $region54: #{forward.5} parent=11 // pred_check_branch
        %485 = sbr.rel (%p483) target = $region56
      $region55: #{forward.5} parent=11 // pred_region
        _
      $region56: #{forward.5} parent=11 // pred_fallthru
        _
      // Predicated region
      $region57: #{forward.5} parent=11 // pred_check
        %p486 = pneg %p328
      $region58: #{forward.5} parent=11 // pred_check_branch
        %488 = sbr.rel (%p486) target = $region60
      $region59: #{forward.5} parent=11 // pred_region
        _
      $region60: #{forward.5} parent=11 // pred_fallthru
        _
      // Predicated region
      $region61: #{forward.5} parent=11 // pred_check
        %p489 = pneg %p349
      $region62: #{forward.5} parent=11 // pred_check_branch
        %491 = sbr.rel (%p489) target = $region64
      $region63: #{forward.5} parent=11 // pred_region
        _
      $region64: #{forward.5} parent=11 // pred_fallthru
        _
      // Predicated region
      $region65: #{forward.5} parent=11 // pred_check
        %p492 = pneg %p370
      $region66: #{forward.5} parent=11 // pred_check_branch
        %494 = sbr.rel (%p492) target = $region68
      $region67: #{forward.5} parent=11 // pred_region
        _
      $region68: #{forward.5} parent=11 // pred_fallthru
        _
      // Predicated region
      $region69: #{forward.5} parent=11 // pred_check
        %p495 = pneg %p391
      $region70: #{forward.5} parent=11 // pred_check_branch
        %497 = sbr.rel (%p495) target = $region72
      $region71: #{forward.5} parent=11 // pred_region
        _
      $region72: #{forward.5} parent=11 // pred_fallthru
        _
      // Predicated region
      $region73: #{forward.5} parent=11 // pred_check
        %p498 = pneg %p412
      $region74: #{forward.5} parent=11 // pred_check_branch
        %500 = sbr.rel (%p498) target = $region76
      $region75: #{forward.5} parent=11 // pred_region
        _
      $region76: #{forward.5} parent=11 // pred_fallthru
        _
    $region12: #{forward.5} parent=5 // pred_fallthru
      _
    %p501 = scmp.lt.s32.totalorder %s24, 2
    // Predicated region
    $region77: #{forward.5} parent=5 // pred_check
      %p502 = pneg %p501
    $region78: #{forward.5} parent=5 // pred_check_branch
      %504 = sbr.rel (%p502) target = $region80
    $region79: #{forward.5} parent=5 // pred_region
      // Predicated region
      $region81: #{forward.5} parent=79 // pred_check
        %p505 = pneg %p44
      $region82: #{forward.5} parent=79 // pred_check_branch
        %507 = sbr.rel (%p505) target = $region84
      $region83: #{forward.5} parent=79 // pred_region
        %p508 = scmp.lt.s32.totalorder %s24, 1
        %s509 = scalar_select %p508, %s24, 1
        %s510 = smul.addr %s509, 8
        %s511 = scalar_lea.vmem %s0, %s510
      $region84: #{forward.5} parent=79 // pred_fallthru
        _
      // Predicated region
      $region85: #{forward.5} parent=79 // pred_check
        %p512 = pneg %p238
      $region86: #{forward.5} parent=79 // pred_check_branch
        %514 = sbr.rel (%p512) target = $region88
      $region87: #{forward.5} parent=79 // pred_region
        %p515 = scmp.lt.s32.totalorder %s24, 1
        %s516 = scalar_select %p515, %s24, 1
        %s517 = scalar_lea.vmem %s9, %s516
      $region88: #{forward.5} parent=79 // pred_fallthru
        _
    $region80: #{forward.5} parent=5 // pred_fallthru
      _
    %p518 = scmp.le.s32.totalorder 1, %s24
    %p519 = scmp.lt.s32.totalorder %s24, 3
    %p520 = pnand %p518, %p519
    %p521 = pneg %p520
    // Predicated region
    $region89: #{forward.5} parent=5 // pred_check
      _
    $region90: #{forward.5} parent=5 // pred_check_branch
      %523 = sbr.rel (%p520) target = $region92
    $region91: #{forward.5} parent=5 // pred_region
      %s524 = ssub.s32 %s24, 1
      %p525 = scmp.lt.s32.totalorder %s29, 1
      %s526 = scalar_select %p525, %s29, 1
      %s527 = smul.addr %s526, 8
      %s528 = scalar_lea.vmem %s0, %s527
      %p529 = pneg %p50
      %p530 = pneg %p47
      %p531 = pneg %p71
      %p532 = pneg %p68
      %p533 = pneg %p92
      %p534 = pneg %p89
      %p535 = pneg %p113
      %p536 = pneg %p110
      %p537 = pneg %p134
      %p538 = pneg %p131
      %p539 = pneg %p155
      %p540 = pneg %p152
      %p541 = pneg %p176
      %p542 = pneg %p173
      %p543 = pneg %p197
      %p544 = pneg %p194
      %p545 = pneg %p218
      %p546 = pneg %p215
      %p547 = scmp.lt.s32.totalorder %s29, 1
      %s548 = scalar_select %p547, %s29, 1
      %s549 = scalar_lea.vmem %s9, %s548
      %p550 = pneg %p244
      %p551 = pneg %p241
      %p552 = pneg %p265
      %p553 = pneg %p262
      %p554 = pneg %p286
      %p555 = pneg %p283
      %p556 = pneg %p307
      %p557 = pneg %p304
      %p558 = pneg %p328
      %p559 = pneg %p325
      %p560 = pneg %p349
      %p561 = pneg %p346
      %p562 = pneg %p370
      %p563 = pneg %p367
      %p564 = pneg %p391
      %p565 = pneg %p388
      %p566 = pneg %p412
      %p567 = pneg %p409
      %p568 = pneg %p438
      %p569 = pneg %p435
      %p570 = scmp.lt.s32.totalorder %s29, 1
      %s571 = scalar_select %p570, %s29, 1
      %s572 = smul.addr %s571, 8
      %s573 = scalar_lea.vmem %s18, %s572
      %p574 = scmp.lt.s32.totalorder %s29, 1
      %s575 = scalar_select %p574, %s29, 1
      %s576 = smul.addr %s575, 8
      %s577 = scalar_lea.vmem %s0, %s576
      %p578 = scmp.lt.s32.totalorder %s29, 1
      %s579 = scalar_select %p578, %s29, 1
      %s580 = scalar_lea.vmem %s9, %s579
      %p581 = scmp.lt.s32.totalorder %s29, 1
      %s582 = scalar_select %p581, %s29, 1
      %s583 = smul.addr %s582, 8
      %s584 = scalar_lea.vmem %s18, %s583
      %v586 = vld [vmem:[%s577] sm:$0xff]
      %v587 = vld [vmem:[%s1] sm:$0x1]
      %v588 = vld [vmem:[%s2] sm:$0x1]
      %vm589 = vcmask 261120
      %v590 = vsel %vm589, %v586, 0.0
      %591 = vadd.xlane.f32.xlu0 %v590
      %v592 = vpop.xlane.xlu0 %591
      %v593 = vrcp.pop 32.0
      %v594 = vmul.f32 32.0, %v593
      %v595 = vsub.f32 1.0, %v594
      %v596 = vmul.f32 %v593, %v595
      %v597 = vadd.f32 %v593, %v596
      %vm598 = vweird.f32 %v593
      %v599 = vsel %vm598, %v593, %v597
      %v600 = vmul.f32 %v592, %v599
      %v601 = vsub.f32 %v586, %v600
      %v602 = vmul.f32 %v601, %v601
      %v603 = vsel %vm589, %v602, 0.0
      %604 = vadd.xlane.f32.xlu0 %v603
      %v605 = vpop.xlane.xlu0 %604
      %v606 = vmul.f32 %v605, %v599
      %v607 = vadd.f32 %v606, 1e-05
      %v608 = vrsqrt.pop %v607
      %v609 = vmul.f32 %v608, %v607
      %v610 = vmul.f32 %v609, %v608
      %v611 = vmul.f32 0.5, %v610
      %v612 = vsub.f32 1.5, %v611
      %v613 = vmul.f32 %v608, %v612
      %vm614 = vweird.f32 %v607
      %vm615 = vweird.f32 %v608
      %vm616 = vmor %vm614, %vm615
      %v617 = vsel %vm616, %v608, %v613
      %v618 = vmul.f32 %v601, %v617
      %v620 = vperm.slane %v587, 0
      %v622 = vmul.f32 %v618, %v620
      %v624 = vperm.slane %v588, 0
      %v626 = vadd.f32 %v622, %v624
      %v627 = vld [vmem:[%s580] sm:$0x1]
      %v628 = vld [vmem:[%s10] sm:$0xff]
      %v629 = vld [vmem:[%s11] sm:$0xff]
      %v630 = vld [vmem:[%s3] sm:$0x1]
      %v631 = vld [vmem:[%s4] sm:$0x1]
      %v632 = vsel %vm589, %v626, 0.0
      %633 = vadd.xlane.f32.xlu0 %v632
      %v634 = vpop.xlane.xlu0 %633
      %v635 = vmul.f32 %v634, %v599
      %v636 = vsub.f32 %v626, %v635
      %v637 = vmul.f32 %v636, %v636
      %v638 = vsel %vm589, %v637, 0.0
      %639 = vadd.xlane.f32.xlu0 %v638
      %v640 = vpop.xlane.xlu0 %639
      %v641 = vmul.f32 %v640, %v599
      %v642 = vadd.f32 %v641, 1e-05
      %v643 = vrsqrt.pop %v642
      %v644 = vmul.f32 %v643, %v642
      %v645 = vmul.f32 %v644, %v643
      %v646 = vmul.f32 0.5, %v645
      %v647 = vsub.f32 1.5, %v646
      %v648 = vmul.f32 %v643, %v647
      %vm649 = vweird.f32 %v642
      %vm650 = vweird.f32 %v643
      %vm651 = vmor %vm649, %vm650
      %v652 = vsel %vm651, %v643, %v648
      %v653 = vmul.f32 %v636, %v652
      %v655 = vperm.slane %v630, 0
      %v657 = vmul.f32 %v653, %v655
      %v659 = vperm.slane %v631, 0
      %v661 = vadd.f32 %v657, %v659
      %v662 = vld [vmem:[%s5] sm:$0xf]
      %v663 = vld [vmem:[%s5 + $0x4] sm:$0xf]
      %v664 = vld [vmem:[%s5 + $0x8] sm:$0xf]
      %v665 = vld [vmem:[%s5 + $0xc] sm:$0xf]
      %v666 = vld [vmem:[%s6] sm:$0x1]
      %v667 = vpack.c.bf16 %v661, %v661
      %v669 = vperm.slane %v666, 0
      %v675 = vunpack.c.l.b16 %v662
      %v676 = vunpack.c.l.b16 %v663
      %v677 = vunpack.c.l.b16 %v664
      %v678 = vunpack.c.l.b16 %v665
      %v679 = vpack.c.b16 %v676, %v675
      %v680 = vpack.c.b16 %v678, %v677
      %v684 = vsel %vm589, %v667, 0
      %686 = vmatpush.bf16.msra.mxu0 0
      %687 = vmatpush.bf16.msra.mxu0 0
      %688 = vmatpush.bf16.msra.mxu0 0
      %689 = vmatpush.bf16.msra.mxu0 0
      %690 = vmatpush.bf16.msra.mxu0 0
      %691 = vmatpush.bf16.msra.mxu0 0
      %692 = vmatpush.bf16.msra.mxu0 %v680
      %693 = vmatpush.bf16.msra.mxu0 %v679
      %694 = vmatmul.bf16.gmra.mxu0 %v684
      %v695 = vpop.f32.mrf.mxu0
      %v696 = vadd.f32 %v669, %v695
      %v697 = vpop.f32.mrf.mxu0
      %698 = vdwg.mxu0
      %700 = vrot.lane.b32.xlu0 %v696, 120
      %v701 = vpop.permute.xlu0 %700
      %703 = vrot.lane.b32.xlu0 %v696, 112
      %v704 = vpop.permute.xlu0 %703
      %706 = vrot.lane.b32.xlu0 %v696, 104
      %v707 = vpop.permute.xlu0 %706
      %v709 = vmul.f32 %v696, %v628
      %v710 = vmul.f32 %v701, %v628
      %v711 = vmul.f32 %v704, %v628
      %v712 = vmul.f32 %v707, %v628
      %713 = vrot.lane.b32.xlu0 %v696, 124
      %v714 = vpop.permute.xlu0 %713
      %715 = vrot.lane.b32.xlu0 %v701, 124
      %v716 = vpop.permute.xlu0 %715
      %717 = vrot.lane.b32.xlu0 %v704, 124
      %v718 = vpop.permute.xlu0 %717
      %719 = vrot.lane.b32.xlu0 %v707, 124
      %v720 = vpop.permute.xlu0 %719
      %725 = vrot.lane.b32.xlu0 %v696, 4
      %v726 = vpop.permute.xlu0 %725
      %727 = vrot.lane.b32.xlu0 %v701, 4
      %v728 = vpop.permute.xlu0 %727
      %729 = vrot.lane.b32.xlu0 %v704, 4
      %v730 = vpop.permute.xlu0 %729
      %731 = vrot.lane.b32.xlu0 %v707, 4
      %v732 = vpop.permute.xlu0 %731
      %vm737 = vcmask 31744
      %v738 = vsel %vm737, %v714, %v726
      %v739 = vsel %vm737, %v716, %v728
      %v740 = vsel %vm737, %v718, %v730
      %v741 = vsel %vm737, %v720, %v732
      %v742 = vmul.f32 %v738, %v629
      %v743 = vmul.f32 %v739, %v629
      %v744 = vmul.f32 %v740, %v629
      %v745 = vmul.f32 %v741, %v629
      %v746 = vadd.f32 %v709, %v742
      %v747 = vadd.f32 %v710, %v743
      %v748 = vadd.f32 %v711, %v744
      %v749 = vadd.f32 %v712, %v745
      %751 = vrot.lane.b32.xlu0 %v628, 32
      %v752 = vpop.permute.xlu0 %751
      %v754 = vmul.f32 %v696, %v752
      %v755 = vmul.f32 %v701, %v752
      %v756 = vmul.f32 %v704, %v752
      %v757 = vmul.f32 %v707, %v752
      %758 = vrot.lane.b32.xlu0 %v696, 92
      %v759 = vpop.permute.xlu0 %758
      %760 = vrot.lane.b32.xlu0 %v701, 92
      %v761 = vpop.permute.xlu0 %760
      %762 = vrot.lane.b32.xlu0 %v704, 92
      %v763 = vpop.permute.xlu0 %762
      %764 = vrot.lane.b32.xlu0 %v707, 92
      %v765 = vpop.permute.xlu0 %764
      %770 = vrot.lane.b32.xlu0 %v696, 100
      %v771 = vpop.permute.xlu0 %770
      %772 = vrot.lane.b32.xlu0 %v701, 100
      %v773 = vpop.permute.xlu0 %772
      %774 = vrot.lane.b32.xlu0 %v704, 100
      %v775 = vpop.permute.xlu0 %774
      %776 = vrot.lane.b32.xlu0 %v707, 100
      %v777 = vpop.permute.xlu0 %776
      %v782 = vsel %vm737, %v759, %v771
      %v783 = vsel %vm737, %v761, %v773
      %v784 = vsel %vm737, %v763, %v775
      %v785 = vsel %vm737, %v765, %v777
      %v786 = vmul.f32 %v782, %v629
      %v787 = vmul.f32 %v783, %v629
      %v788 = vmul.f32 %v784, %v629
      %v789 = vmul.f32 %v785, %v629
      %794 = vrot.lane.b32.xlu0 %v786, 32
      %v795 = vpop.permute.xlu0 %794
      %796 = vrot.lane.b32.xlu0 %v787, 32
      %v797 = vpop.permute.xlu0 %796
      %798 = vrot.lane.b32.xlu0 %v788, 32
      %v799 = vpop.permute.xlu0 %798
      %800 = vrot.lane.b32.xlu0 %v789, 32
      %v801 = vpop.permute.xlu0 %800
      %v806 = vadd.f32 %v754, %v795
      %v807 = vadd.f32 %v755, %v797
      %v808 = vadd.f32 %v756, %v799
      %v809 = vadd.f32 %v757, %v801
      %v810 = vpack.c.bf16 %v746, %v746
      %v811 = vpack.c.bf16 %v747, %v747
      %v812 = vpack.c.bf16 %v748, %v748
      %v813 = vpack.c.bf16 %v749, %v749
      %v814 = vpack.c.bf16 %v806, %v806
      %v815 = vpack.c.bf16 %v807, %v807
      %v816 = vpack.c.bf16 %v808, %v808
      %v817 = vpack.c.bf16 %v809, %v809
      %v819 = vunpack.c.l.b16 %v814
      %v820 = vpack.c.b16 %v819, %v819
      %821 = vrot.lane.b32.xlu0 %v820, 96
      %v822 = vpop.permute.xlu0 %821
      %vm823 = vcmask 64512
      %v825 = vsel %vm823, %v810, 0
      %v828 = vsel %vm823, %v822, 0
      %830 = vmatpush.bf16.xpose.msra.mxu0 0
      %831 = vmatpush.bf16.xpose.msra.mxu0 0
      %832 = vmatpush.bf16.xpose.msra.mxu0 0
      %833 = vmatpush.bf16.xpose.msra.mxu0 0
      %834 = vmatpush.bf16.xpose.msra.mxu0 0
      %835 = vmatpush.bf16.xpose.msra.mxu0 0
      %836 = vmatpush.bf16.xpose.msra.mxu0 0
      %837 = vmatpush.bf16.xpose.msra.mxu0 %v828
      %838 = vmatmul.bf16.gmra.mxu0 %v825
      %v839 = vpop.f32.mrf.mxu0
      %v840 = vadd.f32 0.0, %v839
      %v841 = vpop.f32.mrf.mxu0
      %842 = vdwg.mxu0
      %v844 = vunpack.c.l.b16 %v815
      %v845 = vpack.c.b16 %v844, %v844
      %846 = vrot.lane.b32.xlu0 %v845, 96
      %v847 = vpop.permute.xlu0 %846
      %v849 = vsel %vm823, %v811, 0
      %v852 = vsel %vm823, %v847, 0
      %854 = vmatpush.bf16.xpose.msra.mxu0 0
      %855 = vmatpush.bf16.xpose.msra.mxu0 0
      %856 = vmatpush.bf16.xpose.msra.mxu0 0
      %857 = vmatpush.bf16.xpose.msra.mxu0 0
      %858 = vmatpush.bf16.xpose.msra.mxu0 0
      %859 = vmatpush.bf16.xpose.msra.mxu0 0
      %860 = vmatpush.bf16.xpose.msra.mxu0 0
      %861 = vmatpush.bf16.xpose.msra.mxu0 %v852
      %862 = vmatmul.bf16.gmra.mxu0 %v849
      %v863 = vpop.f32.mrf.mxu0
      %v864 = vadd.f32 0.0, %v863
      %v865 = vpop.f32.mrf.mxu0
      %866 = vdwg.mxu0
      %v868 = vunpack.c.l.b16 %v816
      %v869 = vpack.c.b16 %v868, %v868
      %870 = vrot.lane.b32.xlu0 %v869, 96
      %v871 = vpop.permute.xlu0 %870
      %v873 = vsel %vm823, %v812, 0
      %v876 = vsel %vm823, %v871, 0
      %878 = vmatpush.bf16.xpose.msra.mxu0 0
      %879 = vmatpush.bf16.xpose.msra.mxu0 0
      %880 = vmatpush.bf16.xpose.msra.mxu0 0
      %881 = vmatpush.bf16.xpose.msra.mxu0 0
      %882 = vmatpush.bf16.xpose.msra.mxu0 0
      %883 = vmatpush.bf16.xpose.msra.mxu0 0
      %884 = vmatpush.bf16.xpose.msra.mxu0 0
      %885 = vmatpush.bf16.xpose.msra.mxu0 %v876
      %886 = vmatmul.bf16.gmra.mxu0 %v873
      %v887 = vpop.f32.mrf.mxu0
      %v888 = vadd.f32 0.0, %v887
      %v889 = vpop.f32.mrf.mxu0
      %890 = vdwg.mxu0
      %v892 = vunpack.c.l.b16 %v817
      %v893 = vpack.c.b16 %v892, %v892
      %894 = vrot.lane.b32.xlu0 %v893, 96
      %v895 = vpop.permute.xlu0 %894
      %v897 = vsel %vm823, %v813, 0
      %v900 = vsel %vm823, %v895, 0
      %902 = vmatpush.bf16.xpose.msra.mxu0 0
      %903 = vmatpush.bf16.xpose.msra.mxu0 0
      %904 = vmatpush.bf16.xpose.msra.mxu0 0
      %905 = vmatpush.bf16.xpose.msra.mxu0 0
      %906 = vmatpush.bf16.xpose.msra.mxu0 0
      %907 = vmatpush.bf16.xpose.msra.mxu0 0
      %908 = vmatpush.bf16.xpose.msra.mxu0 0
      %909 = vmatpush.bf16.xpose.msra.mxu0 %v900
      %910 = vmatmul.bf16.gmra.mxu0 %v897
      %v911 = vpop.f32.mrf.mxu0
      %v912 = vadd.f32 0.0, %v911
      %v913 = vpop.f32.mrf.mxu0
      %914 = vdwg.mxu0
      %v915 = vmul.f32 %v840, 0.35355338
      %v916 = vmul.f32 %v864, 0.35355338
      %v917 = vmul.f32 %v888, 0.35355338
      %v918 = vmul.f32 %v912, 0.35355338
      %v920 = vperm.slane %v627, 0
      %v922 = vadd.f32 %v915, %v920
      %v923 = vadd.f32 %v916, %v920
      %v924 = vadd.f32 %v917, %v920
      %v925 = vadd.f32 %v918, %v920
      %v926 = vsel %vm823, %v922, -inf
      %927 = vmax.xlane.f32.xlu0 %v926
      %v928 = vpop.xlane.xlu0 %927
      %v929 = vsel %vm823, %v923, -inf
      %930 = vmax.xlane.f32.xlu0 %v929
      %v931 = vpop.xlane.xlu0 %930
      %v932 = vsel %vm823, %v924, -inf
      %933 = vmax.xlane.f32.xlu0 %v932
      %v934 = vpop.xlane.xlu0 %933
      %v935 = vsel %vm823, %v925, -inf
      %936 = vmax.xlane.f32.xlu0 %v935
      %v937 = vpop.xlane.xlu0 %936
      %v938 = vsub.f32 %v922, %v928
      %v939 = vsub.f32 %v923, %v931
      %v940 = vsub.f32 %v924, %v934
      %v941 = vsub.f32 %v925, %v937
      %v942 = vmul.f32 %v938, 1.442695
      %v943 = vpow.pop %v942
      %v944 = vmul.f32 %v939, 1.442695
      %v945 = vpow.pop %v944
      %v946 = vmul.f32 %v940, 1.442695
      %v947 = vpow.pop %v946
      %v948 = vmul.f32 %v941, 1.442695
      %v949 = vpow.pop %v948
      %v950 = vsel %vm823, %v943, 0.0
      %951 = vadd.xlane.f32.xlu0 %v950
      %v952 = vpop.xlane.xlu0 %951
      %v953 = vsel %vm823, %v945, 0.0
      %954 = vadd.xlane.f32.xlu0 %v953
      %v955 = vpop.xlane.xlu0 %954
      %v956 = vsel %vm823, %v947, 0.0
      %957 = vadd.xlane.f32.xlu0 %v956
      %v958 = vpop.xlane.xlu0 %957
      %v959 = vsel %vm823, %v949, 0.0
      %960 = vadd.xlane.f32.xlu0 %v959
      %v961 = vpop.xlane.xlu0 %960
      %v962 = vpack.c.bf16 %v943, %v943
      %v963 = vpack.c.bf16 %v945, %v945
      %v964 = vpack.c.bf16 %v947, %v947
      %v965 = vpack.c.bf16 %v949, %v949
      %v966 = vpack.c.bf16 %v696, %v696
      %v967 = vpack.c.bf16 %v701, %v701
      %v968 = vpack.c.bf16 %v704, %v704
      %v969 = vpack.c.bf16 %v707, %v707
      %v971 = vunpack.c.l.b16 %v966
      %v972 = vpack.c.b16 %v971, %v971
      %973 = vrot.lane.b32.xlu0 %v972, 64
      %v974 = vpop.permute.xlu0 %973
      %v976 = vsel %vm823, %v962, 0
      %vm978 = vcmask 1043456
      %v980 = vsel %vm978, %v974, 0
      %982 = vmatpush.bf16.msra.mxu0 0
      %983 = vmatpush.bf16.msra.mxu0 0
      %984 = vmatpush.bf16.msra.mxu0 0
      %985 = vmatpush.bf16.msra.mxu0 0
      %986 = vmatpush.bf16.msra.mxu0 0
      %987 = vmatpush.bf16.msra.mxu0 0
      %988 = vmatpush.bf16.msra.mxu0 0
      %989 = vmatpush.bf16.msra.mxu0 %v980
      %990 = vmatmul.bf16.gmra.mxu0 %v976
      %v991 = vpop.f32.mrf.mxu0
      %v992 = vadd.f32 0.0, %v991
      %v993 = vpop.f32.mrf.mxu0
      %994 = vdwg.mxu0
      %v996 = vunpack.c.l.b16 %v967
      %v997 = vpack.c.b16 %v996, %v996
      %998 = vrot.lane.b32.xlu0 %v997, 64
      %v999 = vpop.permute.xlu0 %998
      %v1001 = vsel %vm823, %v963, 0
      %v1004 = vsel %vm978, %v999, 0
      %1006 = vmatpush.bf16.msra.mxu0 0
      %1007 = vmatpush.bf16.msra.mxu0 0
      %1008 = vmatpush.bf16.msra.mxu0 0
      %1009 = vmatpush.bf16.msra.mxu0 0
      %1010 = vmatpush.bf16.msra.mxu0 0
      %1011 = vmatpush.bf16.msra.mxu0 0
      %1012 = vmatpush.bf16.msra.mxu0 0
      %1013 = vmatpush.bf16.msra.mxu0 %v1004
      %1014 = vmatmul.bf16.gmra.mxu0 %v1001
      %v1015 = vpop.f32.mrf.mxu0
      %v1016 = vadd.f32 0.0, %v1015
      %v1017 = vpop.f32.mrf.mxu0
      %1018 = vdwg.mxu0
      %v1020 = vunpack.c.l.b16 %v968
      %v1021 = vpack.c.b16 %v1020, %v1020
      %1022 = vrot.lane.b32.xlu0 %v1021, 64
      %v1023 = vpop.permute.xlu0 %1022
      %v1025 = vsel %vm823, %v964, 0
      %v1028 = vsel %vm978, %v1023, 0
      %1030 = vmatpush.bf16.msra.mxu0 0
      %1031 = vmatpush.bf16.msra.mxu0 0
      %1032 = vmatpush.bf16.msra.mxu0 0
      %1033 = vmatpush.bf16.msra.mxu0 0
      %1034 = vmatpush.bf16.msra.mxu0 0
      %1035 = vmatpush.bf16.msra.mxu0 0
      %1036 = vmatpush.bf16.msra.mxu0 0
      %1037 = vmatpush.bf16.msra.mxu0 %v1028
      %1038 = vmatmul.bf16.gmra.mxu0 %v1025
      %v1039 = vpop.f32.mrf.mxu0
      %v1040 = vadd.f32 0.0, %v1039
      %v1041 = vpop.f32.mrf.mxu0
      %1042 = vdwg.mxu0
      %v1044 = vunpack.c.l.b16 %v969
      %v1045 = vpack.c.b16 %v1044, %v1044
      %1046 = vrot.lane.b32.xlu0 %v1045, 64
      %v1047 = vpop.permute.xlu0 %1046
      %v1049 = vsel %vm823, %v965, 0
      %v1052 = vsel %vm978, %v1047, 0
      %1054 = vmatpush.bf16.msra.mxu0 0
      %1055 = vmatpush.bf16.msra.mxu0 0
      %1056 = vmatpush.bf16.msra.mxu0 0
      %1057 = vmatpush.bf16.msra.mxu0 0
      %1058 = vmatpush.bf16.msra.mxu0 0
      %1059 = vmatpush.bf16.msra.mxu0 0
      %1060 = vmatpush.bf16.msra.mxu0 0
      %1061 = vmatpush.bf16.msra.mxu0 %v1052
      %1062 = vmatmul.bf16.gmra.mxu0 %v1049
      %v1063 = vpop.f32.mrf.mxu0
      %v1064 = vadd.f32 0.0, %v1063
      %v1065 = vpop.f32.mrf.mxu0
      %1066 = vdwg.mxu0
      %v1067 = vrcp.pop %v952
      %v1068 = vrcp.pop %v955
      %v1069 = vrcp.pop %v958
      %v1070 = vrcp.pop %v961
      %v1071 = vmul.f32 %v992, %v1067
      %v1072 = vmul.f32 %v1016, %v1068
      %v1073 = vmul.f32 %v1040, %v1069
      %v1074 = vmul.f32 %v1064, %v1070
      %1076 = vrot.lane.b32.xlu0 %v1072, 8
      %v1077 = vpop.permute.xlu0 %1076
      %1080 = vrot.lane.b32.xlu0 %v1073, 16
      %v1081 = vpop.permute.xlu0 %1080
      %1084 = vrot.lane.b32.xlu0 %v1074, 24
      %v1085 = vpop.permute.xlu0 %1084
      %v1087 = vsel %vm823, %v1071, %v1077
      %vm1088 = vcmask 130048
      %v1089 = vsel %vm1088, %v1087, %v1081
      %vm1090 = vcmask 195584
      %v1091 = vsel %vm1090, %v1089, %v1085
      %v1092 = vld [vmem:[%s7] sm:$0xf]
      %v1093 = vld [vmem:[%s7 + $0x4] sm:$0xf]
      %v1094 = vld [vmem:[%s7 + $0x8] sm:$0xf]
      %v1095 = vld [vmem:[%s7 + $0xc] sm:$0xf]
      %v1096 = vpack.c.bf16 %v1091, %v1091
      %v1097 = vld [vmem:[%s8] sm:$0x1]
      %v1099 = vperm.slane %v1097, 0
      %v1105 = vunpack.c.l.b16 %v1092
      %v1106 = vunpack.c.l.b16 %v1093
      %v1107 = vunpack.c.l.b16 %v1094
      %v1108 = vunpack.c.l.b16 %v1095
      %v1109 = vpack.c.b16 %v1106, %v1105
      %v1110 = vpack.c.b16 %v1108, %v1107
      %v1114 = vsel %vm589, %v1096, 0
      %1116 = vmatpush.bf16.msra.mxu0 0
      %1117 = vmatpush.bf16.msra.mxu0 0
      %1118 = vmatpush.bf16.msra.mxu0 0
      %1119 = vmatpush.bf16.msra.mxu0 0
      %1120 = vmatpush.bf16.msra.mxu0 0
      %1121 = vmatpush.bf16.msra.mxu0 0
      %1122 = vmatpush.bf16.msra.mxu0 %v1110
      %1123 = vmatpush.bf16.msra.mxu0 %v1109
      %1124 = vmatmul.bf16.gmra.mxu0 %v1114
      %v1125 = vpop.f32.mrf.mxu0
      %v1126 = vadd.f32 %v1099, %v1125
      %v1127 = vpop.f32.mrf.mxu0
      %1128 = vdwg.mxu0
      %v1129 = vadd.f32 %v626, %v1126
      %v1130 = vld [vmem:[%s12] sm:$0x1]
      %v1131 = vld [vmem:[%s13] sm:$0x1]
      %v1132 = vsel %vm589, %v1129, 0.0
      %1133 = vadd.xlane.f32.xlu0 %v1132
      %v1134 = vpop.xlane.xlu0 %1133
      %v1135 = vmul.f32 %v1134, %v599
      %v1136 = vsub.f32 %v1129, %v1135
      %v1137 = vmul.f32 %v1136, %v1136
      %v1138 = vsel %vm589, %v1137, 0.0
      %1139 = vadd.xlane.f32.xlu0 %v1138
      %v1140 = vpop.xlane.xlu0 %1139
      %v1141 = vmul.f32 %v1140, %v599
      %v1142 = vadd.f32 %v1141, 1e-05
      %v1143 = vrsqrt.pop %v1142
      %v1144 = vmul.f32 %v1143, %v1142
      %v1145 = vmul.f32 %v1144, %v1143
      %v1146 = vmul.f32 0.5, %v1145
      %v1147 = vsub.f32 1.5, %v1146
      %v1148 = vmul.f32 %v1143, %v1147
      %vm1149 = vweird.f32 %v1142
      %vm1150 = vweird.f32 %v1143
      %vm1151 = vmor %vm1149, %vm1150
      %v1152 = vsel %vm1151, %v1143, %v1148
      %v1153 = vmul.f32 %v1136, %v1152
      %v1155 = vperm.slane %v1130, 0
      %v1157 = vmul.f32 %v1153, %v1155
      %v1159 = vperm.slane %v1131, 0
      %v1161 = vadd.f32 %v1157, %v1159
      %v1162 = vld [vmem:[%s14] sm:$0xf]
      %v1163 = vld [vmem:[%s14 + $0x4] sm:$0xf]
      %v1164 = vld [vmem:[%s14 + $0x8] sm:$0xf]
      %v1165 = vld [vmem:[%s14 + $0xc] sm:$0xf]
      %v1166 = vpack.c.bf16 %v1161, %v1161
      %v1167 = vld [vmem:[%s15] sm:$0x1]
      %v1169 = vperm.slane %v1167, 0
      %v1175 = vunpack.c.l.b16 %v1162
      %v1176 = vunpack.c.l.b16 %v1163
      %v1177 = vunpack.c.l.b16 %v1164
      %v1178 = vunpack.c.l.b16 %v1165
      %v1179 = vpack.c.b16 %v1176, %v1175
      %v1180 = vpack.c.b16 %v1178, %v1177
      %v1184 = vsel %vm589, %v1166, 0
      %1186 = vmatpush.bf16.msra.mxu0 0
      %1187 = vmatpush.bf16.msra.mxu0 0
      %1188 = vmatpush.bf16.msra.mxu0 0
      %1189 = vmatpush.bf16.msra.mxu0 0
      %1190 = vmatpush.bf16.msra.mxu0 0
      %1191 = vmatpush.bf16.msra.mxu0 0
      %1192 = vmatpush.bf16.msra.mxu0 %v1180
      %1193 = vmatpush.bf16.msra.mxu0 %v1179
      %1194 = vmatmul.bf16.gmra.mxu0 %v1184
      %v1195 = vpop.f32.mrf.mxu0
      %v1196 = vadd.f32 %v1169, %v1195
      %v1197 = vpop.f32.mrf.mxu0
      %1198 = vdwg.mxu0
      %v1199 = vmul.f32 %v1196, 0.5
      %v1200 = vmul.f32 %v1196, 0.044715
      %v1201 = vmul.f32 %v1200, %v1196
      %v1202 = vmul.f32 %v1201, %v1196
      %v1203 = vadd.f32 %v1196, %v1202
      %v1204 = vmul.f32 %v1203, 0.7978846
      %v1205 = vtanh.pop %v1204
      %v1206 = vadd.f32 %v1205, 1.0
      %v1207 = vmul.f32 %v1199, %v1206
      %v1208 = vld [vmem:[%s16] sm:$0xf]
      %v1209 = vld [vmem:[%s16 + $0x4] sm:$0xf]
      %v1210 = vld [vmem:[%s16 + $0x8] sm:$0xf]
      %v1211 = vld [vmem:[%s16 + $0xc] sm:$0xf]
      %v1212 = vld [vmem:[%s16 + $0x10] sm:$0xf]
      %v1213 = vld [vmem:[%s16 + $0x14] sm:$0xf]
      %v1214 = vld [vmem:[%s16 + $0x18] sm:$0xf]
      %v1215 = vld [vmem:[%s16 + $0x1c] sm:$0xf]
      %v1216 = vld [vmem:[%s16 + $0x20] sm:$0xf]
      %v1217 = vld [vmem:[%s16 + $0x24] sm:$0xf]
      %v1218 = vld [vmem:[%s16 + $0x28] sm:$0xf]
      %v1219 = vld [vmem:[%s16 + $0x2c] sm:$0xf]
      %v1220 = vld [vmem:[%s16 + $0x30] sm:$0xf]
      %v1221 = vld [vmem:[%s16 + $0x34] sm:$0xf]
      %v1222 = vld [vmem:[%s16 + $0x38] sm:$0xf]
      %v1223 = vld [vmem:[%s16 + $0x3c] sm:$0xf]
      %v1224 = vpack.c.bf16 %v1207, %v1207
      %v1225 = vld [vmem:[%s17] sm:$0x1]
      %v1227 = vperm.slane %v1225, 0
      %v1245 = vunpack.c.l.b16 %v1208
      %v1246 = vunpack.c.l.b16 %v1209
      %v1247 = vunpack.c.l.b16 %v1210
      %v1248 = vunpack.c.l.b16 %v1211
      %v1249 = vunpack.c.l.b16 %v1212
      %v1250 = vunpack.c.l.b16 %v1213
      %v1251 = vunpack.c.l.b16 %v1214
      %v1252 = vunpack.c.l.b16 %v1215
      %v1253 = vunpack.c.l.b16 %v1216
      %v1254 = vunpack.c.l.b16 %v1217
      %v1255 = vunpack.c.l.b16 %v1218
      %v1256 = vunpack.c.l.b16 %v1219
      %v1257 = vunpack.c.l.b16 %v1220
      %v1258 = vunpack.c.l.b16 %v1221
      %v1259 = vunpack.c.l.b16 %v1222
      %v1260 = vunpack.c.l.b16 %v1223
      %v1261 = vpack.c.b16 %v1246, %v1245
      %v1262 = vpack.c.b16 %v1248, %v1247
      %v1263 = vpack.c.b16 %v1250, %v1249
      %v1264 = vpack.c.b16 %v1252, %v1251
      %v1265 = vpack.c.b16 %v1254, %v1253
      %v1266 = vpack.c.b16 %v1256, %v1255
      %v1267 = vpack.c.b16 %v1258, %v1257
      %v1268 = vpack.c.b16 %v1260, %v1259
      %1277 = vmatpush.bf16.msra.mxu0 %v1268
      %1278 = vmatpush.bf16.msra.mxu0 %v1267
      %1279 = vmatpush.bf16.msra.mxu0 %v1266
      %1280 = vmatpush.bf16.msra.mxu0 %v1265
      %1281 = vmatpush.bf16.msra.mxu0 %v1264
      %1282 = vmatpush.bf16.msra.mxu0 %v1263
      %1283 = vmatpush.bf16.msra.mxu0 %v1262
      %1284 = vmatpush.bf16.msra.mxu0 %v1261
      %1285 = vmatmul.bf16.gmra.mxu0 %v1224
      %v1286 = vpop.f32.mrf.mxu0
      %v1287 = vadd.f32 %v1227, %v1286
      %v1288 = vpop.f32.mrf.mxu0
      %1289 = vdwg.mxu0
      %v1290 = vadd.f32 %v1129, %v1287
      %1291 = vst.msk [vmem:[%s584] sm:$0xff] %vm589, %v1290
      %p1292 = scmp.lt.s32.totalorder %s29, 1
      %s1293 = scalar_select %p1292, %s29, 1
      %s1294 = smul.addr %s1293, 8
      %s1295 = scalar_lea.vmem %s18, %s1294
      // Predicated region
      $region93: #{forward.5} parent=91 // pred_check
        %p1296 = pneg %p435
      $region94: #{forward.5} parent=91 // pred_check_branch
        %1298 = sbr.rel (%p1296) target = $region96
      $region95: #{forward.5} parent=91 // pred_region
        _
      $region96: #{forward.5} parent=91 // pred_fallthru
        _
    $region92: #{forward.5} parent=5 // pred_fallthru
      _
    %p1299 = scmp.le.s32.totalorder 2, %s24
    // Predicated region
    $region97: #{forward.5} parent=5 // pred_check
      %p1300 = pneg %p1299
    $region98: #{forward.5} parent=5 // pred_check_branch
      %1302 = sbr.rel (%p1300) target = $region100
    $region99: #{forward.5} parent=5 // pred_region
      %s1303 = ssub.s32 %s24, 2
      // Predicated region
      $region101: #{forward.5} parent=99 // pred_check
        %p1304 = pneg %p441
      $region102: #{forward.5} parent=99 // pred_check_branch
        %1306 = sbr.rel (%p1304) target = $region104
      $region103: #{forward.5} parent=99 // pred_region
        %p1307 = scmp.lt.s32.totalorder %s30, 1
        %s1308 = scalar_select %p1307, %s30, 1
        %s1309 = smul.addr %s1308, 8
        %s1310 = scalar_lea.vmem %s18, %s1309
      $region104: #{forward.5} parent=99 // pred_fallthru
        _
    $region100: #{forward.5} parent=5 // pred_fallthru
      _
  $region6: #{forward.5} parent=0 // loop_footer
    %s28 = sadd.s32 1, %s24
  $region7: #{forward.5} parent=0 // loop_footer_branch
    %23 = sbr.rel target = $region3
  $region8: #{forward.5} parent=0 // loop_exit
    _

// kernel: forward.7
$region0: #{forward.7}
  #allocation0 [shape = 'u32[]', space=smem, size = 0x4, offset = 0x4, fixed_abs, tag = 'smem constant byte address 0x4 - core index']
  #allocation1 [shape = 'u32[72,128]{1,0:T(1,128)}', space=vmem, size = 0x9000, scoped, tag = 'internal scratch']
  %s0 = inlined_call_operand.vmem [shape: f32[2,8,32], index: 0, kind: input, shape index: {}, may-alias: {0,18}]
  %s1 = inlined_call_operand.vmem [shape: f32[1,32], index: 1, kind: input, shape index: {}, may-alias: {1,3}]
  %s2 = inlined_call_operand.vmem [shape: f32[1,32], index: 2, kind: input, shape index: {}, may-alias: {2,4}]
  %s3 = inlined_call_operand.vmem [shape: f32[1,32], index: 3, kind: input, shape index: {}, may-alias: {1,3}]
  %s4 = inlined_call_operand.vmem [shape: f32[1,32], index: 4, kind: input, shape index: {}, may-alias: {2,4}]
  %s5 = inlined_call_operand.vmem [shape: bf16[32,96], index: 5, kind: input, shape index: {}]
  %s6 = inlined_call_operand.vmem [shape: f32[1,96], index: 6, kind: input, shape index: {}]
  %s7 = inlined_call_operand.vmem [shape: bf16[32,32], index: 7, kind: input, shape index: {}]
  %s8 = inlined_call_operand.vmem [shape: f32[1,32], index: 8, kind: input, shape index: {}]
  %s9 = inlined_call_operand.vmem [shape: f32[2,1,8], index: 9, kind: input, shape index: {}]
  %s10 = inlined_call_operand.vmem [shape: f32[8,8], index: 10, kind: input, shape index: {}]
  %s11 = inlined_call_operand.vmem [shape: f32[8,8], index: 11, kind: input, shape index: {}]
  %s12 = inlined_call_operand.vmem [shape: f32[1,32], index: 12, kind: input, shape index: {}]
  %s13 = inlined_call_operand.vmem [shape: f32[1,32], index: 13, kind: input, shape index: {}]
  %s14 = inlined_call_operand.vmem [shape: bf16[32,128], index: 14, kind: input, shape index: {}]
  %s15 = inlined_call_operand.vmem [shape: f32[1,128], index: 15, kind: input, shape index: {}]
  %s16 = inlined_call_operand.vmem [shape: bf16[128,32], index: 16, kind: input, shape index: {}]
  %s17 = inlined_call_operand.vmem [shape: f32[1,32], index: 17, kind: input, shape index: {}]
  %s18 = inlined_call_operand.vmem [shape: f32[2,8,32], index: 18, kind: output, shape index: {}, may-alias: {0,18}]
  %s19 = sld [smem:[#allocation0]]
  $region105: #{forward.7} parent=0
    _
  %s21 = ssub.s32 1, %s19
  %s22 = scalar_select 0, %s21, %s19
  loop: start=0, step=1, limit=4
  $region2: #{forward.7} parent=0 // loop_pre_header
    _
  $region3: #{forward.7} parent=0 // loop_header
    %s24 = sphi 0, %s28
    %p25 = scmp.ge.s32.totalorder %s24, 4
    %s34 = sphi 0, %s36
    %s37 = sphi 0, %s34
    %s38 = sphi 0, %s37
    %s54 = sphi 0, %s38
    %s58 = sphi 0, %s58
    %s60 = sphi 0, %s58
    %s61 = sphi 0, %s60
    %s75 = sphi 0, %s61
    %s79 = sphi 0, %s79
    %s81 = sphi 0, %s79
    %s82 = sphi 0, %s81
    %s96 = sphi 0, %s82
    %s100 = sphi 0, %s100
    %s102 = sphi 0, %s100
    %s103 = sphi 0, %s102
    %s117 = sphi 0, %s103
    %s121 = sphi 0, %s121
    %s123 = sphi 0, %s121
    %s124 = sphi 0, %s123
    %s138 = sphi 0, %s124
    %s142 = sphi 0, %s142
    %s144 = sphi 0, %s142
    %s145 = sphi 0, %s144
    %s159 = sphi 0, %s145
    %s163 = sphi 0, %s163
    %s165 = sphi 0, %s163
    %s166 = sphi 0, %s165
    %s180 = sphi 0, %s166
    %s184 = sphi 0, %s184
    %s186 = sphi 0, %s184
    %s187 = sphi 0, %s186
    %s201 = sphi 0, %s187
    %s205 = sphi 0, %s205
    %s207 = sphi 0, %s205
    %s208 = sphi 0, %s207
    %s222 = sphi 0, %s208
    %s228 = sphi 0, %s230
    %s231 = sphi 0, %s228
    %s232 = sphi 0, %s231
    %s248 = sphi 0, %s232
    %s252 = sphi 0, %s252
    %s254 = sphi 0, %s252
    %s255 = sphi 0, %s254
    %s269 = sphi 0, %s255
    %s273 = sphi 0, %s273
    %s275 = sphi 0, %s273
    %s276 = sphi 0, %s275
    %s290 = sphi 0, %s276
    %s294 = sphi 0, %s294
    %s296 = sphi 0, %s294
    %s297 = sphi 0, %s296
    %s311 = sphi 0, %s297
    %s315 = sphi 0, %s315
    %s317 = sphi 0, %s315
    %s318 = sphi 0, %s317
    %s332 = sphi 0, %s318
    %s336 = sphi 0, %s336
    %s338 = sphi 0, %s336
    %s339 = sphi 0, %s338
    %s353 = sphi 0, %s339
    %s357 = sphi 0, %s357
    %s359 = sphi 0, %s357
    %s360 = sphi 0, %s359
    %s374 = sphi 0, %s360
    %s378 = sphi 0, %s378
    %s380 = sphi 0, %s378
    %s381 = sphi 0, %s380
    %s395 = sphi 0, %s381
    %s399 = sphi 0, %s399
    %s401 = sphi 0, %s399
    %s402 = sphi 0, %s401
    %s416 = sphi 0, %s402
    %s422 = sphi 0, %s424
    %s425 = sphi 0, %s422
    %s426 = sphi 0, %s425
    %s442 = sphi 0, %s426
  $region4: #{forward.7} parent=0 // loop_header_branch
    %27 = sbr.rel (%p25) target = $region8
  $region5: #{forward.7} parent=0 // loop_body
    %s29 = ssub.s32 %s24, 1
    %s30 = ssub.s32 %s24, 2
    %s31 = sadd.s32 %s24, 1
    %s32 = ssub.s32 %s24, %s31
    %p33 = scmp.eq.s32.totalorder %s32, 0
    %s35 = sadd.s32 %s34, 1
    %s36 = scalar_select %p33, %s34, %s35
    %p39 = pneg %p33
    %p40 = scmp.eq.s32.totalorder %s24, 1
    %p41 = por %p39, %p40
    %p42 = scmp.ne.s32.totalorder %s34, %s37
    %p43 = scmp.eq.s32.totalorder %s24, 0
    %p44 = por %p42, %p43
    %p45 = scmp.ne.s32.totalorder %s34, %s37
    %p46 = scmp.eq.s32.totalorder %s29, 1
    %p47 = por %p45, %p46
    %p48 = scmp.ne.s32.totalorder %s37, %s38
    %p49 = scmp.eq.s32.totalorder %s29, 0
    %p50 = por %p48, %p49
    %p51 = scmp.ne.s32.totalorder %s37, %s38
    %p52 = scmp.eq.s32.totalorder %s30, 1
    %p53 = por %p51, %p52
    %p55 = scmp.ne.s32.totalorder %s38, %s54
    %p56 = scmp.eq.s32.totalorder %s30, 0
    %p57 = por %p55, %p56
    %s59 = sadd.s32 %s58, 1
    %p62 = scmp.eq.s32.totalorder %s24, 1
    %p63 = scmp.ne.s32.totalorder %s58, %s60
    %p64 = scmp.eq.s32.totalorder %s24, 0
    %p65 = por %p63, %p64
    %p66 = scmp.ne.s32.totalorder %s58, %s60
    %p67 = scmp.eq.s32.totalorder %s29, 1
    %p68 = por %p66, %p67
    %p69 = scmp.ne.s32.totalorder %s60, %s61
    %p70 = scmp.eq.s32.totalorder %s29, 0
    %p71 = por %p69, %p70
    %p72 = scmp.ne.s32.totalorder %s60, %s61
    %p73 = scmp.eq.s32.totalorder %s30, 1
    %p74 = por %p72, %p73
    %p76 = scmp.ne.s32.totalorder %s61, %s75
    %p77 = scmp.eq.s32.totalorder %s30, 0
    %p78 = por %p76, %p77
    %s80 = sadd.s32 %s79, 1
    %p83 = scmp.eq.s32.totalorder %s24, 1
    %p84 = scmp.ne.s32.totalorder %s79, %s81
    %p85 = scmp.eq.s32.totalorder %s24, 0
    %p86 = por %p84, %p85
    %p87 = scmp.ne.s32.totalorder %s79, %s81
    %p88 = scmp.eq.s32.totalorder %s29, 1
    %p89 = por %p87, %p88
    %p90 = scmp.ne.s32.totalorder %s81, %s82
    %p91 = scmp.eq.s32.totalorder %s29, 0
    %p92 = por %p90, %p91
    %p93 = scmp.ne.s32.totalorder %s81, %s82
    %p94 = scmp.eq.s32.totalorder %s30, 1
    %p95 = por %p93, %p94
    %p97 = scmp.ne.s32.totalorder %s82, %s96
    %p98 = scmp.eq.s32.totalorder %s30, 0
    %p99 = por %p97, %p98
    %s101 = sadd.s32 %s100, 1
    %p104 = scmp.eq.s32.totalorder %s24, 1
    %p105 = scmp.ne.s32.totalorder %s100, %s102
    %p106 = scmp.eq.s32.totalorder %s24, 0
    %p107 = por %p105, %p106
    %p108 = scmp.ne.s32.totalorder %s100, %s102
    %p109 = scmp.eq.s32.totalorder %s29, 1
    %p110 = por %p108, %p109
    %p111 = scmp.ne.s32.totalorder %s102, %s103
    %p112 = scmp.eq.s32.totalorder %s29, 0
    %p113 = por %p111, %p112
    %p114 = scmp.ne.s32.totalorder %s102, %s103
    %p115 = scmp.eq.s32.totalorder %s30, 1
    %p116 = por %p114, %p115
    %p118 = scmp.ne.s32.totalorder %s103, %s117
    %p119 = scmp.eq.s32.totalorder %s30, 0
    %p120 = por %p118, %p119
    %s122 = sadd.s32 %s121, 1
    %p125 = scmp.eq.s32.totalorder %s24, 1
    %p126 = scmp.ne.s32.totalorder %s121, %s123
    %p127 = scmp.eq.s32.totalorder %s24, 0
    %p128 = por %p126, %p127
    %p129 = scmp.ne.s32.totalorder %s121, %s123
    %p130 = scmp.eq.s32.totalorder %s29, 1
    %p131 = por %p129, %p130
    %p132 = scmp.ne.s32.totalorder %s123, %s124
    %p133 = scmp.eq.s32.totalorder %s29, 0
    %p134 = por %p132, %p133
    %p135 = scmp.ne.s32.totalorder %s123, %s124
    %p136 = scmp.eq.s32.totalorder %s30, 1
    %p137 = por %p135, %p136
    %p139 = scmp.ne.s32.totalorder %s124, %s138
    %p140 = scmp.eq.s32.totalorder %s30, 0
    %p141 = por %p139, %p140
    %s143 = sadd.s32 %s142, 1
    %p146 = scmp.eq.s32.totalorder %s24, 1
    %p147 = scmp.ne.s32.totalorder %s142, %s144
    %p148 = scmp.eq.s32.totalorder %s24, 0
    %p149 = por %p147, %p148
    %p150 = scmp.ne.s32.totalorder %s142, %s144
    %p151 = scmp.eq.s32.totalorder %s29, 1
    %p152 = por %p150, %p151
    %p153 = scmp.ne.s32.totalorder %s144, %s145
    %p154 = scmp.eq.s32.totalorder %s29, 0
    %p155 = por %p153, %p154
    %p156 = scmp.ne.s32.totalorder %s144, %s145
    %p157 = scmp.eq.s32.totalorder %s30, 1
    %p158 = por %p156, %p157
    %p160 = scmp.ne.s32.totalorder %s145, %s159
    %p161 = scmp.eq.s32.totalorder %s30, 0
    %p162 = por %p160, %p161
    %s164 = sadd.s32 %s163, 1
    %p167 = scmp.eq.s32.totalorder %s24, 1
    %p168 = scmp.ne.s32.totalorder %s163, %s165
    %p169 = scmp.eq.s32.totalorder %s24, 0
    %p170 = por %p168, %p169
    %p171 = scmp.ne.s32.totalorder %s163, %s165
    %p172 = scmp.eq.s32.totalorder %s29, 1
    %p173 = por %p171, %p172
    %p174 = scmp.ne.s32.totalorder %s165, %s166
    %p175 = scmp.eq.s32.totalorder %s29, 0
    %p176 = por %p174, %p175
    %p177 = scmp.ne.s32.totalorder %s165, %s166
    %p178 = scmp.eq.s32.totalorder %s30, 1
    %p179 = por %p177, %p178
    %p181 = scmp.ne.s32.totalorder %s166, %s180
    %p182 = scmp.eq.s32.totalorder %s30, 0
    %p183 = por %p181, %p182
    %s185 = sadd.s32 %s184, 1
    %p188 = scmp.eq.s32.totalorder %s24, 1
    %p189 = scmp.ne.s32.totalorder %s184, %s186
    %p190 = scmp.eq.s32.totalorder %s24, 0
    %p191 = por %p189, %p190
    %p192 = scmp.ne.s32.totalorder %s184, %s186
    %p193 = scmp.eq.s32.totalorder %s29, 1
    %p194 = por %p192, %p193
    %p195 = scmp.ne.s32.totalorder %s186, %s187
    %p196 = scmp.eq.s32.totalorder %s29, 0
    %p197 = por %p195, %p196
    %p198 = scmp.ne.s32.totalorder %s186, %s187
    %p199 = scmp.eq.s32.totalorder %s30, 1
    %p200 = por %p198, %p199
    %p202 = scmp.ne.s32.totalorder %s187, %s201
    %p203 = scmp.eq.s32.totalorder %s30, 0
    %p204 = por %p202, %p203
    %s206 = sadd.s32 %s205, 1
    %p209 = scmp.eq.s32.totalorder %s24, 1
    %p210 = scmp.ne.s32.totalorder %s205, %s207
    %p211 = scmp.eq.s32.totalorder %s24, 0
    %p212 = por %p210, %p211
    %p213 = scmp.ne.s32.totalorder %s205, %s207
    %p214 = scmp.eq.s32.totalorder %s29, 1
    %p215 = por %p213, %p214
    %p216 = scmp.ne.s32.totalorder %s207, %s208
    %p217 = scmp.eq.s32.totalorder %s29, 0
    %p218 = por %p216, %p217
    %p219 = scmp.ne.s32.totalorder %s207, %s208
    %p220 = scmp.eq.s32.totalorder %s30, 1
    %p221 = por %p219, %p220
    %p223 = scmp.ne.s32.totalorder %s208, %s222
    %p224 = scmp.eq.s32.totalorder %s30, 0
    %p225 = por %p223, %p224
    %s226 = ssub.s32 %s24, %s31
    %p227 = scmp.eq.s32.totalorder %s226, 0
    %s229 = sadd.s32 %s228, 1
    %s230 = scalar_select %p227, %s228, %s229
    %p233 = pneg %p227
    %p234 = scmp.eq.s32.totalorder %s24, 1
    %p235 = por %p233, %p234
    %p236 = scmp.ne.s32.totalorder %s228, %s231
    %p237 = scmp.eq.s32.totalorder %s24, 0
    %p238 = por %p236, %p237
    %p239 = scmp.ne.s32.totalorder %s228, %s231
    %p240 = scmp.eq.s32.totalorder %s29, 1
    %p241 = por %p239, %p240
    %p242 = scmp.ne.s32.totalorder %s231, %s232
    %p243 = scmp.eq.s32.totalorder %s29, 0
    %p244 = por %p242, %p243
    %p245 = scmp.ne.s32.totalorder %s231, %s232
    %p246 = scmp.eq.s32.totalorder %s30, 1
    %p247 = por %p245, %p246
    %p249 = scmp.ne.s32.totalorder %s232, %s248
    %p250 = scmp.eq.s32.totalorder %s30, 0
    %p251 = por %p249, %p250
    %s253 = sadd.s32 %s252, 1
    %p256 = scmp.eq.s32.totalorder %s24, 1
    %p257 = scmp.ne.s32.totalorder %s252, %s254
    %p258 = scmp.eq.s32.totalorder %s24, 0
    %p259 = por %p257, %p258
    %p260 = scmp.ne.s32.totalorder %s252, %s254
    %p261 = scmp.eq.s32.totalorder %s29, 1
    %p262 = por %p260, %p261
    %p263 = scmp.ne.s32.totalorder %s254, %s255
    %p264 = scmp.eq.s32.totalorder %s29, 0
    %p265 = por %p263, %p264
    %p266 = scmp.ne.s32.totalorder %s254, %s255
    %p267 = scmp.eq.s32.totalorder %s30, 1
    %p268 = por %p266, %p267
    %p270 = scmp.ne.s32.totalorder %s255, %s269
    %p271 = scmp.eq.s32.totalorder %s30, 0
    %p272 = por %p270, %p271
    %s274 = sadd.s32 %s273, 1
    %p277 = scmp.eq.s32.totalorder %s24, 1
    %p278 = scmp.ne.s32.totalorder %s273, %s275
    %p279 = scmp.eq.s32.totalorder %s24, 0
    %p280 = por %p278, %p279
    %p281 = scmp.ne.s32.totalorder %s273, %s275
    %p282 = scmp.eq.s32.totalorder %s29, 1
    %p283 = por %p281, %p282
    %p284 = scmp.ne.s32.totalorder %s275, %s276
    %p285 = scmp.eq.s32.totalorder %s29, 0
    %p286 = por %p284, %p285
    %p287 = scmp.ne.s32.totalorder %s275, %s276
    %p288 = scmp.eq.s32.totalorder %s30, 1
    %p289 = por %p287, %p288
    %p291 = scmp.ne.s32.totalorder %s276, %s290
    %p292 = scmp.eq.s32.totalorder %s30, 0
    %p293 = por %p291, %p292
    %s295 = sadd.s32 %s294, 1
    %p298 = scmp.eq.s32.totalorder %s24, 1
    %p299 = scmp.ne.s32.totalorder %s294, %s296
    %p300 = scmp.eq.s32.totalorder %s24, 0
    %p301 = por %p299, %p300
    %p302 = scmp.ne.s32.totalorder %s294, %s296
    %p303 = scmp.eq.s32.totalorder %s29, 1
    %p304 = por %p302, %p303
    %p305 = scmp.ne.s32.totalorder %s296, %s297
    %p306 = scmp.eq.s32.totalorder %s29, 0
    %p307 = por %p305, %p306
    %p308 = scmp.ne.s32.totalorder %s296, %s297
    %p309 = scmp.eq.s32.totalorder %s30, 1
    %p310 = por %p308, %p309
    %p312 = scmp.ne.s32.totalorder %s297, %s311
    %p313 = scmp.eq.s32.totalorder %s30, 0
    %p314 = por %p312, %p313
    %s316 = sadd.s32 %s315, 1
    %p319 = scmp.eq.s32.totalorder %s24, 1
    %p320 = scmp.ne.s32.totalorder %s315, %s317
    %p321 = scmp.eq.s32.totalorder %s24, 0
    %p322 = por %p320, %p321
    %p323 = scmp.ne.s32.totalorder %s315, %s317
    %p324 = scmp.eq.s32.totalorder %s29, 1
    %p325 = por %p323, %p324
    %p326 = scmp.ne.s32.totalorder %s317, %s318
    %p327 = scmp.eq.s32.totalorder %s29, 0
    %p328 = por %p326, %p327
    %p329 = scmp.ne.s32.totalorder %s317, %s318
    %p330 = scmp.eq.s32.totalorder %s30, 1
    %p331 = por %p329, %p330
    %p333 = scmp.ne.s32.totalorder %s318, %s332
    %p334 = scmp.eq.s32.totalorder %s30, 0
    %p335 = por %p333, %p334
    %s337 = sadd.s32 %s336, 1
    %p340 = scmp.eq.s32.totalorder %s24, 1
    %p341 = scmp.ne.s32.totalorder %s336, %s338
    %p342 = scmp.eq.s32.totalorder %s24, 0
    %p343 = por %p341, %p342
    %p344 = scmp.ne.s32.totalorder %s336, %s338
    %p345 = scmp.eq.s32.totalorder %s29, 1
    %p346 = por %p344, %p345
    %p347 = scmp.ne.s32.totalorder %s338, %s339
    %p348 = scmp.eq.s32.totalorder %s29, 0
    %p349 = por %p347, %p348
    %p350 = scmp.ne.s32.totalorder %s338, %s339
    %p351 = scmp.eq.s32.totalorder %s30, 1
    %p352 = por %p350, %p351
    %p354 = scmp.ne.s32.totalorder %s339, %s353
    %p355 = scmp.eq.s32.totalorder %s30, 0
    %p356 = por %p354, %p355
    %s358 = sadd.s32 %s357, 1
    %p361 = scmp.eq.s32.totalorder %s24, 1
    %p362 = scmp.ne.s32.totalorder %s357, %s359
    %p363 = scmp.eq.s32.totalorder %s24, 0
    %p364 = por %p362, %p363
    %p365 = scmp.ne.s32.totalorder %s357, %s359
    %p366 = scmp.eq.s32.totalorder %s29, 1
    %p367 = por %p365, %p366
    %p368 = scmp.ne.s32.totalorder %s359, %s360
    %p369 = scmp.eq.s32.totalorder %s29, 0
    %p370 = por %p368, %p369
    %p371 = scmp.ne.s32.totalorder %s359, %s360
    %p372 = scmp.eq.s32.totalorder %s30, 1
    %p373 = por %p371, %p372
    %p375 = scmp.ne.s32.totalorder %s360, %s374
    %p376 = scmp.eq.s32.totalorder %s30, 0
    %p377 = por %p375, %p376
    %s379 = sadd.s32 %s378, 1
    %p382 = scmp.eq.s32.totalorder %s24, 1
    %p383 = scmp.ne.s32.totalorder %s378, %s380
    %p384 = scmp.eq.s32.totalorder %s24, 0
    %p385 = por %p383, %p384
    %p386 = scmp.ne.s32.totalorder %s378, %s380
    %p387 = scmp.eq.s32.totalorder %s29, 1
    %p388 = por %p386, %p387
    %p389 = scmp.ne.s32.totalorder %s380, %s381
    %p390 = scmp.eq.s32.totalorder %s29, 0
    %p391 = por %p389, %p390
    %p392 = scmp.ne.s32.totalorder %s380, %s381
    %p393 = scmp.eq.s32.totalorder %s30, 1
    %p394 = por %p392, %p393
    %p396 = scmp.ne.s32.totalorder %s381, %s395
    %p397 = scmp.eq.s32.totalorder %s30, 0
    %p398 = por %p396, %p397
    %s400 = sadd.s32 %s399, 1
    %p403 = scmp.eq.s32.totalorder %s24, 1
    %p404 = scmp.ne.s32.totalorder %s399, %s401
    %p405 = scmp.eq.s32.totalorder %s24, 0
    %p406 = por %p404, %p405
    %p407 = scmp.ne.s32.totalorder %s399, %s401
    %p408 = scmp.eq.s32.totalorder %s29, 1
    %p409 = por %p407, %p408
    %p410 = scmp.ne.s32.totalorder %s401, %s402
    %p411 = scmp.eq.s32.totalorder %s29, 0
    %p412 = por %p410, %p411
    %p413 = scmp.ne.s32.totalorder %s401, %s402
    %p414 = scmp.eq.s32.totalorder %s30, 1
    %p415 = por %p413, %p414
    %p417 = scmp.ne.s32.totalorder %s402, %s416
    %p418 = scmp.eq.s32.totalorder %s30, 0
    %p419 = por %p417, %p418
    %s420 = ssub.s32 %s24, %s31
    %p421 = scmp.eq.s32.totalorder %s420, 0
    %s423 = sadd.s32 %s422, 1
    %s424 = scalar_select %p421, %s422, %s423
    %p427 = pneg %p421
    %p428 = scmp.eq.s32.totalorder %s24, 1
    %p429 = por %p427, %p428
    %p430 = scmp.ne.s32.totalorder %s422, %s425
    %p431 = scmp.eq.s32.totalorder %s24, 0
    %p432 = por %p430, %p431
    %p433 = scmp.ne.s32.totalorder %s422, %s425
    %p434 = scmp.eq.s32.totalorder %s29, 1
    %p435 = por %p433, %p434
    %p436 = scmp.ne.s32.totalorder %s425, %s426
    %p437 = scmp.eq.s32.totalorder %s29, 0
    %p438 = por %p436, %p437
    %p439 = scmp.ne.s32.totalorder %s425, %s426
    %p440 = scmp.eq.s32.totalorder %s30, 1
    %p441 = por %p439, %p440
    %p443 = scmp.ne.s32.totalorder %s426, %s442
    %p444 = scmp.eq.s32.totalorder %s30, 0
    %p445 = por %p443, %p444
    %p446 = scmp.le.s32.totalorder 1, %s24
    %p447 = scmp.lt.s32.totalorder %s24, 3
    %p448 = pnand %p446, %p447
    %p449 = pneg %p448
    // Predicated region
    $region9: #{forward.7} parent=5 // pred_check
      _
    $region10: #{forward.7} parent=5 // pred_check_branch
      %451 = sbr.rel (%p448) target = $region12
    $region11: #{forward.7} parent=5 // pred_region
      %s452 = ssub.s32 %s24, 1
      // Predicated region
      $region13: #{forward.7} parent=11 // pred_check
        %p453 = pneg %p71
      $region14: #{forward.7} parent=11 // pred_check_branch
        %455 = sbr.rel (%p453) target = $region16
      $region15: #{forward.7} parent=11 // pred_region
        _
      $region16: #{forward.7} parent=11 // pred_fallthru
        _
      // Predicated region
      $region17: #{forward.7} parent=11 // pred_check
        %p456 = pneg %p92
      $region18: #{forward.7} parent=11 // pred_check_branch
        %458 = sbr.rel (%p456) target = $region20
      $region19: #{forward.7} parent=11 // pred_region
        _
      $region20: #{forward.7} parent=11 // pred_fallthru
        _
      // Predicated region
      $region21: #{forward.7} parent=11 // pred_check
        %p459 = pneg %p113
      $region22: #{forward.7} parent=11 // pred_check_branch
        %461 = sbr.rel (%p459) target = $region24
      $region23: #{forward.7} parent=11 // pred_region
        _
      $region24: #{forward.7} parent=11 // pred_fallthru
        _
      // Predicated region
      $region25: #{forward.7} parent=11 // pred_check
        %p462 = pneg %p134
      $region26: #{forward.7} parent=11 // pred_check_branch
        %464 = sbr.rel (%p462) target = $region28
      $region27: #{forward.7} parent=11 // pred_region
        _
      $region28: #{forward.7} parent=11 // pred_fallthru
        _
      // Predicated region
      $region29: #{forward.7} parent=11 // pred_check
        %p465 = pneg %p155
      $region30: #{forward.7} parent=11 // pred_check_branch
        %467 = sbr.rel (%p465) target = $region32
      $region31: #{forward.7} parent=11 // pred_region
        _
      $region32: #{forward.7} parent=11 // pred_fallthru
        _
      // Predicated region
      $region33: #{forward.7} parent=11 // pred_check
        %p468 = pneg %p176
      $region34: #{forward.7} parent=11 // pred_check_branch
        %470 = sbr.rel (%p468) target = $region36
      $region35: #{forward.7} parent=11 // pred_region
        _
      $region36: #{forward.7} parent=11 // pred_fallthru
        _
      // Predicated region
      $region37: #{forward.7} parent=11 // pred_check
        %p471 = pneg %p197
      $region38: #{forward.7} parent=11 // pred_check_branch
        %473 = sbr.rel (%p471) target = $region40
      $region39: #{forward.7} parent=11 // pred_region
        _
      $region40: #{forward.7} parent=11 // pred_fallthru
        _
      // Predicated region
      $region41: #{forward.7} parent=11 // pred_check
        %p474 = pneg %p218
      $region42: #{forward.7} parent=11 // pred_check_branch
        %476 = sbr.rel (%p474) target = $region44
      $region43: #{forward.7} parent=11 // pred_region
        _
      $region44: #{forward.7} parent=11 // pred_fallthru
        _
      // Predicated region
      $region45: #{forward.7} parent=11 // pred_check
        %p477 = pneg %p265
      $region46: #{forward.7} parent=11 // pred_check_branch
        %479 = sbr.rel (%p477) target = $region48
      $region47: #{forward.7} parent=11 // pred_region
        _
      $region48: #{forward.7} parent=11 // pred_fallthru
        _
      // Predicated region
      $region49: #{forward.7} parent=11 // pred_check
        %p480 = pneg %p286
      $region50: #{forward.7} parent=11 // pred_check_branch
        %482 = sbr.rel (%p480) target = $region52
      $region51: #{forward.7} parent=11 // pred_region
        _
      $region52: #{forward.7} parent=11 // pred_fallthru
        _
      // Predicated region
      $region53: #{forward.7} parent=11 // pred_check
        %p483 = pneg %p307
      $region54: #{forward.7} parent=11 // pred_check_branch
        %485 = sbr.rel (%p483) target = $region56
      $region55: #{forward.7} parent=11 // pred_region
        _
      $region56: #{forward.7} parent=11 // pred_fallthru
        _
      // Predicated region
      $region57: #{forward.7} parent=11 // pred_check
        %p486 = pneg %p328
      $region58: #{forward.7} parent=11 // pred_check_branch
        %488 = sbr.rel (%p486) target = $region60
      $region59: #{forward.7} parent=11 // pred_region
        _
      $region60: #{forward.7} parent=11 // pred_fallthru
        _
      // Predicated region
      $region61: #{forward.7} parent=11 // pred_check
        %p489 = pneg %p349
      $region62: #{forward.7} parent=11 // pred_check_branch
        %491 = sbr.rel (%p489) target = $region64
      $region63: #{forward.7} parent=11 // pred_region
        _
      $region64: #{forward.7} parent=11 // pred_fallthru
        _
      // Predicated region
      $region65: #{forward.7} parent=11 // pred_check
        %p492 = pneg %p370
      $region66: #{forward.7} parent=11 // pred_check_branch
        %494 = sbr.rel (%p492) target = $region68
      $region67: #{forward.7} parent=11 // pred_region
        _
      $region68: #{forward.7} parent=11 // pred_fallthru
        _
      // Predicated region
      $region69: #{forward.7} parent=11 // pred_check
        %p495 = pneg %p391
      $region70: #{forward.7} parent=11 // pred_check_branch
        %497 = sbr.rel (%p495) target = $region72
      $region71: #{forward.7} parent=11 // pred_region
        _
      $region72: #{forward.7} parent=11 // pred_fallthru
        _
      // Predicated region
      $region73: #{forward.7} parent=11 // pred_check
        %p498 = pneg %p412
      $region74: #{forward.7} parent=11 // pred_check_branch
        %500 = sbr.rel (%p498) target = $region76
      $region75: #{forward.7} parent=11 // pred_region
        _
      $region76: #{forward.7} parent=11 // pred_fallthru
        _
    $region12: #{forward.7} parent=5 // pred_fallthru
      _
    %p501 = scmp.lt.s32.totalorder %s24, 2
    // Predicated region
    $region77: #{forward.7} parent=5 // pred_check
      %p502 = pneg %p501
    $region78: #{forward.7} parent=5 // pred_check_branch
      %504 = sbr.rel (%p502) target = $region80
    $region79: #{forward.7} parent=5 // pred_region
      // Predicated region
      $region81: #{forward.7} parent=79 // pred_check
        %p505 = pneg %p44
      $region82: #{forward.7} parent=79 // pred_check_branch
        %507 = sbr.rel (%p505) target = $region84
      $region83: #{forward.7} parent=79 // pred_region
        %p508 = scmp.lt.s32.totalorder %s24, 1
        %s509 = scalar_select %p508, %s24, 1
        %s510 = smul.addr %s509, 8
        %s511 = scalar_lea.vmem %s0, %s510
      $region84: #{forward.7} parent=79 // pred_fallthru
        _
      // Predicated region
      $region85: #{forward.7} parent=79 // pred_check
        %p512 = pneg %p238
      $region86: #{forward.7} parent=79 // pred_check_branch
        %514 = sbr.rel (%p512) target = $region88
      $region87: #{forward.7} parent=79 // pred_region
        %p515 = scmp.lt.s32.totalorder %s24, 1
        %s516 = scalar_select %p515, %s24, 1
        %s517 = scalar_lea.vmem %s9, %s516
      $region88: #{forward.7} parent=79 // pred_fallthru
        _
    $region80: #{forward.7} parent=5 // pred_fallthru
      _
    %p518 = scmp.le.s32.totalorder 1, %s24
    %p519 = scmp.lt.s32.totalorder %s24, 3
    %p520 = pnand %p518, %p519
    %p521 = pneg %p520
    // Predicated region
    $region89: #{forward.7} parent=5 // pred_check
      _
    $region90: #{forward.7} parent=5 // pred_check_branch
      %523 = sbr.rel (%p520) target = $region92
    $region91: #{forward.7} parent=5 // pred_region
      %s524 = ssub.s32 %s24, 1
      %p525 = scmp.lt.s32.totalorder %s29, 1
      %s526 = scalar_select %p525, %s29, 1
      %s527 = smul.addr %s526, 8
      %s528 = scalar_lea.vmem %s0, %s527
      %p529 = pneg %p50
      %p530 = pneg %p47
      %p531 = pneg %p71
      %p532 = pneg %p68
      %p533 = pneg %p92
      %p534 = pneg %p89
      %p535 = pneg %p113
      %p536 = pneg %p110
      %p537 = pneg %p134
      %p538 = pneg %p131
      %p539 = pneg %p155
      %p540 = pneg %p152
      %p541 = pneg %p176
      %p542 = pneg %p173
      %p543 = pneg %p197
      %p544 = pneg %p194
      %p545 = pneg %p218
      %p546 = pneg %p215
      %p547 = scmp.lt.s32.totalorder %s29, 1
      %s548 = scalar_select %p547, %s29, 1
      %s549 = scalar_lea.vmem %s9, %s548
      %p550 = pneg %p244
      %p551 = pneg %p241
      %p552 = pneg %p265
      %p553 = pneg %p262
      %p554 = pneg %p286
      %p555 = pneg %p283
      %p556 = pneg %p307
      %p557 = pneg %p304
      %p558 = pneg %p328
      %p559 = pneg %p325
      %p560 = pneg %p349
      %p561 = pneg %p346
      %p562 = pneg %p370
      %p563 = pneg %p367
      %p564 = pneg %p391
      %p565 = pneg %p388
      %p566 = pneg %p412
      %p567 = pneg %p409
      %p568 = pneg %p438
      %p569 = pneg %p435
      %p570 = scmp.lt.s32.totalorder %s29, 1
      %s571 = scalar_select %p570, %s29, 1
      %s572 = smul.addr %s571, 8
      %s573 = scalar_lea.vmem %s18, %s572
      %p574 = scmp.lt.s32.totalorder %s29, 1
      %s575 = scalar_select %p574, %s29, 1
      %s576 = smul.addr %s575, 8
      %s577 = scalar_lea.vmem %s0, %s576
      %p578 = scmp.lt.s32.totalorder %s29, 1
      %s579 = scalar_select %p578, %s29, 1
      %s580 = scalar_lea.vmem %s9, %s579
      %p581 = scmp.lt.s32.totalorder %s29, 1
      %s582 = scalar_select %p581, %s29, 1
      %s583 = smul.addr %s582, 8
      %s584 = scalar_lea.vmem %s18, %s583
      %v586 = vld [vmem:[%s577] sm:$0xff]
      %v587 = vld [vmem:[%s580] sm:$0x1]
      %v588 = vld [vmem:[%s10] sm:$0xff]
      %v589 = vld [vmem:[%s11] sm:$0xff]
      %v590 = vld [vmem:[%s3] sm:$0x1]
      %v591 = vld [vmem:[%s4] sm:$0x1]
      %vm592 = vcmask 261120
      %v593 = vsel %vm592, %v586, 0.0
      %594 = vadd.xlane.f32.xlu0 %v593
      %v595 = vpop.xlane.xlu0 %594
      %v596 = vrcp.pop 32.0
      %v597 = vmul.f32 32.0, %v596
      %v598 = vsub.f32 1.0, %v597
      %v599 = vmul.f32 %v596, %v598
      %v600 = vadd.f32 %v596, %v599
      %vm601 = vweird.f32 %v596
      %v602 = vsel %vm601, %v596, %v600
      %v603 = vmul.f32 %v595, %v602
      %v604 = vsub.f32 %v586, %v603
      %v605 = vmul.f32 %v604, %v604
      %v606 = vsel %vm592, %v605, 0.0
      %607 = vadd.xlane.f32.xlu0 %v606
      %v608 = vpop.xlane.xlu0 %607
      %v609 = vmul.f32 %v608, %v602
      %v610 = vadd.f32 %v609, 1e-05
      %v611 = vrsqrt.pop %v610
      %v612 = vmul.f32 %v611, %v610
      %v613 = vmul.f32 %v612, %v611
      %v614 = vmul.f32 0.5, %v613
      %v615 = vsub.f32 1.5, %v614
      %v616 = vmul.f32 %v611, %v615
      %vm617 = vweird.f32 %v610
      %vm618 = vweird.f32 %v611
      %vm619 = vmor %vm617, %vm618
      %v620 = vsel %vm619, %v611, %v616
      %v621 = vmul.f32 %v604, %v620
      %v623 = vperm.slane %v590, 0
      %v625 = vmul.f32 %v621, %v623
      %v627 = vperm.slane %v591, 0
      %v629 = vadd.f32 %v625, %v627
      %v630 = vld [vmem:[%s5] sm:$0xf]
      %v631 = vld [vmem:[%s5 + $0x4] sm:$0xf]
      %v632 = vld [vmem:[%s5 + $0x8] sm:$0xf]
      %v633 = vld [vmem:[%s5 + $0xc] sm:$0xf]
      %v634 = vld [vmem:[%s6] sm:$0x1]
      %v635 = vpack.c.bf16 %v629, %v629
      %v637 = vperm.slane %v634, 0
      %v643 = vunpack.c.l.b16 %v630
      %v644 = vunpack.c.l.b16 %v631
      %v645 = vunpack.c.l.b16 %v632
      %v646 = vunpack.c.l.b16 %v633
      %v647 = vpack.c.b16 %v644, %v643
      %v648 = vpack.c.b16 %v646, %v645
      %v652 = vsel %vm592, %v635, 0
      %654 = vmatpush.bf16.msra.mxu0 0
      %655 = vmatpush.bf16.msra.mxu0 0
      %656 = vmatpush.bf16.msra.mxu0 0
      %657 = vmatpush.bf16.msra.mxu0 0
      %658 = vmatpush.bf16.msra.mxu0 0
      %659 = vmatpush.bf16.msra.mxu0 0
      %660 = vmatpush.bf16.msra.mxu0 %v648
      %661 = vmatpush.bf16.msra.mxu0 %v647
      %662 = vmatmul.bf16.gmra.mxu0 %v652
      %v663 = vpop.f32.mrf.mxu0
      %v664 = vadd.f32 %v637, %v663
      %v665 = vpop.f32.mrf.mxu0
      %666 = vdwg.mxu0
      %668 = vrot.lane.b32.xlu0 %v664, 120
      %v669 = vpop.permute.xlu0 %668
      %671 = vrot.lane.b32.xlu0 %v664, 112
      %v672 = vpop.permute.xlu0 %671
      %674 = vrot.lane.b32.xlu0 %v664, 104
      %v675 = vpop.permute.xlu0 %674
      %v677 = vmul.f32 %v664, %v588
      %v678 = vmul.f32 %v669, %v588
      %v679 = vmul.f32 %v672, %v588
      %v680 = vmul.f32 %v675, %v588
      %681 = vrot.lane.b32.xlu0 %v664, 124
      %v682 = vpop.permute.xlu0 %681
      %683 = vrot.lane.b32.xlu0 %v669, 124
      %v684 = vpop.permute.xlu0 %683
      %685 = vrot.lane.b32.xlu0 %v672, 124
      %v686 = vpop.permute.xlu0 %685
      %687 = vrot.lane.b32.xlu0 %v675, 124
      %v688 = vpop.permute.xlu0 %687
      %693 = vrot.lane.b32.xlu0 %v664, 4
      %v694 = vpop.permute.xlu0 %693
      %695 = vrot.lane.b32.xlu0 %v669, 4
      %v696 = vpop.permute.xlu0 %695
      %697 = vrot.lane.b32.xlu0 %v672, 4
      %v698 = vpop.permute.xlu0 %697
      %699 = vrot.lane.b32.xlu0 %v675, 4
      %v700 = vpop.permute.xlu0 %699
      %vm705 = vcmask 31744
      %v706 = vsel %vm705, %v682, %v694
      %v707 = vsel %vm705, %v684, %v696
      %v708 = vsel %vm705, %v686, %v698
      %v709 = vsel %vm705, %v688, %v700
      %v710 = vmul.f32 %v706, %v589
      %v711 = vmul.f32 %v707, %v589
      %v712 = vmul.f32 %v708, %v589
      %v713 = vmul.f32 %v709, %v589
      %v714 = vadd.f32 %v677, %v710
      %v715 = vadd.f32 %v678, %v711
      %v716 = vadd.f32 %v679, %v712
      %v717 = vadd.f32 %v680, %v713
      %719 = vrot.lane.b32.xlu0 %v588, 32
      %v720 = vpop.permute.xlu0 %719
      %v722 = vmul.f32 %v664, %v720
      %v723 = vmul.f32 %v669, %v720
      %v724 = vmul.f32 %v672, %v720
      %v725 = vmul.f32 %v675, %v720
      %726 = vrot.lane.b32.xlu0 %v664, 92
      %v727 = vpop.permute.xlu0 %726
      %728 = vrot.lane.b32.xlu0 %v669, 92
      %v729 = vpop.permute.xlu0 %728
      %730 = vrot.lane.b32.xlu0 %v672, 92
      %v731 = vpop.permute.xlu0 %730
      %732 = vrot.lane.b32.xlu0 %v675, 92
      %v733 = vpop.permute.xlu0 %732
      %738 = vrot.lane.b32.xlu0 %v664, 100
      %v739 = vpop.permute.xlu0 %738
      %740 = vrot.lane.b32.xlu0 %v669, 100
      %v741 = vpop.permute.xlu0 %740
      %742 = vrot.lane.b32.xlu0 %v672, 100
      %v743 = vpop.permute.xlu0 %742
      %744 = vrot.lane.b32.xlu0 %v675, 100
      %v745 = vpop.permute.xlu0 %744
      %v750 = vsel %vm705, %v727, %v739
      %v751 = vsel %vm705, %v729, %v741
      %v752 = vsel %vm705, %v731, %v743
      %v753 = vsel %vm705, %v733, %v745
      %v754 = vmul.f32 %v750, %v589
      %v755 = vmul.f32 %v751, %v589
      %v756 = vmul.f32 %v752, %v589
      %v757 = vmul.f32 %v753, %v589
      %762 = vrot.lane.b32.xlu0 %v754, 32
      %v763 = vpop.permute.xlu0 %762
      %764 = vrot.lane.b32.xlu0 %v755, 32
      %v765 = vpop.permute.xlu0 %764
      %766 = vrot.lane.b32.xlu0 %v756, 32
      %v767 = vpop.permute.xlu0 %766
      %768 = vrot.lane.b32.xlu0 %v757, 32
      %v769 = vpop.permute.xlu0 %768
      %v774 = vadd.f32 %v722, %v763
      %v775 = vadd.f32 %v723, %v765
      %v776 = vadd.f32 %v724, %v767
      %v777 = vadd.f32 %v725, %v769
      %v778 = vpack.c.bf16 %v714, %v714
      %v779 = vpack.c.bf16 %v715, %v715
      %v780 = vpack.c.bf16 %v716, %v716
      %v781 = vpack.c.bf16 %v717, %v717
      %v782 = vpack.c.bf16 %v774, %v774
      %v783 = vpack.c.bf16 %v775, %v775
      %v784 = vpack.c.bf16 %v776, %v776
      %v785 = vpack.c.bf16 %v777, %v777
      %v787 = vunpack.c.l.b16 %v782
      %v788 = vpack.c.b16 %v787, %v787
      %789 = vrot.lane.b32.xlu0 %v788, 96
      %v790 = vpop.permute.xlu0 %789
      %vm791 = vcmask 64512
      %v793 = vsel %vm791, %v778, 0
      %v796 = vsel %vm791, %v790, 0
      %798 = vmatpush.bf16.xpose.msra.mxu0 0
      %799 = vmatpush.bf16.xpose.msra.mxu0 0
      %800 = vmatpush.bf16.xpose.msra.mxu0 0
      %801 = vmatpush.bf16.xpose.msra.mxu0 0
      %802 = vmatpush.bf16.xpose.msra.mxu0 0
      %803 = vmatpush.bf16.xpose.msra.mxu0 0
      %804 = vmatpush.bf16.xpose.msra.mxu0 0
      %805 = vmatpush.bf16.xpose.msra.mxu0 %v796
      %806 = vmatmul.bf16.gmra.mxu0 %v793
      %v807 = vpop.f32.mrf.mxu0
      %v808 = vadd.f32 0.0, %v807
      %v809 = vpop.f32.mrf.mxu0
      %810 = vdwg.mxu0
      %v812 = vunpack.c.l.b16 %v783
      %v813 = vpack.c.b16 %v812, %v812
      %814 = vrot.lane.b32.xlu0 %v813, 96
      %v815 = vpop.permute.xlu0 %814
      %v817 = vsel %vm791, %v779, 0
      %v820 = vsel %vm791, %v815, 0
      %822 = vmatpush.bf16.xpose.msra.mxu0 0
      %823 = vmatpush.bf16.xpose.msra.mxu0 0
      %824 = vmatpush.bf16.xpose.msra.mxu0 0
      %825 = vmatpush.bf16.xpose.msra.mxu0 0
      %826 = vmatpush.bf16.xpose.msra.mxu0 0
      %827 = vmatpush.bf16.xpose.msra.mxu0 0
      %828 = vmatpush.bf16.xpose.msra.mxu0 0
      %829 = vmatpush.bf16.xpose.msra.mxu0 %v820
      %830 = vmatmul.bf16.gmra.mxu0 %v817
      %v831 = vpop.f32.mrf.mxu0
      %v832 = vadd.f32 0.0, %v831
      %v833 = vpop.f32.mrf.mxu0
      %834 = vdwg.mxu0
      %v836 = vunpack.c.l.b16 %v784
      %v837 = vpack.c.b16 %v836, %v836
      %838 = vrot.lane.b32.xlu0 %v837, 96
      %v839 = vpop.permute.xlu0 %838
      %v841 = vsel %vm791, %v780, 0
      %v844 = vsel %vm791, %v839, 0
      %846 = vmatpush.bf16.xpose.msra.mxu0 0
      %847 = vmatpush.bf16.xpose.msra.mxu0 0
      %848 = vmatpush.bf16.xpose.msra.mxu0 0
      %849 = vmatpush.bf16.xpose.msra.mxu0 0
      %850 = vmatpush.bf16.xpose.msra.mxu0 0
      %851 = vmatpush.bf16.xpose.msra.mxu0 0
      %852 = vmatpush.bf16.xpose.msra.mxu0 0
      %853 = vmatpush.bf16.xpose.msra.mxu0 %v844
      %854 = vmatmul.bf16.gmra.mxu0 %v841
      %v855 = vpop.f32.mrf.mxu0
      %v856 = vadd.f32 0.0, %v855
      %v857 = vpop.f32.mrf.mxu0
      %858 = vdwg.mxu0
      %v860 = vunpack.c.l.b16 %v785
      %v861 = vpack.c.b16 %v860, %v860
      %862 = vrot.lane.b32.xlu0 %v861, 96
      %v863 = vpop.permute.xlu0 %862
      %v865 = vsel %vm791, %v781, 0
      %v868 = vsel %vm791, %v863, 0
      %870 = vmatpush.bf16.xpose.msra.mxu0 0
      %871 = vmatpush.bf16.xpose.msra.mxu0 0
      %872 = vmatpush.bf16.xpose.msra.mxu0 0
      %873 = vmatpush.bf16.xpose.msra.mxu0 0
      %874 = vmatpush.bf16.xpose.msra.mxu0 0
      %875 = vmatpush.bf16.xpose.msra.mxu0 0
      %876 = vmatpush.bf16.xpose.msra.mxu0 0
      %877 = vmatpush.bf16.xpose.msra.mxu0 %v868
      %878 = vmatmul.bf16.gmra.mxu0 %v865
      %v879 = vpop.f32.mrf.mxu0
      %v880 = vadd.f32 0.0, %v879
      %v881 = vpop.f32.mrf.mxu0
      %882 = vdwg.mxu0
      %v883 = vmul.f32 %v808, 0.35355338
      %v884 = vmul.f32 %v832, 0.35355338
      %v885 = vmul.f32 %v856, 0.35355338
      %v886 = vmul.f32 %v880, 0.35355338
      %v888 = vperm.slane %v587, 0
      %v890 = vadd.f32 %v883, %v888
      %v891 = vadd.f32 %v884, %v888
      %v892 = vadd.f32 %v885, %v888
      %v893 = vadd.f32 %v886, %v888
      %v894 = vsel %vm791, %v890, -inf
      %895 = vmax.xlane.f32.xlu0 %v894
      %v896 = vpop.xlane.xlu0 %895
      %v897 = vsel %vm791, %v891, -inf
      %898 = vmax.xlane.f32.xlu0 %v897
      %v899 = vpop.xlane.xlu0 %898
      %v900 = vsel %vm791, %v892, -inf
      %901 = vmax.xlane.f32.xlu0 %v900
      %v902 = vpop.xlane.xlu0 %901
      %v903 = vsel %vm791, %v893, -inf
      %904 = vmax.xlane.f32.xlu0 %v903
      %v905 = vpop.xlane.xlu0 %904
      %v906 = vsub.f32 %v890, %v896
      %v907 = vsub.f32 %v891, %v899
      %v908 = vsub.f32 %v892, %v902
      %v909 = vsub.f32 %v893, %v905
      %v910 = vmul.f32 %v906, 1.442695
      %v911 = vpow.pop %v910
      %v912 = vmul.f32 %v907, 1.442695
      %v913 = vpow.pop %v912
      %v914 = vmul.f32 %v908, 1.442695
      %v915 = vpow.pop %v914
      %v916 = vmul.f32 %v909, 1.442695
      %v917 = vpow.pop %v916
      %v918 = vsel %vm791, %v911, 0.0
      %919 = vadd.xlane.f32.xlu0 %v918
      %v920 = vpop.xlane.xlu0 %919
      %v921 = vsel %vm791, %v913, 0.0
      %922 = vadd.xlane.f32.xlu0 %v921
      %v923 = vpop.xlane.xlu0 %922
      %v924 = vsel %vm791, %v915, 0.0
      %925 = vadd.xlane.f32.xlu0 %v924
      %v926 = vpop.xlane.xlu0 %925
      %v927 = vsel %vm791, %v917, 0.0
      %928 = vadd.xlane.f32.xlu0 %v927
      %v929 = vpop.xlane.xlu0 %928
      %v930 = vpack.c.bf16 %v911, %v911
      %v931 = vpack.c.bf16 %v913, %v913
      %v932 = vpack.c.bf16 %v915, %v915
      %v933 = vpack.c.bf16 %v917, %v917
      %v934 = vpack.c.bf16 %v664, %v664
      %v935 = vpack.c.bf16 %v669, %v669
      %v936 = vpack.c.bf16 %v672, %v672
      %v937 = vpack.c.bf16 %v675, %v675
      %v939 = vunpack.c.l.b16 %v934
      %v940 = vpack.c.b16 %v939, %v939
      %941 = vrot.lane.b32.xlu0 %v940, 64
      %v942 = vpop.permute.xlu0 %941
      %v944 = vsel %vm791, %v930, 0
      %vm946 = vcmask 1043456
      %v948 = vsel %vm946, %v942, 0
      %950 = vmatpush.bf16.msra.mxu0 0
      %951 = vmatpush.bf16.msra.mxu0 0
      %952 = vmatpush.bf16.msra.mxu0 0
      %953 = vmatpush.bf16.msra.mxu0 0
      %954 = vmatpush.bf16.msra.mxu0 0
      %955 = vmatpush.bf16.msra.mxu0 0
      %956 = vmatpush.bf16.msra.mxu0 0
      %957 = vmatpush.bf16.msra.mxu0 %v948
      %958 = vmatmul.bf16.gmra.mxu0 %v944
      %v959 = vpop.f32.mrf.mxu0
      %v960 = vadd.f32 0.0, %v959
      %v961 = vpop.f32.mrf.mxu0
      %962 = vdwg.mxu0
      %v964 = vunpack.c.l.b16 %v935
      %v965 = vpack.c.b16 %v964, %v964
      %966 = vrot.lane.b32.xlu0 %v965, 64
      %v967 = vpop.permute.xlu0 %966
      %v969 = vsel %vm791, %v931, 0
      %v972 = vsel %vm946, %v967, 0
      %974 = vmatpush.bf16.msra.mxu0 0
      %975 = vmatpush.bf16.msra.mxu0 0
      %976 = vmatpush.bf16.msra.mxu0 0
      %977 = vmatpush.bf16.msra.mxu0 0
      %978 = vmatpush.bf16.msra.mxu0 0
      %979 = vmatpush.bf16.msra.mxu0 0
      %980 = vmatpush.bf16.msra.mxu0 0
      %981 = vmatpush.bf16.msra.mxu0 %v972
      %982 = vmatmul.bf16.gmra.mxu0 %v969
      %v983 = vpop.f32.mrf.mxu0
      %v984 = vadd.f32 0.0, %v983
      %v985 = vpop.f32.mrf.mxu0
      %986 = vdwg.mxu0
      %v988 = vunpack.c.l.b16 %v936
      %v989 = vpack.c.b16 %v988, %v988
      %990 = vrot.lane.b32.xlu0 %v989, 64
      %v991 = vpop.permute.xlu0 %990
      %v993 = vsel %vm791, %v932, 0
      %v996 = vsel %vm946, %v991, 0
      %998 = vmatpush.bf16.msra.mxu0 0
      %999 = vmatpush.bf16.msra.mxu0 0
      %1000 = vmatpush.bf16.msra.mxu0 0
      %1001 = vmatpush.bf16.msra.mxu0 0
      %1002 = vmatpush.bf16.msra.mxu0 0
      %1003 = vmatpush.bf16.msra.mxu0 0
      %1004 = vmatpush.bf16.msra.mxu0 0
      %1005 = vmatpush.bf16.msra.mxu0 %v996
      %1006 = vmatmul.bf16.gmra.mxu0 %v993
      %v1007 = vpop.f32.mrf.mxu0
      %v1008 = vadd.f32 0.0, %v1007
      %v1009 = vpop.f32.mrf.mxu0
      %1010 = vdwg.mxu0
      %v1012 = vunpack.c.l.b16 %v937
      %v1013 = vpack.c.b16 %v1012, %v1012
      %1014 = vrot.lane.b32.xlu0 %v1013, 64
      %v1015 = vpop.permute.xlu0 %1014
      %v1017 = vsel %vm791, %v933, 0
      %v1020 = vsel %vm946, %v1015, 0
      %1022 = vmatpush.bf16.msra.mxu0 0
      %1023 = vmatpush.bf16.msra.mxu0 0
      %1024 = vmatpush.bf16.msra.mxu0 0
      %1025 = vmatpush.bf16.msra.mxu0 0
      %1026 = vmatpush.bf16.msra.mxu0 0
      %1027 = vmatpush.bf16.msra.mxu0 0
      %1028 = vmatpush.bf16.msra.mxu0 0
      %1029 = vmatpush.bf16.msra.mxu0 %v1020
      %1030 = vmatmul.bf16.gmra.mxu0 %v1017
      %v1031 = vpop.f32.mrf.mxu0
      %v1032 = vadd.f32 0.0, %v1031
      %v1033 = vpop.f32.mrf.mxu0
      %1034 = vdwg.mxu0
      %v1035 = vrcp.pop %v920
      %v1036 = vrcp.pop %v923
      %v1037 = vrcp.pop %v926
      %v1038 = vrcp.pop %v929
      %v1039 = vmul.f32 %v960, %v1035
      %v1040 = vmul.f32 %v984, %v1036
      %v1041 = vmul.f32 %v1008, %v1037
      %v1042 = vmul.f32 %v1032, %v1038
      %1044 = vrot.lane.b32.xlu0 %v1040, 8
      %v1045 = vpop.permute.xlu0 %1044
      %1048 = vrot.lane.b32.xlu0 %v1041, 16
      %v1049 = vpop.permute.xlu0 %1048
      %1052 = vrot.lane.b32.xlu0 %v1042, 24
      %v1053 = vpop.permute.xlu0 %1052
      %v1055 = vsel %vm791, %v1039, %v1045
      %vm1056 = vcmask 130048
      %v1057 = vsel %vm1056, %v1055, %v1049
      %vm1058 = vcmask 195584
      %v1059 = vsel %vm1058, %v1057, %v1053
      %v1060 = vld [vmem:[%s7] sm:$0xf]
      %v1061 = vld [vmem:[%s7 + $0x4] sm:$0xf]
      %v1062 = vld [vmem:[%s7 + $0x8] sm:$0xf]
      %v1063 = vld [vmem:[%s7 + $0xc] sm:$0xf]
      %v1064 = vpack.c.bf16 %v1059, %v1059
      %v1065 = vld [vmem:[%s8] sm:$0x1]
      %v1067 = vperm.slane %v1065, 0
      %v1073 = vunpack.c.l.b16 %v1060
      %v1074 = vunpack.c.l.b16 %v1061
      %v1075 = vunpack.c.l.b16 %v1062
      %v1076 = vunpack.c.l.b16 %v1063
      %v1077 = vpack.c.b16 %v1074, %v1073
      %v1078 = vpack.c.b16 %v1076, %v1075
      %v1082 = vsel %vm592, %v1064, 0
      %1084 = vmatpush.bf16.msra.mxu0 0
      %1085 = vmatpush.bf16.msra.mxu0 0
      %1086 = vmatpush.bf16.msra.mxu0 0
      %1087 = vmatpush.bf16.msra.mxu0 0
      %1088 = vmatpush.bf16.msra.mxu0 0
      %1089 = vmatpush.bf16.msra.mxu0 0
      %1090 = vmatpush.bf16.msra.mxu0 %v1078
      %1091 = vmatpush.bf16.msra.mxu0 %v1077
      %1092 = vmatmul.bf16.gmra.mxu0 %v1082
      %v1093 = vpop.f32.mrf.mxu0
      %v1094 = vadd.f32 %v1067, %v1093
      %v1095 = vpop.f32.mrf.mxu0
      %1096 = vdwg.mxu0
      %v1097 = vadd.f32 %v586, %v1094
      %v1098 = vld [vmem:[%s12] sm:$0x1]
      %v1099 = vld [vmem:[%s13] sm:$0x1]
      %v1100 = vsel %vm592, %v1097, 0.0
      %1101 = vadd.xlane.f32.xlu0 %v1100
      %v1102 = vpop.xlane.xlu0 %1101
      %v1103 = vmul.f32 %v1102, %v602
      %v1104 = vsub.f32 %v1097, %v1103
      %v1105 = vmul.f32 %v1104, %v1104
      %v1106 = vsel %vm592, %v1105, 0.0
      %1107 = vadd.xlane.f32.xlu0 %v1106
      %v1108 = vpop.xlane.xlu0 %1107
      %v1109 = vmul.f32 %v1108, %v602
      %v1110 = vadd.f32 %v1109, 1e-05
      %v1111 = vrsqrt.pop %v1110
      %v1112 = vmul.f32 %v1111, %v1110
      %v1113 = vmul.f32 %v1112, %v1111
      %v1114 = vmul.f32 0.5, %v1113
      %v1115 = vsub.f32 1.5, %v1114
      %v1116 = vmul.f32 %v1111, %v1115
      %vm1117 = vweird.f32 %v1110
      %vm1118 = vweird.f32 %v1111
      %vm1119 = vmor %vm1117, %vm1118
      %v1120 = vsel %vm1119, %v1111, %v1116
      %v1121 = vmul.f32 %v1104, %v1120
      %v1123 = vperm.slane %v1098, 0
      %v1125 = vmul.f32 %v1121, %v1123
      %v1127 = vperm.slane %v1099, 0
      %v1129 = vadd.f32 %v1125, %v1127
      %v1130 = vld [vmem:[%s14] sm:$0xf]
      %v1131 = vld [vmem:[%s14 + $0x4] sm:$0xf]
      %v1132 = vld [vmem:[%s14 + $0x8] sm:$0xf]
      %v1133 = vld [vmem:[%s14 + $0xc] sm:$0xf]
      %v1134 = vpack.c.bf16 %v1129, %v1129
      %v1135 = vld [vmem:[%s15] sm:$0x1]
      %v1137 = vperm.slane %v1135, 0
      %v1143 = vunpack.c.l.b16 %v1130
      %v1144 = vunpack.c.l.b16 %v1131
      %v1145 = vunpack.c.l.b16 %v1132
      %v1146 = vunpack.c.l.b16 %v1133
      %v1147 = vpack.c.b16 %v1144, %v1143
      %v1148 = vpack.c.b16 %v1146, %v1145
      %v1152 = vsel %vm592, %v1134, 0
      %1154 = vmatpush.bf16.msra.mxu0 0
      %1155 = vmatpush.bf16.msra.mxu0 0
      %1156 = vmatpush.bf16.msra.mxu0 0
      %1157 = vmatpush.bf16.msra.mxu0 0
      %1158 = vmatpush.bf16.msra.mxu0 0
      %1159 = vmatpush.bf16.msra.mxu0 0
      %1160 = vmatpush.bf16.msra.mxu0 %v1148
      %1161 = vmatpush.bf16.msra.mxu0 %v1147
      %1162 = vmatmul.bf16.gmra.mxu0 %v1152
      %v1163 = vpop.f32.mrf.mxu0
      %v1164 = vadd.f32 %v1137, %v1163
      %v1165 = vpop.f32.mrf.mxu0
      %1166 = vdwg.mxu0
      %v1167 = vmul.f32 %v1164, 0.5
      %v1168 = vmul.f32 %v1164, 0.044715
      %v1169 = vmul.f32 %v1168, %v1164
      %v1170 = vmul.f32 %v1169, %v1164
      %v1171 = vadd.f32 %v1164, %v1170
      %v1172 = vmul.f32 %v1171, 0.7978846
      %v1173 = vtanh.pop %v1172
      %v1174 = vadd.f32 %v1173, 1.0
      %v1175 = vmul.f32 %v1167, %v1174
      %v1176 = vld [vmem:[%s16] sm:$0xf]
      %v1177 = vld [vmem:[%s16 + $0x4] sm:$0xf]
      %v1178 = vld [vmem:[%s16 + $0x8] sm:$0xf]
      %v1179 = vld [vmem:[%s16 + $0xc] sm:$0xf]
      %v1180 = vld [vmem:[%s16 + $0x10] sm:$0xf]
      %v1181 = vld [vmem:[%s16 + $0x14] sm:$0xf]
      %v1182 = vld [vmem:[%s16 + $0x18] sm:$0xf]
      %v1183 = vld [vmem:[%s16 + $0x1c] sm:$0xf]
      %v1184 = vld [vmem:[%s16 + $0x20] sm:$0xf]
      %v1185 = vld [vmem:[%s16 + $0x24] sm:$0xf]
      %v1186 = vld [vmem:[%s16 + $0x28] sm:$0xf]
      %v1187 = vld [vmem:[%s16 + $0x2c] sm:$0xf]
      %v1188 = vld [vmem:[%s16 + $0x30] sm:$0xf]
      %v1189 = vld [vmem:[%s16 + $0x34] sm:$0xf]
      %v1190 = vld [vmem:[%s16 + $0x38] sm:$0xf]
      %v1191 = vld [vmem:[%s16 + $0x3c] sm:$0xf]
      %v1192 = vpack.c.bf16 %v1175, %v1175
      %v1193 = vld [vmem:[%s17] sm:$0x1]
      %v1195 = vperm.slane %v1193, 0
      %v1213 = vunpack.c.l.b16 %v1176
      %v1214 = vunpack.c.l.b16 %v1177
      %v1215 = vunpack.c.l.b16 %v1178
      %v1216 = vunpack.c.l.b16 %v1179
      %v1217 = vunpack.c.l.b16 %v1180
      %v1218 = vunpack.c.l.b16 %v1181
      %v1219 = vunpack.c.l.b16 %v1182
      %v1220 = vunpack.c.l.b16 %v1183
      %v1221 = vunpack.c.l.b16 %v1184
      %v1222 = vunpack.c.l.b16 %v1185
      %v1223 = vunpack.c.l.b16 %v1186
      %v1224 = vunpack.c.l.b16 %v1187
      %v1225 = vunpack.c.l.b16 %v1188
      %v1226 = vunpack.c.l.b16 %v1189
      %v1227 = vunpack.c.l.b16 %v1190
      %v1228 = vunpack.c.l.b16 %v1191
      %v1229 = vpack.c.b16 %v1214, %v1213
      %v1230 = vpack.c.b16 %v1216, %v1215
      %v1231 = vpack.c.b16 %v1218, %v1217
      %v1232 = vpack.c.b16 %v1220, %v1219
      %v1233 = vpack.c.b16 %v1222, %v1221
      %v1234 = vpack.c.b16 %v1224, %v1223
      %v1235 = vpack.c.b16 %v1226, %v1225
      %v1236 = vpack.c.b16 %v1228, %v1227
      %1245 = vmatpush.bf16.msra.mxu0 %v1236
      %1246 = vmatpush.bf16.msra.mxu0 %v1235
      %1247 = vmatpush.bf16.msra.mxu0 %v1234
      %1248 = vmatpush.bf16.msra.mxu0 %v1233
      %1249 = vmatpush.bf16.msra.mxu0 %v1232
      %1250 = vmatpush.bf16.msra.mxu0 %v1231
      %1251 = vmatpush.bf16.msra.mxu0 %v1230
      %1252 = vmatpush.bf16.msra.mxu0 %v1229
      %1253 = vmatmul.bf16.gmra.mxu0 %v1192
      %v1254 = vpop.f32.mrf.mxu0
      %v1255 = vadd.f32 %v1195, %v1254
      %v1256 = vpop.f32.mrf.mxu0
      %1257 = vdwg.mxu0
      %v1258 = vadd.f32 %v1097, %v1255
      %1259 = vst.msk [vmem:[%s584] sm:$0xff] %vm592, %v1258
      %p1260 = scmp.lt.s32.totalorder %s29, 1
      %s1261 = scalar_select %p1260, %s29, 1
      %s1262 = smul.addr %s1261, 8
      %s1263 = scalar_lea.vmem %s18, %s1262
      // Predicated region
      $region93: #{forward.7} parent=91 // pred_check
        %p1264 = pneg %p435
      $region94: #{forward.7} parent=91 // pred_check_branch
        %1266 = sbr.rel (%p1264) target = $region96
      $region95: #{forward.7} parent=91 // pred_region
        _
      $region96: #{forward.7} parent=91 // pred_fallthru
        _
    $region92: #{forward.7} parent=5 // pred_fallthru
      _
    %p1267 = scmp.le.s32.totalorder 2, %s24
    // Predicated region
    $region97: #{forward.7} parent=5 // pred_check
      %p1268 = pneg %p1267
    $region98: #{forward.7} parent=5 // pred_check_branch
      %1270 = sbr.rel (%p1268) target = $region100
    $region99: #{forward.7} parent=5 // pred_region
      %s1271 = ssub.s32 %s24, 2
      // Predicated region
      $region101: #{forward.7} parent=99 // pred_check
        %p1272 = pneg %p441
      $region102: #{forward.7} parent=99 // pred_check_branch
        %1274 = sbr.rel (%p1272) target = $region104
      $region103: #{forward.7} parent=99 // pred_region
        %p1275 = scmp.lt.s32.totalorder %s30, 1
        %s1276 = scalar_select %p1275, %s30, 1
        %s1277 = smul.addr %s1276, 8
        %s1278 = scalar_lea.vmem %s18, %s1277
      $region104: #{forward.7} parent=99 // pred_fallthru
        _
    $region100: #{forward.7} parent=5 // pred_fallthru
      _
  $region6: #{forward.7} parent=0 // loop_footer
    %s28 = sadd.s32 1, %s24
  $region7: #{forward.7} parent=0 // loop_footer_branch
    %23 = sbr.rel target = $region3
  $region8: #{forward.7} parent=0 // loop_exit
    _

// kernel: forward.6
$region0: #{forward.6}
  #allocation0 [shape = 'u32[]', space=smem, size = 0x4, offset = 0x4, fixed_abs, tag = 'smem constant byte address 0x4 - core index']
  #allocation1 [shape = 'u32[72,128]{1,0:T(1,128)}', space=vmem, size = 0x9000, scoped, tag = 'internal scratch']
  %s0 = inlined_call_operand.vmem [shape: f32[2,8,32], index: 0, kind: input, shape index: {}, may-alias: {0,26}]
  %s1 = inlined_call_operand.vmem [shape: f32[2,8,32], index: 1, kind: input, shape index: {}]
  %s2 = inlined_call_operand.vmem [shape: f32[1,32], index: 2, kind: input, shape index: {}]
  %s3 = inlined_call_operand.vmem [shape: f32[1,32], index: 3, kind: input, shape index: {}]
  %s4 = inlined_call_operand.vmem [shape: bf16[32,96], index: 4, kind: input, shape index: {}]
  %s5 = inlined_call_operand.vmem [shape: f32[1,96], index: 5, kind: input, shape index: {}]
  %s6 = inlined_call_operand.vmem [shape: bf16[32,32], index: 6, kind: input, shape index: {}]
  %s7 = inlined_call_operand.vmem [shape: f32[1,32], index: 7, kind: input, shape index: {}]
  %s8 = inlined_call_operand.vmem [shape: f32[2,1,8], index: 8, kind: input, shape index: {}]
  %s9 = inlined_call_operand.vmem [shape: f32[1,32], index: 9, kind: input, shape index: {}]
  %s10 = inlined_call_operand.vmem [shape: f32[1,32], index: 10, kind: input, shape index: {}]
  %s11 = inlined_call_operand.vmem [shape: bf16[32,96], index: 11, kind: input, shape index: {}]
  %s12 = inlined_call_operand.vmem [shape: f32[1,96], index: 12, kind: input, shape index: {}]
  %s13 = inlined_call_operand.vmem [shape: bf16[32,32], index: 13, kind: input, shape index: {}]
  %s14 = inlined_call_operand.vmem [shape: f32[1,32], index: 14, kind: input, shape index: {}]
  %s15 = inlined_call_operand.vmem [shape: f32[2,1,8], index: 15, kind: input, shape index: {}]
  %s16 = inlined_call_operand.vmem [shape: f32[8,8], index: 16, kind: input, shape index: {}, may-alias: {16,18}]
  %s17 = inlined_call_operand.vmem [shape: f32[8,8], index: 17, kind: input, shape index: {}, may-alias: {17,19}]
  %s18 = inlined_call_operand.vmem [shape: f32[8,8], index: 18, kind: input, shape index: {}, may-alias: {16,18}]
  %s19 = inlined_call_operand.vmem [shape: f32[8,8], index: 19, kind: input, shape index: {}, may-alias: {17,19}]
  %s20 = inlined_call_operand.vmem [shape: f32[1,32], index: 20, kind: input, shape index: {}]
  %s21 = inlined_call_operand.vmem [shape: f32[1,32], index: 21, kind: input, shape index: {}]
  %s22 = inlined_call_operand.vmem [shape: bf16[32,128], index: 22, kind: input, shape index: {}]
  %s23 = inlined_call_operand.vmem [shape: f32[1,128], index: 23, kind: input, shape index: {}]
  %s24 = inlined_call_operand.vmem [shape: bf16[128,32], index: 24, kind: input, shape index: {}]
  %s25 = inlined_call_operand.vmem [shape: f32[1,32], index: 25, kind: input, shape index: {}]
  %s26 = inlined_call_operand.vmem [shape: f32[2,8,32], index: 26, kind: output, shape index: {}, may-alias: {0,26}]
  %s27 = sld [smem:[#allocation0]]
  $region137: #{forward.6} parent=0
    _
  %s29 = ssub.s32 1, %s27
  %s30 = scalar_select 0, %s29, %s27
  loop: start=0, step=1, limit=4
  $region2: #{forward.6} parent=0 // loop_pre_header
    _
  $region3: #{forward.6} parent=0 // loop_header
    %s32 = sphi 0, %s36
    %p33 = scmp.ge.s32.totalorder %s32, 4
    %s42 = sphi 0, %s44
    %s45 = sphi 0, %s42
    %s46 = sphi 0, %s45
    %s62 = sphi 0, %s46
    %s68 = sphi 0, %s70
    %s71 = sphi 0, %s68
    %s72 = sphi 0, %s71
    %s88 = sphi 0, %s72
    %s92 = sphi 0, %s92
    %s94 = sphi 0, %s92
    %s95 = sphi 0, %s94
    %s109 = sphi 0, %s95
    %s113 = sphi 0, %s113
    %s115 = sphi 0, %s113
    %s116 = sphi 0, %s115
    %s130 = sphi 0, %s116
    %s134 = sphi 0, %s134
    %s136 = sphi 0, %s134
    %s137 = sphi 0, %s136
    %s151 = sphi 0, %s137
    %s155 = sphi 0, %s155
    %s157 = sphi 0, %s155
    %s158 = sphi 0, %s157
    %s172 = sphi 0, %s158
    %s176 = sphi 0, %s176
    %s178 = sphi 0, %s176
    %s179 = sphi 0, %s178
    %s193 = sphi 0, %s179
    %s197 = sphi 0, %s197
    %s199 = sphi 0, %s197
    %s200 = sphi 0, %s199
    %s214 = sphi 0, %s200
    %s220 = sphi 0, %s222
    %s223 = sphi 0, %s220
    %s224 = sphi 0, %s223
    %s240 = sphi 0, %s224
    %s244 = sphi 0, %s244
    %s246 = sphi 0, %s244
    %s247 = sphi 0, %s246
    %s261 = sphi 0, %s247
    %s265 = sphi 0, %s265
    %s267 = sphi 0, %s265
    %s268 = sphi 0, %s267
    %s282 = sphi 0, %s268
    %s286 = sphi 0, %s286
    %s288 = sphi 0, %s286
    %s289 = sphi 0, %s288
    %s303 = sphi 0, %s289
    %s307 = sphi 0, %s307
    %s309 = sphi 0, %s307
    %s310 = sphi 0, %s309
    %s324 = sphi 0, %s310
    %s328 = sphi 0, %s328
    %s330 = sphi 0, %s328
    %s331 = sphi 0, %s330
    %s345 = sphi 0, %s331
    %s349 = sphi 0, %s349
    %s351 = sphi 0, %s349
    %s352 = sphi 0, %s351
    %s366 = sphi 0, %s352
    %s372 = sphi 0, %s374
    %s375 = sphi 0, %s372
    %s376 = sphi 0, %s375
    %s392 = sphi 0, %s376
    %s396 = sphi 0, %s396
    %s398 = sphi 0, %s396
    %s399 = sphi 0, %s398
    %s413 = sphi 0, %s399
    %s417 = sphi 0, %s417
    %s419 = sphi 0, %s417
    %s420 = sphi 0, %s419
    %s434 = sphi 0, %s420
    %s438 = sphi 0, %s438
    %s440 = sphi 0, %s438
    %s441 = sphi 0, %s440
    %s455 = sphi 0, %s441
    %s459 = sphi 0, %s459
    %s461 = sphi 0, %s459
    %s462 = sphi 0, %s461
    %s476 = sphi 0, %s462
    %s480 = sphi 0, %s480
    %s482 = sphi 0, %s480
    %s483 = sphi 0, %s482
    %s497 = sphi 0, %s483
    %s501 = sphi 0, %s501
    %s503 = sphi 0, %s501
    %s504 = sphi 0, %s503
    %s518 = sphi 0, %s504
    %s522 = sphi 0, %s522
    %s524 = sphi 0, %s522
    %s525 = sphi 0, %s524
    %s539 = sphi 0, %s525
    %s543 = sphi 0, %s543
    %s545 = sphi 0, %s543
    %s546 = sphi 0, %s545
    %s560 = sphi 0, %s546
    %s564 = sphi 0, %s564
    %s566 = sphi 0, %s564
    %s567 = sphi 0, %s566
    %s581 = sphi 0, %s567
    %s585 = sphi 0, %s585
    %s587 = sphi 0, %s585
    %s588 = sphi 0, %s587
    %s602 = sphi 0, %s588
    %s608 = sphi 0, %s610
    %s611 = sphi 0, %s608
    %s612 = sphi 0, %s611
    %s628 = sphi 0, %s612
  $region4: #{forward.6} parent=0 // loop_header_branch
    %35 = sbr.rel (%p33) target = $region8
  $region5: #{forward.6} parent=0 // loop_body
    %s37 = ssub.s32 %s32, 1
    %s38 = ssub.s32 %s32, 2
    %s39 = sadd.s32 %s32, 1
    %s40 = ssub.s32 %s32, %s39
    %p41 = scmp.eq.s32.totalorder %s40, 0
    %s43 = sadd.s32 %s42, 1
    %s44 = scalar_select %p41, %s42, %s43
    %p47 = pneg %p41
    %p48 = scmp.eq.s32.totalorder %s32, 1
    %p49 = por %p47, %p48
    %p50 = scmp.ne.s32.totalorder %s42, %s45
    %p51 = scmp.eq.s32.totalorder %s32, 0
    %p52 = por %p50, %p51
    %p53 = scmp.ne.s32.totalorder %s42, %s45
    %p54 = scmp.eq.s32.totalorder %s37, 1
    %p55 = por %p53, %p54
    %p56 = scmp.ne.s32.totalorder %s45, %s46
    %p57 = scmp.eq.s32.totalorder %s37, 0
    %p58 = por %p56, %p57
    %p59 = scmp.ne.s32.totalorder %s45, %s46
    %p60 = scmp.eq.s32.totalorder %s38, 1
    %p61 = por %p59, %p60
    %p63 = scmp.ne.s32.totalorder %s46, %s62
    %p64 = scmp.eq.s32.totalorder %s38, 0
    %p65 = por %p63, %p64
    %s66 = ssub.s32 %s32, %s39
    %p67 = scmp.eq.s32.totalorder %s66, 0
    %s69 = sadd.s32 %s68, 1
    %s70 = scalar_select %p67, %s68, %s69
    %p73 = pneg %p67
    %p74 = scmp.eq.s32.totalorder %s32, 1
    %p75 = por %p73, %p74
    %p76 = scmp.ne.s32.totalorder %s68, %s71
    %p77 = scmp.eq.s32.totalorder %s32, 0
    %p78 = por %p76, %p77
    %p79 = scmp.ne.s32.totalorder %s68, %s71
    %p80 = scmp.eq.s32.totalorder %s37, 1
    %p81 = por %p79, %p80
    %p82 = scmp.ne.s32.totalorder %s71, %s72
    %p83 = scmp.eq.s32.totalorder %s37, 0
    %p84 = por %p82, %p83
    %p85 = scmp.ne.s32.totalorder %s71, %s72
    %p86 = scmp.eq.s32.totalorder %s38, 1
    %p87 = por %p85, %p86
    %p89 = scmp.ne.s32.totalorder %s72, %s88
    %p90 = scmp.eq.s32.totalorder %s38, 0
    %p91 = por %p89, %p90
    %s93 = sadd.s32 %s92, 1
    %p96 = scmp.eq.s32.totalorder %s32, 1
    %p97 = scmp.ne.s32.totalorder %s92, %s94
    %p98 = scmp.eq.s32.totalorder %s32, 0
    %p99 = por %p97, %p98
    %p100 = scmp.ne.s32.totalorder %s92, %s94
    %p101 = scmp.eq.s32.totalorder %s37, 1
    %p102 = por %p100, %p101
    %p103 = scmp.ne.s32.totalorder %s94, %s95
    %p104 = scmp.eq.s32.totalorder %s37, 0
    %p105 = por %p103, %p104
    %p106 = scmp.ne.s32.totalorder %s94, %s95
    %p107 = scmp.eq.s32.totalorder %s38, 1
    %p108 = por %p106, %p107
    %p110 = scmp.ne.s32.totalorder %s95, %s109
    %p111 = scmp.eq.s32.totalorder %s38, 0
    %p112 = por %p110, %p111
    %s114 = sadd.s32 %s113, 1
    %p117 = scmp.eq.s32.totalorder %s32, 1
    %p118 = scmp.ne.s32.totalorder %s113, %s115
    %p119 = scmp.eq.s32.totalorder %s32, 0
    %p120 = por %p118, %p119
    %p121 = scmp.ne.s32.totalorder %s113, %s115
    %p122 = scmp.eq.s32.totalorder %s37, 1
    %p123 = por %p121, %p122
    %p124 = scmp.ne.s32.totalorder %s115, %s116
    %p125 = scmp.eq.s32.totalorder %s37, 0
    %p126 = por %p124, %p125
    %p127 = scmp.ne.s32.totalorder %s115, %s116
    %p128 = scmp.eq.s32.totalorder %s38, 1
    %p129 = por %p127, %p128
    %p131 = scmp.ne.s32.totalorder %s116, %s130
    %p132 = scmp.eq.s32.totalorder %s38, 0
    %p133 = por %p131, %p132
    %s135 = sadd.s32 %s134, 1
    %p138 = scmp.eq.s32.totalorder %s32, 1
    %p139 = scmp.ne.s32.totalorder %s134, %s136
    %p140 = scmp.eq.s32.totalorder %s32, 0
    %p141 = por %p139, %p140
    %p142 = scmp.ne.s32.totalorder %s134, %s136
    %p143 = scmp.eq.s32.totalorder %s37, 1
    %p144 = por %p142, %p143
    %p145 = scmp.ne.s32.totalorder %s136, %s137
    %p146 = scmp.eq.s32.totalorder %s37, 0
    %p147 = por %p145, %p146
    %p148 = scmp.ne.s32.totalorder %s136, %s137
    %p149 = scmp.eq.s32.totalorder %s38, 1
    %p150 = por %p148, %p149
    %p152 = scmp.ne.s32.totalorder %s137, %s151
    %p153 = scmp.eq.s32.totalorder %s38, 0
    %p154 = por %p152, %p153
    %s156 = sadd.s32 %s155, 1
    %p159 = scmp.eq.s32.totalorder %s32, 1
    %p160 = scmp.ne.s32.totalorder %s155, %s157
    %p161 = scmp.eq.s32.totalorder %s32, 0
    %p162 = por %p160, %p161
    %p163 = scmp.ne.s32.totalorder %s155, %s157
    %p164 = scmp.eq.s32.totalorder %s37, 1
    %p165 = por %p163, %p164
    %p166 = scmp.ne.s32.totalorder %s157, %s158
    %p167 = scmp.eq.s32.totalorder %s37, 0
    %p168 = por %p166, %p167
    %p169 = scmp.ne.s32.totalorder %s157, %s158
    %p170 = scmp.eq.s32.totalorder %s38, 1
    %p171 = por %p169, %p170
    %p173 = scmp.ne.s32.totalorder %s158, %s172
    %p174 = scmp.eq.s32.totalorder %s38, 0
    %p175 = por %p173, %p174
    %s177 = sadd.s32 %s176, 1
    %p180 = scmp.eq.s32.totalorder %s32, 1
    %p181 = scmp.ne.s32.totalorder %s176, %s178
    %p182 = scmp.eq.s32.totalorder %s32, 0
    %p183 = por %p181, %p182
    %p184 = scmp.ne.s32.totalorder %s176, %s178
    %p185 = scmp.eq.s32.totalorder %s37, 1
    %p186 = por %p184, %p185
    %p187 = scmp.ne.s32.totalorder %s178, %s179
    %p188 = scmp.eq.s32.totalorder %s37, 0
    %p189 = por %p187, %p188
    %p190 = scmp.ne.s32.totalorder %s178, %s179
    %p191 = scmp.eq.s32.totalorder %s38, 1
    %p192 = por %p190, %p191
    %p194 = scmp.ne.s32.totalorder %s179, %s193
    %p195 = scmp.eq.s32.totalorder %s38, 0
    %p196 = por %p194, %p195
    %s198 = sadd.s32 %s197, 1
    %p201 = scmp.eq.s32.totalorder %s32, 1
    %p202 = scmp.ne.s32.totalorder %s197, %s199
    %p203 = scmp.eq.s32.totalorder %s32, 0
    %p204 = por %p202, %p203
    %p205 = scmp.ne.s32.totalorder %s197, %s199
    %p206 = scmp.eq.s32.totalorder %s37, 1
    %p207 = por %p205, %p206
    %p208 = scmp.ne.s32.totalorder %s199, %s200
    %p209 = scmp.eq.s32.totalorder %s37, 0
    %p210 = por %p208, %p209
    %p211 = scmp.ne.s32.totalorder %s199, %s200
    %p212 = scmp.eq.s32.totalorder %s38, 1
    %p213 = por %p211, %p212
    %p215 = scmp.ne.s32.totalorder %s200, %s214
    %p216 = scmp.eq.s32.totalorder %s38, 0
    %p217 = por %p215, %p216
    %s218 = ssub.s32 %s32, %s39
    %p219 = scmp.eq.s32.totalorder %s218, 0
    %s221 = sadd.s32 %s220, 1
    %s222 = scalar_select %p219, %s220, %s221
    %p225 = pneg %p219
    %p226 = scmp.eq.s32.totalorder %s32, 1
    %p227 = por %p225, %p226
    %p228 = scmp.ne.s32.totalorder %s220, %s223
    %p229 = scmp.eq.s32.totalorder %s32, 0
    %p230 = por %p228, %p229
    %p231 = scmp.ne.s32.totalorder %s220, %s223
    %p232 = scmp.eq.s32.totalorder %s37, 1
    %p233 = por %p231, %p232
    %p234 = scmp.ne.s32.totalorder %s223, %s224
    %p235 = scmp.eq.s32.totalorder %s37, 0
    %p236 = por %p234, %p235
    %p237 = scmp.ne.s32.totalorder %s223, %s224
    %p238 = scmp.eq.s32.totalorder %s38, 1
    %p239 = por %p237, %p238
    %p241 = scmp.ne.s32.totalorder %s224, %s240
    %p242 = scmp.eq.s32.totalorder %s38, 0
    %p243 = por %p241, %p242
    %s245 = sadd.s32 %s244, 1
    %p248 = scmp.eq.s32.totalorder %s32, 1
    %p249 = scmp.ne.s32.totalorder %s244, %s246
    %p250 = scmp.eq.s32.totalorder %s32, 0
    %p251 = por %p249, %p250
    %p252 = scmp.ne.s32.totalorder %s244, %s246
    %p253 = scmp.eq.s32.totalorder %s37, 1
    %p254 = por %p252, %p253
    %p255 = scmp.ne.s32.totalorder %s246, %s247
    %p256 = scmp.eq.s32.totalorder %s37, 0
    %p257 = por %p255, %p256
    %p258 = scmp.ne.s32.totalorder %s246, %s247
    %p259 = scmp.eq.s32.totalorder %s38, 1
    %p260 = por %p258, %p259
    %p262 = scmp.ne.s32.totalorder %s247, %s261
    %p263 = scmp.eq.s32.totalorder %s38, 0
    %p264 = por %p262, %p263
    %s266 = sadd.s32 %s265, 1
    %p269 = scmp.eq.s32.totalorder %s32, 1
    %p270 = scmp.ne.s32.totalorder %s265, %s267
    %p271 = scmp.eq.s32.totalorder %s32, 0
    %p272 = por %p270, %p271
    %p273 = scmp.ne.s32.totalorder %s265, %s267
    %p274 = scmp.eq.s32.totalorder %s37, 1
    %p275 = por %p273, %p274
    %p276 = scmp.ne.s32.totalorder %s267, %s268
    %p277 = scmp.eq.s32.totalorder %s37, 0
    %p278 = por %p276, %p277
    %p279 = scmp.ne.s32.totalorder %s267, %s268
    %p280 = scmp.eq.s32.totalorder %s38, 1
    %p281 = por %p279, %p280
    %p283 = scmp.ne.s32.totalorder %s268, %s282
    %p284 = scmp.eq.s32.totalorder %s38, 0
    %p285 = por %p283, %p284
    %s287 = sadd.s32 %s286, 1
    %p290 = scmp.eq.s32.totalorder %s32, 1
    %p291 = scmp.ne.s32.totalorder %s286, %s288
    %p292 = scmp.eq.s32.totalorder %s32, 0
    %p293 = por %p291, %p292
    %p294 = scmp.ne.s32.totalorder %s286, %s288
    %p295 = scmp.eq.s32.totalorder %s37, 1
    %p296 = por %p294, %p295
    %p297 = scmp.ne.s32.totalorder %s288, %s289
    %p298 = scmp.eq.s32.totalorder %s37, 0
    %p299 = por %p297, %p298
    %p300 = scmp.ne.s32.totalorder %s288, %s289
    %p301 = scmp.eq.s32.totalorder %s38, 1
    %p302 = por %p300, %p301
    %p304 = scmp.ne.s32.totalorder %s289, %s303
    %p305 = scmp.eq.s32.totalorder %s38, 0
    %p306 = por %p304, %p305
    %s308 = sadd.s32 %s307, 1
    %p311 = scmp.eq.s32.totalorder %s32, 1
    %p312 = scmp.ne.s32.totalorder %s307, %s309
    %p313 = scmp.eq.s32.totalorder %s32, 0
    %p314 = por %p312, %p313
    %p315 = scmp.ne.s32.totalorder %s307, %s309
    %p316 = scmp.eq.s32.totalorder %s37, 1
    %p317 = por %p315, %p316
    %p318 = scmp.ne.s32.totalorder %s309, %s310
    %p319 = scmp.eq.s32.totalorder %s37, 0
    %p320 = por %p318, %p319
    %p321 = scmp.ne.s32.totalorder %s309, %s310
    %p322 = scmp.eq.s32.totalorder %s38, 1
    %p323 = por %p321, %p322
    %p325 = scmp.ne.s32.totalorder %s310, %s324
    %p326 = scmp.eq.s32.totalorder %s38, 0
    %p327 = por %p325, %p326
    %s329 = sadd.s32 %s328, 1
    %p332 = scmp.eq.s32.totalorder %s32, 1
    %p333 = scmp.ne.s32.totalorder %s328, %s330
    %p334 = scmp.eq.s32.totalorder %s32, 0
    %p335 = por %p333, %p334
    %p336 = scmp.ne.s32.totalorder %s328, %s330
    %p337 = scmp.eq.s32.totalorder %s37, 1
    %p338 = por %p336, %p337
    %p339 = scmp.ne.s32.totalorder %s330, %s331
    %p340 = scmp.eq.s32.totalorder %s37, 0
    %p341 = por %p339, %p340
    %p342 = scmp.ne.s32.totalorder %s330, %s331
    %p343 = scmp.eq.s32.totalorder %s38, 1
    %p344 = por %p342, %p343
    %p346 = scmp.ne.s32.totalorder %s331, %s345
    %p347 = scmp.eq.s32.totalorder %s38, 0
    %p348 = por %p346, %p347
    %s350 = sadd.s32 %s349, 1
    %p353 = scmp.eq.s32.totalorder %s32, 1
    %p354 = scmp.ne.s32.totalorder %s349, %s351
    %p355 = scmp.eq.s32.totalorder %s32, 0
    %p356 = por %p354, %p355
    %p357 = scmp.ne.s32.totalorder %s349, %s351
    %p358 = scmp.eq.s32.totalorder %s37, 1
    %p359 = por %p357, %p358
    %p360 = scmp.ne.s32.totalorder %s351, %s352
    %p361 = scmp.eq.s32.totalorder %s37, 0
    %p362 = por %p360, %p361
    %p363 = scmp.ne.s32.totalorder %s351, %s352
    %p364 = scmp.eq.s32.totalorder %s38, 1
    %p365 = por %p363, %p364
    %p367 = scmp.ne.s32.totalorder %s352, %s366
    %p368 = scmp.eq.s32.totalorder %s38, 0
    %p369 = por %p367, %p368
    %s370 = ssub.s32 %s32, %s39
    %p371 = scmp.eq.s32.totalorder %s370, 0
    %s373 = sadd.s32 %s372, 1
    %s374 = scalar_select %p371, %s372, %s373
    %p377 = pneg %p371
    %p378 = scmp.eq.s32.totalorder %s32, 1
    %p379 = por %p377, %p378
    %p380 = scmp.ne.s32.totalorder %s372, %s375
    %p381 = scmp.eq.s32.totalorder %s32, 0
    %p382 = por %p380, %p381
    %p383 = scmp.ne.s32.totalorder %s372, %s375
    %p384 = scmp.eq.s32.totalorder %s37, 1
    %p385 = por %p383, %p384
    %p386 = scmp.ne.s32.totalorder %s375, %s376
    %p387 = scmp.eq.s32.totalorder %s37, 0
    %p388 = por %p386, %p387
    %p389 = scmp.ne.s32.totalorder %s375, %s376
    %p390 = scmp.eq.s32.totalorder %s38, 1
    %p391 = por %p389, %p390
    %p393 = scmp.ne.s32.totalorder %s376, %s392
    %p394 = scmp.eq.s32.totalorder %s38, 0
    %p395 = por %p393, %p394
    %s397 = sadd.s32 %s396, 1
    %p400 = scmp.eq.s32.totalorder %s32, 1
    %p401 = scmp.ne.s32.totalorder %s396, %s398
    %p402 = scmp.eq.s32.totalorder %s32, 0
    %p403 = por %p401, %p402
    %p404 = scmp.ne.s32.totalorder %s396, %s398
    %p405 = scmp.eq.s32.totalorder %s37, 1
    %p406 = por %p404, %p405
    %p407 = scmp.ne.s32.totalorder %s398, %s399
    %p408 = scmp.eq.s32.totalorder %s37, 0
    %p409 = por %p407, %p408
    %p410 = scmp.ne.s32.totalorder %s398, %s399
    %p411 = scmp.eq.s32.totalorder %s38, 1
    %p412 = por %p410, %p411
    %p414 = scmp.ne.s32.totalorder %s399, %s413
    %p415 = scmp.eq.s32.totalorder %s38, 0
    %p416 = por %p414, %p415
    %s418 = sadd.s32 %s417, 1
    %p421 = scmp.eq.s32.totalorder %s32, 1
    %p422 = scmp.ne.s32.totalorder %s417, %s419
    %p423 = scmp.eq.s32.totalorder %s32, 0
    %p424 = por %p422, %p423
    %p425 = scmp.ne.s32.totalorder %s417, %s419
    %p426 = scmp.eq.s32.totalorder %s37, 1
    %p427 = por %p425, %p426
    %p428 = scmp.ne.s32.totalorder %s419, %s420
    %p429 = scmp.eq.s32.totalorder %s37, 0
    %p430 = por %p428, %p429
    %p431 = scmp.ne.s32.totalorder %s419, %s420
    %p432 = scmp.eq.s32.totalorder %s38, 1
    %p433 = por %p431, %p432
    %p435 = scmp.ne.s32.totalorder %s420, %s434
    %p436 = scmp.eq.s32.totalorder %s38, 0
    %p437 = por %p435, %p436
    %s439 = sadd.s32 %s438, 1
    %p442 = scmp.eq.s32.totalorder %s32, 1
    %p443 = scmp.ne.s32.totalorder %s438, %s440
    %p444 = scmp.eq.s32.totalorder %s32, 0
    %p445 = por %p443, %p444
    %p446 = scmp.ne.s32.totalorder %s438, %s440
    %p447 = scmp.eq.s32.totalorder %s37, 1
    %p448 = por %p446, %p447
    %p449 = scmp.ne.s32.totalorder %s440, %s441
    %p450 = scmp.eq.s32.totalorder %s37, 0
    %p451 = por %p449, %p450
    %p452 = scmp.ne.s32.totalorder %s440, %s441
    %p453 = scmp.eq.s32.totalorder %s38, 1
    %p454 = por %p452, %p453
    %p456 = scmp.ne.s32.totalorder %s441, %s455
    %p457 = scmp.eq.s32.totalorder %s38, 0
    %p458 = por %p456, %p457
    %s460 = sadd.s32 %s459, 1
    %p463 = scmp.eq.s32.totalorder %s32, 1
    %p464 = scmp.ne.s32.totalorder %s459, %s461
    %p465 = scmp.eq.s32.totalorder %s32, 0
    %p466 = por %p464, %p465
    %p467 = scmp.ne.s32.totalorder %s459, %s461
    %p468 = scmp.eq.s32.totalorder %s37, 1
    %p469 = por %p467, %p468
    %p470 = scmp.ne.s32.totalorder %s461, %s462
    %p471 = scmp.eq.s32.totalorder %s37, 0
    %p472 = por %p470, %p471
    %p473 = scmp.ne.s32.totalorder %s461, %s462
    %p474 = scmp.eq.s32.totalorder %s38, 1
    %p475 = por %p473, %p474
    %p477 = scmp.ne.s32.totalorder %s462, %s476
    %p478 = scmp.eq.s32.totalorder %s38, 0
    %p479 = por %p477, %p478
    %s481 = sadd.s32 %s480, 1
    %p484 = scmp.eq.s32.totalorder %s32, 1
    %p485 = scmp.ne.s32.totalorder %s480, %s482
    %p486 = scmp.eq.s32.totalorder %s32, 0
    %p487 = por %p485, %p486
    %p488 = scmp.ne.s32.totalorder %s480, %s482
    %p489 = scmp.eq.s32.totalorder %s37, 1
    %p490 = por %p488, %p489
    %p491 = scmp.ne.s32.totalorder %s482, %s483
    %p492 = scmp.eq.s32.totalorder %s37, 0
    %p493 = por %p491, %p492
    %p494 = scmp.ne.s32.totalorder %s482, %s483
    %p495 = scmp.eq.s32.totalorder %s38, 1
    %p496 = por %p494, %p495
    %p498 = scmp.ne.s32.totalorder %s483, %s497
    %p499 = scmp.eq.s32.totalorder %s38, 0
    %p500 = por %p498, %p499
    %s502 = sadd.s32 %s501, 1
    %p505 = scmp.eq.s32.totalorder %s32, 1
    %p506 = scmp.ne.s32.totalorder %s501, %s503
    %p507 = scmp.eq.s32.totalorder %s32, 0
    %p508 = por %p506, %p507
    %p509 = scmp.ne.s32.totalorder %s501, %s503
    %p510 = scmp.eq.s32.totalorder %s37, 1
    %p511 = por %p509, %p510
    %p512 = scmp.ne.s32.totalorder %s503, %s504
    %p513 = scmp.eq.s32.totalorder %s37, 0
    %p514 = por %p512, %p513
    %p515 = scmp.ne.s32.totalorder %s503, %s504
    %p516 = scmp.eq.s32.totalorder %s38, 1
    %p517 = por %p515, %p516
    %p519 = scmp.ne.s32.totalorder %s504, %s518
    %p520 = scmp.eq.s32.totalorder %s38, 0
    %p521 = por %p519, %p520
    %s523 = sadd.s32 %s522, 1
    %p526 = scmp.eq.s32.totalorder %s32, 1
    %p527 = scmp.ne.s32.totalorder %s522, %s524
    %p528 = scmp.eq.s32.totalorder %s32, 0
    %p529 = por %p527, %p528
    %p530 = scmp.ne.s32.totalorder %s522, %s524
    %p531 = scmp.eq.s32.totalorder %s37, 1
    %p532 = por %p530, %p531
    %p533 = scmp.ne.s32.totalorder %s524, %s525
    %p534 = scmp.eq.s32.totalorder %s37, 0
    %p535 = por %p533, %p534
    %p536 = scmp.ne.s32.totalorder %s524, %s525
    %p537 = scmp.eq.s32.totalorder %s38, 1
    %p538 = por %p536, %p537
    %p540 = scmp.ne.s32.totalorder %s525, %s539
    %p541 = scmp.eq.s32.totalorder %s38, 0
    %p542 = por %p540, %p541
    %s544 = sadd.s32 %s543, 1
    %p547 = scmp.eq.s32.totalorder %s32, 1
    %p548 = scmp.ne.s32.totalorder %s543, %s545
    %p549 = scmp.eq.s32.totalorder %s32, 0
    %p550 = por %p548, %p549
    %p551 = scmp.ne.s32.totalorder %s543, %s545
    %p552 = scmp.eq.s32.totalorder %s37, 1
    %p553 = por %p551, %p552
    %p554 = scmp.ne.s32.totalorder %s545, %s546
    %p555 = scmp.eq.s32.totalorder %s37, 0
    %p556 = por %p554, %p555
    %p557 = scmp.ne.s32.totalorder %s545, %s546
    %p558 = scmp.eq.s32.totalorder %s38, 1
    %p559 = por %p557, %p558
    %p561 = scmp.ne.s32.totalorder %s546, %s560
    %p562 = scmp.eq.s32.totalorder %s38, 0
    %p563 = por %p561, %p562
    %s565 = sadd.s32 %s564, 1
    %p568 = scmp.eq.s32.totalorder %s32, 1
    %p569 = scmp.ne.s32.totalorder %s564, %s566
    %p570 = scmp.eq.s32.totalorder %s32, 0
    %p571 = por %p569, %p570
    %p572 = scmp.ne.s32.totalorder %s564, %s566
    %p573 = scmp.eq.s32.totalorder %s37, 1
    %p574 = por %p572, %p573
    %p575 = scmp.ne.s32.totalorder %s566, %s567
    %p576 = scmp.eq.s32.totalorder %s37, 0
    %p577 = por %p575, %p576
    %p578 = scmp.ne.s32.totalorder %s566, %s567
    %p579 = scmp.eq.s32.totalorder %s38, 1
    %p580 = por %p578, %p579
    %p582 = scmp.ne.s32.totalorder %s567, %s581
    %p583 = scmp.eq.s32.totalorder %s38, 0
    %p584 = por %p582, %p583
    %s586 = sadd.s32 %s585, 1
    %p589 = scmp.eq.s32.totalorder %s32, 1
    %p590 = scmp.ne.s32.totalorder %s585, %s587
    %p591 = scmp.eq.s32.totalorder %s32, 0
    %p592 = por %p590, %p591
    %p593 = scmp.ne.s32.totalorder %s585, %s587
    %p594 = scmp.eq.s32.totalorder %s37, 1
    %p595 = por %p593, %p594
    %p596 = scmp.ne.s32.totalorder %s587, %s588
    %p597 = scmp.eq.s32.totalorder %s37, 0
    %p598 = por %p596, %p597
    %p599 = scmp.ne.s32.totalorder %s587, %s588
    %p600 = scmp.eq.s32.totalorder %s38, 1
    %p601 = por %p599, %p600
    %p603 = scmp.ne.s32.totalorder %s588, %s602
    %p604 = scmp.eq.s32.totalorder %s38, 0
    %p605 = por %p603, %p604
    %s606 = ssub.s32 %s32, %s39
    %p607 = scmp.eq.s32.totalorder %s606, 0
    %s609 = sadd.s32 %s608, 1
    %s610 = scalar_select %p607, %s608, %s609
    %p613 = pneg %p607
    %p614 = scmp.eq.s32.totalorder %s32, 1
    %p615 = por %p613, %p614
    %p616 = scmp.ne.s32.totalorder %s608, %s611
    %p617 = scmp.eq.s32.totalorder %s32, 0
    %p618 = por %p616, %p617
    %p619 = scmp.ne.s32.totalorder %s608, %s611
    %p620 = scmp.eq.s32.totalorder %s37, 1
    %p621 = por %p619, %p620
    %p622 = scmp.ne.s32.totalorder %s611, %s612
    %p623 = scmp.eq.s32.totalorder %s37, 0
    %p624 = por %p622, %p623
    %p625 = scmp.ne.s32.totalorder %s611, %s612
    %p626 = scmp.eq.s32.totalorder %s38, 1
    %p627 = por %p625, %p626
    %p629 = scmp.ne.s32.totalorder %s612, %s628
    %p630 = scmp.eq.s32.totalorder %s38, 0
    %p631 = por %p629, %p630
    %p632 = scmp.le.s32.totalorder 1, %s32
    %p633 = scmp.lt.s32.totalorder %s32, 3
    %p634 = pnand %p632, %p633
    %p635 = pneg %p634
    // Predicated region
    $region9: #{forward.6} parent=5 // pred_check
      _
    $region10: #{forward.6} parent=5 // pred_check_branch
      %637 = sbr.rel (%p634) target = $region12
    $region11: #{forward.6} parent=5 // pred_region
      %s638 = ssub.s32 %s32, 1
      // Predicated region
      $region13: #{forward.6} parent=11 // pred_check
        %p639 = pneg %p105
      $region14: #{forward.6} parent=11 // pred_check_branch
        %641 = sbr.rel (%p639) target = $region16
      $region15: #{forward.6} parent=11 // pred_region
        _
      $region16: #{forward.6} parent=11 // pred_fallthru
        _
      // Predicated region
      $region17: #{forward.6} parent=11 // pred_check
        %p642 = pneg %p126
      $region18: #{forward.6} parent=11 // pred_check_branch
        %644 = sbr.rel (%p642) target = $region20
      $region19: #{forward.6} parent=11 // pred_region
        _
      $region20: #{forward.6} parent=11 // pred_fallthru
        _
      // Predicated region
      $region21: #{forward.6} parent=11 // pred_check
        %p645 = pneg %p147
      $region22: #{forward.6} parent=11 // pred_check_branch
        %647 = sbr.rel (%p645) target = $region24
      $region23: #{forward.6} parent=11 // pred_region
        _
      $region24: #{forward.6} parent=11 // pred_fallthru
        _
      // Predicated region
      $region25: #{forward.6} parent=11 // pred_check
        %p648 = pneg %p168
      $region26: #{forward.6} parent=11 // pred_check_branch
        %650 = sbr.rel (%p648) target = $region28
      $region27: #{forward.6} parent=11 // pred_region
        _
      $region28: #{forward.6} parent=11 // pred_fallthru
        _
      // Predicated region
      $region29: #{forward.6} parent=11 // pred_check
        %p651 = pneg %p189
      $region30: #{forward.6} parent=11 // pred_check_branch
        %653 = sbr.rel (%p651) target = $region32
      $region31: #{forward.6} parent=11 // pred_region
        _
      $region32: #{forward.6} parent=11 // pred_fallthru
        _
      // Predicated region
      $region33: #{forward.6} parent=11 // pred_check
        %p654 = pneg %p210
      $region34: #{forward.6} parent=11 // pred_check_branch
        %656 = sbr.rel (%p654) target = $region36
      $region35: #{forward.6} parent=11 // pred_region
        _
      $region36: #{forward.6} parent=11 // pred_fallthru
        _
      // Predicated region
      $region37: #{forward.6} parent=11 // pred_check
        %p657 = pneg %p257
      $region38: #{forward.6} parent=11 // pred_check_branch
        %659 = sbr.rel (%p657) target = $region40
      $region39: #{forward.6} parent=11 // pred_region
        _
      $region40: #{forward.6} parent=11 // pred_fallthru
        _
      // Predicated region
      $region41: #{forward.6} parent=11 // pred_check
        %p660 = pneg %p278
      $region42: #{forward.6} parent=11 // pred_check_branch
        %662 = sbr.rel (%p660) target = $region44
      $region43: #{forward.6} parent=11 // pred_region
        _
      $region44: #{forward.6} parent=11 // pred_fallthru
        _
      // Predicated region
      $region45: #{forward.6} parent=11 // pred_check
        %p663 = pneg %p299
      $region46: #{forward.6} parent=11 // pred_check_branch
        %665 = sbr.rel (%p663) target = $region48
      $region47: #{forward.6} parent=11 // pred_region
        _
      $region48: #{forward.6} parent=11 // pred_fallthru
        _
      // Predicated region
      $region49: #{forward.6} parent=11 // pred_check
        %p666 = pneg %p320
      $region50: #{forward.6} parent=11 // pred_check_branch
        %668 = sbr.rel (%p666) target = $region52
      $region51: #{forward.6} parent=11 // pred_region
        _
      $region52: #{forward.6} parent=11 // pred_fallthru
        _
      // Predicated region
      $region53: #{forward.6} parent=11 // pred_check
        %p669 = pneg %p341
      $region54: #{forward.6} parent=11 // pred_check_branch
        %671 = sbr.rel (%p669) target = $region56
      $region55: #{forward.6} parent=11 // pred_region
        _
      $region56: #{forward.6} parent=11 // pred_fallthru
        _
      // Predicated region
      $region57: #{forward.6} parent=11 // pred_check
        %p672 = pneg %p362
      $region58: #{forward.6} parent=11 // pred_check_branch
        %674 = sbr.rel (%p672) target = $region60
      $region59: #{forward.6} parent=11 // pred_region
        _
      $region60: #{forward.6} parent=11 // pred_fallthru
        _
      // Predicated region
      $region61: #{forward.6} parent=11 // pred_check
        %p675 = pneg %p409
      $region62: #{forward.6} parent=11 // pred_check_branch
        %677 = sbr.rel (%p675) target = $region64
      $region63: #{forward.6} parent=11 // pred_region
        _
      $region64: #{forward.6} parent=11 // pred_fallthru
        _
      // Predicated region
      $region65: #{forward.6} parent=11 // pred_check
        %p678 = pneg %p430
      $region66: #{forward.6} parent=11 // pred_check_branch
        %680 = sbr.rel (%p678) target = $region68
      $region67: #{forward.6} parent=11 // pred_region
        _
      $region68: #{forward.6} parent=11 // pred_fallthru
        _
      // Predicated region
      $region69: #{forward.6} parent=11 // pred_check
        %p681 = pneg %p451
      $region70: #{forward.6} parent=11 // pred_check_branch
        %683 = sbr.rel (%p681) target = $region72
      $region71: #{forward.6} parent=11 // pred_region
        _
      $region72: #{forward.6} parent=11 // pred_fallthru
        _
      // Predicated region
      $region73: #{forward.6} parent=11 // pred_check
        %p684 = pneg %p472
      $region74: #{forward.6} parent=11 // pred_check_branch
        %686 = sbr.rel (%p684) target = $region76
      $region75: #{forward.6} parent=11 // pred_region
        _
      $region76: #{forward.6} parent=11 // pred_fallthru
        _
      // Predicated region
      $region77: #{forward.6} parent=11 // pred_check
        %p687 = pneg %p493
      $region78: #{forward.6} parent=11 // pred_check_branch
        %689 = sbr.rel (%p687) target = $region80
      $region79: #{forward.6} parent=11 // pred_region
        _
      $region80: #{forward.6} parent=11 // pred_fallthru
        _
      // Predicated region
      $region81: #{forward.6} parent=11 // pred_check
        %p690 = pneg %p514
      $region82: #{forward.6} parent=11 // pred_check_branch
        %692 = sbr.rel (%p690) target = $region84
      $region83: #{forward.6} parent=11 // pred_region
        _
      $region84: #{forward.6} parent=11 // pred_fallthru
        _
      // Predicated region
      $region85: #{forward.6} parent=11 // pred_check
        %p693 = pneg %p535
      $region86: #{forward.6} parent=11 // pred_check_branch
        %695 = sbr.rel (%p693) target = $region88
      $region87: #{forward.6} parent=11 // pred_region
        _
      $region88: #{forward.6} parent=11 // pred_fallthru
        _
      // Predicated region
      $region89: #{forward.6} parent=11 // pred_check
        %p696 = pneg %p556
      $region90: #{forward.6} parent=11 // pred_check_branch
        %698 = sbr.rel (%p696) target = $region92
      $region91: #{forward.6} parent=11 // pred_region
        _
      $region92: #{forward.6} parent=11 // pred_fallthru
        _
      // Predicated region
      $region93: #{forward.6} parent=11 // pred_check
        %p699 = pneg %p577
      $region94: #{forward.6} parent=11 // pred_check_branch
        %701 = sbr.rel (%p699) target = $region96
      $region95: #{forward.6} parent=11 // pred_region
        _
      $region96: #{forward.6} parent=11 // pred_fallthru
        _
      // Predicated region
      $region97: #{forward.6} parent=11 // pred_check
        %p702 = pneg %p598
      $region98: #{forward.6} parent=11 // pred_check_branch
        %704 = sbr.rel (%p702) target = $region100
      $region99: #{forward.6} parent=11 // pred_region
        _
      $region100: #{forward.6} parent=11 // pred_fallthru
        _
    $region12: #{forward.6} parent=5 // pred_fallthru
      _
    %p705 = scmp.lt.s32.totalorder %s32, 2
    // Predicated region
    $region101: #{forward.6} parent=5 // pred_check
      %p706 = pneg %p705
    $region102: #{forward.6} parent=5 // pred_check_branch
      %708 = sbr.rel (%p706) target = $region104
    $region103: #{forward.6} parent=5 // pred_region
      // Predicated region
      $region105: #{forward.6} parent=103 // pred_check
        %p709 = pneg %p52
      $region106: #{forward.6} parent=103 // pred_check_branch
        %711 = sbr.rel (%p709) target = $region108
      $region107: #{forward.6} parent=103 // pred_region
        %p712 = scmp.lt.s32.totalorder %s32, 1
        %s713 = scalar_select %p712, %s32, 1
        %s714 = smul.addr %s713, 8
        %s715 = scalar_lea.vmem %s0, %s714
      $region108: #{forward.6} parent=103 // pred_fallthru
        _
      // Predicated region
      $region109: #{forward.6} parent=103 // pred_check
        %p716 = pneg %p78
      $region110: #{forward.6} parent=103 // pred_check_branch
        %718 = sbr.rel (%p716) target = $region112
      $region111: #{forward.6} parent=103 // pred_region
        %p719 = scmp.lt.s32.totalorder %s32, 1
        %s720 = scalar_select %p719, %s32, 1
        %s721 = smul.addr %s720, 8
        %s722 = scalar_lea.vmem %s1, %s721
      $region112: #{forward.6} parent=103 // pred_fallthru
        _
      // Predicated region
      $region113: #{forward.6} parent=103 // pred_check
        %p723 = pneg %p230
      $region114: #{forward.6} parent=103 // pred_check_branch
        %725 = sbr.rel (%p723) target = $region116
      $region115: #{forward.6} parent=103 // pred_region
        %p726 = scmp.lt.s32.totalorder %s32, 1
        %s727 = scalar_select %p726, %s32, 1
        %s728 = scalar_lea.vmem %s8, %s727
      $region116: #{forward.6} parent=103 // pred_fallthru
        _
      // Predicated region
      $region117: #{forward.6} parent=103 // pred_check
        %p729 = pneg %p382
      $region118: #{forward.6} parent=103 // pred_check_branch
        %731 = sbr.rel (%p729) target = $region120
      $region119: #{forward.6} parent=103 // pred_region
        %p732 = scmp.lt.s32.totalorder %s32, 1
        %s733 = scalar_select %p732, %s32, 1
        %s734 = scalar_lea.vmem %s15, %s733
      $region120: #{forward.6} parent=103 // pred_fallthru
        _
    $region104: #{forward.6} parent=5 // pred_fallthru
      _
    %p735 = scmp.le.s32.totalorder 1, %s32
    %p736 = scmp.lt.s32.totalorder %s32, 3
    %p737 = pnand %p735, %p736
    %p738 = pneg %p737
    // Predicated region
    $region121: #{forward.6} parent=5 // pred_check
      _
    $region122: #{forward.6} parent=5 // pred_check_branch
      %740 = sbr.rel (%p737) target = $region124
    $region123: #{forward.6} parent=5 // pred_region
      %s741 = ssub.s32 %s32, 1
      %p742 = scmp.lt.s32.totalorder %s37, 1
      %s743 = scalar_select %p742, %s37, 1
      %s744 = smul.addr %s743, 8
      %s745 = scalar_lea.vmem %s0, %s744
      %p746 = pneg %p58
      %p747 = pneg %p55
      %p748 = scmp.lt.s32.totalorder %s37, 1
      %s749 = scalar_select %p748, %s37, 1
      %s750 = smul.addr %s749, 8
      %s751 = scalar_lea.vmem %s1, %s750
      %p752 = pneg %p84
      %p753 = pneg %p81
      %p754 = pneg %p105
      %p755 = pneg %p102
      %p756 = pneg %p126
      %p757 = pneg %p123
      %p758 = pneg %p147
      %p759 = pneg %p144
      %p760 = pneg %p168
      %p761 = pneg %p165
      %p762 = pneg %p189
      %p763 = pneg %p186
      %p764 = pneg %p210
      %p765 = pneg %p207
      %p766 = scmp.lt.s32.totalorder %s37, 1
      %s767 = scalar_select %p766, %s37, 1
      %s768 = scalar_lea.vmem %s8, %s767
      %p769 = pneg %p236
      %p770 = pneg %p233
      %p771 = pneg %p257
      %p772 = pneg %p254
      %p773 = pneg %p278
      %p774 = pneg %p275
      %p775 = pneg %p299
      %p776 = pneg %p296
      %p777 = pneg %p320
      %p778 = pneg %p317
      %p779 = pneg %p341
      %p780 = pneg %p338
      %p781 = pneg %p362
      %p782 = pneg %p359
      %p783 = scmp.lt.s32.totalorder %s37, 1
      %s784 = scalar_select %p783, %s37, 1
      %s785 = scalar_lea.vmem %s15, %s784
      %p786 = pneg %p388
      %p787 = pneg %p385
      %p788 = pneg %p409
      %p789 = pneg %p406
      %p790 = pneg %p430
      %p791 = pneg %p427
      %p792 = pneg %p451
      %p793 = pneg %p448
      %p794 = pneg %p472
      %p795 = pneg %p469
      %p796 = pneg %p493
      %p797 = pneg %p490
      %p798 = pneg %p514
      %p799 = pneg %p511
      %p800 = pneg %p535
      %p801 = pneg %p532
      %p802 = pneg %p556
      %p803 = pneg %p553
      %p804 = pneg %p577
      %p805 = pneg %p574
      %p806 = pneg %p598
      %p807 = pneg %p595
      %p808 = pneg %p624
      %p809 = pneg %p621
      %p810 = scmp.lt.s32.totalorder %s37, 1
      %s811 = scalar_select %p810, %s37, 1
      %s812 = smul.addr %s811, 8
      %s813 = scalar_lea.vmem %s26, %s812
      %p814 = scmp.lt.s32.totalorder %s37, 1
      %s815 = scalar_select %p814, %s37, 1
      %s816 = smul.addr %s815, 8
      %s817 = scalar_lea.vmem %s0, %s816
      %p818 = scmp.lt.s32.totalorder %s37, 1
      %s819 = scalar_select %p818, %s37, 1
      %s820 = smul.addr %s819, 8
      %s821 = scalar_lea.vmem %s1, %s820
      %p822 = scmp.lt.s32.totalorder %s37, 1
      %s823 = scalar_select %p822, %s37, 1
      %s824 = scalar_lea.vmem %s8, %s823
      %p825 = scmp.lt.s32.totalorder %s37, 1
      %s826 = scalar_select %p825, %s37, 1
      %s827 = scalar_lea.vmem %s15, %s826
      %p828 = scmp.lt.s32.totalorder %s37, 1
      %s829 = scalar_select %p828, %s37, 1
      %s830 = smul.addr %s829, 8
      %s831 = scalar_lea.vmem %s26, %s830
      %v833 = vld [vmem:[%s817] sm:$0xff]
      %v834 = vld [vmem:[%s821] sm:$0xff]
      %v835 = vld [vmem:[%s824] sm:$0x1]
      %v836 = vld [vmem:[%s16] sm:$0xff]
      %v837 = vld [vmem:[%s17] sm:$0xff]
      %v838 = vld [vmem:[%s2] sm:$0x1]
      %v839 = vld [vmem:[%s3] sm:$0x1]
      %vm840 = vcmask 261120
      %v841 = vsel %vm840, %v833, 0.0
      %842 = vadd.xlane.f32.xlu0 %v841
      %v843 = vpop.xlane.xlu0 %842
      %v844 = vrcp.pop 32.0
      %v845 = vmul.f32 32.0, %v844
      %v846 = vsub.f32 1.0, %v845
      %v847 = vmul.f32 %v844, %v846
      %v848 = vadd.f32 %v844, %v847
      %vm849 = vweird.f32 %v844
      %v850 = vsel %vm849, %v844, %v848
      %v851 = vmul.f32 %v843, %v850
      %v852 = vsub.f32 %v833, %v851
      %v853 = vmul.f32 %v852, %v852
      %v854 = vsel %vm840, %v853, 0.0
      %855 = vadd.xlane.f32.xlu0 %v854
      %v856 = vpop.xlane.xlu0 %855
      %v857 = vmul.f32 %v856, %v850
      %v858 = vadd.f32 %v857, 1e-05
      %v859 = vrsqrt.pop %v858
      %v860 = vmul.f32 %v859, %v858
      %v861 = vmul.f32 %v860, %v859
      %v862 = vmul.f32 0.5, %v861
      %v863 = vsub.f32 1.5, %v862
      %v864 = vmul.f32 %v859, %v863
      %vm865 = vweird.f32 %v858
      %vm866 = vweird.f32 %v859
      %vm867 = vmor %vm865, %vm866
      %v868 = vsel %vm867, %v859, %v864
      %v869 = vmul.f32 %v852, %v868
      %v871 = vperm.slane %v838, 0
      %v873 = vmul.f32 %v869, %v871
      %v875 = vperm.slane %v839, 0
      %v877 = vadd.f32 %v873, %v875
      %v878 = vld [vmem:[%s4] sm:$0xf]
      %v879 = vld [vmem:[%s4 + $0x4] sm:$0xf]
      %v880 = vld [vmem:[%s4 + $0x8] sm:$0xf]
      %v881 = vld [vmem:[%s4 + $0xc] sm:$0xf]
      %v882 = vld [vmem:[%s5] sm:$0x1]
      %v883 = vpack.c.bf16 %v877, %v877
      %v885 = vperm.slane %v882, 0
      %v891 = vunpack.c.l.b16 %v878
      %v892 = vunpack.c.l.b16 %v879
      %v893 = vunpack.c.l.b16 %v880
      %v894 = vunpack.c.l.b16 %v881
      %v895 = vpack.c.b16 %v892, %v891
      %v896 = vpack.c.b16 %v894, %v893
      %v900 = vsel %vm840, %v883, 0
      %902 = vmatpush.bf16.msra.mxu0 0
      %903 = vmatpush.bf16.msra.mxu0 0
      %904 = vmatpush.bf16.msra.mxu0 0
      %905 = vmatpush.bf16.msra.mxu0 0
      %906 = vmatpush.bf16.msra.mxu0 0
      %907 = vmatpush.bf16.msra.mxu0 0
      %908 = vmatpush.bf16.msra.mxu0 %v896
      %909 = vmatpush.bf16.msra.mxu0 %v895
      %910 = vmatmul.bf16.gmra.mxu0 %v900
      %v911 = vpop.f32.mrf.mxu0
      %v912 = vadd.f32 %v885, %v911
      %v913 = vpop.f32.mrf.mxu0
      %914 = vdwg.mxu0
      %916 = vrot.lane.b32.xlu0 %v912, 120
      %v917 = vpop.permute.xlu0 %916
      %919 = vrot.lane.b32.xlu0 %v912, 112
      %v920 = vpop.permute.xlu0 %919
      %922 = vrot.lane.b32.xlu0 %v912, 104
      %v923 = vpop.permute.xlu0 %922
      %v925 = vmul.f32 %v912, %v836
      %v926 = vmul.f32 %v917, %v836
      %v927 = vmul.f32 %v920, %v836
      %v928 = vmul.f32 %v923, %v836
      %929 = vrot.lane.b32.xlu0 %v912, 124
      %v930 = vpop.permute.xlu0 %929
      %931 = vrot.lane.b32.xlu0 %v917, 124
      %v932 = vpop.permute.xlu0 %931
      %933 = vrot.lane.b32.xlu0 %v920, 124
      %v934 = vpop.permute.xlu0 %933
      %935 = vrot.lane.b32.xlu0 %v923, 124
      %v936 = vpop.permute.xlu0 %935
      %941 = vrot.lane.b32.xlu0 %v912, 4
      %v942 = vpop.permute.xlu0 %941
      %943 = vrot.lane.b32.xlu0 %v917, 4
      %v944 = vpop.permute.xlu0 %943
      %945 = vrot.lane.b32.xlu0 %v920, 4
      %v946 = vpop.permute.xlu0 %945
      %947 = vrot.lane.b32.xlu0 %v923, 4
      %v948 = vpop.permute.xlu0 %947
      %vm953 = vcmask 31744
      %v954 = vsel %vm953, %v930, %v942
      %v955 = vsel %vm953, %v932, %v944
      %v956 = vsel %vm953, %v934, %v946
      %v957 = vsel %vm953, %v936, %v948
      %v958 = vmul.f32 %v954, %v837
      %v959 = vmul.f32 %v955, %v837
      %v960 = vmul.f32 %v956, %v837
      %v961 = vmul.f32 %v957, %v837
      %v962 = vadd.f32 %v925, %v958
      %v963 = vadd.f32 %v926, %v959
      %v964 = vadd.f32 %v927, %v960
      %v965 = vadd.f32 %v928, %v961
      %967 = vrot.lane.b32.xlu0 %v836, 32
      %v968 = vpop.permute.xlu0 %967
      %v970 = vmul.f32 %v912, %v968
      %v971 = vmul.f32 %v917, %v968
      %v972 = vmul.f32 %v920, %v968
      %v973 = vmul.f32 %v923, %v968
      %974 = vrot.lane.b32.xlu0 %v912, 92
      %v975 = vpop.permute.xlu0 %974
      %976 = vrot.lane.b32.xlu0 %v917, 92
      %v977 = vpop.permute.xlu0 %976
      %978 = vrot.lane.b32.xlu0 %v920, 92
      %v979 = vpop.permute.xlu0 %978
      %980 = vrot.lane.b32.xlu0 %v923, 92
      %v981 = vpop.permute.xlu0 %980
      %986 = vrot.lane.b32.xlu0 %v912, 100
      %v987 = vpop.permute.xlu0 %986
      %988 = vrot.lane.b32.xlu0 %v917, 100
      %v989 = vpop.permute.xlu0 %988
      %990 = vrot.lane.b32.xlu0 %v920, 100
      %v991 = vpop.permute.xlu0 %990
      %992 = vrot.lane.b32.xlu0 %v923, 100
      %v993 = vpop.permute.xlu0 %992
      %v998 = vsel %vm953, %v975, %v987
      %v999 = vsel %vm953, %v977, %v989
      %v1000 = vsel %vm953, %v979, %v991
      %v1001 = vsel %vm953, %v981, %v993
      %v1002 = vmul.f32 %v998, %v837
      %v1003 = vmul.f32 %v999, %v837
      %v1004 = vmul.f32 %v1000, %v837
      %v1005 = vmul.f32 %v1001, %v837
      %1010 = vrot.lane.b32.xlu0 %v1002, 32
      %v1011 = vpop.permute.xlu0 %1010
      %1012 = vrot.lane.b32.xlu0 %v1003, 32
      %v1013 = vpop.permute.xlu0 %1012
      %1014 = vrot.lane.b32.xlu0 %v1004, 32
      %v1015 = vpop.permute.xlu0 %1014
      %1016 = vrot.lane.b32.xlu0 %v1005, 32
      %v1017 = vpop.permute.xlu0 %1016
      %v1022 = vadd.f32 %v970, %v1011
      %v1023 = vadd.f32 %v971, %v1013
      %v1024 = vadd.f32 %v972, %v1015
      %v1025 = vadd.f32 %v973, %v1017
      %v1026 = vpack.c.bf16 %v962, %v962
      %v1027 = vpack.c.bf16 %v963, %v963
      %v1028 = vpack.c.bf16 %v964, %v964
      %v1029 = vpack.c.bf16 %v965, %v965
      %v1030 = vpack.c.bf16 %v1022, %v1022
      %v1031 = vpack.c.bf16 %v1023, %v1023
      %v1032 = vpack.c.bf16 %v1024, %v1024
      %v1033 = vpack.c.bf16 %v1025, %v1025
      %v1035 = vunpack.c.l.b16 %v1030
      %v1036 = vpack.c.b16 %v1035, %v1035
      %1037 = vrot.lane.b32.xlu0 %v1036, 96
      %v1038 = vpop.permute.xlu0 %1037
      %vm1039 = vcmask 64512
      %v1041 = vsel %vm1039, %v1026, 0
      %v1044 = vsel %vm1039, %v1038, 0
      %1046 = vmatpush.bf16.xpose.msra.mxu0 0
      %1047 = vmatpush.bf16.xpose.msra.mxu0 0
      %1048 = vmatpush.bf16.xpose.msra.mxu0 0
      %1049 = vmatpush.bf16.xpose.msra.mxu0 0
      %1050 = vmatpush.bf16.xpose.msra.mxu0 0
      %1051 = vmatpush.bf16.xpose.msra.mxu0 0
      %1052 = vmatpush.bf16.xpose.msra.mxu0 0
      %1053 = vmatpush.bf16.xpose.msra.mxu0 %v1044
      %1054 = vmatmul.bf16.gmra.mxu0 %v1041
      %v1055 = vpop.f32.mrf.mxu0
      %v1056 = vadd.f32 0.0, %v1055
      %v1057 = vpop.f32.mrf.mxu0
      %1058 = vdwg.mxu0
      %v1060 = vunpack.c.l.b16 %v1031
      %v1061 = vpack.c.b16 %v1060, %v1060
      %1062 = vrot.lane.b32.xlu0 %v1061, 96
      %v1063 = vpop.permute.xlu0 %1062
      %v1065 = vsel %vm1039, %v1027, 0
      %v1068 = vsel %vm1039, %v1063, 0
      %1070 = vmatpush.bf16.xpose.msra.mxu0 0
      %1071 = vmatpush.bf16.xpose.msra.mxu0 0
      %1072 = vmatpush.bf16.xpose.msra.mxu0 0
      %1073 = vmatpush.bf16.xpose.msra.mxu0 0
      %1074 = vmatpush.bf16.xpose.msra.mxu0 0
      %1075 = vmatpush.bf16.xpose.msra.mxu0 0
      %1076 = vmatpush.bf16.xpose.msra.mxu0 0
      %1077 = vmatpush.bf16.xpose.msra.mxu0 %v1068
      %1078 = vmatmul.bf16.gmra.mxu0 %v1065
      %v1079 = vpop.f32.mrf.mxu0
      %v1080 = vadd.f32 0.0, %v1079
      %v1081 = vpop.f32.mrf.mxu0
      %1082 = vdwg.mxu0
      %v1084 = vunpack.c.l.b16 %v1032
      %v1085 = vpack.c.b16 %v1084, %v1084
      %1086 = vrot.lane.b32.xlu0 %v1085, 96
      %v1087 = vpop.permute.xlu0 %1086
      %v1089 = vsel %vm1039, %v1028, 0
      %v1092 = vsel %vm1039, %v1087, 0
      %1094 = vmatpush.bf16.xpose.msra.mxu0 0
      %1095 = vmatpush.bf16.xpose.msra.mxu0 0
      %1096 = vmatpush.bf16.xpose.msra.mxu0 0
      %1097 = vmatpush.bf16.xpose.msra.mxu0 0
      %1098 = vmatpush.bf16.xpose.msra.mxu0 0
      %1099 = vmatpush.bf16.xpose.msra.mxu0 0
      %1100 = vmatpush.bf16.xpose.msra.mxu0 0
      %1101 = vmatpush.bf16.xpose.msra.mxu0 %v1092
      %1102 = vmatmul.bf16.gmra.mxu0 %v1089
      %v1103 = vpop.f32.mrf.mxu0
      %v1104 = vadd.f32 0.0, %v1103
      %v1105 = vpop.f32.mrf.mxu0
      %1106 = vdwg.mxu0
      %v1108 = vunpack.c.l.b16 %v1033
      %v1109 = vpack.c.b16 %v1108, %v1108
      %1110 = vrot.lane.b32.xlu0 %v1109, 96
      %v1111 = vpop.permute.xlu0 %1110
      %v1113 = vsel %vm1039, %v1029, 0
      %v1116 = vsel %vm1039, %v1111, 0
      %1118 = vmatpush.bf16.xpose.msra.mxu0 0
      %1119 = vmatpush.bf16.xpose.msra.mxu0 0
      %1120 = vmatpush.bf16.xpose.msra.mxu0 0
      %1121 = vmatpush.bf16.xpose.msra.mxu0 0
      %1122 = vmatpush.bf16.xpose.msra.mxu0 0
      %1123 = vmatpush.bf16.xpose.msra.mxu0 0
      %1124 = vmatpush.bf16.xpose.msra.mxu0 0
      %1125 = vmatpush.bf16.xpose.msra.mxu0 %v1116
      %1126 = vmatmul.bf16.gmra.mxu0 %v1113
      %v1127 = vpop.f32.mrf.mxu0
      %v1128 = vadd.f32 0.0, %v1127
      %v1129 = vpop.f32.mrf.mxu0
      %1130 = vdwg.mxu0
      %v1131 = vmul.f32 %v1056, 0.35355338
      %v1132 = vmul.f32 %v1080, 0.35355338
      %v1133 = vmul.f32 %v1104, 0.35355338
      %v1134 = vmul.f32 %v1128, 0.35355338
      %v1136 = vperm.slane %v835, 0
      %v1138 = vadd.f32 %v1131, %v1136
      %v1139 = vadd.f32 %v1132, %v1136
      %v1140 = vadd.f32 %v1133, %v1136
      %v1141 = vadd.f32 %v1134, %v1136
      %v1142 = vsel %vm1039, %v1138, -inf
      %1143 = vmax.xlane.f32.xlu0 %v1142
      %v1144 = vpop.xlane.xlu0 %1143
      %v1145 = vsel %vm1039, %v1139, -inf
      %1146 = vmax.xlane.f32.xlu0 %v1145
      %v1147 = vpop.xlane.xlu0 %1146
      %v1148 = vsel %vm1039, %v1140, -inf
      %1149 = vmax.xlane.f32.xlu0 %v1148
      %v1150 = vpop.xlane.xlu0 %1149
      %v1151 = vsel %vm1039, %v1141, -inf
      %1152 = vmax.xlane.f32.xlu0 %v1151
      %v1153 = vpop.xlane.xlu0 %1152
      %v1154 = vsub.f32 %v1138, %v1144
      %v1155 = vsub.f32 %v1139, %v1147
      %v1156 = vsub.f32 %v1140, %v1150
      %v1157 = vsub.f32 %v1141, %v1153
      %v1158 = vmul.f32 %v1154, 1.442695
      %v1159 = vpow.pop %v1158
      %v1160 = vmul.f32 %v1155, 1.442695
      %v1161 = vpow.pop %v1160
      %v1162 = vmul.f32 %v1156, 1.442695
      %v1163 = vpow.pop %v1162
      %v1164 = vmul.f32 %v1157, 1.442695
      %v1165 = vpow.pop %v1164
      %v1166 = vsel %vm1039, %v1159, 0.0
      %1167 = vadd.xlane.f32.xlu0 %v1166
      %v1168 = vpop.xlane.xlu0 %1167
      %v1169 = vsel %vm1039, %v1161, 0.0
      %1170 = vadd.xlane.f32.xlu0 %v1169
      %v1171 = vpop.xlane.xlu0 %1170
      %v1172 = vsel %vm1039, %v1163, 0.0
      %1173 = vadd.xlane.f32.xlu0 %v1172
      %v1174 = vpop.xlane.xlu0 %1173
      %v1175 = vsel %vm1039, %v1165, 0.0
      %1176 = vadd.xlane.f32.xlu0 %v1175
      %v1177 = vpop.xlane.xlu0 %1176
      %v1178 = vpack.c.bf16 %v1159, %v1159
      %v1179 = vpack.c.bf16 %v1161, %v1161
      %v1180 = vpack.c.bf16 %v1163, %v1163
      %v1181 = vpack.c.bf16 %v1165, %v1165
      %v1182 = vpack.c.bf16 %v912, %v912
      %v1183 = vpack.c.bf16 %v917, %v917
      %v1184 = vpack.c.bf16 %v920, %v920
      %v1185 = vpack.c.bf16 %v923, %v923
      %v1187 = vunpack.c.l.b16 %v1182
      %v1188 = vpack.c.b16 %v1187, %v1187
      %1189 = vrot.lane.b32.xlu0 %v1188, 64
      %v1190 = vpop.permute.xlu0 %1189
      %v1192 = vsel %vm1039, %v1178, 0
      %vm1194 = vcmask 1043456
      %v1196 = vsel %vm1194, %v1190, 0
      %1198 = vmatpush.bf16.msra.mxu0 0
      %1199 = vmatpush.bf16.msra.mxu0 0
      %1200 = vmatpush.bf16.msra.mxu0 0
      %1201 = vmatpush.bf16.msra.mxu0 0
      %1202 = vmatpush.bf16.msra.mxu0 0
      %1203 = vmatpush.bf16.msra.mxu0 0
      %1204 = vmatpush.bf16.msra.mxu0 0
      %1205 = vmatpush.bf16.msra.mxu0 %v1196
      %1206 = vmatmul.bf16.gmra.mxu0 %v1192
      %v1207 = vpop.f32.mrf.mxu0
      %v1208 = vadd.f32 0.0, %v1207
      %v1209 = vpop.f32.mrf.mxu0
      %1210 = vdwg.mxu0
      %v1212 = vunpack.c.l.b16 %v1183
      %v1213 = vpack.c.b16 %v1212, %v1212
      %1214 = vrot.lane.b32.xlu0 %v1213, 64
      %v1215 = vpop.permute.xlu0 %1214
      %v1217 = vsel %vm1039, %v1179, 0
      %v1220 = vsel %vm1194, %v1215, 0
      %1222 = vmatpush.bf16.msra.mxu0 0
      %1223 = vmatpush.bf16.msra.mxu0 0
      %1224 = vmatpush.bf16.msra.mxu0 0
      %1225 = vmatpush.bf16.msra.mxu0 0
      %1226 = vmatpush.bf16.msra.mxu0 0
      %1227 = vmatpush.bf16.msra.mxu0 0
      %1228 = vmatpush.bf16.msra.mxu0 0
      %1229 = vmatpush.bf16.msra.mxu0 %v1220
      %1230 = vmatmul.bf16.gmra.mxu0 %v1217
      %v1231 = vpop.f32.mrf.mxu0
      %v1232 = vadd.f32 0.0, %v1231
      %v1233 = vpop.f32.mrf.mxu0
      %1234 = vdwg.mxu0
      %v1236 = vunpack.c.l.b16 %v1184
      %v1237 = vpack.c.b16 %v1236, %v1236
      %1238 = vrot.lane.b32.xlu0 %v1237, 64
      %v1239 = vpop.permute.xlu0 %1238
      %v1241 = vsel %vm1039, %v1180, 0
      %v1244 = vsel %vm1194, %v1239, 0
      %1246 = vmatpush.bf16.msra.mxu0 0
      %1247 = vmatpush.bf16.msra.mxu0 0
      %1248 = vmatpush.bf16.msra.mxu0 0
      %1249 = vmatpush.bf16.msra.mxu0 0
      %1250 = vmatpush.bf16.msra.mxu0 0
      %1251 = vmatpush.bf16.msra.mxu0 0
      %1252 = vmatpush.bf16.msra.mxu0 0
      %1253 = vmatpush.bf16.msra.mxu0 %v1244
      %1254 = vmatmul.bf16.gmra.mxu0 %v1241
      %v1255 = vpop.f32.mrf.mxu0
      %v1256 = vadd.f32 0.0, %v1255
      %v1257 = vpop.f32.mrf.mxu0
      %1258 = vdwg.mxu0
      %v1260 = vunpack.c.l.b16 %v1185
      %v1261 = vpack.c.b16 %v1260, %v1260
      %1262 = vrot.lane.b32.xlu0 %v1261, 64
      %v1263 = vpop.permute.xlu0 %1262
      %v1265 = vsel %vm1039, %v1181, 0
      %v1268 = vsel %vm1194, %v1263, 0
      %1270 = vmatpush.bf16.msra.mxu0 0
      %1271 = vmatpush.bf16.msra.mxu0 0
      %1272 = vmatpush.bf16.msra.mxu0 0
      %1273 = vmatpush.bf16.msra.mxu0 0
      %1274 = vmatpush.bf16.msra.mxu0 0
      %1275 = vmatpush.bf16.msra.mxu0 0
      %1276 = vmatpush.bf16.msra.mxu0 0
      %1277 = vmatpush.bf16.msra.mxu0 %v1268
      %1278 = vmatmul.bf16.gmra.mxu0 %v1265
      %v1279 = vpop.f32.mrf.mxu0
      %v1280 = vadd.f32 0.0, %v1279
      %v1281 = vpop.f32.mrf.mxu0
      %1282 = vdwg.mxu0
      %v1283 = vrcp.pop %v1168
      %v1284 = vrcp.pop %v1171
      %v1285 = vrcp.pop %v1174
      %v1286 = vrcp.pop %v1177
      %v1287 = vmul.f32 %v1208, %v1283
      %v1288 = vmul.f32 %v1232, %v1284
      %v1289 = vmul.f32 %v1256, %v1285
      %v1290 = vmul.f32 %v1280, %v1286
      %1292 = vrot.lane.b32.xlu0 %v1288, 8
      %v1293 = vpop.permute.xlu0 %1292
      %1296 = vrot.lane.b32.xlu0 %v1289, 16
      %v1297 = vpop.permute.xlu0 %1296
      %1300 = vrot.lane.b32.xlu0 %v1290, 24
      %v1301 = vpop.permute.xlu0 %1300
      %v1303 = vsel %vm1039, %v1287, %v1293
      %vm1304 = vcmask 130048
      %v1305 = vsel %vm1304, %v1303, %v1297
      %vm1306 = vcmask 195584
      %v1307 = vsel %vm1306, %v1305, %v1301
      %v1308 = vld [vmem:[%s6] sm:$0xf]
      %v1309 = vld [vmem:[%s6 + $0x4] sm:$0xf]
      %v1310 = vld [vmem:[%s6 + $0x8] sm:$0xf]
      %v1311 = vld [vmem:[%s6 + $0xc] sm:$0xf]
      %v1312 = vpack.c.bf16 %v1307, %v1307
      %v1313 = vld [vmem:[%s7] sm:$0x1]
      %v1315 = vperm.slane %v1313, 0
      %v1321 = vunpack.c.l.b16 %v1308
      %v1322 = vunpack.c.l.b16 %v1309
      %v1323 = vunpack.c.l.b16 %v1310
      %v1324 = vunpack.c.l.b16 %v1311
      %v1325 = vpack.c.b16 %v1322, %v1321
      %v1326 = vpack.c.b16 %v1324, %v1323
      %v1330 = vsel %vm840, %v1312, 0
      %1332 = vmatpush.bf16.msra.mxu0 0
      %1333 = vmatpush.bf16.msra.mxu0 0
      %1334 = vmatpush.bf16.msra.mxu0 0
      %1335 = vmatpush.bf16.msra.mxu0 0
      %1336 = vmatpush.bf16.msra.mxu0 0
      %1337 = vmatpush.bf16.msra.mxu0 0
      %1338 = vmatpush.bf16.msra.mxu0 %v1326
      %1339 = vmatpush.bf16.msra.mxu0 %v1325
      %1340 = vmatmul.bf16.gmra.mxu0 %v1330
      %v1341 = vpop.f32.mrf.mxu0
      %v1342 = vadd.f32 %v1315, %v1341
      %v1343 = vpop.f32.mrf.mxu0
      %1344 = vdwg.mxu0
      %v1345 = vadd.f32 %v833, %v1342
      %v1346 = vld [vmem:[%s827] sm:$0x1]
      %v1347 = vld [vmem:[%s16] sm:$0xff]
      %v1348 = vld [vmem:[%s17] sm:$0xff]
      %v1349 = vld [vmem:[%s18] sm:$0xff]
      %v1350 = vld [vmem:[%s19] sm:$0xff]
      %v1351 = vld [vmem:[%s9] sm:$0x1]
      %v1352 = vld [vmem:[%s10] sm:$0x1]
      %v1353 = vsel %vm840, %v1345, 0.0
      %1354 = vadd.xlane.f32.xlu0 %v1353
      %v1355 = vpop.xlane.xlu0 %1354
      %v1356 = vmul.f32 %v1355, %v850
      %v1357 = vsub.f32 %v1345, %v1356
      %v1358 = vmul.f32 %v1357, %v1357
      %v1359 = vsel %vm840, %v1358, 0.0
      %1360 = vadd.xlane.f32.xlu0 %v1359
      %v1361 = vpop.xlane.xlu0 %1360
      %v1362 = vmul.f32 %v1361, %v850
      %v1363 = vadd.f32 %v1362, 1e-05
      %v1364 = vrsqrt.pop %v1363
      %v1365 = vmul.f32 %v1364, %v1363
      %v1366 = vmul.f32 %v1365, %v1364
      %v1367 = vmul.f32 0.5, %v1366
      %v1368 = vsub.f32 1.5, %v1367
      %v1369 = vmul.f32 %v1364, %v1368
      %vm1370 = vweird.f32 %v1363
      %vm1371 = vweird.f32 %v1364
      %vm1372 = vmor %vm1370, %vm1371
      %v1373 = vsel %vm1372, %v1364, %v1369
      %v1374 = vmul.f32 %v1357, %v1373
      %v1376 = vperm.slane %v1351, 0
      %v1378 = vmul.f32 %v1374, %v1376
      %v1380 = vperm.slane %v1352, 0
      %v1382 = vadd.f32 %v1378, %v1380
      %v1383 = vld [vmem:[%s11] sm:$0xf]
      %v1384 = vld [vmem:[%s11 + $0x4] sm:$0xf]
      %v1385 = vld [vmem:[%s11 + $0x8] sm:$0xf]
      %v1386 = vld [vmem:[%s11 + $0xc] sm:$0xf]
      %v1387 = vld [vmem:[%s12] sm:$0x1]
      %v1388 = vpack.c.bf16 %v1382, %v1382
      %v1390 = vperm.slane %v1387, 0
      %v1396 = vunpack.c.l.b16 %v1383
      %v1397 = vunpack.c.l.b16 %v1384
      %v1398 = vunpack.c.l.b16 %v1385
      %v1399 = vunpack.c.l.b16 %v1386
      %v1400 = vpack.c.b16 %v1397, %v1396
      %v1401 = vpack.c.b16 %v1399, %v1398
      %v1405 = vsel %vm840, %v1388, 0
      %1407 = vmatpush.bf16.msra.mxu0 0
      %1408 = vmatpush.bf16.msra.mxu0 0
      %1409 = vmatpush.bf16.msra.mxu0 0
      %1410 = vmatpush.bf16.msra.mxu0 0
      %1411 = vmatpush.bf16.msra.mxu0 0
      %1412 = vmatpush.bf16.msra.mxu0 0
      %1413 = vmatpush.bf16.msra.mxu0 %v1401
      %1414 = vmatpush.bf16.msra.mxu0 %v1400
      %1415 = vmatmul.bf16.gmra.mxu0 %v1405
      %v1416 = vpop.f32.mrf.mxu0
      %v1417 = vadd.f32 %v1390, %v1416
      %v1418 = vpop.f32.mrf.mxu0
      %1419 = vdwg.mxu0
      %v1420 = vpack.c.bf16 %v834, %v834
      %1421 = vrot.lane.b32.xlu0 %v1400, 96
      %v1422 = vpop.permute.xlu0 %1421
      %1423 = vrot.lane.b32.xlu0 %v1401, 96
      %v1424 = vpop.permute.xlu0 %1423
      %1427 = vrot.lane.b32.xlu0 %v1390, 96
      %v1428 = vpop.permute.xlu0 %1427
      %v1431 = vsel %vm840, %v1420, 0
      %1433 = vmatpush.bf16.msra.mxu0 0
      %1434 = vmatpush.bf16.msra.mxu0 0
      %1435 = vmatpush.bf16.msra.mxu0 0
      %1436 = vmatpush.bf16.msra.mxu0 0
      %1437 = vmatpush.bf16.msra.mxu0 0
      %1438 = vmatpush.bf16.msra.mxu0 0
      %1439 = vmatpush.bf16.msra.mxu0 %v1424
      %1440 = vmatpush.bf16.msra.mxu0 %v1422
      %1441 = vmatmul.bf16.gmra.mxu0 %v1431
      %v1442 = vpop.f32.mrf.mxu0
      %v1443 = vadd.f32 %v1428, %v1442
      %v1444 = vpop.f32.mrf.mxu0
      %1445 = vdwg.mxu0
      %1447 = vrot.lane.b32.xlu0 %v1417, 120
      %v1448 = vpop.permute.xlu0 %1447
      %1450 = vrot.lane.b32.xlu0 %v1417, 112
      %v1451 = vpop.permute.xlu0 %1450
      %1453 = vrot.lane.b32.xlu0 %v1417, 104
      %v1454 = vpop.permute.xlu0 %1453
      %v1456 = vmul.f32 %v1417, %v1347
      %v1457 = vmul.f32 %v1448, %v1347
      %v1458 = vmul.f32 %v1451, %v1347
      %v1459 = vmul.f32 %v1454, %v1347
      %1460 = vrot.lane.b32.xlu0 %v1417, 124
      %v1461 = vpop.permute.xlu0 %1460
      %1462 = vrot.lane.b32.xlu0 %v1448, 124
      %v1463 = vpop.permute.xlu0 %1462
      %1464 = vrot.lane.b32.xlu0 %v1451, 124
      %v1465 = vpop.permute.xlu0 %1464
      %1466 = vrot.lane.b32.xlu0 %v1454, 124
      %v1467 = vpop.permute.xlu0 %1466
      %1472 = vrot.lane.b32.xlu0 %v1417, 4
      %v1473 = vpop.permute.xlu0 %1472
      %1474 = vrot.lane.b32.xlu0 %v1448, 4
      %v1475 = vpop.permute.xlu0 %1474
      %1476 = vrot.lane.b32.xlu0 %v1451, 4
      %v1477 = vpop.permute.xlu0 %1476
      %1478 = vrot.lane.b32.xlu0 %v1454, 4
      %v1479 = vpop.permute.xlu0 %1478
      %v1484 = vsel %vm953, %v1461, %v1473
      %v1485 = vsel %vm953, %v1463, %v1475
      %v1486 = vsel %vm953, %v1465, %v1477
      %v1487 = vsel %vm953, %v1467, %v1479
      %v1488 = vmul.f32 %v1484, %v1348
      %v1489 = vmul.f32 %v1485, %v1348
      %v1490 = vmul.f32 %v1486, %v1348
      %v1491 = vmul.f32 %v1487, %v1348
      %v1492 = vadd.f32 %v1456, %v1488
      %v1493 = vadd.f32 %v1457, %v1489
      %v1494 = vadd.f32 %v1458, %v1490
      %v1495 = vadd.f32 %v1459, %v1491
      %1497 = vrot.lane.b32.xlu0 %v1443, 120
      %v1498 = vpop.permute.xlu0 %1497
      %1500 = vrot.lane.b32.xlu0 %v1443, 112
      %v1501 = vpop.permute.xlu0 %1500
      %1503 = vrot.lane.b32.xlu0 %v1443, 104
      %v1504 = vpop.permute.xlu0 %1503
      %v1506 = vmul.f32 %v1443, %v1349
      %v1507 = vmul.f32 %v1498, %v1349
      %v1508 = vmul.f32 %v1501, %v1349
      %v1509 = vmul.f32 %v1504, %v1349
      %1510 = vrot.lane.b32.xlu0 %v1443, 124
      %v1511 = vpop.permute.xlu0 %1510
      %1512 = vrot.lane.b32.xlu0 %v1498, 124
      %v1513 = vpop.permute.xlu0 %1512
      %1514 = vrot.lane.b32.xlu0 %v1501, 124
      %v1515 = vpop.permute.xlu0 %1514
      %1516 = vrot.lane.b32.xlu0 %v1504, 124
      %v1517 = vpop.permute.xlu0 %1516
      %1522 = vrot.lane.b32.xlu0 %v1443, 4
      %v1523 = vpop.permute.xlu0 %1522
      %1524 = vrot.lane.b32.xlu0 %v1498, 4
      %v1525 = vpop.permute.xlu0 %1524
      %1526 = vrot.lane.b32.xlu0 %v1501, 4
      %v1527 = vpop.permute.xlu0 %1526
      %1528 = vrot.lane.b32.xlu0 %v1504, 4
      %v1529 = vpop.permute.xlu0 %1528
      %v1534 = vsel %vm953, %v1511, %v1523
      %v1535 = vsel %vm953, %v1513, %v1525
      %v1536 = vsel %vm953, %v1515, %v1527
      %v1537 = vsel %vm953, %v1517, %v1529
      %v1538 = vmul.f32 %v1534, %v1350
      %v1539 = vmul.f32 %v1535, %v1350
      %v1540 = vmul.f32 %v1536, %v1350
      %v1541 = vmul.f32 %v1537, %v1350
      %v1542 = vadd.f32 %v1506, %v1538
      %v1543 = vadd.f32 %v1507, %v1539
      %v1544 = vadd.f32 %v1508, %v1540
      %v1545 = vadd.f32 %v1509, %v1541
      %v1546 = vpack.c.bf16 %v1492, %v1492
      %v1547 = vpack.c.bf16 %v1493, %v1493
      %v1548 = vpack.c.bf16 %v1494, %v1494
      %v1549 = vpack.c.bf16 %v1495, %v1495
      %v1550 = vpack.c.bf16 %v1542, %v1542
      %v1551 = vpack.c.bf16 %v1543, %v1543
      %v1552 = vpack.c.bf16 %v1544, %v1544
      %v1553 = vpack.c.bf16 %v1545, %v1545
      %v1555 = vsel %vm1039, %v1546, 0
      %v1558 = vsel %vm1039, %v1550, 0
      %1560 = vmatpush.bf16.xpose.msra.mxu0 0
      %1561 = vmatpush.bf16.xpose.msra.mxu0 0
      %1562 = vmatpush.bf16.xpose.msra.mxu0 0
      %1563 = vmatpush.bf16.xpose.msra.mxu0 0
      %1564 = vmatpush.bf16.xpose.msra.mxu0 0
      %1565 = vmatpush.bf16.xpose.msra.mxu0 0
      %1566 = vmatpush.bf16.xpose.msra.mxu0 0
      %1567 = vmatpush.bf16.xpose.msra.mxu0 %v1558
      %1568 = vmatmul.bf16.gmra.mxu0 %v1555
      %v1569 = vpop.f32.mrf.mxu0
      %v1570 = vadd.f32 0.0, %v1569
      %v1571 = vpop.f32.mrf.mxu0
      %1572 = vdwg.mxu0
      %v1574 = vsel %vm1039, %v1547, 0
      %v1577 = vsel %vm1039, %v1551, 0
      %1579 = vmatpush.bf16.xpose.msra.mxu0 0
      %1580 = vmatpush.bf16.xpose.msra.mxu0 0
      %1581 = vmatpush.bf16.xpose.msra.mxu0 0
      %1582 = vmatpush.bf16.xpose.msra.mxu0 0
      %1583 = vmatpush.bf16.xpose.msra.mxu0 0
      %1584 = vmatpush.bf16.xpose.msra.mxu0 0
      %1585 = vmatpush.bf16.xpose.msra.mxu0 0
      %1586 = vmatpush.bf16.xpose.msra.mxu0 %v1577
      %1587 = vmatmul.bf16.gmra.mxu0 %v1574
      %v1588 = vpop.f32.mrf.mxu0
      %v1589 = vadd.f32 0.0, %v1588
      %v1590 = vpop.f32.mrf.mxu0
      %1591 = vdwg.mxu0
      %v1593 = vsel %vm1039, %v1548, 0
      %v1596 = vsel %vm1039, %v1552, 0
      %1598 = vmatpush.bf16.xpose.msra.mxu0 0
      %1599 = vmatpush.bf16.xpose.msra.mxu0 0
      %1600 = vmatpush.bf16.xpose.msra.mxu0 0
      %1601 = vmatpush.bf16.xpose.msra.mxu0 0
      %1602 = vmatpush.bf16.xpose.msra.mxu0 0
      %1603 = vmatpush.bf16.xpose.msra.mxu0 0
      %1604 = vmatpush.bf16.xpose.msra.mxu0 0
      %1605 = vmatpush.bf16.xpose.msra.mxu0 %v1596
      %1606 = vmatmul.bf16.gmra.mxu0 %v1593
      %v1607 = vpop.f32.mrf.mxu0
      %v1608 = vadd.f32 0.0, %v1607
      %v1609 = vpop.f32.mrf.mxu0
      %1610 = vdwg.mxu0
      %v1612 = vsel %vm1039, %v1549, 0
      %v1615 = vsel %vm1039, %v1553, 0
      %1617 = vmatpush.bf16.xpose.msra.mxu0 0
      %1618 = vmatpush.bf16.xpose.msra.mxu0 0
      %1619 = vmatpush.bf16.xpose.msra.mxu0 0
      %1620 = vmatpush.bf16.xpose.msra.mxu0 0
      %1621 = vmatpush.bf16.xpose.msra.mxu0 0
      %1622 = vmatpush.bf16.xpose.msra.mxu0 0
      %1623 = vmatpush.bf16.xpose.msra.mxu0 0
      %1624 = vmatpush.bf16.xpose.msra.mxu0 %v1615
      %1625 = vmatmul.bf16.gmra.mxu0 %v1612
      %v1626 = vpop.f32.mrf.mxu0
      %v1627 = vadd.f32 0.0, %v1626
      %v1628 = vpop.f32.mrf.mxu0
      %1629 = vdwg.mxu0
      %v1630 = vmul.f32 %v1570, 0.35355338
      %v1631 = vmul.f32 %v1589, 0.35355338
      %v1632 = vmul.f32 %v1608, 0.35355338
      %v1633 = vmul.f32 %v1627, 0.35355338
      %v1635 = vperm.slane %v1346, 0
      %v1637 = vadd.f32 %v1630, %v1635
      %v1638 = vadd.f32 %v1631, %v1635
      %v1639 = vadd.f32 %v1632, %v1635
      %v1640 = vadd.f32 %v1633, %v1635
      %v1641 = vsel %vm1039, %v1637, -inf
      %1642 = vmax.xlane.f32.xlu0 %v1641
      %v1643 = vpop.xlane.xlu0 %1642
      %v1644 = vsel %vm1039, %v1638, -inf
      %1645 = vmax.xlane.f32.xlu0 %v1644
      %v1646 = vpop.xlane.xlu0 %1645
      %v1647 = vsel %vm1039, %v1639, -inf
      %1648 = vmax.xlane.f32.xlu0 %v1647
      %v1649 = vpop.xlane.xlu0 %1648
      %v1650 = vsel %vm1039, %v1640, -inf
      %1651 = vmax.xlane.f32.xlu0 %v1650
      %v1652 = vpop.xlane.xlu0 %1651
      %v1653 = vsub.f32 %v1637, %v1643
      %v1654 = vsub.f32 %v1638, %v1646
      %v1655 = vsub.f32 %v1639, %v1649
      %v1656 = vsub.f32 %v1640, %v1652
      %v1657 = vmul.f32 %v1653, 1.442695
      %v1658 = vpow.pop %v1657
      %v1659 = vmul.f32 %v1654, 1.442695
      %v1660 = vpow.pop %v1659
      %v1661 = vmul.f32 %v1655, 1.442695
      %v1662 = vpow.pop %v1661
      %v1663 = vmul.f32 %v1656, 1.442695
      %v1664 = vpow.pop %v1663
      %v1665 = vsel %vm1039, %v1658, 0.0
      %1666 = vadd.xlane.f32.xlu0 %v1665
      %v1667 = vpop.xlane.xlu0 %1666
      %v1668 = vsel %vm1039, %v1660, 0.0
      %1669 = vadd.xlane.f32.xlu0 %v1668
      %v1670 = vpop.xlane.xlu0 %1669
      %v1671 = vsel %vm1039, %v1662, 0.0
      %1672 = vadd.xlane.f32.xlu0 %v1671
      %v1673 = vpop.xlane.xlu0 %1672
      %v1674 = vsel %vm1039, %v1664, 0.0
      %1675 = vadd.xlane.f32.xlu0 %v1674
      %v1676 = vpop.xlane.xlu0 %1675
      %v1677 = vpack.c.bf16 %v1658, %v1658
      %v1678 = vpack.c.bf16 %v1660, %v1660
      %v1679 = vpack.c.bf16 %v1662, %v1662
      %v1680 = vpack.c.bf16 %v1664, %v1664
      %v1681 = vpack.c.bf16 %v1443, %v1443
      %v1682 = vpack.c.bf16 %v1498, %v1498
      %v1683 = vpack.c.bf16 %v1501, %v1501
      %v1684 = vpack.c.bf16 %v1504, %v1504
      %v1686 = vunpack.c.l.b16 %v1681
      %v1687 = vpack.c.b16 %v1686, %v1686
      %1688 = vrot.lane.b32.xlu0 %v1687, 96
      %v1689 = vpop.permute.xlu0 %1688
      %v1691 = vsel %vm1039, %v1677, 0
      %v1694 = vsel %vm1194, %v1689, 0
      %1696 = vmatpush.bf16.msra.mxu0 0
      %1697 = vmatpush.bf16.msra.mxu0 0
      %1698 = vmatpush.bf16.msra.mxu0 0
      %1699 = vmatpush.bf16.msra.mxu0 0
      %1700 = vmatpush.bf16.msra.mxu0 0
      %1701 = vmatpush.bf16.msra.mxu0 0
      %1702 = vmatpush.bf16.msra.mxu0 0
      %1703 = vmatpush.bf16.msra.mxu0 %v1694
      %1704 = vmatmul.bf16.gmra.mxu0 %v1691
      %v1705 = vpop.f32.mrf.mxu0
      %v1706 = vadd.f32 0.0, %v1705
      %v1707 = vpop.f32.mrf.mxu0
      %1708 = vdwg.mxu0
      %v1710 = vunpack.c.l.b16 %v1682
      %v1711 = vpack.c.b16 %v1710, %v1710
      %1712 = vrot.lane.b32.xlu0 %v1711, 96
      %v1713 = vpop.permute.xlu0 %1712
      %v1715 = vsel %vm1039, %v1678, 0
      %v1718 = vsel %vm1194, %v1713, 0
      %1720 = vmatpush.bf16.msra.mxu0 0
      %1721 = vmatpush.bf16.msra.mxu0 0
      %1722 = vmatpush.bf16.msra.mxu0 0
      %1723 = vmatpush.bf16.msra.mxu0 0
      %1724 = vmatpush.bf16.msra.mxu0 0
      %1725 = vmatpush.bf16.msra.mxu0 0
      %1726 = vmatpush.bf16.msra.mxu0 0
      %1727 = vmatpush.bf16.msra.mxu0 %v1718
      %1728 = vmatmul.bf16.gmra.mxu0 %v1715
      %v1729 = vpop.f32.mrf.mxu0
      %v1730 = vadd.f32 0.0, %v1729
      %v1731 = vpop.f32.mrf.mxu0
      %1732 = vdwg.mxu0
      %v1734 = vunpack.c.l.b16 %v1683
      %v1735 = vpack.c.b16 %v1734, %v1734
      %1736 = vrot.lane.b32.xlu0 %v1735, 96
      %v1737 = vpop.permute.xlu0 %1736
      %v1739 = vsel %vm1039, %v1679, 0
      %v1742 = vsel %vm1194, %v1737, 0
      %1744 = vmatpush.bf16.msra.mxu0 0
      %1745 = vmatpush.bf16.msra.mxu0 0
      %1746 = vmatpush.bf16.msra.mxu0 0
      %1747 = vmatpush.bf16.msra.mxu0 0
      %1748 = vmatpush.bf16.msra.mxu0 0
      %1749 = vmatpush.bf16.msra.mxu0 0
      %1750 = vmatpush.bf16.msra.mxu0 0
      %1751 = vmatpush.bf16.msra.mxu0 %v1742
      %1752 = vmatmul.bf16.gmra.mxu0 %v1739
      %v1753 = vpop.f32.mrf.mxu0
      %v1754 = vadd.f32 0.0, %v1753
      %v1755 = vpop.f32.mrf.mxu0
      %1756 = vdwg.mxu0
      %v1758 = vunpack.c.l.b16 %v1684
      %v1759 = vpack.c.b16 %v1758, %v1758
      %1760 = vrot.lane.b32.xlu0 %v1759, 96
      %v1761 = vpop.permute.xlu0 %1760
      %v1763 = vsel %vm1039, %v1680, 0
      %v1766 = vsel %vm1194, %v1761, 0
      %1768 = vmatpush.bf16.msra.mxu0 0
      %1769 = vmatpush.bf16.msra.mxu0 0
      %1770 = vmatpush.bf16.msra.mxu0 0
      %1771 = vmatpush.bf16.msra.mxu0 0
      %1772 = vmatpush.bf16.msra.mxu0 0
      %1773 = vmatpush.bf16.msra.mxu0 0
      %1774 = vmatpush.bf16.msra.mxu0 0
      %1775 = vmatpush.bf16.msra.mxu0 %v1766
      %1776 = vmatmul.bf16.gmra.mxu0 %v1763
      %v1777 = vpop.f32.mrf.mxu0
      %v1778 = vadd.f32 0.0, %v1777
      %v1779 = vpop.f32.mrf.mxu0
      %1780 = vdwg.mxu0
      %v1781 = vrcp.pop %v1667
      %v1782 = vrcp.pop %v1670
      %v1783 = vrcp.pop %v1673
      %v1784 = vrcp.pop %v1676
      %v1785 = vmul.f32 %v1706, %v1781
      %v1786 = vmul.f32 %v1730, %v1782
      %v1787 = vmul.f32 %v1754, %v1783
      %v1788 = vmul.f32 %v1778, %v1784
      %1790 = vrot.lane.b32.xlu0 %v1786, 8
      %v1791 = vpop.permute.xlu0 %1790
      %1794 = vrot.lane.b32.xlu0 %v1787, 16
      %v1795 = vpop.permute.xlu0 %1794
      %1798 = vrot.lane.b32.xlu0 %v1788, 24
      %v1799 = vpop.permute.xlu0 %1798
      %v1801 = vsel %vm1039, %v1785, %v1791
      %v1802 = vsel %vm1304, %v1801, %v1795
      %v1803 = vsel %vm1306, %v1802, %v1799
      %v1804 = vld [vmem:[%s13] sm:$0xf]
      %v1805 = vld [vmem:[%s13 + $0x4] sm:$0xf]
      %v1806 = vld [vmem:[%s13 + $0x8] sm:$0xf]
      %v1807 = vld [vmem:[%s13 + $0xc] sm:$0xf]
      %v1808 = vpack.c.bf16 %v1803, %v1803
      %v1809 = vld [vmem:[%s14] sm:$0x1]
      %v1811 = vperm.slane %v1809, 0
      %v1817 = vunpack.c.l.b16 %v1804
      %v1818 = vunpack.c.l.b16 %v1805
      %v1819 = vunpack.c.l.b16 %v1806
      %v1820 = vunpack.c.l.b16 %v1807
      %v1821 = vpack.c.b16 %v1818, %v1817
      %v1822 = vpack.c.b16 %v1820, %v1819
      %v1826 = vsel %vm840, %v1808, 0
      %1828 = vmatpush.bf16.msra.mxu0 0
      %1829 = vmatpush.bf16.msra.mxu0 0
      %1830 = vmatpush.bf16.msra.mxu0 0
      %1831 = vmatpush.bf16.msra.mxu0 0
      %1832 = vmatpush.bf16.msra.mxu0 0
      %1833 = vmatpush.bf16.msra.mxu0 0
      %1834 = vmatpush.bf16.msra.mxu0 %v1822
      %1835 = vmatpush.bf16.msra.mxu0 %v1821
      %1836 = vmatmul.bf16.gmra.mxu0 %v1826
      %v1837 = vpop.f32.mrf.mxu0
      %v1838 = vadd.f32 %v1811, %v1837
      %v1839 = vpop.f32.mrf.mxu0
      %1840 = vdwg.mxu0
      %v1841 = vadd.f32 %v1345, %v1838
      %v1842 = vld [vmem:[%s20] sm:$0x1]
      %v1843 = vld [vmem:[%s21] sm:$0x1]
      %v1844 = vsel %vm840, %v1841, 0.0
      %1845 = vadd.xlane.f32.xlu0 %v1844
      %v1846 = vpop.xlane.xlu0 %1845
      %v1847 = vmul.f32 %v1846, %v850
      %v1848 = vsub.f32 %v1841, %v1847
      %v1849 = vmul.f32 %v1848, %v1848
      %v1850 = vsel %vm840, %v1849, 0.0
      %1851 = vadd.xlane.f32.xlu0 %v1850
      %v1852 = vpop.xlane.xlu0 %1851
      %v1853 = vmul.f32 %v1852, %v850
      %v1854 = vadd.f32 %v1853, 1e-05
      %v1855 = vrsqrt.pop %v1854
      %v1856 = vmul.f32 %v1855, %v1854
      %v1857 = vmul.f32 %v1856, %v1855
      %v1858 = vmul.f32 0.5, %v1857
      %v1859 = vsub.f32 1.5, %v1858
      %v1860 = vmul.f32 %v1855, %v1859
      %vm1861 = vweird.f32 %v1854
      %vm1862 = vweird.f32 %v1855
      %vm1863 = vmor %vm1861, %vm1862
      %v1864 = vsel %vm1863, %v1855, %v1860
      %v1865 = vmul.f32 %v1848, %v1864
      %v1867 = vperm.slane %v1842, 0
      %v1869 = vmul.f32 %v1865, %v1867
      %v1871 = vperm.slane %v1843, 0
      %v1873 = vadd.f32 %v1869, %v1871
      %v1874 = vld [vmem:[%s22] sm:$0xf]
      %v1875 = vld [vmem:[%s22 + $0x4] sm:$0xf]
      %v1876 = vld [vmem:[%s22 + $0x8] sm:$0xf]
      %v1877 = vld [vmem:[%s22 + $0xc] sm:$0xf]
      %v1878 = vpack.c.bf16 %v1873, %v1873
      %v1879 = vld [vmem:[%s23] sm:$0x1]
      %v1881 = vperm.slane %v1879, 0
      %v1887 = vunpack.c.l.b16 %v1874
      %v1888 = vunpack.c.l.b16 %v1875
      %v1889 = vunpack.c.l.b16 %v1876
      %v1890 = vunpack.c.l.b16 %v1877
      %v1891 = vpack.c.b16 %v1888, %v1887
      %v1892 = vpack.c.b16 %v1890, %v1889
      %v1896 = vsel %vm840, %v1878, 0
      %1898 = vmatpush.bf16.msra.mxu0 0
      %1899 = vmatpush.bf16.msra.mxu0 0
      %1900 = vmatpush.bf16.msra.mxu0 0
      %1901 = vmatpush.bf16.msra.mxu0 0
      %1902 = vmatpush.bf16.msra.mxu0 0
      %1903 = vmatpush.bf16.msra.mxu0 0
      %1904 = vmatpush.bf16.msra.mxu0 %v1892
      %1905 = vmatpush.bf16.msra.mxu0 %v1891
      %1906 = vmatmul.bf16.gmra.mxu0 %v1896
      %v1907 = vpop.f32.mrf.mxu0
      %v1908 = vadd.f32 %v1881, %v1907
      %v1909 = vpop.f32.mrf.mxu0
      %1910 = vdwg.mxu0
      %v1911 = vmul.f32 %v1908, 0.5
      %v1912 = vmul.f32 %v1908, 0.044715
      %v1913 = vmul.f32 %v1912, %v1908
      %v1914 = vmul.f32 %v1913, %v1908
      %v1915 = vadd.f32 %v1908, %v1914
      %v1916 = vmul.f32 %v1915, 0.7978846
      %v1917 = vtanh.pop %v1916
      %v1918 = vadd.f32 %v1917, 1.0
      %v1919 = vmul.f32 %v1911, %v1918
      %v1920 = vld [vmem:[%s24] sm:$0xf]
      %v1921 = vld [vmem:[%s24 + $0x4] sm:$0xf]
      %v1922 = vld [vmem:[%s24 + $0x8] sm:$0xf]
      %v1923 = vld [vmem:[%s24 + $0xc] sm:$0xf]
      %v1924 = vld [vmem:[%s24 + $0x10] sm:$0xf]
      %v1925 = vld [vmem:[%s24 + $0x14] sm:$0xf]
      %v1926 = vld [vmem:[%s24 + $0x18] sm:$0xf]
      %v1927 = vld [vmem:[%s24 + $0x1c] sm:$0xf]
      %v1928 = vld [vmem:[%s24 + $0x20] sm:$0xf]
      %v1929 = vld [vmem:[%s24 + $0x24] sm:$0xf]
      %v1930 = vld [vmem:[%s24 + $0x28] sm:$0xf]
      %v1931 = vld [vmem:[%s24 + $0x2c] sm:$0xf]
      %v1932 = vld [vmem:[%s24 + $0x30] sm:$0xf]
      %v1933 = vld [vmem:[%s24 + $0x34] sm:$0xf]
      %v1934 = vld [vmem:[%s24 + $0x38] sm:$0xf]
      %v1935 = vld [vmem:[%s24 + $0x3c] sm:$0xf]
      %v1936 = vpack.c.bf16 %v1919, %v1919
      %v1937 = vld [vmem:[%s25] sm:$0x1]
      %v1939 = vperm.slane %v1937, 0
      %v1957 = vunpack.c.l.b16 %v1920
      %v1958 = vunpack.c.l.b16 %v1921
      %v1959 = vunpack.c.l.b16 %v1922
      %v1960 = vunpack.c.l.b16 %v1923
      %v1961 = vunpack.c.l.b16 %v1924
      %v1962 = vunpack.c.l.b16 %v1925
      %v1963 = vunpack.c.l.b16 %v1926
      %v1964 = vunpack.c.l.b16 %v1927
      %v1965 = vunpack.c.l.b16 %v1928
      %v1966 = vunpack.c.l.b16 %v1929
      %v1967 = vunpack.c.l.b16 %v1930
      %v1968 = vunpack.c.l.b16 %v1931
      %v1969 = vunpack.c.l.b16 %v1932
      %v1970 = vunpack.c.l.b16 %v1933
      %v1971 = vunpack.c.l.b16 %v1934
      %v1972 = vunpack.c.l.b16 %v1935
      %v1973 = vpack.c.b16 %v1958, %v1957
      %v1974 = vpack.c.b16 %v1960, %v1959
      %v1975 = vpack.c.b16 %v1962, %v1961
      %v1976 = vpack.c.b16 %v1964, %v1963
      %v1977 = vpack.c.b16 %v1966, %v1965
      %v1978 = vpack.c.b16 %v1968, %v1967
      %v1979 = vpack.c.b16 %v1970, %v1969
      %v1980 = vpack.c.b16 %v1972, %v1971
      %1989 = vmatpush.bf16.msra.mxu0 %v1980
      %1990 = vmatpush.bf16.msra.mxu0 %v1979
      %1991 = vmatpush.bf16.msra.mxu0 %v1978
      %1992 = vmatpush.bf16.msra.mxu0 %v1977
      %1993 = vmatpush.bf16.msra.mxu0 %v1976
      %1994 = vmatpush.bf16.msra.mxu0 %v1975
      %1995 = vmatpush.bf16.msra.mxu0 %v1974
      %1996 = vmatpush.bf16.msra.mxu0 %v1973
      %1997 = vmatmul.bf16.gmra.mxu0 %v1936
      %v1998 = vpop.f32.mrf.mxu0
      %v1999 = vadd.f32 %v1939, %v1998
      %v2000 = vpop.f32.mrf.mxu0
      %2001 = vdwg.mxu0
      %v2002 = vadd.f32 %v1841, %v1999
      %2003 = vst.msk [vmem:[%s831] sm:$0xff] %vm840, %v2002
      %p2004 = scmp.lt.s32.totalorder %s37, 1
      %s2005 = scalar_select %p2004, %s37, 1
      %s2006 = smul.addr %s2005, 8
      %s2007 = scalar_lea.vmem %s26, %s2006
      // Predicated region
      $region125: #{forward.6} parent=123 // pred_check
        %p2008 = pneg %p621
      $region126: #{forward.6} parent=123 // pred_check_branch
        %2010 = sbr.rel (%p2008) target = $region128
      $region127: #{forward.6} parent=123 // pred_region
        _
      $region128: #{forward.6} parent=123 // pred_fallthru
        _
    $region124: #{forward.6} parent=5 // pred_fallthru
      _
    %p2011 = scmp.le.s32.totalorder 2, %s32
    // Predicated region
    $region129: #{forward.6} parent=5 // pred_check
      %p2012 = pneg %p2011
    $region130: #{forward.6} parent=5 // pred_check_branch
      %2014 = sbr.rel (%p2012) target = $region132
    $region131: #{forward.6} parent=5 // pred_region
      %s2015 = ssub.s32 %s32, 2
      // Predicated region
      $region133: #{forward.6} parent=131 // pred_check
        %p2016 = pneg %p627
      $region134: #{forward.6} parent=131 // pred_check_branch
        %2018 = sbr.rel (%p2016) target = $region136
      $region135: #{forward.6} parent=131 // pred_region
        %p2019 = scmp.lt.s32.totalorder %s38, 1
        %s2020 = scalar_select %p2019, %s38, 1
        %s2021 = smul.addr %s2020, 8
        %s2022 = scalar_lea.vmem %s26, %s2021
      $region136: #{forward.6} parent=131 // pred_fallthru
        _
    $region132: #{forward.6} parent=5 // pred_fallthru
      _
  $region6: #{forward.6} parent=0 // loop_footer
    %s36 = sadd.s32 1, %s32
  $region7: #{forward.6} parent=0 // loop_footer_branch
    %31 = sbr.rel target = $region3
  $region8: #{forward.6} parent=0 // loop_exit
    _

// kernel: forward.8
$region0: #{forward.8}
  #allocation0 [shape = 'u32[]', space=smem, size = 0x4, offset = 0x4, fixed_abs, tag = 'smem constant byte address 0x4 - core index']
  #allocation1 [shape = 'u32[72,128]{1,0:T(1,128)}', space=vmem, size = 0x9000, scoped, tag = 'internal scratch']
  %s0 = inlined_call_operand.vmem [shape: f32[2,8,32], index: 0, kind: input, shape index: {}, may-alias: {0,26}]
  %s1 = inlined_call_operand.vmem [shape: f32[2,8,32], index: 1, kind: input, shape index: {}]
  %s2 = inlined_call_operand.vmem [shape: f32[1,32], index: 2, kind: input, shape index: {}]
  %s3 = inlined_call_operand.vmem [shape: f32[1,32], index: 3, kind: input, shape index: {}]
  %s4 = inlined_call_operand.vmem [shape: bf16[32,96], index: 4, kind: input, shape index: {}]
  %s5 = inlined_call_operand.vmem [shape: f32[1,96], index: 5, kind: input, shape index: {}]
  %s6 = inlined_call_operand.vmem [shape: bf16[32,32], index: 6, kind: input, shape index: {}]
  %s7 = inlined_call_operand.vmem [shape: f32[1,32], index: 7, kind: input, shape index: {}]
  %s8 = inlined_call_operand.vmem [shape: f32[2,1,8], index: 8, kind: input, shape index: {}]
  %s9 = inlined_call_operand.vmem [shape: f32[1,32], index: 9, kind: input, shape index: {}]
  %s10 = inlined_call_operand.hbm [shape: f32[1,32], index: 10, kind: input, shape index: {}]
  %s11 = inlined_call_operand.vmem [shape: bf16[32,96], index: 11, kind: input, shape index: {}]
  %s12 = inlined_call_operand.hbm [shape: f32[1,96], index: 12, kind: input, shape index: {}]
  %s13 = inlined_call_operand.vmem [shape: bf16[32,32], index: 13, kind: input, shape index: {}]
  %s14 = inlined_call_operand.hbm [shape: f32[1,32], index: 14, kind: input, shape index: {}]
  %s15 = inlined_call_operand.vmem [shape: f32[2,1,8], index: 15, kind: input, shape index: {}]
  %s16 = inlined_call_operand.vmem [shape: f32[8,8], index: 16, kind: input, shape index: {}, may-alias: {16,18}]
  %s17 = inlined_call_operand.vmem [shape: f32[8,8], index: 17, kind: input, shape index: {}, may-alias: {17,19}]
  %s18 = inlined_call_operand.vmem [shape: f32[8,8], index: 18, kind: input, shape index: {}, may-alias: {16,18}]
  %s19 = inlined_call_operand.vmem [shape: f32[8,8], index: 19, kind: input, shape index: {}, may-alias: {17,19}]
  %s20 = inlined_call_operand.hbm [shape: f32[1,32], index: 20, kind: input, shape index: {}]
  %s21 = inlined_call_operand.hbm [shape: f32[1,32], index: 21, kind: input, shape index: {}]
  %s22 = inlined_call_operand.vmem [shape: bf16[32,128], index: 22, kind: input, shape index: {}]
  %s23 = inlined_call_operand.hbm [shape: f32[1,128], index: 23, kind: input, shape index: {}]
  %s24 = inlined_call_operand.vmem [shape: bf16[128,32], index: 24, kind: input, shape index: {}]
  %s25 = inlined_call_operand.hbm [shape: f32[1,32], index: 25, kind: input, shape index: {}]
  %s26 = inlined_call_operand.vmem [shape: f32[2,8,32], index: 26, kind: output, shape index: {}, may-alias: {0,26}]
  %s27 = sld [smem:[#allocation0]]
  $region165: #{forward.8} parent=0
    _
  %s29 = ssub.s32 1, %s27
  %s30 = scalar_select 0, %s29, %s27
  $region1: #{forward.8} parent=0
    #allocation2 [shape = 'u8[512]{0}', space=vmem, size = 0x400, scoped, tag = 'input window, operand 10, single buffered']
    #allocation3 [shape = 's32[2]{0}', space=sflag, size = 0x8, scoped, tag = 'scoped memory for forward.8']
    #allocation4 [shape = 'u8[512]{0}', space=vmem, size = 0x400, scoped, tag = 'input window, operand 12, single buffered']
    #allocation5 [shape = 's32[1]{0}', space=sflag, size = 0x4, scoped, tag = 'scoped memory for forward.8']
    #allocation6 [shape = 'u8[512]{0}', space=vmem, size = 0x400, scoped, tag = 'input window, operand 14, single buffered']
    #allocation7 [shape = 'u8[512]{0}', space=vmem, size = 0x400, scoped, tag = 'input window, operand 20, single buffered']
    #allocation8 [shape = 's32[1]{0}', space=sflag, size = 0x4, scoped, tag = 'scoped memory for forward.8']
    #allocation9 [shape = 'u8[512]{0}', space=vmem, size = 0x400, scoped, tag = 'input window, operand 21, single buffered']
    #allocation10 [shape = 'u8[512]{0}', space=vmem, size = 0x400, scoped, tag = 'input window, operand 23, single buffered']
    #allocation11 [shape = 's32[1]{0}', space=sflag, size = 0x4, scoped, tag = 'scoped memory for forward.8']
    #allocation12 [shape = 'u8[512]{0}', space=vmem, size = 0x400, scoped, tag = 'input window, operand 25, single buffered']
    %31 = vsyncpa [#allocation3], 0
    %32 = vsyncpa [#allocation5], 0
    %33 = vsyncpa [#allocation8], 0
    %34 = vsyncpa [#allocation11], 0
    loop: start=0, step=1, limit=4
    $region2: #{forward.8} parent=1 // loop_pre_header
      _
    $region3: #{forward.8} parent=1 // loop_header
      %s36 = sphi 0, %s40
      %p37 = scmp.ge.s32.totalorder %s36, 4
      %s46 = sphi 0, %s48
      %s49 = sphi 0, %s46
      %s50 = sphi 0, %s49
      %s66 = sphi 0, %s50
      %s72 = sphi 0, %s74
      %s75 = sphi 0, %s72
      %s76 = sphi 0, %s75
      %s92 = sphi 0, %s76
      %s96 = sphi 0, %s96
      %s98 = sphi 0, %s96
      %s99 = sphi 0, %s98
      %s113 = sphi 0, %s99
      %s117 = sphi 0, %s117
      %s119 = sphi 0, %s117
      %s120 = sphi 0, %s119
      %s134 = sphi 0, %s120
      %s138 = sphi 0, %s138
      %s140 = sphi 0, %s138
      %s141 = sphi 0, %s140
      %s155 = sphi 0, %s141
      %s159 = sphi 0, %s159
      %s161 = sphi 0, %s159
      %s162 = sphi 0, %s161
      %s176 = sphi 0, %s162
      %s180 = sphi 0, %s180
      %s182 = sphi 0, %s180
      %s183 = sphi 0, %s182
      %s197 = sphi 0, %s183
      %s201 = sphi 0, %s201
      %s203 = sphi 0, %s201
      %s204 = sphi 0, %s203
      %s218 = sphi 0, %s204
      %s224 = sphi 0, %s226
      %s227 = sphi 0, %s224
      %s228 = sphi 0, %s227
      %s244 = sphi 0, %s228
      %s248 = sphi 0, %s248
      %s250 = sphi 0, %s248
      %s251 = sphi 0, %s250
      %s265 = sphi 0, %s251
      %s269 = sphi 0, %s269
      %s271 = sphi 0, %s269
      %s272 = sphi 0, %s271
      %s286 = sphi 0, %s272
      %s290 = sphi 0, %s290
      %s292 = sphi 0, %s290
      %s293 = sphi 0, %s292
      %s307 = sphi 0, %s293
      %s311 = sphi 0, %s311
      %s313 = sphi 0, %s311
      %s314 = sphi 0, %s313
      %s328 = sphi 0, %s314
      %s332 = sphi 0, %s332
      %s334 = sphi 0, %s332
      %s335 = sphi 0, %s334
      %s349 = sphi 0, %s335
      %s353 = sphi 0, %s353
      %s355 = sphi 0, %s353
      %s356 = sphi 0, %s355
      %s370 = sphi 0, %s356
      %s376 = sphi 0, %s378
      %s379 = sphi 0, %s376
      %s380 = sphi 0, %s379
      %s396 = sphi 0, %s380
      %s400 = sphi 0, %s400
      %s402 = sphi 0, %s400
      %s403 = sphi 0, %s402
      %s417 = sphi 0, %s403
      %s421 = sphi 0, %s421
      %s423 = sphi 0, %s421
      %s424 = sphi 0, %s423
      %s438 = sphi 0, %s424
      %s442 = sphi 0, %s442
      %s444 = sphi 0, %s442
      %s445 = sphi 0, %s444
      %s459 = sphi 0, %s445
      %s463 = sphi 0, %s463
      %s465 = sphi 0, %s463
      %s466 = sphi 0, %s465
      %s480 = sphi 0, %s466
      %s484 = sphi 0, %s484
      %s486 = sphi 0, %s484
      %s487 = sphi 0, %s486
      %s501 = sphi 0, %s487
      %s505 = sphi 0, %s505
      %s507 = sphi 0, %s505
      %s508 = sphi 0, %s507
      %s522 = sphi 0, %s508
      %s526 = sphi 0, %s526
      %s528 = sphi 0, %s526
      %s529 = sphi 0, %s528
      %s543 = sphi 0, %s529
      %s547 = sphi 0, %s547
      %s549 = sphi 0, %s547
      %s550 = sphi 0, %s549
      %s564 = sphi 0, %s550
      %s568 = sphi 0, %s568
      %s570 = sphi 0, %s568
      %s571 = sphi 0, %s570
      %s585 = sphi 0, %s571
      %s589 = sphi 0, %s589
      %s591 = sphi 0, %s589
      %s592 = sphi 0, %s591
      %s606 = sphi 0, %s592
      %s612 = sphi 0, %s614
      %s615 = sphi 0, %s612
      %s616 = sphi 0, %s615
      %s632 = sphi 0, %s616
    $region4: #{forward.8} parent=1 // loop_header_branch
      %39 = sbr.rel (%p37) target = $region8
    $region5: #{forward.8} parent=1 // loop_body
      %s41 = ssub.s32 %s36, 1
      %s42 = ssub.s32 %s36, 2
      %s43 = sadd.s32 %s36, 1
      %s44 = ssub.s32 %s36, %s43
      %p45 = scmp.eq.s32.totalorder %s44, 0
      %s47 = sadd.s32 %s46, 1
      %s48 = scalar_select %p45, %s46, %s47
      %p51 = pneg %p45
      %p52 = scmp.eq.s32.totalorder %s36, 1
      %p53 = por %p51, %p52
      %p54 = scmp.ne.s32.totalorder %s46, %s49
      %p55 = scmp.eq.s32.totalorder %s36, 0
      %p56 = por %p54, %p55
      %p57 = scmp.ne.s32.totalorder %s46, %s49
      %p58 = scmp.eq.s32.totalorder %s41, 1
      %p59 = por %p57, %p58
      %p60 = scmp.ne.s32.totalorder %s49, %s50
      %p61 = scmp.eq.s32.totalorder %s41, 0
      %p62 = por %p60, %p61
      %p63 = scmp.ne.s32.totalorder %s49, %s50
      %p64 = scmp.eq.s32.totalorder %s42, 1
      %p65 = por %p63, %p64
      %p67 = scmp.ne.s32.totalorder %s50, %s66
      %p68 = scmp.eq.s32.totalorder %s42, 0
      %p69 = por %p67, %p68
      %s70 = ssub.s32 %s36, %s43
      %p71 = scmp.eq.s32.totalorder %s70, 0
      %s73 = sadd.s32 %s72, 1
      %s74 = scalar_select %p71, %s72, %s73
      %p77 = pneg %p71
      %p78 = scmp.eq.s32.totalorder %s36, 1
      %p79 = por %p77, %p78
      %p80 = scmp.ne.s32.totalorder %s72, %s75
      %p81 = scmp.eq.s32.totalorder %s36, 0
      %p82 = por %p80, %p81
      %p83 = scmp.ne.s32.totalorder %s72, %s75
      %p84 = scmp.eq.s32.totalorder %s41, 1
      %p85 = por %p83, %p84
      %p86 = scmp.ne.s32.totalorder %s75, %s76
      %p87 = scmp.eq.s32.totalorder %s41, 0
      %p88 = por %p86, %p87
      %p89 = scmp.ne.s32.totalorder %s75, %s76
      %p90 = scmp.eq.s32.totalorder %s42, 1
      %p91 = por %p89, %p90
      %p93 = scmp.ne.s32.totalorder %s76, %s92
      %p94 = scmp.eq.s32.totalorder %s42, 0
      %p95 = por %p93, %p94
      %s97 = sadd.s32 %s96, 1
      %p100 = scmp.eq.s32.totalorder %s36, 1
      %p101 = scmp.ne.s32.totalorder %s96, %s98
      %p102 = scmp.eq.s32.totalorder %s36, 0
      %p103 = por %p101, %p102
      %p104 = scmp.ne.s32.totalorder %s96, %s98
      %p105 = scmp.eq.s32.totalorder %s41, 1
      %p106 = por %p104, %p105
      %p107 = scmp.ne.s32.totalorder %s98, %s99
      %p108 = scmp.eq.s32.totalorder %s41, 0
      %p109 = por %p107, %p108
      %p110 = scmp.ne.s32.totalorder %s98, %s99
      %p111 = scmp.eq.s32.totalorder %s42, 1
      %p112 = por %p110, %p111
      %p114 = scmp.ne.s32.totalorder %s99, %s113
      %p115 = scmp.eq.s32.totalorder %s42, 0
      %p116 = por %p114, %p115
      %s118 = sadd.s32 %s117, 1
      %p121 = scmp.eq.s32.totalorder %s36, 1
      %p122 = scmp.ne.s32.totalorder %s117, %s119
      %p123 = scmp.eq.s32.totalorder %s36, 0
      %p124 = por %p122, %p123
      %p125 = scmp.ne.s32.totalorder %s117, %s119
      %p126 = scmp.eq.s32.totalorder %s41, 1
      %p127 = por %p125, %p126
      %p128 = scmp.ne.s32.totalorder %s119, %s120
      %p129 = scmp.eq.s32.totalorder %s41, 0
      %p130 = por %p128, %p129
      %p131 = scmp.ne.s32.totalorder %s119, %s120
      %p132 = scmp.eq.s32.totalorder %s42, 1
      %p133 = por %p131, %p132
      %p135 = scmp.ne.s32.totalorder %s120, %s134
      %p136 = scmp.eq.s32.totalorder %s42, 0
      %p137 = por %p135, %p136
      %s139 = sadd.s32 %s138, 1
      %p142 = scmp.eq.s32.totalorder %s36, 1
      %p143 = scmp.ne.s32.totalorder %s138, %s140
      %p144 = scmp.eq.s32.totalorder %s36, 0
      %p145 = por %p143, %p144
      %p146 = scmp.ne.s32.totalorder %s138, %s140
      %p147 = scmp.eq.s32.totalorder %s41, 1
      %p148 = por %p146, %p147
      %p149 = scmp.ne.s32.totalorder %s140, %s141
      %p150 = scmp.eq.s32.totalorder %s41, 0
      %p151 = por %p149, %p150
      %p152 = scmp.ne.s32.totalorder %s140, %s141
      %p153 = scmp.eq.s32.totalorder %s42, 1
      %p154 = por %p152, %p153
      %p156 = scmp.ne.s32.totalorder %s141, %s155
      %p157 = scmp.eq.s32.totalorder %s42, 0
      %p158 = por %p156, %p157
      %s160 = sadd.s32 %s159, 1
      %p163 = scmp.eq.s32.totalorder %s36, 1
      %p164 = scmp.ne.s32.totalorder %s159, %s161
      %p165 = scmp.eq.s32.totalorder %s36, 0
      %p166 = por %p164, %p165
      %p167 = scmp.ne.s32.totalorder %s159, %s161
      %p168 = scmp.eq.s32.totalorder %s41, 1
      %p169 = por %p167, %p168
      %p170 = scmp.ne.s32.totalorder %s161, %s162
      %p171 = scmp.eq.s32.totalorder %s41, 0
      %p172 = por %p170, %p171
      %p173 = scmp.ne.s32.totalorder %s161, %s162
      %p174 = scmp.eq.s32.totalorder %s42, 1
      %p175 = por %p173, %p174
      %p177 = scmp.ne.s32.totalorder %s162, %s176
      %p178 = scmp.eq.s32.totalorder %s42, 0
      %p179 = por %p177, %p178
      %s181 = sadd.s32 %s180, 1
      %p184 = scmp.eq.s32.totalorder %s36, 1
      %p185 = scmp.ne.s32.totalorder %s180, %s182
      %p186 = scmp.eq.s32.totalorder %s36, 0
      %p187 = por %p185, %p186
      %p188 = scmp.ne.s32.totalorder %s180, %s182
      %p189 = scmp.eq.s32.totalorder %s41, 1
      %p190 = por %p188, %p189
      %p191 = scmp.ne.s32.totalorder %s182, %s183
      %p192 = scmp.eq.s32.totalorder %s41, 0
      %p193 = por %p191, %p192
      %p194 = scmp.ne.s32.totalorder %s182, %s183
      %p195 = scmp.eq.s32.totalorder %s42, 1
      %p196 = por %p194, %p195
      %p198 = scmp.ne.s32.totalorder %s183, %s197
      %p199 = scmp.eq.s32.totalorder %s42, 0
      %p200 = por %p198, %p199
      %s202 = sadd.s32 %s201, 1
      %p205 = scmp.eq.s32.totalorder %s36, 1
      %p206 = scmp.ne.s32.totalorder %s201, %s203
      %p207 = scmp.eq.s32.totalorder %s36, 0
      %p208 = por %p206, %p207
      %p209 = scmp.ne.s32.totalorder %s201, %s203
      %p210 = scmp.eq.s32.totalorder %s41, 1
      %p211 = por %p209, %p210
      %p212 = scmp.ne.s32.totalorder %s203, %s204
      %p213 = scmp.eq.s32.totalorder %s41, 0
      %p214 = por %p212, %p213
      %p215 = scmp.ne.s32.totalorder %s203, %s204
      %p216 = scmp.eq.s32.totalorder %s42, 1
      %p217 = por %p215, %p216
      %p219 = scmp.ne.s32.totalorder %s204, %s218
      %p220 = scmp.eq.s32.totalorder %s42, 0
      %p221 = por %p219, %p220
      %s222 = ssub.s32 %s36, %s43
      %p223 = scmp.eq.s32.totalorder %s222, 0
      %s225 = sadd.s32 %s224, 1
      %s226 = scalar_select %p223, %s224, %s225
      %p229 = pneg %p223
      %p230 = scmp.eq.s32.totalorder %s36, 1
      %p231 = por %p229, %p230
      %p232 = scmp.ne.s32.totalorder %s224, %s227
      %p233 = scmp.eq.s32.totalorder %s36, 0
      %p234 = por %p232, %p233
      %p235 = scmp.ne.s32.totalorder %s224, %s227
      %p236 = scmp.eq.s32.totalorder %s41, 1
      %p237 = por %p235, %p236
      %p238 = scmp.ne.s32.totalorder %s227, %s228
      %p239 = scmp.eq.s32.totalorder %s41, 0
      %p240 = por %p238, %p239
      %p241 = scmp.ne.s32.totalorder %s227, %s228
      %p242 = scmp.eq.s32.totalorder %s42, 1
      %p243 = por %p241, %p242
      %p245 = scmp.ne.s32.totalorder %s228, %s244
      %p246 = scmp.eq.s32.totalorder %s42, 0
      %p247 = por %p245, %p246
      %s249 = sadd.s32 %s248, 1
      %p252 = scmp.eq.s32.totalorder %s36, 1
      %p253 = scmp.ne.s32.totalorder %s248, %s250
      %p254 = scmp.eq.s32.totalorder %s36, 0
      %p255 = por %p253, %p254
      %p256 = scmp.ne.s32.totalorder %s248, %s250
      %p257 = scmp.eq.s32.totalorder %s41, 1
      %p258 = por %p256, %p257
      %p259 = scmp.ne.s32.totalorder %s250, %s251
      %p260 = scmp.eq.s32.totalorder %s41, 0
      %p261 = por %p259, %p260
      %p262 = scmp.ne.s32.totalorder %s250, %s251
      %p263 = scmp.eq.s32.totalorder %s42, 1
      %p264 = por %p262, %p263
      %p266 = scmp.ne.s32.totalorder %s251, %s265
      %p267 = scmp.eq.s32.totalorder %s42, 0
      %p268 = por %p266, %p267
      %s270 = sadd.s32 %s269, 1
      %p273 = scmp.eq.s32.totalorder %s36, 1
      %p274 = scmp.ne.s32.totalorder %s269, %s271
      %p275 = scmp.eq.s32.totalorder %s36, 0
      %p276 = por %p274, %p275
      %p277 = scmp.ne.s32.totalorder %s269, %s271
      %p278 = scmp.eq.s32.totalorder %s41, 1
      %p279 = por %p277, %p278
      %p280 = scmp.ne.s32.totalorder %s271, %s272
      %p281 = scmp.eq.s32.totalorder %s41, 0
      %p282 = por %p280, %p281
      %p283 = scmp.ne.s32.totalorder %s271, %s272
      %p284 = scmp.eq.s32.totalorder %s42, 1
      %p285 = por %p283, %p284
      %p287 = scmp.ne.s32.totalorder %s272, %s286
      %p288 = scmp.eq.s32.totalorder %s42, 0
      %p289 = por %p287, %p288
      %s291 = sadd.s32 %s290, 1
      %p294 = scmp.eq.s32.totalorder %s36, 1
      %p295 = scmp.ne.s32.totalorder %s290, %s292
      %p296 = scmp.eq.s32.totalorder %s36, 0
      %p297 = por %p295, %p296
      %p298 = scmp.ne.s32.totalorder %s290, %s292
      %p299 = scmp.eq.s32.totalorder %s41, 1
      %p300 = por %p298, %p299
      %p301 = scmp.ne.s32.totalorder %s292, %s293
      %p302 = scmp.eq.s32.totalorder %s41, 0
      %p303 = por %p301, %p302
      %p304 = scmp.ne.s32.totalorder %s292, %s293
      %p305 = scmp.eq.s32.totalorder %s42, 1
      %p306 = por %p304, %p305
      %p308 = scmp.ne.s32.totalorder %s293, %s307
      %p309 = scmp.eq.s32.totalorder %s42, 0
      %p310 = por %p308, %p309
      %s312 = sadd.s32 %s311, 1
      %p315 = scmp.eq.s32.totalorder %s36, 1
      %p316 = scmp.ne.s32.totalorder %s311, %s313
      %p317 = scmp.eq.s32.totalorder %s36, 0
      %p318 = por %p316, %p317
      %p319 = scmp.ne.s32.totalorder %s311, %s313
      %p320 = scmp.eq.s32.totalorder %s41, 1
      %p321 = por %p319, %p320
      %p322 = scmp.ne.s32.totalorder %s313, %s314
      %p323 = scmp.eq.s32.totalorder %s41, 0
      %p324 = por %p322, %p323
      %p325 = scmp.ne.s32.totalorder %s313, %s314
      %p326 = scmp.eq.s32.totalorder %s42, 1
      %p327 = por %p325, %p326
      %p329 = scmp.ne.s32.totalorder %s314, %s328
      %p330 = scmp.eq.s32.totalorder %s42, 0
      %p331 = por %p329, %p330
      %s333 = sadd.s32 %s332, 1
      %p336 = scmp.eq.s32.totalorder %s36, 1
      %p337 = scmp.ne.s32.totalorder %s332, %s334
      %p338 = scmp.eq.s32.totalorder %s36, 0
      %p339 = por %p337, %p338
      %p340 = scmp.ne.s32.totalorder %s332, %s334
      %p341 = scmp.eq.s32.totalorder %s41, 1
      %p342 = por %p340, %p341
      %p343 = scmp.ne.s32.totalorder %s334, %s335
      %p344 = scmp.eq.s32.totalorder %s41, 0
      %p345 = por %p343, %p344
      %p346 = scmp.ne.s32.totalorder %s334, %s335
      %p347 = scmp.eq.s32.totalorder %s42, 1
      %p348 = por %p346, %p347
      %p350 = scmp.ne.s32.totalorder %s335, %s349
      %p351 = scmp.eq.s32.totalorder %s42, 0
      %p352 = por %p350, %p351
      %s354 = sadd.s32 %s353, 1
      %p357 = scmp.eq.s32.totalorder %s36, 1
      %p358 = scmp.ne.s32.totalorder %s353, %s355
      %p359 = scmp.eq.s32.totalorder %s36, 0
      %p360 = por %p358, %p359
      %p361 = scmp.ne.s32.totalorder %s353, %s355
      %p362 = scmp.eq.s32.totalorder %s41, 1
      %p363 = por %p361, %p362
      %p364 = scmp.ne.s32.totalorder %s355, %s356
      %p365 = scmp.eq.s32.totalorder %s41, 0
      %p366 = por %p364, %p365
      %p367 = scmp.ne.s32.totalorder %s355, %s356
      %p368 = scmp.eq.s32.totalorder %s42, 1
      %p369 = por %p367, %p368
      %p371 = scmp.ne.s32.totalorder %s356, %s370
      %p372 = scmp.eq.s32.totalorder %s42, 0
      %p373 = por %p371, %p372
      %s374 = ssub.s32 %s36, %s43
      %p375 = scmp.eq.s32.totalorder %s374, 0
      %s377 = sadd.s32 %s376, 1
      %s378 = scalar_select %p375, %s376, %s377
      %p381 = pneg %p375
      %p382 = scmp.eq.s32.totalorder %s36, 1
      %p383 = por %p381, %p382
      %p384 = scmp.ne.s32.totalorder %s376, %s379
      %p385 = scmp.eq.s32.totalorder %s36, 0
      %p386 = por %p384, %p385
      %p387 = scmp.ne.s32.totalorder %s376, %s379
      %p388 = scmp.eq.s32.totalorder %s41, 1
      %p389 = por %p387, %p388
      %p390 = scmp.ne.s32.totalorder %s379, %s380
      %p391 = scmp.eq.s32.totalorder %s41, 0
      %p392 = por %p390, %p391
      %p393 = scmp.ne.s32.totalorder %s379, %s380
      %p394 = scmp.eq.s32.totalorder %s42, 1
      %p395 = por %p393, %p394
      %p397 = scmp.ne.s32.totalorder %s380, %s396
      %p398 = scmp.eq.s32.totalorder %s42, 0
      %p399 = por %p397, %p398
      %s401 = sadd.s32 %s400, 1
      %p404 = scmp.eq.s32.totalorder %s36, 1
      %p405 = scmp.ne.s32.totalorder %s400, %s402
      %p406 = scmp.eq.s32.totalorder %s36, 0
      %p407 = por %p405, %p406
      %p408 = scmp.ne.s32.totalorder %s400, %s402
      %p409 = scmp.eq.s32.totalorder %s41, 1
      %p410 = por %p408, %p409
      %p411 = scmp.ne.s32.totalorder %s402, %s403
      %p412 = scmp.eq.s32.totalorder %s41, 0
      %p413 = por %p411, %p412
      %p414 = scmp.ne.s32.totalorder %s402, %s403
      %p415 = scmp.eq.s32.totalorder %s42, 1
      %p416 = por %p414, %p415
      %p418 = scmp.ne.s32.totalorder %s403, %s417
      %p419 = scmp.eq.s32.totalorder %s42, 0
      %p420 = por %p418, %p419
      %s422 = sadd.s32 %s421, 1
      %p425 = scmp.eq.s32.totalorder %s36, 1
      %p426 = scmp.ne.s32.totalorder %s421, %s423
      %p427 = scmp.eq.s32.totalorder %s36, 0
      %p428 = por %p426, %p427
      %p429 = scmp.ne.s32.totalorder %s421, %s423
      %p430 = scmp.eq.s32.totalorder %s41, 1
      %p431 = por %p429, %p430
      %p432 = scmp.ne.s32.totalorder %s423, %s424
      %p433 = scmp.eq.s32.totalorder %s41, 0
      %p434 = por %p432, %p433
      %p435 = scmp.ne.s32.totalorder %s423, %s424
      %p436 = scmp.eq.s32.totalorder %s42, 1
      %p437 = por %p435, %p436
      %p439 = scmp.ne.s32.totalorder %s424, %s438
      %p440 = scmp.eq.s32.totalorder %s42, 0
      %p441 = por %p439, %p440
      %s443 = sadd.s32 %s442, 1
      %p446 = scmp.eq.s32.totalorder %s36, 1
      %p447 = scmp.ne.s32.totalorder %s442, %s444
      %p448 = scmp.eq.s32.totalorder %s36, 0
      %p449 = por %p447, %p448
      %p450 = scmp.ne.s32.totalorder %s442, %s444
      %p451 = scmp.eq.s32.totalorder %s41, 1
      %p452 = por %p450, %p451
      %p453 = scmp.ne.s32.totalorder %s444, %s445
      %p454 = scmp.eq.s32.totalorder %s41, 0
      %p455 = por %p453, %p454
      %p456 = scmp.ne.s32.totalorder %s444, %s445
      %p457 = scmp.eq.s32.totalorder %s42, 1
      %p458 = por %p456, %p457
      %p460 = scmp.ne.s32.totalorder %s445, %s459
      %p461 = scmp.eq.s32.totalorder %s42, 0
      %p462 = por %p460, %p461
      %s464 = sadd.s32 %s463, 1
      %p467 = scmp.eq.s32.totalorder %s36, 1
      %p468 = scmp.ne.s32.totalorder %s463, %s465
      %p469 = scmp.eq.s32.totalorder %s36, 0
      %p470 = por %p468, %p469
      %p471 = scmp.ne.s32.totalorder %s463, %s465
      %p472 = scmp.eq.s32.totalorder %s41, 1
      %p473 = por %p471, %p472
      %p474 = scmp.ne.s32.totalorder %s465, %s466
      %p475 = scmp.eq.s32.totalorder %s41, 0
      %p476 = por %p474, %p475
      %p477 = scmp.ne.s32.totalorder %s465, %s466
      %p478 = scmp.eq.s32.totalorder %s42, 1
      %p479 = por %p477, %p478
      %p481 = scmp.ne.s32.totalorder %s466, %s480
      %p482 = scmp.eq.s32.totalorder %s42, 0
      %p483 = por %p481, %p482
      %s485 = sadd.s32 %s484, 1
      %p488 = scmp.eq.s32.totalorder %s36, 1
      %p489 = scmp.ne.s32.totalorder %s484, %s486
      %p490 = scmp.eq.s32.totalorder %s36, 0
      %p491 = por %p489, %p490
      %p492 = scmp.ne.s32.totalorder %s484, %s486
      %p493 = scmp.eq.s32.totalorder %s41, 1
      %p494 = por %p492, %p493
      %p495 = scmp.ne.s32.totalorder %s486, %s487
      %p496 = scmp.eq.s32.totalorder %s41, 0
      %p497 = por %p495, %p496
      %p498 = scmp.ne.s32.totalorder %s486, %s487
      %p499 = scmp.eq.s32.totalorder %s42, 1
      %p500 = por %p498, %p499
      %p502 = scmp.ne.s32.totalorder %s487, %s501
      %p503 = scmp.eq.s32.totalorder %s42, 0
      %p504 = por %p502, %p503
      %s506 = sadd.s32 %s505, 1
      %p509 = scmp.eq.s32.totalorder %s36, 1
      %p510 = scmp.ne.s32.totalorder %s505, %s507
      %p511 = scmp.eq.s32.totalorder %s36, 0
      %p512 = por %p510, %p511
      %p513 = scmp.ne.s32.totalorder %s505, %s507
      %p514 = scmp.eq.s32.totalorder %s41, 1
      %p515 = por %p513, %p514
      %p516 = scmp.ne.s32.totalorder %s507, %s508
      %p517 = scmp.eq.s32.totalorder %s41, 0
      %p518 = por %p516, %p517
      %p519 = scmp.ne.s32.totalorder %s507, %s508
      %p520 = scmp.eq.s32.totalorder %s42, 1
      %p521 = por %p519, %p520
      %p523 = scmp.ne.s32.totalorder %s508, %s522
      %p524 = scmp.eq.s32.totalorder %s42, 0
      %p525 = por %p523, %p524
      %s527 = sadd.s32 %s526, 1
      %p530 = scmp.eq.s32.totalorder %s36, 1
      %p531 = scmp.ne.s32.totalorder %s526, %s528
      %p532 = scmp.eq.s32.totalorder %s36, 0
      %p533 = por %p531, %p532
      %p534 = scmp.ne.s32.totalorder %s526, %s528
      %p535 = scmp.eq.s32.totalorder %s41, 1
      %p536 = por %p534, %p535
      %p537 = scmp.ne.s32.totalorder %s528, %s529
      %p538 = scmp.eq.s32.totalorder %s41, 0
      %p539 = por %p537, %p538
      %p540 = scmp.ne.s32.totalorder %s528, %s529
      %p541 = scmp.eq.s32.totalorder %s42, 1
      %p542 = por %p540, %p541
      %p544 = scmp.ne.s32.totalorder %s529, %s543
      %p545 = scmp.eq.s32.totalorder %s42, 0
      %p546 = por %p544, %p545
      %s548 = sadd.s32 %s547, 1
      %p551 = scmp.eq.s32.totalorder %s36, 1
      %p552 = scmp.ne.s32.totalorder %s547, %s549
      %p553 = scmp.eq.s32.totalorder %s36, 0
      %p554 = por %p552, %p553
      %p555 = scmp.ne.s32.totalorder %s547, %s549
      %p556 = scmp.eq.s32.totalorder %s41, 1
      %p557 = por %p555, %p556
      %p558 = scmp.ne.s32.totalorder %s549, %s550
      %p559 = scmp.eq.s32.totalorder %s41, 0
      %p560 = por %p558, %p559
      %p561 = scmp.ne.s32.totalorder %s549, %s550
      %p562 = scmp.eq.s32.totalorder %s42, 1
      %p563 = por %p561, %p562
      %p565 = scmp.ne.s32.totalorder %s550, %s564
      %p566 = scmp.eq.s32.totalorder %s42, 0
      %p567 = por %p565, %p566
      %s569 = sadd.s32 %s568, 1
      %p572 = scmp.eq.s32.totalorder %s36, 1
      %p573 = scmp.ne.s32.totalorder %s568, %s570
      %p574 = scmp.eq.s32.totalorder %s36, 0
      %p575 = por %p573, %p574
      %p576 = scmp.ne.s32.totalorder %s568, %s570
      %p577 = scmp.eq.s32.totalorder %s41, 1
      %p578 = por %p576, %p577
      %p579 = scmp.ne.s32.totalorder %s570, %s571
      %p580 = scmp.eq.s32.totalorder %s41, 0
      %p581 = por %p579, %p580
      %p582 = scmp.ne.s32.totalorder %s570, %s571
      %p583 = scmp.eq.s32.totalorder %s42, 1
      %p584 = por %p582, %p583
      %p586 = scmp.ne.s32.totalorder %s571, %s585
      %p587 = scmp.eq.s32.totalorder %s42, 0
      %p588 = por %p586, %p587
      %s590 = sadd.s32 %s589, 1
      %p593 = scmp.eq.s32.totalorder %s36, 1
      %p594 = scmp.ne.s32.totalorder %s589, %s591
      %p595 = scmp.eq.s32.totalorder %s36, 0
      %p596 = por %p594, %p595
      %p597 = scmp.ne.s32.totalorder %s589, %s591
      %p598 = scmp.eq.s32.totalorder %s41, 1
      %p599 = por %p597, %p598
      %p600 = scmp.ne.s32.totalorder %s591, %s592
      %p601 = scmp.eq.s32.totalorder %s41, 0
      %p602 = por %p600, %p601
      %p603 = scmp.ne.s32.totalorder %s591, %s592
      %p604 = scmp.eq.s32.totalorder %s42, 1
      %p605 = por %p603, %p604
      %p607 = scmp.ne.s32.totalorder %s592, %s606
      %p608 = scmp.eq.s32.totalorder %s42, 0
      %p609 = por %p607, %p608
      %s610 = ssub.s32 %s36, %s43
      %p611 = scmp.eq.s32.totalorder %s610, 0
      %s613 = sadd.s32 %s612, 1
      %s614 = scalar_select %p611, %s612, %s613
      %p617 = pneg %p611
      %p618 = scmp.eq.s32.totalorder %s36, 1
      %p619 = por %p617, %p618
      %p620 = scmp.ne.s32.totalorder %s612, %s615
      %p621 = scmp.eq.s32.totalorder %s36, 0
      %p622 = por %p620, %p621
      %p623 = scmp.ne.s32.totalorder %s612, %s615
      %p624 = scmp.eq.s32.totalorder %s41, 1
      %p625 = por %p623, %p624
      %p626 = scmp.ne.s32.totalorder %s615, %s616
      %p627 = scmp.eq.s32.totalorder %s41, 0
      %p628 = por %p626, %p627
      %p629 = scmp.ne.s32.totalorder %s615, %s616
      %p630 = scmp.eq.s32.totalorder %s42, 1
      %p631 = por %p629, %p630
      %p633 = scmp.ne.s32.totalorder %s616, %s632
      %p634 = scmp.eq.s32.totalorder %s42, 0
      %p635 = por %p633, %p634
      %p636 = scmp.le.s32.totalorder 1, %s36
      %p637 = scmp.lt.s32.totalorder %s36, 3
      %p638 = pnand %p636, %p637
      %p639 = pneg %p638
      // Predicated region
      $region9: #{forward.8} parent=5 // pred_check
        _
      $region10: #{forward.8} parent=5 // pred_check_branch
        %641 = sbr.rel (%p638) target = $region12
      $region11: #{forward.8} parent=5 // pred_region
        %s642 = ssub.s32 %s36, 1
        // Predicated region
        $region13: #{forward.8} parent=11 // pred_check
          %p643 = pneg %p109
        $region14: #{forward.8} parent=11 // pred_check_branch
          %645 = sbr.rel (%p643) target = $region16
        $region15: #{forward.8} parent=11 // pred_region
          _
        $region16: #{forward.8} parent=11 // pred_fallthru
          _
        // Predicated region
        $region17: #{forward.8} parent=11 // pred_check
          %p646 = pneg %p130
        $region18: #{forward.8} parent=11 // pred_check_branch
          %648 = sbr.rel (%p646) target = $region20
        $region19: #{forward.8} parent=11 // pred_region
          _
        $region20: #{forward.8} parent=11 // pred_fallthru
          _
        // Predicated region
        $region21: #{forward.8} parent=11 // pred_check
          %p649 = pneg %p151
        $region22: #{forward.8} parent=11 // pred_check_branch
          %651 = sbr.rel (%p649) target = $region24
        $region23: #{forward.8} parent=11 // pred_region
          _
        $region24: #{forward.8} parent=11 // pred_fallthru
          _
        // Predicated region
        $region25: #{forward.8} parent=11 // pred_check
          %p652 = pneg %p172
        $region26: #{forward.8} parent=11 // pred_check_branch
          %654 = sbr.rel (%p652) target = $region28
        $region27: #{forward.8} parent=11 // pred_region
          _
        $region28: #{forward.8} parent=11 // pred_fallthru
          _
        // Predicated region
        $region29: #{forward.8} parent=11 // pred_check
          %p655 = pneg %p193
        $region30: #{forward.8} parent=11 // pred_check_branch
          %657 = sbr.rel (%p655) target = $region32
        $region31: #{forward.8} parent=11 // pred_region
          _
        $region32: #{forward.8} parent=11 // pred_fallthru
          _
        // Predicated region
        $region33: #{forward.8} parent=11 // pred_check
          %p658 = pneg %p214
        $region34: #{forward.8} parent=11 // pred_check_branch
          %660 = sbr.rel (%p658) target = $region36
        $region35: #{forward.8} parent=11 // pred_region
          _
        $region36: #{forward.8} parent=11 // pred_fallthru
          _
        // Predicated region
        $region37: #{forward.8} parent=11 // pred_check
          %p661 = pneg %p261
        $region38: #{forward.8} parent=11 // pred_check_branch
          %663 = sbr.rel (%p661) target = $region40
        $region39: #{forward.8} parent=11 // pred_region
          _
        $region40: #{forward.8} parent=11 // pred_fallthru
          _
        // Predicated region
        $region41: #{forward.8} parent=11 // pred_check
          %p664 = pneg %p282
        $region42: #{forward.8} parent=11 // pred_check_branch
          %666 = sbr.rel (%p664) target = $region44
        $region43: #{forward.8} parent=11 // pred_region
          %668 = vsyncadd [#allocation3], 0
          %s670 = sshll.u32 %s10, 4
          %s671 = int_to_ptr.hbm [resolvable:$true] %s670
          %s672 = sshll.u32 [#allocation2], 4
          %s673 = int_to_ptr.vmem [resolvable:$true] %s672
          %675 = dma.hbm_to_vmem [thread:$0]  %s671, 16, %s673, [#allocation3]
        $region44: #{forward.8} parent=11 // pred_fallthru
          _
        // Predicated region
        $region45: #{forward.8} parent=11 // pred_check
          %p676 = pneg %p303
        $region46: #{forward.8} parent=11 // pred_check_branch
          %678 = sbr.rel (%p676) target = $region48
        $region47: #{forward.8} parent=11 // pred_region
          _
        $region48: #{forward.8} parent=11 // pred_fallthru
          _
        // Predicated region
        $region49: #{forward.8} parent=11 // pred_check
          %p679 = pneg %p324
        $region50: #{forward.8} parent=11 // pred_check_branch
          %681 = sbr.rel (%p679) target = $region52
        $region51: #{forward.8} parent=11 // pred_region
          %683 = vsyncadd [#allocation5], 0
          %s685 = sshll.u32 %s12, 4
          %s686 = int_to_ptr.hbm [resolvable:$true] %s685
          %s687 = sshll.u32 [#allocation4], 4
          %s688 = int_to_ptr.vmem [resolvable:$true] %s687
          %690 = dma.hbm_to_vmem [thread:$0]  %s686, 16, %s688, [#allocation5]
        $region52: #{forward.8} parent=11 // pred_fallthru
          _
        // Predicated region
        $region53: #{forward.8} parent=11 // pred_check
          %p691 = pneg %p345
        $region54: #{forward.8} parent=11 // pred_check_branch
          %693 = sbr.rel (%p691) target = $region56
        $region55: #{forward.8} parent=11 // pred_region
          _
        $region56: #{forward.8} parent=11 // pred_fallthru
          _
        // Predicated region
        $region57: #{forward.8} parent=11 // pred_check
          %p694 = pneg %p366
        $region58: #{forward.8} parent=11 // pred_check_branch
          %696 = sbr.rel (%p694) target = $region60
        $region59: #{forward.8} parent=11 // pred_region
          %698 = vsyncadd [#allocation5], 0
          %s700 = sshll.u32 %s14, 4
          %s701 = int_to_ptr.hbm [resolvable:$true] %s700
          %s702 = sshll.u32 [#allocation6], 4
          %s703 = int_to_ptr.vmem [resolvable:$true] %s702
          %705 = dma.hbm_to_vmem [thread:$0]  %s701, 16, %s703, [#allocation5]
        $region60: #{forward.8} parent=11 // pred_fallthru
          _
        // Predicated region
        $region61: #{forward.8} parent=11 // pred_check
          %p706 = pneg %p413
        $region62: #{forward.8} parent=11 // pred_check_branch
          %708 = sbr.rel (%p706) target = $region64
        $region63: #{forward.8} parent=11 // pred_region
          _
        $region64: #{forward.8} parent=11 // pred_fallthru
          _
        // Predicated region
        $region65: #{forward.8} parent=11 // pred_check
          %p709 = pneg %p434
        $region66: #{forward.8} parent=11 // pred_check_branch
          %711 = sbr.rel (%p709) target = $region68
        $region67: #{forward.8} parent=11 // pred_region
          _
        $region68: #{forward.8} parent=11 // pred_fallthru
          _
        // Predicated region
        $region69: #{forward.8} parent=11 // pred_check
          %p712 = pneg %p455
        $region70: #{forward.8} parent=11 // pred_check_branch
          %714 = sbr.rel (%p712) target = $region72
        $region71: #{forward.8} parent=11 // pred_region
          _
        $region72: #{forward.8} parent=11 // pred_fallthru
          _
        // Predicated region
        $region73: #{forward.8} parent=11 // pred_check
          %p715 = pneg %p476
        $region74: #{forward.8} parent=11 // pred_check_branch
          %717 = sbr.rel (%p715) target = $region76
        $region75: #{forward.8} parent=11 // pred_region
          _
        $region76: #{forward.8} parent=11 // pred_fallthru
          _
        // Predicated region
        $region77: #{forward.8} parent=11 // pred_check
          %p718 = pneg %p497
        $region78: #{forward.8} parent=11 // pred_check_branch
          %720 = sbr.rel (%p718) target = $region80
        $region79: #{forward.8} parent=11 // pred_region
          %722 = vsyncadd [#allocation8], 0
          %s724 = sshll.u32 %s20, 4
          %s725 = int_to_ptr.hbm [resolvable:$true] %s724
          %s726 = sshll.u32 [#allocation7], 4
          %s727 = int_to_ptr.vmem [resolvable:$true] %s726
          %729 = dma.hbm_to_vmem [thread:$0]  %s725, 16, %s727, [#allocation8]
        $region80: #{forward.8} parent=11 // pred_fallthru
          _
        // Predicated region
        $region81: #{forward.8} parent=11 // pred_check
          %p730 = pneg %p518
        $region82: #{forward.8} parent=11 // pred_check_branch
          %732 = sbr.rel (%p730) target = $region84
        $region83: #{forward.8} parent=11 // pred_region
          %734 = vsyncadd [#allocation8], 0
          %s736 = sshll.u32 %s21, 4
          %s737 = int_to_ptr.hbm [resolvable:$true] %s736
          %s738 = sshll.u32 [#allocation9], 4
          %s739 = int_to_ptr.vmem [resolvable:$true] %s738
          %741 = dma.hbm_to_vmem [thread:$0]  %s737, 16, %s739, [#allocation8]
        $region84: #{forward.8} parent=11 // pred_fallthru
          _
        // Predicated region
        $region85: #{forward.8} parent=11 // pred_check
          %p742 = pneg %p539
        $region86: #{forward.8} parent=11 // pred_check_branch
          %744 = sbr.rel (%p742) target = $region88
        $region87: #{forward.8} parent=11 // pred_region
          _
        $region88: #{forward.8} parent=11 // pred_fallthru
          _
        // Predicated region
        $region89: #{forward.8} parent=11 // pred_check
          %p745 = pneg %p560
        $region90: #{forward.8} parent=11 // pred_check_branch
          %747 = sbr.rel (%p745) target = $region92
        $region91: #{forward.8} parent=11 // pred_region
          %749 = vsyncadd [#allocation11], 0
          %s751 = sshll.u32 %s23, 4
          %s752 = int_to_ptr.hbm [resolvable:$true] %s751
          %s753 = sshll.u32 [#allocation10], 4
          %s754 = int_to_ptr.vmem [resolvable:$true] %s753
          %756 = dma.hbm_to_vmem [thread:$0]  %s752, 16, %s754, [#allocation11]
        $region92: #{forward.8} parent=11 // pred_fallthru
          _
        // Predicated region
        $region93: #{forward.8} parent=11 // pred_check
          %p757 = pneg %p581
        $region94: #{forward.8} parent=11 // pred_check_branch
          %759 = sbr.rel (%p757) target = $region96
        $region95: #{forward.8} parent=11 // pred_region
          _
        $region96: #{forward.8} parent=11 // pred_fallthru
          _
        // Predicated region
        $region97: #{forward.8} parent=11 // pred_check
          %p760 = pneg %p602
        $region98: #{forward.8} parent=11 // pred_check_branch
          %762 = sbr.rel (%p760) target = $region100
        $region99: #{forward.8} parent=11 // pred_region
          %764 = vsyncadd [#allocation11], 0
          %s766 = sshll.u32 %s25, 4
          %s767 = int_to_ptr.hbm [resolvable:$true] %s766
          %s768 = sshll.u32 [#allocation12], 4
          %s769 = int_to_ptr.vmem [resolvable:$true] %s768
          %771 = dma.hbm_to_vmem [thread:$0]  %s767, 16, %s769, [#allocation11]
        $region100: #{forward.8} parent=11 // pred_fallthru
          _
      $region12: #{forward.8} parent=5 // pred_fallthru
        _
      %p772 = scmp.lt.s32.totalorder %s36, 2
      // Predicated region
      $region101: #{forward.8} parent=5 // pred_check
        %p773 = pneg %p772
      $region102: #{forward.8} parent=5 // pred_check_branch
        %775 = sbr.rel (%p773) target = $region104
      $region103: #{forward.8} parent=5 // pred_region
        // Predicated region
        $region105: #{forward.8} parent=103 // pred_check
          %p776 = pneg %p56
        $region106: #{forward.8} parent=103 // pred_check_branch
          %778 = sbr.rel (%p776) target = $region108
        $region107: #{forward.8} parent=103 // pred_region
          %p779 = scmp.lt.s32.totalorder %s36, 1
          %s780 = scalar_select %p779, %s36, 1
          %s781 = smul.addr %s780, 8
          %s782 = scalar_lea.vmem %s0, %s781
        $region108: #{forward.8} parent=103 // pred_fallthru
          _
        // Predicated region
        $region109: #{forward.8} parent=103 // pred_check
          %p783 = pneg %p82
        $region110: #{forward.8} parent=103 // pred_check_branch
          %785 = sbr.rel (%p783) target = $region112
        $region111: #{forward.8} parent=103 // pred_region
          %p786 = scmp.lt.s32.totalorder %s36, 1
          %s787 = scalar_select %p786, %s36, 1
          %s788 = smul.addr %s787, 8
          %s789 = scalar_lea.vmem %s1, %s788
        $region112: #{forward.8} parent=103 // pred_fallthru
          _
        // Predicated region
        $region113: #{forward.8} parent=103 // pred_check
          %p790 = pneg %p234
        $region114: #{forward.8} parent=103 // pred_check_branch
          %792 = sbr.rel (%p790) target = $region116
        $region115: #{forward.8} parent=103 // pred_region
          %p793 = scmp.lt.s32.totalorder %s36, 1
          %s794 = scalar_select %p793, %s36, 1
          %s795 = scalar_lea.vmem %s8, %s794
        $region116: #{forward.8} parent=103 // pred_fallthru
          _
        // Predicated region
        $region117: #{forward.8} parent=103 // pred_check
          %p796 = pneg %p386
        $region118: #{forward.8} parent=103 // pred_check_branch
          %798 = sbr.rel (%p796) target = $region120
        $region119: #{forward.8} parent=103 // pred_region
          %p799 = scmp.lt.s32.totalorder %s36, 1
          %s800 = scalar_select %p799, %s36, 1
          %s801 = scalar_lea.vmem %s15, %s800
        $region120: #{forward.8} parent=103 // pred_fallthru
          _
      $region104: #{forward.8} parent=5 // pred_fallthru
        _
      %p802 = scmp.le.s32.totalorder 1, %s36
      %p803 = scmp.lt.s32.totalorder %s36, 3
      %p804 = pnand %p802, %p803
      %p805 = pneg %p804
      // Predicated region
      $region121: #{forward.8} parent=5 // pred_check
        _
      $region122: #{forward.8} parent=5 // pred_check_branch
        %807 = sbr.rel (%p804) target = $region124
      $region123: #{forward.8} parent=5 // pred_region
        %s808 = ssub.s32 %s36, 1
        // Predicated region
        $region125: #{forward.8} parent=123 // pred_check
          %p809 = pneg %p282
        $region126: #{forward.8} parent=123 // pred_check_branch
          %811 = sbr.rel (%p809) target = $region128
        $region127: #{forward.8} parent=123 // pred_region
          %813 = dma.done [#allocation3], 16
        $region128: #{forward.8} parent=123 // pred_fallthru
          _
        // Predicated region
        $region129: #{forward.8} parent=123 // pred_check
          %p814 = pneg %p324
        $region130: #{forward.8} parent=123 // pred_check_branch
          %816 = sbr.rel (%p814) target = $region132
        $region131: #{forward.8} parent=123 // pred_region
          %818 = dma.done [#allocation5], 16
        $region132: #{forward.8} parent=123 // pred_fallthru
          _
        // Predicated region
        $region133: #{forward.8} parent=123 // pred_check
          %p819 = pneg %p366
        $region134: #{forward.8} parent=123 // pred_check_branch
          %821 = sbr.rel (%p819) target = $region136
        $region135: #{forward.8} parent=123 // pred_region
          %823 = dma.done [#allocation5], 16
        $region136: #{forward.8} parent=123 // pred_fallthru
          _
        // Predicated region
        $region137: #{forward.8} parent=123 // pred_check
          %p824 = pneg %p497
        $region138: #{forward.8} parent=123 // pred_check_branch
          %826 = sbr.rel (%p824) target = $region140
        $region139: #{forward.8} parent=123 // pred_region
          %828 = dma.done [#allocation8], 16
        $region140: #{forward.8} parent=123 // pred_fallthru
          _
        // Predicated region
        $region141: #{forward.8} parent=123 // pred_check
          %p829 = pneg %p518
        $region142: #{forward.8} parent=123 // pred_check_branch
          %831 = sbr.rel (%p829) target = $region144
        $region143: #{forward.8} parent=123 // pred_region
          %833 = dma.done [#allocation8], 16
        $region144: #{forward.8} parent=123 // pred_fallthru
          _
        // Predicated region
        $region145: #{forward.8} parent=123 // pred_check
          %p834 = pneg %p560
        $region146: #{forward.8} parent=123 // pred_check_branch
          %836 = sbr.rel (%p834) target = $region148
        $region147: #{forward.8} parent=123 // pred_region
          %838 = dma.done [#allocation11], 16
        $region148: #{forward.8} parent=123 // pred_fallthru
          _
        // Predicated region
        $region149: #{forward.8} parent=123 // pred_check
          %p839 = pneg %p602
        $region150: #{forward.8} parent=123 // pred_check_branch
          %841 = sbr.rel (%p839) target = $region152
        $region151: #{forward.8} parent=123 // pred_region
          %843 = dma.done [#allocation11], 16
        $region152: #{forward.8} parent=123 // pred_fallthru
          _
        %p844 = scmp.lt.s32.totalorder %s41, 1
        %s845 = scalar_select %p844, %s41, 1
        %s846 = smul.addr %s845, 8
        %s847 = scalar_lea.vmem %s0, %s846
        %p848 = pneg %p62
        %p849 = pneg %p59
        %p850 = scmp.lt.s32.totalorder %s41, 1
        %s851 = scalar_select %p850, %s41, 1
        %s852 = smul.addr %s851, 8
        %s853 = scalar_lea.vmem %s1, %s852
        %p854 = pneg %p88
        %p855 = pneg %p85
        %p856 = pneg %p109
        %p857 = pneg %p106
        %p858 = pneg %p130
        %p859 = pneg %p127
        %p860 = pneg %p151
        %p861 = pneg %p148
        %p862 = pneg %p172
        %p863 = pneg %p169
        %p864 = pneg %p193
        %p865 = pneg %p190
        %p866 = pneg %p214
        %p867 = pneg %p211
        %p868 = scmp.lt.s32.totalorder %s41, 1
        %s869 = scalar_select %p868, %s41, 1
        %s870 = scalar_lea.vmem %s8, %s869
        %p871 = pneg %p240
        %p872 = pneg %p237
        %p873 = pneg %p261
        %p874 = pneg %p258
        %p875 = pneg %p282
        %p876 = pneg %p279
        %p877 = pneg %p303
        %p878 = pneg %p300
        %p879 = pneg %p324
        %p880 = pneg %p321
        %p881 = pneg %p345
        %p882 = pneg %p342
        %p883 = pneg %p366
        %p884 = pneg %p363
        %p885 = scmp.lt.s32.totalorder %s41, 1
        %s886 = scalar_select %p885, %s41, 1
        %s887 = scalar_lea.vmem %s15, %s886
        %p888 = pneg %p392
        %p889 = pneg %p389
        %p890 = pneg %p413
        %p891 = pneg %p410
        %p892 = pneg %p434
        %p893 = pneg %p431
        %p894 = pneg %p455
        %p895 = pneg %p452
        %p896 = pneg %p476
        %p897 = pneg %p473
        %p898 = pneg %p497
        %p899 = pneg %p494
        %p900 = pneg %p518
        %p901 = pneg %p515
        %p902 = pneg %p539
        %p903 = pneg %p536
        %p904 = pneg %p560
        %p905 = pneg %p557
        %p906 = pneg %p581
        %p907 = pneg %p578
        %p908 = pneg %p602
        %p909 = pneg %p599
        %p910 = pneg %p628
        %p911 = pneg %p625
        %p912 = scmp.lt.s32.totalorder %s41, 1
        %s913 = scalar_select %p912, %s41, 1
        %s914 = smul.addr %s913, 8
        %s915 = scalar_lea.vmem %s26, %s914
        %p916 = scmp.lt.s32.totalorder %s41, 1
        %s917 = scalar_select %p916, %s41, 1
        %s918 = smul.addr %s917, 8
        %s919 = scalar_lea.vmem %s0, %s918
        %p920 = scmp.lt.s32.totalorder %s41, 1
        %s921 = scalar_select %p920, %s41, 1
        %s922 = smul.addr %s921, 8
        %s923 = scalar_lea.vmem %s1, %s922
        %p924 = scmp.lt.s32.totalorder %s41, 1
        %s925 = scalar_select %p924, %s41, 1
        %s926 = scalar_lea.vmem %s8, %s925
        %p927 = scmp.lt.s32.totalorder %s41, 1
        %s928 = scalar_select %p927, %s41, 1
        %s929 = scalar_lea.vmem %s15, %s928
        %p930 = scmp.lt.s32.totalorder %s41, 1
        %s931 = scalar_select %p930, %s41, 1
        %s932 = smul.addr %s931, 8
        %s933 = scalar_lea.vmem %s26, %s932
        %v935 = vld [vmem:[%s919] sm:$0xff]
        %v936 = vld [vmem:[%s923] sm:$0xff]
        %v937 = vld [vmem:[%s926] sm:$0x1]
        %v938 = vld [vmem:[%s16] sm:$0xff]
        %v939 = vld [vmem:[%s17] sm:$0xff]
        %v940 = vld [vmem:[%s2] sm:$0x1]
        %v941 = vld [vmem:[%s3] sm:$0x1]
        %vm942 = vcmask 261120
        %v943 = vsel %vm942, %v935, 0.0
        %944 = vadd.xlane.f32.xlu0 %v943
        %v945 = vpop.xlane.xlu0 %944
        %v946 = vrcp.pop 32.0
        %v947 = vmul.f32 32.0, %v946
        %v948 = vsub.f32 1.0, %v947
        %v949 = vmul.f32 %v946, %v948
        %v950 = vadd.f32 %v946, %v949
        %vm951 = vweird.f32 %v946
        %v952 = vsel %vm951, %v946, %v950
        %v953 = vmul.f32 %v945, %v952
        %v954 = vsub.f32 %v935, %v953
        %v955 = vmul.f32 %v954, %v954
        %v956 = vsel %vm942, %v955, 0.0
        %957 = vadd.xlane.f32.xlu0 %v956
        %v958 = vpop.xlane.xlu0 %957
        %v959 = vmul.f32 %v958, %v952
        %v960 = vadd.f32 %v959, 1e-05
        %v961 = vrsqrt.pop %v960
        %v962 = vmul.f32 %v961, %v960
        %v963 = vmul.f32 %v962, %v961
        %v964 = vmul.f32 0.5, %v963
        %v965 = vsub.f32 1.5, %v964
        %v966 = vmul.f32 %v961, %v965
        %vm967 = vweird.f32 %v960
        %vm968 = vweird.f32 %v961
        %vm969 = vmor %vm967, %vm968
        %v970 = vsel %vm969, %v961, %v966
        %v971 = vmul.f32 %v954, %v970
        %v973 = vperm.slane %v940, 0
        %v975 = vmul.f32 %v971, %v973
        %v977 = vperm.slane %v941, 0
        %v979 = vadd.f32 %v975, %v977
        %v980 = vld [vmem:[%s4] sm:$0xf]
        %v981 = vld [vmem:[%s4 + $0x4] sm:$0xf]
        %v982 = vld [vmem:[%s4 + $0x8] sm:$0xf]
        %v983 = vld [vmem:[%s4 + $0xc] sm:$0xf]
        %v984 = vld [vmem:[%s5] sm:$0x1]
        %v985 = vpack.c.bf16 %v979, %v979
        %v987 = vperm.slane %v984, 0
        %v993 = vunpack.c.l.b16 %v980
        %v994 = vunpack.c.l.b16 %v981
        %v995 = vunpack.c.l.b16 %v982
        %v996 = vunpack.c.l.b16 %v983
        %v997 = vpack.c.b16 %v994, %v993
        %v998 = vpack.c.b16 %v996, %v995
        %v1002 = vsel %vm942, %v985, 0
        %1004 = vmatpush.bf16.msra.mxu0 0
        %1005 = vmatpush.bf16.msra.mxu0 0
        %1006 = vmatpush.bf16.msra.mxu0 0
        %1007 = vmatpush.bf16.msra.mxu0 0
        %1008 = vmatpush.bf16.msra.mxu0 0
        %1009 = vmatpush.bf16.msra.mxu0 0
        %1010 = vmatpush.bf16.msra.mxu0 %v998
        %1011 = vmatpush.bf16.msra.mxu0 %v997
        %1012 = vmatmul.bf16.gmra.mxu0 %v1002
        %v1013 = vpop.f32.mrf.mxu0
        %v1014 = vadd.f32 %v987, %v1013
        %v1015 = vpop.f32.mrf.mxu0
        %1016 = vdwg.mxu0
        %1018 = vrot.lane.b32.xlu0 %v1014, 120
        %v1019 = vpop.permute.xlu0 %1018
        %1021 = vrot.lane.b32.xlu0 %v1014, 112
        %v1022 = vpop.permute.xlu0 %1021
        %1024 = vrot.lane.b32.xlu0 %v1014, 104
        %v1025 = vpop.permute.xlu0 %1024
        %v1027 = vmul.f32 %v1014, %v938
        %v1028 = vmul.f32 %v1019, %v938
        %v1029 = vmul.f32 %v1022, %v938
        %v1030 = vmul.f32 %v1025, %v938
        %1031 = vrot.lane.b32.xlu0 %v1014, 124
        %v1032 = vpop.permute.xlu0 %1031
        %1033 = vrot.lane.b32.xlu0 %v1019, 124
        %v1034 = vpop.permute.xlu0 %1033
        %1035 = vrot.lane.b32.xlu0 %v1022, 124
        %v1036 = vpop.permute.xlu0 %1035
        %1037 = vrot.lane.b32.xlu0 %v1025, 124
        %v1038 = vpop.permute.xlu0 %1037
        %1043 = vrot.lane.b32.xlu0 %v1014, 4
        %v1044 = vpop.permute.xlu0 %1043
        %1045 = vrot.lane.b32.xlu0 %v1019, 4
        %v1046 = vpop.permute.xlu0 %1045
        %1047 = vrot.lane.b32.xlu0 %v1022, 4
        %v1048 = vpop.permute.xlu0 %1047
        %1049 = vrot.lane.b32.xlu0 %v1025, 4
        %v1050 = vpop.permute.xlu0 %1049
        %vm1055 = vcmask 31744
        %v1056 = vsel %vm1055, %v1032, %v1044
        %v1057 = vsel %vm1055, %v1034, %v1046
        %v1058 = vsel %vm1055, %v1036, %v1048
        %v1059 = vsel %vm1055, %v1038, %v1050
        %v1060 = vmul.f32 %v1056, %v939
        %v1061 = vmul.f32 %v1057, %v939
        %v1062 = vmul.f32 %v1058, %v939
        %v1063 = vmul.f32 %v1059, %v939
        %v1064 = vadd.f32 %v1027, %v1060
        %v1065 = vadd.f32 %v1028, %v1061
        %v1066 = vadd.f32 %v1029, %v1062
        %v1067 = vadd.f32 %v1030, %v1063
        %1069 = vrot.lane.b32.xlu0 %v938, 32
        %v1070 = vpop.permute.xlu0 %1069
        %v1072 = vmul.f32 %v1014, %v1070
        %v1073 = vmul.f32 %v1019, %v1070
        %v1074 = vmul.f32 %v1022, %v1070
        %v1075 = vmul.f32 %v1025, %v1070
        %1076 = vrot.lane.b32.xlu0 %v1014, 92
        %v1077 = vpop.permute.xlu0 %1076
        %1078 = vrot.lane.b32.xlu0 %v1019, 92
        %v1079 = vpop.permute.xlu0 %1078
        %1080 = vrot.lane.b32.xlu0 %v1022, 92
        %v1081 = vpop.permute.xlu0 %1080
        %1082 = vrot.lane.b32.xlu0 %v1025, 92
        %v1083 = vpop.permute.xlu0 %1082
        %1088 = vrot.lane.b32.xlu0 %v1014, 100
        %v1089 = vpop.permute.xlu0 %1088
        %1090 = vrot.lane.b32.xlu0 %v1019, 100
        %v1091 = vpop.permute.xlu0 %1090
        %1092 = vrot.lane.b32.xlu0 %v1022, 100
        %v1093 = vpop.permute.xlu0 %1092
        %1094 = vrot.lane.b32.xlu0 %v1025, 100
        %v1095 = vpop.permute.xlu0 %1094
        %v1100 = vsel %vm1055, %v1077, %v1089
        %v1101 = vsel %vm1055, %v1079, %v1091
        %v1102 = vsel %vm1055, %v1081, %v1093
        %v1103 = vsel %vm1055, %v1083, %v1095
        %v1104 = vmul.f32 %v1100, %v939
        %v1105 = vmul.f32 %v1101, %v939
        %v1106 = vmul.f32 %v1102, %v939
        %v1107 = vmul.f32 %v1103, %v939
        %1112 = vrot.lane.b32.xlu0 %v1104, 32
        %v1113 = vpop.permute.xlu0 %1112
        %1114 = vrot.lane.b32.xlu0 %v1105, 32
        %v1115 = vpop.permute.xlu0 %1114
        %1116 = vrot.lane.b32.xlu0 %v1106, 32
        %v1117 = vpop.permute.xlu0 %1116
        %1118 = vrot.lane.b32.xlu0 %v1107, 32
        %v1119 = vpop.permute.xlu0 %1118
        %v1124 = vadd.f32 %v1072, %v1113
        %v1125 = vadd.f32 %v1073, %v1115
        %v1126 = vadd.f32 %v1074, %v1117
        %v1127 = vadd.f32 %v1075, %v1119
        %v1128 = vpack.c.bf16 %v1064, %v1064
        %v1129 = vpack.c.bf16 %v1065, %v1065
        %v1130 = vpack.c.bf16 %v1066, %v1066
        %v1131 = vpack.c.bf16 %v1067, %v1067
        %v1132 = vpack.c.bf16 %v1124, %v1124
        %v1133 = vpack.c.bf16 %v1125, %v1125
        %v1134 = vpack.c.bf16 %v1126, %v1126
        %v1135 = vpack.c.bf16 %v1127, %v1127
        %v1137 = vunpack.c.l.b16 %v1132
        %v1138 = vpack.c.b16 %v1137, %v1137
        %1139 = vrot.lane.b32.xlu0 %v1138, 96
        %v1140 = vpop.permute.xlu0 %1139
        %vm1141 = vcmask 64512
        %v1143 = vsel %vm1141, %v1128, 0
        %v1146 = vsel %vm1141, %v1140, 0
        %1148 = vmatpush.bf16.xpose.msra.mxu0 0
        %1149 = vmatpush.bf16.xpose.msra.mxu0 0
        %1150 = vmatpush.bf16.xpose.msra.mxu0 0
        %1151 = vmatpush.bf16.xpose.msra.mxu0 0
        %1152 = vmatpush.bf16.xpose.msra.mxu0 0
        %1153 = vmatpush.bf16.xpose.msra.mxu0 0
        %1154 = vmatpush.bf16.xpose.msra.mxu0 0
        %1155 = vmatpush.bf16.xpose.msra.mxu0 %v1146
        %1156 = vmatmul.bf16.gmra.mxu0 %v1143
        %v1157 = vpop.f32.mrf.mxu0
        %v1158 = vadd.f32 0.0, %v1157
        %v1159 = vpop.f32.mrf.mxu0
        %1160 = vdwg.mxu0
        %v1162 = vunpack.c.l.b16 %v1133
        %v1163 = vpack.c.b16 %v1162, %v1162
        %1164 = vrot.lane.b32.xlu0 %v1163, 96
        %v1165 = vpop.permute.xlu0 %1164
        %v1167 = vsel %vm1141, %v1129, 0
        %v1170 = vsel %vm1141, %v1165, 0
        %1172 = vmatpush.bf16.xpose.msra.mxu0 0
        %1173 = vmatpush.bf16.xpose.msra.mxu0 0
        %1174 = vmatpush.bf16.xpose.msra.mxu0 0
        %1175 = vmatpush.bf16.xpose.msra.mxu0 0
        %1176 = vmatpush.bf16.xpose.msra.mxu0 0
        %1177 = vmatpush.bf16.xpose.msra.mxu0 0
        %1178 = vmatpush.bf16.xpose.msra.mxu0 0
        %1179 = vmatpush.bf16.xpose.msra.mxu0 %v1170
        %1180 = vmatmul.bf16.gmra.mxu0 %v1167
        %v1181 = vpop.f32.mrf.mxu0
        %v1182 = vadd.f32 0.0, %v1181
        %v1183 = vpop.f32.mrf.mxu0
        %1184 = vdwg.mxu0
        %v1186 = vunpack.c.l.b16 %v1134
        %v1187 = vpack.c.b16 %v1186, %v1186
        %1188 = vrot.lane.b32.xlu0 %v1187, 96
        %v1189 = vpop.permute.xlu0 %1188
        %v1191 = vsel %vm1141, %v1130, 0
        %v1194 = vsel %vm1141, %v1189, 0
        %1196 = vmatpush.bf16.xpose.msra.mxu0 0
        %1197 = vmatpush.bf16.xpose.msra.mxu0 0
        %1198 = vmatpush.bf16.xpose.msra.mxu0 0
        %1199 = vmatpush.bf16.xpose.msra.mxu0 0
        %1200 = vmatpush.bf16.xpose.msra.mxu0 0
        %1201 = vmatpush.bf16.xpose.msra.mxu0 0
        %1202 = vmatpush.bf16.xpose.msra.mxu0 0
        %1203 = vmatpush.bf16.xpose.msra.mxu0 %v1194
        %1204 = vmatmul.bf16.gmra.mxu0 %v1191
        %v1205 = vpop.f32.mrf.mxu0
        %v1206 = vadd.f32 0.0, %v1205
        %v1207 = vpop.f32.mrf.mxu0
        %1208 = vdwg.mxu0
        %v1210 = vunpack.c.l.b16 %v1135
        %v1211 = vpack.c.b16 %v1210, %v1210
        %1212 = vrot.lane.b32.xlu0 %v1211, 96
        %v1213 = vpop.permute.xlu0 %1212
        %v1215 = vsel %vm1141, %v1131, 0
        %v1218 = vsel %vm1141, %v1213, 0
        %1220 = vmatpush.bf16.xpose.msra.mxu0 0
        %1221 = vmatpush.bf16.xpose.msra.mxu0 0
        %1222 = vmatpush.bf16.xpose.msra.mxu0 0
        %1223 = vmatpush.bf16.xpose.msra.mxu0 0
        %1224 = vmatpush.bf16.xpose.msra.mxu0 0
        %1225 = vmatpush.bf16.xpose.msra.mxu0 0
        %1226 = vmatpush.bf16.xpose.msra.mxu0 0
        %1227 = vmatpush.bf16.xpose.msra.mxu0 %v1218
        %1228 = vmatmul.bf16.gmra.mxu0 %v1215
        %v1229 = vpop.f32.mrf.mxu0
        %v1230 = vadd.f32 0.0, %v1229
        %v1231 = vpop.f32.mrf.mxu0
        %1232 = vdwg.mxu0
        %v1233 = vmul.f32 %v1158, 0.35355338
        %v1234 = vmul.f32 %v1182, 0.35355338
        %v1235 = vmul.f32 %v1206, 0.35355338
        %v1236 = vmul.f32 %v1230, 0.35355338
        %v1238 = vperm.slane %v937, 0
        %v1240 = vadd.f32 %v1233, %v1238
        %v1241 = vadd.f32 %v1234, %v1238
        %v1242 = vadd.f32 %v1235, %v1238
        %v1243 = vadd.f32 %v1236, %v1238
        %v1244 = vsel %vm1141, %v1240, -inf
        %1245 = vmax.xlane.f32.xlu0 %v1244
        %v1246 = vpop.xlane.xlu0 %1245
        %v1247 = vsel %vm1141, %v1241, -inf
        %1248 = vmax.xlane.f32.xlu0 %v1247
        %v1249 = vpop.xlane.xlu0 %1248
        %v1250 = vsel %vm1141, %v1242, -inf
        %1251 = vmax.xlane.f32.xlu0 %v1250
        %v1252 = vpop.xlane.xlu0 %1251
        %v1253 = vsel %vm1141, %v1243, -inf
        %1254 = vmax.xlane.f32.xlu0 %v1253
        %v1255 = vpop.xlane.xlu0 %1254
        %v1256 = vsub.f32 %v1240, %v1246
        %v1257 = vsub.f32 %v1241, %v1249
        %v1258 = vsub.f32 %v1242, %v1252
        %v1259 = vsub.f32 %v1243, %v1255
        %v1260 = vmul.f32 %v1256, 1.442695
        %v1261 = vpow.pop %v1260
        %v1262 = vmul.f32 %v1257, 1.442695
        %v1263 = vpow.pop %v1262
        %v1264 = vmul.f32 %v1258, 1.442695
        %v1265 = vpow.pop %v1264
        %v1266 = vmul.f32 %v1259, 1.442695
        %v1267 = vpow.pop %v1266
        %v1268 = vsel %vm1141, %v1261, 0.0
        %1269 = vadd.xlane.f32.xlu0 %v1268
        %v1270 = vpop.xlane.xlu0 %1269
        %v1271 = vsel %vm1141, %v1263, 0.0
        %1272 = vadd.xlane.f32.xlu0 %v1271
        %v1273 = vpop.xlane.xlu0 %1272
        %v1274 = vsel %vm1141, %v1265, 0.0
        %1275 = vadd.xlane.f32.xlu0 %v1274
        %v1276 = vpop.xlane.xlu0 %1275
        %v1277 = vsel %vm1141, %v1267, 0.0
        %1278 = vadd.xlane.f32.xlu0 %v1277
        %v1279 = vpop.xlane.xlu0 %1278
        %v1280 = vpack.c.bf16 %v1261, %v1261
        %v1281 = vpack.c.bf16 %v1263, %v1263
        %v1282 = vpack.c.bf16 %v1265, %v1265
        %v1283 = vpack.c.bf16 %v1267, %v1267
        %v1284 = vpack.c.bf16 %v1014, %v1014
        %v1285 = vpack.c.bf16 %v1019, %v1019
        %v1286 = vpack.c.bf16 %v1022, %v1022
        %v1287 = vpack.c.bf16 %v1025, %v1025
        %v1289 = vunpack.c.l.b16 %v1284
        %v1290 = vpack.c.b16 %v1289, %v1289
        %1291 = vrot.lane.b32.xlu0 %v1290, 64
        %v1292 = vpop.permute.xlu0 %1291
        %v1294 = vsel %vm1141, %v1280, 0
        %vm1296 = vcmask 1043456
        %v1298 = vsel %vm1296, %v1292, 0
        %1300 = vmatpush.bf16.msra.mxu0 0
        %1301 = vmatpush.bf16.msra.mxu0 0
        %1302 = vmatpush.bf16.msra.mxu0 0
        %1303 = vmatpush.bf16.msra.mxu0 0
        %1304 = vmatpush.bf16.msra.mxu0 0
        %1305 = vmatpush.bf16.msra.mxu0 0
        %1306 = vmatpush.bf16.msra.mxu0 0
        %1307 = vmatpush.bf16.msra.mxu0 %v1298
        %1308 = vmatmul.bf16.gmra.mxu0 %v1294
        %v1309 = vpop.f32.mrf.mxu0
        %v1310 = vadd.f32 0.0, %v1309
        %v1311 = vpop.f32.mrf.mxu0
        %1312 = vdwg.mxu0
        %v1314 = vunpack.c.l.b16 %v1285
        %v1315 = vpack.c.b16 %v1314, %v1314
        %1316 = vrot.lane.b32.xlu0 %v1315, 64
        %v1317 = vpop.permute.xlu0 %1316
        %v1319 = vsel %vm1141, %v1281, 0
        %v1322 = vsel %vm1296, %v1317, 0
        %1324 = vmatpush.bf16.msra.mxu0 0
        %1325 = vmatpush.bf16.msra.mxu0 0
        %1326 = vmatpush.bf16.msra.mxu0 0
        %1327 = vmatpush.bf16.msra.mxu0 0
        %1328 = vmatpush.bf16.msra.mxu0 0
        %1329 = vmatpush.bf16.msra.mxu0 0
        %1330 = vmatpush.bf16.msra.mxu0 0
        %1331 = vmatpush.bf16.msra.mxu0 %v1322
        %1332 = vmatmul.bf16.gmra.mxu0 %v1319
        %v1333 = vpop.f32.mrf.mxu0
        %v1334 = vadd.f32 0.0, %v1333
        %v1335 = vpop.f32.mrf.mxu0
        %1336 = vdwg.mxu0
        %v1338 = vunpack.c.l.b16 %v1286
        %v1339 = vpack.c.b16 %v1338, %v1338
        %1340 = vrot.lane.b32.xlu0 %v1339, 64
        %v1341 = vpop.permute.xlu0 %1340
        %v1343 = vsel %vm1141, %v1282, 0
        %v1346 = vsel %vm1296, %v1341, 0
        %1348 = vmatpush.bf16.msra.mxu0 0
        %1349 = vmatpush.bf16.msra.mxu0 0
        %1350 = vmatpush.bf16.msra.mxu0 0
        %1351 = vmatpush.bf16.msra.mxu0 0
        %1352 = vmatpush.bf16.msra.mxu0 0
        %1353 = vmatpush.bf16.msra.mxu0 0
        %1354 = vmatpush.bf16.msra.mxu0 0
        %1355 = vmatpush.bf16.msra.mxu0 %v1346
        %1356 = vmatmul.bf16.gmra.mxu0 %v1343
        %v1357 = vpop.f32.mrf.mxu0
        %v1358 = vadd.f32 0.0, %v1357
        %v1359 = vpop.f32.mrf.mxu0
        %1360 = vdwg.mxu0
        %v1362 = vunpack.c.l.b16 %v1287
        %v1363 = vpack.c.b16 %v1362, %v1362
        %1364 = vrot.lane.b32.xlu0 %v1363, 64
        %v1365 = vpop.permute.xlu0 %1364
        %v1367 = vsel %vm1141, %v1283, 0
        %v1370 = vsel %vm1296, %v1365, 0
        %1372 = vmatpush.bf16.msra.mxu0 0
        %1373 = vmatpush.bf16.msra.mxu0 0
        %1374 = vmatpush.bf16.msra.mxu0 0
        %1375 = vmatpush.bf16.msra.mxu0 0
        %1376 = vmatpush.bf16.msra.mxu0 0
        %1377 = vmatpush.bf16.msra.mxu0 0
        %1378 = vmatpush.bf16.msra.mxu0 0
        %1379 = vmatpush.bf16.msra.mxu0 %v1370
        %1380 = vmatmul.bf16.gmra.mxu0 %v1367
        %v1381 = vpop.f32.mrf.mxu0
        %v1382 = vadd.f32 0.0, %v1381
        %v1383 = vpop.f32.mrf.mxu0
        %1384 = vdwg.mxu0
        %v1385 = vrcp.pop %v1270
        %v1386 = vrcp.pop %v1273
        %v1387 = vrcp.pop %v1276
        %v1388 = vrcp.pop %v1279
        %v1389 = vmul.f32 %v1310, %v1385
        %v1390 = vmul.f32 %v1334, %v1386
        %v1391 = vmul.f32 %v1358, %v1387
        %v1392 = vmul.f32 %v1382, %v1388
        %1394 = vrot.lane.b32.xlu0 %v1390, 8
        %v1395 = vpop.permute.xlu0 %1394
        %1398 = vrot.lane.b32.xlu0 %v1391, 16
        %v1399 = vpop.permute.xlu0 %1398
        %1402 = vrot.lane.b32.xlu0 %v1392, 24
        %v1403 = vpop.permute.xlu0 %1402
        %v1405 = vsel %vm1141, %v1389, %v1395
        %vm1406 = vcmask 130048
        %v1407 = vsel %vm1406, %v1405, %v1399
        %vm1408 = vcmask 195584
        %v1409 = vsel %vm1408, %v1407, %v1403
        %v1410 = vld [vmem:[%s6] sm:$0xf]
        %v1411 = vld [vmem:[%s6 + $0x4] sm:$0xf]
        %v1412 = vld [vmem:[%s6 + $0x8] sm:$0xf]
        %v1413 = vld [vmem:[%s6 + $0xc] sm:$0xf]
        %v1414 = vpack.c.bf16 %v1409, %v1409
        %v1415 = vld [vmem:[%s7] sm:$0x1]
        %v1417 = vperm.slane %v1415, 0
        %v1423 = vunpack.c.l.b16 %v1410
        %v1424 = vunpack.c.l.b16 %v1411
        %v1425 = vunpack.c.l.b16 %v1412
        %v1426 = vunpack.c.l.b16 %v1413
        %v1427 = vpack.c.b16 %v1424, %v1423
        %v1428 = vpack.c.b16 %v1426, %v1425
        %v1432 = vsel %vm942, %v1414, 0
        %1434 = vmatpush.bf16.msra.mxu0 0
        %1435 = vmatpush.bf16.msra.mxu0 0
        %1436 = vmatpush.bf16.msra.mxu0 0
        %1437 = vmatpush.bf16.msra.mxu0 0
        %1438 = vmatpush.bf16.msra.mxu0 0
        %1439 = vmatpush.bf16.msra.mxu0 0
        %1440 = vmatpush.bf16.msra.mxu0 %v1428
        %1441 = vmatpush.bf16.msra.mxu0 %v1427
        %1442 = vmatmul.bf16.gmra.mxu0 %v1432
        %v1443 = vpop.f32.mrf.mxu0
        %v1444 = vadd.f32 %v1417, %v1443
        %v1445 = vpop.f32.mrf.mxu0
        %1446 = vdwg.mxu0
        %v1447 = vadd.f32 %v935, %v1444
        %v1448 = vld [vmem:[%s929] sm:$0x1]
        %v1449 = vld [vmem:[%s16] sm:$0xff]
        %v1450 = vld [vmem:[%s17] sm:$0xff]
        %v1451 = vld [vmem:[%s18] sm:$0xff]
        %v1452 = vld [vmem:[%s19] sm:$0xff]
        %v1453 = vld [vmem:[%s9] sm:$0x1]
        %v1454 = vld [vmem:[#allocation2] sm:$0x1]
        %v1455 = vsel %vm942, %v1447, 0.0
        %1456 = vadd.xlane.f32.xlu0 %v1455
        %v1457 = vpop.xlane.xlu0 %1456
        %v1458 = vmul.f32 %v1457, %v952
        %v1459 = vsub.f32 %v1447, %v1458
        %v1460 = vmul.f32 %v1459, %v1459
        %v1461 = vsel %vm942, %v1460, 0.0
        %1462 = vadd.xlane.f32.xlu0 %v1461
        %v1463 = vpop.xlane.xlu0 %1462
        %v1464 = vmul.f32 %v1463, %v952
        %v1465 = vadd.f32 %v1464, 1e-05
        %v1466 = vrsqrt.pop %v1465
        %v1467 = vmul.f32 %v1466, %v1465
        %v1468 = vmul.f32 %v1467, %v1466
        %v1469 = vmul.f32 0.5, %v1468
        %v1470 = vsub.f32 1.5, %v1469
        %v1471 = vmul.f32 %v1466, %v1470
        %vm1472 = vweird.f32 %v1465
        %vm1473 = vweird.f32 %v1466
        %vm1474 = vmor %vm1472, %vm1473
        %v1475 = vsel %vm1474, %v1466, %v1471
        %v1476 = vmul.f32 %v1459, %v1475
        %v1478 = vperm.slane %v1453, 0
        %v1480 = vmul.f32 %v1476, %v1478
        %v1482 = vperm.slane %v1454, 0
        %v1484 = vadd.f32 %v1480, %v1482
        %v1485 = vld [vmem:[%s11] sm:$0xf]
        %v1486 = vld [vmem:[%s11 + $0x4] sm:$0xf]
        %v1487 = vld [vmem:[%s11 + $0x8] sm:$0xf]
        %v1488 = vld [vmem:[%s11 + $0xc] sm:$0xf]
        %v1489 = vld [vmem:[#allocation4] sm:$0x1]
        %v1490 = vpack.c.bf16 %v1484, %v1484
        %v1492 = vperm.slane %v1489, 0
        %v1498 = vunpack.c.l.b16 %v1485
        %v1499 = vunpack.c.l.b16 %v1486
        %v1500 = vunpack.c.l.b16 %v1487
        %v1501 = vunpack.c.l.b16 %v1488
        %v1502 = vpack.c.b16 %v1499, %v1498
        %v1503 = vpack.c.b16 %v1501, %v1500
        %v1507 = vsel %vm942, %v1490, 0
        %1509 = vmatpush.bf16.msra.mxu0 0
        %1510 = vmatpush.bf16.msra.mxu0 0
        %1511 = vmatpush.bf16.msra.mxu0 0
        %1512 = vmatpush.bf16.msra.mxu0 0
        %1513 = vmatpush.bf16.msra.mxu0 0
        %1514 = vmatpush.bf16.msra.mxu0 0
        %1515 = vmatpush.bf16.msra.mxu0 %v1503
        %1516 = vmatpush.bf16.msra.mxu0 %v1502
        %1517 = vmatmul.bf16.gmra.mxu0 %v1507
        %v1518 = vpop.f32.mrf.mxu0
        %v1519 = vadd.f32 %v1492, %v1518
        %v1520 = vpop.f32.mrf.mxu0
        %1521 = vdwg.mxu0
        %v1522 = vpack.c.bf16 %v936, %v936
        %1523 = vrot.lane.b32.xlu0 %v1502, 96
        %v1524 = vpop.permute.xlu0 %1523
        %1525 = vrot.lane.b32.xlu0 %v1503, 96
        %v1526 = vpop.permute.xlu0 %1525
        %1529 = vrot.lane.b32.xlu0 %v1492, 96
        %v1530 = vpop.permute.xlu0 %1529
        %v1533 = vsel %vm942, %v1522, 0
        %1535 = vmatpush.bf16.msra.mxu0 0
        %1536 = vmatpush.bf16.msra.mxu0 0
        %1537 = vmatpush.bf16.msra.mxu0 0
        %1538 = vmatpush.bf16.msra.mxu0 0
        %1539 = vmatpush.bf16.msra.mxu0 0
        %1540 = vmatpush.bf16.msra.mxu0 0
        %1541 = vmatpush.bf16.msra.mxu0 %v1526
        %1542 = vmatpush.bf16.msra.mxu0 %v1524
        %1543 = vmatmul.bf16.gmra.mxu0 %v1533
        %v1544 = vpop.f32.mrf.mxu0
        %v1545 = vadd.f32 %v1530, %v1544
        %v1546 = vpop.f32.mrf.mxu0
        %1547 = vdwg.mxu0
        %1549 = vrot.lane.b32.xlu0 %v1519, 120
        %v1550 = vpop.permute.xlu0 %1549
        %1552 = vrot.lane.b32.xlu0 %v1519, 112
        %v1553 = vpop.permute.xlu0 %1552
        %1555 = vrot.lane.b32.xlu0 %v1519, 104
        %v1556 = vpop.permute.xlu0 %1555
        %v1558 = vmul.f32 %v1519, %v1449
        %v1559 = vmul.f32 %v1550, %v1449
        %v1560 = vmul.f32 %v1553, %v1449
        %v1561 = vmul.f32 %v1556, %v1449
        %1562 = vrot.lane.b32.xlu0 %v1519, 124
        %v1563 = vpop.permute.xlu0 %1562
        %1564 = vrot.lane.b32.xlu0 %v1550, 124
        %v1565 = vpop.permute.xlu0 %1564
        %1566 = vrot.lane.b32.xlu0 %v1553, 124
        %v1567 = vpop.permute.xlu0 %1566
        %1568 = vrot.lane.b32.xlu0 %v1556, 124
        %v1569 = vpop.permute.xlu0 %1568
        %1574 = vrot.lane.b32.xlu0 %v1519, 4
        %v1575 = vpop.permute.xlu0 %1574
        %1576 = vrot.lane.b32.xlu0 %v1550, 4
        %v1577 = vpop.permute.xlu0 %1576
        %1578 = vrot.lane.b32.xlu0 %v1553, 4
        %v1579 = vpop.permute.xlu0 %1578
        %1580 = vrot.lane.b32.xlu0 %v1556, 4
        %v1581 = vpop.permute.xlu0 %1580
        %v1586 = vsel %vm1055, %v1563, %v1575
        %v1587 = vsel %vm1055, %v1565, %v1577
        %v1588 = vsel %vm1055, %v1567, %v1579
        %v1589 = vsel %vm1055, %v1569, %v1581
        %v1590 = vmul.f32 %v1586, %v1450
        %v1591 = vmul.f32 %v1587, %v1450
        %v1592 = vmul.f32 %v1588, %v1450
        %v1593 = vmul.f32 %v1589, %v1450
        %v1594 = vadd.f32 %v1558, %v1590
        %v1595 = vadd.f32 %v1559, %v1591
        %v1596 = vadd.f32 %v1560, %v1592
        %v1597 = vadd.f32 %v1561, %v1593
        %1599 = vrot.lane.b32.xlu0 %v1545, 120
        %v1600 = vpop.permute.xlu0 %1599
        %1602 = vrot.lane.b32.xlu0 %v1545, 112
        %v1603 = vpop.permute.xlu0 %1602
        %1605 = vrot.lane.b32.xlu0 %v1545, 104
        %v1606 = vpop.permute.xlu0 %1605
        %v1608 = vmul.f32 %v1545, %v1451
        %v1609 = vmul.f32 %v1600, %v1451
        %v1610 = vmul.f32 %v1603, %v1451
        %v1611 = vmul.f32 %v1606, %v1451
        %1612 = vrot.lane.b32.xlu0 %v1545, 124
        %v1613 = vpop.permute.xlu0 %1612
        %1614 = vrot.lane.b32.xlu0 %v1600, 124
        %v1615 = vpop.permute.xlu0 %1614
        %1616 = vrot.lane.b32.xlu0 %v1603, 124
        %v1617 = vpop.permute.xlu0 %1616
        %1618 = vrot.lane.b32.xlu0 %v1606, 124
        %v1619 = vpop.permute.xlu0 %1618
        %1624 = vrot.lane.b32.xlu0 %v1545, 4
        %v1625 = vpop.permute.xlu0 %1624
        %1626 = vrot.lane.b32.xlu0 %v1600, 4
        %v1627 = vpop.permute.xlu0 %1626
        %1628 = vrot.lane.b32.xlu0 %v1603, 4
        %v1629 = vpop.permute.xlu0 %1628
        %1630 = vrot.lane.b32.xlu0 %v1606, 4
        %v1631 = vpop.permute.xlu0 %1630
        %v1636 = vsel %vm1055, %v1613, %v1625
        %v1637 = vsel %vm1055, %v1615, %v1627
        %v1638 = vsel %vm1055, %v1617, %v1629
        %v1639 = vsel %vm1055, %v1619, %v1631
        %v1640 = vmul.f32 %v1636, %v1452
        %v1641 = vmul.f32 %v1637, %v1452
        %v1642 = vmul.f32 %v1638, %v1452
        %v1643 = vmul.f32 %v1639, %v1452
        %v1644 = vadd.f32 %v1608, %v1640
        %v1645 = vadd.f32 %v1609, %v1641
        %v1646 = vadd.f32 %v1610, %v1642
        %v1647 = vadd.f32 %v1611, %v1643
        %v1648 = vpack.c.bf16 %v1594, %v1594
        %v1649 = vpack.c.bf16 %v1595, %v1595
        %v1650 = vpack.c.bf16 %v1596, %v1596
        %v1651 = vpack.c.bf16 %v1597, %v1597
        %v1652 = vpack.c.bf16 %v1644, %v1644
        %v1653 = vpack.c.bf16 %v1645, %v1645
        %v1654 = vpack.c.bf16 %v1646, %v1646
        %v1655 = vpack.c.bf16 %v1647, %v1647
        %v1657 = vsel %vm1141, %v1648, 0
        %v1660 = vsel %vm1141, %v1652, 0
        %1662 = vmatpush.bf16.xpose.msra.mxu0 0
        %1663 = vmatpush.bf16.xpose.msra.mxu0 0
        %1664 = vmatpush.bf16.xpose.msra.mxu0 0
        %1665 = vmatpush.bf16.xpose.msra.mxu0 0
        %1666 = vmatpush.bf16.xpose.msra.mxu0 0
        %1667 = vmatpush.bf16.xpose.msra.mxu0 0
        %1668 = vmatpush.bf16.xpose.msra.mxu0 0
        %1669 = vmatpush.bf16.xpose.msra.mxu0 %v1660
        %1670 = vmatmul.bf16.gmra.mxu0 %v1657
        %v1671 = vpop.f32.mrf.mxu0
        %v1672 = vadd.f32 0.0, %v1671
        %v1673 = vpop.f32.mrf.mxu0
        %1674 = vdwg.mxu0
        %v1676 = vsel %vm1141, %v1649, 0
        %v1679 = vsel %vm1141, %v1653, 0
        %1681 = vmatpush.bf16.xpose.msra.mxu0 0
        %1682 = vmatpush.bf16.xpose.msra.mxu0 0
        %1683 = vmatpush.bf16.xpose.msra.mxu0 0
        %1684 = vmatpush.bf16.xpose.msra.mxu0 0
        %1685 = vmatpush.bf16.xpose.msra.mxu0 0
        %1686 = vmatpush.bf16.xpose.msra.mxu0 0
        %1687 = vmatpush.bf16.xpose.msra.mxu0 0
        %1688 = vmatpush.bf16.xpose.msra.mxu0 %v1679
        %1689 = vmatmul.bf16.gmra.mxu0 %v1676
        %v1690 = vpop.f32.mrf.mxu0
        %v1691 = vadd.f32 0.0, %v1690
        %v1692 = vpop.f32.mrf.mxu0
        %1693 = vdwg.mxu0
        %v1695 = vsel %vm1141, %v1650, 0
        %v1698 = vsel %vm1141, %v1654, 0
        %1700 = vmatpush.bf16.xpose.msra.mxu0 0
        %1701 = vmatpush.bf16.xpose.msra.mxu0 0
        %1702 = vmatpush.bf16.xpose.msra.mxu0 0
        %1703 = vmatpush.bf16.xpose.msra.mxu0 0
        %1704 = vmatpush.bf16.xpose.msra.mxu0 0
        %1705 = vmatpush.bf16.xpose.msra.mxu0 0
        %1706 = vmatpush.bf16.xpose.msra.mxu0 0
        %1707 = vmatpush.bf16.xpose.msra.mxu0 %v1698
        %1708 = vmatmul.bf16.gmra.mxu0 %v1695
        %v1709 = vpop.f32.mrf.mxu0
        %v1710 = vadd.f32 0.0, %v1709
        %v1711 = vpop.f32.mrf.mxu0
        %1712 = vdwg.mxu0
        %v1714 = vsel %vm1141, %v1651, 0
        %v1717 = vsel %vm1141, %v1655, 0
        %1719 = vmatpush.bf16.xpose.msra.mxu0 0
        %1720 = vmatpush.bf16.xpose.msra.mxu0 0
        %1721 = vmatpush.bf16.xpose.msra.mxu0 0
        %1722 = vmatpush.bf16.xpose.msra.mxu0 0
        %1723 = vmatpush.bf16.xpose.msra.mxu0 0
        %1724 = vmatpush.bf16.xpose.msra.mxu0 0
        %1725 = vmatpush.bf16.xpose.msra.mxu0 0
        %1726 = vmatpush.bf16.xpose.msra.mxu0 %v1717
        %1727 = vmatmul.bf16.gmra.mxu0 %v1714
        %v1728 = vpop.f32.mrf.mxu0
        %v1729 = vadd.f32 0.0, %v1728
        %v1730 = vpop.f32.mrf.mxu0
        %1731 = vdwg.mxu0
        %v1732 = vmul.f32 %v1672, 0.35355338
        %v1733 = vmul.f32 %v1691, 0.35355338
        %v1734 = vmul.f32 %v1710, 0.35355338
        %v1735 = vmul.f32 %v1729, 0.35355338
        %v1737 = vperm.slane %v1448, 0
        %v1739 = vadd.f32 %v1732, %v1737
        %v1740 = vadd.f32 %v1733, %v1737
        %v1741 = vadd.f32 %v1734, %v1737
        %v1742 = vadd.f32 %v1735, %v1737
        %v1743 = vsel %vm1141, %v1739, -inf
        %1744 = vmax.xlane.f32.xlu0 %v1743
        %v1745 = vpop.xlane.xlu0 %1744
        %v1746 = vsel %vm1141, %v1740, -inf
        %1747 = vmax.xlane.f32.xlu0 %v1746
        %v1748 = vpop.xlane.xlu0 %1747
        %v1749 = vsel %vm1141, %v1741, -inf
        %1750 = vmax.xlane.f32.xlu0 %v1749
        %v1751 = vpop.xlane.xlu0 %1750
        %v1752 = vsel %vm1141, %v1742, -inf
        %1753 = vmax.xlane.f32.xlu0 %v1752
        %v1754 = vpop.xlane.xlu0 %1753
        %v1755 = vsub.f32 %v1739, %v1745
        %v1756 = vsub.f32 %v1740, %v1748
        %v1757 = vsub.f32 %v1741, %v1751
        %v1758 = vsub.f32 %v1742, %v1754
        %v1759 = vmul.f32 %v1755, 1.442695
        %v1760 = vpow.pop %v1759
        %v1761 = vmul.f32 %v1756, 1.442695
        %v1762 = vpow.pop %v1761
        %v1763 = vmul.f32 %v1757, 1.442695
        %v1764 = vpow.pop %v1763
        %v1765 = vmul.f32 %v1758, 1.442695
        %v1766 = vpow.pop %v1765
        %v1767 = vsel %vm1141, %v1760, 0.0
        %1768 = vadd.xlane.f32.xlu0 %v1767
        %v1769 = vpop.xlane.xlu0 %1768
        %v1770 = vsel %vm1141, %v1762, 0.0
        %1771 = vadd.xlane.f32.xlu0 %v1770
        %v1772 = vpop.xlane.xlu0 %1771
        %v1773 = vsel %vm1141, %v1764, 0.0
        %1774 = vadd.xlane.f32.xlu0 %v1773
        %v1775 = vpop.xlane.xlu0 %1774
        %v1776 = vsel %vm1141, %v1766, 0.0
        %1777 = vadd.xlane.f32.xlu0 %v1776
        %v1778 = vpop.xlane.xlu0 %1777
        %v1779 = vpack.c.bf16 %v1760, %v1760
        %v1780 = vpack.c.bf16 %v1762, %v1762
        %v1781 = vpack.c.bf16 %v1764, %v1764
        %v1782 = vpack.c.bf16 %v1766, %v1766
        %v1783 = vpack.c.bf16 %v1545, %v1545
        %v1784 = vpack.c.bf16 %v1600, %v1600
        %v1785 = vpack.c.bf16 %v1603, %v1603
        %v1786 = vpack.c.bf16 %v1606, %v1606
        %v1788 = vunpack.c.l.b16 %v1783
        %v1789 = vpack.c.b16 %v1788, %v1788
        %1790 = vrot.lane.b32.xlu0 %v1789, 96
        %v1791 = vpop.permute.xlu0 %1790
        %v1793 = vsel %vm1141, %v1779, 0
        %v1796 = vsel %vm1296, %v1791, 0
        %1798 = vmatpush.bf16.msra.mxu0 0
        %1799 = vmatpush.bf16.msra.mxu0 0
        %1800 = vmatpush.bf16.msra.mxu0 0
        %1801 = vmatpush.bf16.msra.mxu0 0
        %1802 = vmatpush.bf16.msra.mxu0 0
        %1803 = vmatpush.bf16.msra.mxu0 0
        %1804 = vmatpush.bf16.msra.mxu0 0
        %1805 = vmatpush.bf16.msra.mxu0 %v1796
        %1806 = vmatmul.bf16.gmra.mxu0 %v1793
        %v1807 = vpop.f32.mrf.mxu0
        %v1808 = vadd.f32 0.0, %v1807
        %v1809 = vpop.f32.mrf.mxu0
        %1810 = vdwg.mxu0
        %v1812 = vunpack.c.l.b16 %v1784
        %v1813 = vpack.c.b16 %v1812, %v1812
        %1814 = vrot.lane.b32.xlu0 %v1813, 96
        %v1815 = vpop.permute.xlu0 %1814
        %v1817 = vsel %vm1141, %v1780, 0
        %v1820 = vsel %vm1296, %v1815, 0
        %1822 = vmatpush.bf16.msra.mxu0 0
        %1823 = vmatpush.bf16.msra.mxu0 0
        %1824 = vmatpush.bf16.msra.mxu0 0
        %1825 = vmatpush.bf16.msra.mxu0 0
        %1826 = vmatpush.bf16.msra.mxu0 0
        %1827 = vmatpush.bf16.msra.mxu0 0
        %1828 = vmatpush.bf16.msra.mxu0 0
        %1829 = vmatpush.bf16.msra.mxu0 %v1820
        %1830 = vmatmul.bf16.gmra.mxu0 %v1817
        %v1831 = vpop.f32.mrf.mxu0
        %v1832 = vadd.f32 0.0, %v1831
        %v1833 = vpop.f32.mrf.mxu0
        %1834 = vdwg.mxu0
        %v1836 = vunpack.c.l.b16 %v1785
        %v1837 = vpack.c.b16 %v1836, %v1836
        %1838 = vrot.lane.b32.xlu0 %v1837, 96
        %v1839 = vpop.permute.xlu0 %1838
        %v1841 = vsel %vm1141, %v1781, 0
        %v1844 = vsel %vm1296, %v1839, 0
        %1846 = vmatpush.bf16.msra.mxu0 0
        %1847 = vmatpush.bf16.msra.mxu0 0
        %1848 = vmatpush.bf16.msra.mxu0 0
        %1849 = vmatpush.bf16.msra.mxu0 0
        %1850 = vmatpush.bf16.msra.mxu0 0
        %1851 = vmatpush.bf16.msra.mxu0 0
        %1852 = vmatpush.bf16.msra.mxu0 0
        %1853 = vmatpush.bf16.msra.mxu0 %v1844
        %1854 = vmatmul.bf16.gmra.mxu0 %v1841
        %v1855 = vpop.f32.mrf.mxu0
        %v1856 = vadd.f32 0.0, %v1855
        %v1857 = vpop.f32.mrf.mxu0
        %1858 = vdwg.mxu0
        %v1860 = vunpack.c.l.b16 %v1786
        %v1861 = vpack.c.b16 %v1860, %v1860
        %1862 = vrot.lane.b32.xlu0 %v1861, 96
        %v1863 = vpop.permute.xlu0 %1862
        %v1865 = vsel %vm1141, %v1782, 0
        %v1868 = vsel %vm1296, %v1863, 0
        %1870 = vmatpush.bf16.msra.mxu0 0
        %1871 = vmatpush.bf16.msra.mxu0 0
        %1872 = vmatpush.bf16.msra.mxu0 0
        %1873 = vmatpush.bf16.msra.mxu0 0
        %1874 = vmatpush.bf16.msra.mxu0 0
        %1875 = vmatpush.bf16.msra.mxu0 0
        %1876 = vmatpush.bf16.msra.mxu0 0
        %1877 = vmatpush.bf16.msra.mxu0 %v1868
        %1878 = vmatmul.bf16.gmra.mxu0 %v1865
        %v1879 = vpop.f32.mrf.mxu0
        %v1880 = vadd.f32 0.0, %v1879
        %v1881 = vpop.f32.mrf.mxu0
        %1882 = vdwg.mxu0
        %v1883 = vrcp.pop %v1769
        %v1884 = vrcp.pop %v1772
        %v1885 = vrcp.pop %v1775
        %v1886 = vrcp.pop %v1778
        %v1887 = vmul.f32 %v1808, %v1883
        %v1888 = vmul.f32 %v1832, %v1884
        %v1889 = vmul.f32 %v1856, %v1885
        %v1890 = vmul.f32 %v1880, %v1886
        %1892 = vrot.lane.b32.xlu0 %v1888, 8
        %v1893 = vpop.permute.xlu0 %1892
        %1896 = vrot.lane.b32.xlu0 %v1889, 16
        %v1897 = vpop.permute.xlu0 %1896
        %1900 = vrot.lane.b32.xlu0 %v1890, 24
        %v1901 = vpop.permute.xlu0 %1900
        %v1903 = vsel %vm1141, %v1887, %v1893
        %v1904 = vsel %vm1406, %v1903, %v1897
        %v1905 = vsel %vm1408, %v1904, %v1901
        %v1906 = vld [vmem:[%s13] sm:$0xf]
        %v1907 = vld [vmem:[%s13 + $0x4] sm:$0xf]
        %v1908 = vld [vmem:[%s13 + $0x8] sm:$0xf]
        %v1909 = vld [vmem:[%s13 + $0xc] sm:$0xf]
        %v1910 = vpack.c.bf16 %v1905, %v1905
        %v1911 = vld [vmem:[#allocation6] sm:$0x1]
        %v1913 = vperm.slane %v1911, 0
        %v1919 = vunpack.c.l.b16 %v1906
        %v1920 = vunpack.c.l.b16 %v1907
        %v1921 = vunpack.c.l.b16 %v1908
        %v1922 = vunpack.c.l.b16 %v1909
        %v1923 = vpack.c.b16 %v1920, %v1919
        %v1924 = vpack.c.b16 %v1922, %v1921
        %v1928 = vsel %vm942, %v1910, 0
        %1930 = vmatpush.bf16.msra.mxu0 0
        %1931 = vmatpush.bf16.msra.mxu0 0
        %1932 = vmatpush.bf16.msra.mxu0 0
        %1933 = vmatpush.bf16.msra.mxu0 0
        %1934 = vmatpush.bf16.msra.mxu0 0
        %1935 = vmatpush.bf16.msra.mxu0 0
        %1936 = vmatpush.bf16.msra.mxu0 %v1924
        %1937 = vmatpush.bf16.msra.mxu0 %v1923
        %1938 = vmatmul.bf16.gmra.mxu0 %v1928
        %v1939 = vpop.f32.mrf.mxu0
        %v1940 = vadd.f32 %v1913, %v1939
        %v1941 = vpop.f32.mrf.mxu0
        %1942 = vdwg.mxu0
        %v1943 = vadd.f32 %v1447, %v1940
        %v1944 = vld [vmem:[#allocation7] sm:$0x1]
        %v1945 = vld [vmem:[#allocation9] sm:$0x1]
        %v1946 = vsel %vm942, %v1943, 0.0
        %1947 = vadd.xlane.f32.xlu0 %v1946
        %v1948 = vpop.xlane.xlu0 %1947
        %v1949 = vmul.f32 %v1948, %v952
        %v1950 = vsub.f32 %v1943, %v1949
        %v1951 = vmul.f32 %v1950, %v1950
        %v1952 = vsel %vm942, %v1951, 0.0
        %1953 = vadd.xlane.f32.xlu0 %v1952
        %v1954 = vpop.xlane.xlu0 %1953
        %v1955 = vmul.f32 %v1954, %v952
        %v1956 = vadd.f32 %v1955, 1e-05
        %v1957 = vrsqrt.pop %v1956
        %v1958 = vmul.f32 %v1957, %v1956
        %v1959 = vmul.f32 %v1958, %v1957
        %v1960 = vmul.f32 0.5, %v1959
        %v1961 = vsub.f32 1.5, %v1960
        %v1962 = vmul.f32 %v1957, %v1961
        %vm1963 = vweird.f32 %v1956
        %vm1964 = vweird.f32 %v1957
        %vm1965 = vmor %vm1963, %vm1964
        %v1966 = vsel %vm1965, %v1957, %v1962
        %v1967 = vmul.f32 %v1950, %v1966
        %v1969 = vperm.slane %v1944, 0
        %v1971 = vmul.f32 %v1967, %v1969
        %v1973 = vperm.slane %v1945, 0
        %v1975 = vadd.f32 %v1971, %v1973
        %v1976 = vld [vmem:[%s22] sm:$0xf]
        %v1977 = vld [vmem:[%s22 + $0x4] sm:$0xf]
        %v1978 = vld [vmem:[%s22 + $0x8] sm:$0xf]
        %v1979 = vld [vmem:[%s22 + $0xc] sm:$0xf]
        %v1980 = vpack.c.bf16 %v1975, %v1975
        %v1981 = vld [vmem:[#allocation10] sm:$0x1]
        %v1983 = vperm.slane %v1981, 0
        %v1989 = vunpack.c.l.b16 %v1976
        %v1990 = vunpack.c.l.b16 %v1977
        %v1991 = vunpack.c.l.b16 %v1978
        %v1992 = vunpack.c.l.b16 %v1979
        %v1993 = vpack.c.b16 %v1990, %v1989
        %v1994 = vpack.c.b16 %v1992, %v1991
        %v1998 = vsel %vm942, %v1980, 0
        %2000 = vmatpush.bf16.msra.mxu0 0
        %2001 = vmatpush.bf16.msra.mxu0 0
        %2002 = vmatpush.bf16.msra.mxu0 0
        %2003 = vmatpush.bf16.msra.mxu0 0
        %2004 = vmatpush.bf16.msra.mxu0 0
        %2005 = vmatpush.bf16.msra.mxu0 0
        %2006 = vmatpush.bf16.msra.mxu0 %v1994
        %2007 = vmatpush.bf16.msra.mxu0 %v1993
        %2008 = vmatmul.bf16.gmra.mxu0 %v1998
        %v2009 = vpop.f32.mrf.mxu0
        %v2010 = vadd.f32 %v1983, %v2009
        %v2011 = vpop.f32.mrf.mxu0
        %2012 = vdwg.mxu0
        %v2013 = vmul.f32 %v2010, 0.5
        %v2014 = vmul.f32 %v2010, 0.044715
        %v2015 = vmul.f32 %v2014, %v2010
        %v2016 = vmul.f32 %v2015, %v2010
        %v2017 = vadd.f32 %v2010, %v2016
        %v2018 = vmul.f32 %v2017, 0.7978846
        %v2019 = vtanh.pop %v2018
        %v2020 = vadd.f32 %v2019, 1.0
        %v2021 = vmul.f32 %v2013, %v2020
        %v2022 = vld [vmem:[%s24] sm:$0xf]
        %v2023 = vld [vmem:[%s24 + $0x4] sm:$0xf]
        %v2024 = vld [vmem:[%s24 + $0x8] sm:$0xf]
        %v2025 = vld [vmem:[%s24 + $0xc] sm:$0xf]
        %v2026 = vld [vmem:[%s24 + $0x10] sm:$0xf]
        %v2027 = vld [vmem:[%s24 + $0x14] sm:$0xf]
        %v2028 = vld [vmem:[%s24 + $0x18] sm:$0xf]
        %v2029 = vld [vmem:[%s24 + $0x1c] sm:$0xf]
        %v2030 = vld [vmem:[%s24 + $0x20] sm:$0xf]
        %v2031 = vld [vmem:[%s24 + $0x24] sm:$0xf]
        %v2032 = vld [vmem:[%s24 + $0x28] sm:$0xf]
        %v2033 = vld [vmem:[%s24 + $0x2c] sm:$0xf]
        %v2034 = vld [vmem:[%s24 + $0x30] sm:$0xf]
        %v2035 = vld [vmem:[%s24 + $0x34] sm:$0xf]
        %v2036 = vld [vmem:[%s24 + $0x38] sm:$0xf]
        %v2037 = vld [vmem:[%s24 + $0x3c] sm:$0xf]
        %v2038 = vpack.c.bf16 %v2021, %v2021
        %v2039 = vld [vmem:[#allocation12] sm:$0x1]
        %v2041 = vperm.slane %v2039, 0
        %v2059 = vunpack.c.l.b16 %v2022
        %v2060 = vunpack.c.l.b16 %v2023
        %v2061 = vunpack.c.l.b16 %v2024
        %v2062 = vunpack.c.l.b16 %v2025
        %v2063 = vunpack.c.l.b16 %v2026
        %v2064 = vunpack.c.l.b16 %v2027
        %v2065 = vunpack.c.l.b16 %v2028
        %v2066 = vunpack.c.l.b16 %v2029
        %v2067 = vunpack.c.l.b16 %v2030
        %v2068 = vunpack.c.l.b16 %v2031
        %v2069 = vunpack.c.l.b16 %v2032
        %v2070 = vunpack.c.l.b16 %v2033
        %v2071 = vunpack.c.l.b16 %v2034
        %v2072 = vunpack.c.l.b16 %v2035
        %v2073 = vunpack.c.l.b16 %v2036
        %v2074 = vunpack.c.l.b16 %v2037
        %v2075 = vpack.c.b16 %v2060, %v2059
        %v2076 = vpack.c.b16 %v2062, %v2061
        %v2077 = vpack.c.b16 %v2064, %v2063
        %v2078 = vpack.c.b16 %v2066, %v2065
        %v2079 = vpack.c.b16 %v2068, %v2067
        %v2080 = vpack.c.b16 %v2070, %v2069
        %v2081 = vpack.c.b16 %v2072, %v2071
        %v2082 = vpack.c.b16 %v2074, %v2073
        %2091 = vmatpush.bf16.msra.mxu0 %v2082
        %2092 = vmatpush.bf16.msra.mxu0 %v2081
        %2093 = vmatpush.bf16.msra.mxu0 %v2080
        %2094 = vmatpush.bf16.msra.mxu0 %v2079
        %2095 = vmatpush.bf16.msra.mxu0 %v2078
        %2096 = vmatpush.bf16.msra.mxu0 %v2077
        %2097 = vmatpush.bf16.msra.mxu0 %v2076
        %2098 = vmatpush.bf16.msra.mxu0 %v2075
        %2099 = vmatmul.bf16.gmra.mxu0 %v2038
        %v2100 = vpop.f32.mrf.mxu0
        %v2101 = vadd.f32 %v2041, %v2100
        %v2102 = vpop.f32.mrf.mxu0
        %2103 = vdwg.mxu0
        %v2104 = vadd.f32 %v1943, %v2101
        %2105 = vst.msk [vmem:[%s933] sm:$0xff] %vm942, %v2104
        %p2106 = scmp.lt.s32.totalorder %s41, 1
        %s2107 = scalar_select %p2106, %s41, 1
        %s2108 = smul.addr %s2107, 8
        %s2109 = scalar_lea.vmem %s26, %s2108
        // Predicated region
        $region153: #{forward.8} parent=123 // pred_check
          %p2110 = pneg %p625
        $region154: #{forward.8} parent=123 // pred_check_branch
          %2112 = sbr.rel (%p2110) target = $region156
        $region155: #{forward.8} parent=123 // pred_region
          _
        $region156: #{forward.8} parent=123 // pred_fallthru
          _
      $region124: #{forward.8} parent=5 // pred_fallthru
        _
      %p2113 = scmp.le.s32.totalorder 2, %s36
      // Predicated region
      $region157: #{forward.8} parent=5 // pred_check
        %p2114 = pneg %p2113
      $region158: #{forward.8} parent=5 // pred_check_branch
        %2116 = sbr.rel (%p2114) target = $region160
      $region159: #{forward.8} parent=5 // pred_region
        %s2117 = ssub.s32 %s36, 2
        // Predicated region
        $region161: #{forward.8} parent=159 // pred_check
          %p2118 = pneg %p631
        $region162: #{forward.8} parent=159 // pred_check_branch
          %2120 = sbr.rel (%p2118) target = $region164
        $region163: #{forward.8} parent=159 // pred_region
          %p2121 = scmp.lt.s32.totalorder %s42, 1
          %s2122 = scalar_select %p2121, %s42, 1
          %s2123 = smul.addr %s2122, 8
          %s2124 = scalar_lea.vmem %s26, %s2123
        $region164: #{forward.8} parent=159 // pred_fallthru
          _
      $region160: #{forward.8} parent=5 // pred_fallthru
        _
    $region6: #{forward.8} parent=1 // loop_footer
      %s40 = sadd.s32 1, %s36
    $region7: #{forward.8} parent=1 // loop_footer_branch
      %35 = sbr.rel target = $region3
    $region8: #{forward.8} parent=1 // loop_exit
      _
    %2125 = vsyncpa [#allocation3], 1
    %s2126 = scalar_lea.sflag [#allocation3], 1
    %2127 = vsyncpa %s2126, 1
    %2128 = vsyncpa [#allocation5], 1
    %2129 = vsyncpa [#allocation8], 1
    %2130 = vsyncpa [#allocation11], 1

// kernel: forward.9
$region0: #{forward.9}
  #allocation0 [shape = 'u32[]', space=smem, size = 0x4, offset = 0x4, fixed_abs, tag = 'smem constant byte address 0x4 - core index']
  #allocation1 [shape = 'u32[72,128]{1,0:T(1,128)}', space=vmem, size = 0x9000, scoped, tag = 'internal scratch']
  %s0 = inlined_call_operand.vmem [shape: f32[32,32], index: 0, kind: input, shape index: {}]
  %s1 = inlined_call_operand.vmem [shape: bf16[32,32], index: 1, kind: input, shape index: {}]
  %s2 = inlined_call_operand.vmem [shape: f32[1,32], index: 2, kind: input, shape index: {}]
  %s3 = inlined_call_operand.vmem [shape: f32[1,32], index: 3, kind: input, shape index: {}]
  %s4 = inlined_call_operand.vmem [shape: f32[1,32], index: 4, kind: input, shape index: {}]
  %s5 = inlined_call_operand.vmem [shape: bf16[32,128], index: 5, kind: input, shape index: {}]
  %s6 = inlined_call_operand.vmem [shape: f32[1,128], index: 6, kind: input, shape index: {}]
  %s7 = inlined_call_operand.vmem [shape: f32[32,128], index: 7, kind: output, shape index: {}]
  %s8 = sld [smem:[#allocation0]]
  $region38: #{forward.9} parent=0
    _
  %s10 = ssub.s32 1, %s8
  %s11 = scalar_select 0, %s10, %s8
  // Predicated region
  $region2: #{forward.9} parent=0 // pred_check
    _
  $region3: #{forward.9} parent=0 // pred_check_branch
    %13 = sbr.rel (0) target = $region5
  $region4: #{forward.9} parent=0 // pred_region
    _
  $region5: #{forward.9} parent=0 // pred_fallthru
    _
  // Predicated region
  $region6: #{forward.9} parent=0 // pred_check
    _
  $region7: #{forward.9} parent=0 // pred_check_branch
    %15 = sbr.rel (0) target = $region9
  $region8: #{forward.9} parent=0 // pred_region
    _
  $region9: #{forward.9} parent=0 // pred_fallthru
    _
  // Predicated region
  $region10: #{forward.9} parent=0 // pred_check
    _
  $region11: #{forward.9} parent=0 // pred_check_branch
    %17 = sbr.rel (0) target = $region13
  $region12: #{forward.9} parent=0 // pred_region
    _
  $region13: #{forward.9} parent=0 // pred_fallthru
    _
  // Predicated region
  $region14: #{forward.9} parent=0 // pred_check
    _
  $region15: #{forward.9} parent=0 // pred_check_branch
    %19 = sbr.rel (0) target = $region17
  $region16: #{forward.9} parent=0 // pred_region
    _
  $region17: #{forward.9} parent=0 // pred_fallthru
    _
  // Predicated region
  $region18: #{forward.9} parent=0 // pred_check
    _
  $region19: #{forward.9} parent=0 // pred_check_branch
    %21 = sbr.rel (0) target = $region21
  $region20: #{forward.9} parent=0 // pred_region
    _
  $region21: #{forward.9} parent=0 // pred_fallthru
    _
  // Predicated region
  $region22: #{forward.9} parent=0 // pred_check
    _
  $region23: #{forward.9} parent=0 // pred_check_branch
    %23 = sbr.rel (0) target = $region25
  $region24: #{forward.9} parent=0 // pred_region
    _
  $region25: #{forward.9} parent=0 // pred_fallthru
    _
  // Predicated region
  $region26: #{forward.9} parent=0 // pred_check
    _
  $region27: #{forward.9} parent=0 // pred_check_branch
    %25 = sbr.rel (0) target = $region29
  $region28: #{forward.9} parent=0 // pred_region
    _
  $region29: #{forward.9} parent=0 // pred_fallthru
    _
  %v27 = vld [vmem:[%s0] sm:$0xff]
  %v28 = vld [vmem:[%s0 + $0x8] sm:$0xff]
  %v29 = vld [vmem:[%s0 + $0x10] sm:$0xff]
  %v30 = vld [vmem:[%s0 + $0x18] sm:$0xff]
  %v31 = vld [vmem:[%s1] sm:$0xf]
  %v32 = vld [vmem:[%s1 + $0x4] sm:$0xf]
  %v33 = vld [vmem:[%s1 + $0x8] sm:$0xf]
  %v34 = vld [vmem:[%s1 + $0xc] sm:$0xf]
  %v35 = vpack.c.bf16 %v28, %v27
  %v36 = vpack.c.bf16 %v30, %v29
  %v37 = vld [vmem:[%s2] sm:$0x1]
  %v39 = vperm.slane %v37, 0
  %v45 = vunpack.c.l.b16 %v31
  %v46 = vunpack.c.l.b16 %v32
  %v47 = vunpack.c.l.b16 %v33
  %v48 = vunpack.c.l.b16 %v34
  %v49 = vpack.c.b16 %v46, %v45
  %v50 = vpack.c.b16 %v48, %v47
  %vm53 = vcmask 261120
  %v55 = vsel %vm53, %v35, 0
  %v58 = vsel %vm53, %v36, 0
  %60 = vmatpush.bf16.msra.mxu0 0
  %61 = vmatpush.bf16.msra.mxu0 0
  %62 = vmatpush.bf16.msra.mxu0 0
  %63 = vmatpush.bf16.msra.mxu0 0
  %64 = vmatpush.bf16.msra.mxu0 0
  %65 = vmatpush.bf16.msra.mxu0 0
  %66 = vmatpush.bf16.msra.mxu0 %v50
  %67 = vmatpush.bf16.msra.mxu0 %v49
  %68 = vmatmul.bf16.gmra.mxu0 %v55
  %v69 = vpop.f32.mrf.mxu0
  %v70 = vadd.f32 %v39, %v69
  %v71 = vpop.f32.mrf.mxu0
  %v72 = vadd.f32 %v39, %v71
  %73 = vmatmul.bf16.gmra.mxu0 %v58
  %v74 = vpop.f32.mrf.mxu0
  %v75 = vadd.f32 %v39, %v74
  %v76 = vpop.f32.mrf.mxu0
  %v77 = vadd.f32 %v39, %v76
  %78 = vdwg.mxu0
  %v79 = vmul.f32 %v70, 0.5
  %v80 = vmul.f32 %v72, 0.5
  %v81 = vmul.f32 %v75, 0.5
  %v82 = vmul.f32 %v77, 0.5
  %v83 = vmul.f32 %v70, 0.044715
  %v84 = vmul.f32 %v72, 0.044715
  %v85 = vmul.f32 %v75, 0.044715
  %v86 = vmul.f32 %v77, 0.044715
  %v87 = vmul.f32 %v83, %v70
  %v88 = vmul.f32 %v84, %v72
  %v89 = vmul.f32 %v85, %v75
  %v90 = vmul.f32 %v86, %v77
  %v91 = vmul.f32 %v87, %v70
  %v92 = vmul.f32 %v88, %v72
  %v93 = vmul.f32 %v89, %v75
  %v94 = vmul.f32 %v90, %v77
  %v95 = vadd.f32 %v70, %v91
  %v96 = vadd.f32 %v72, %v92
  %v97 = vadd.f32 %v75, %v93
  %v98 = vadd.f32 %v77, %v94
  %v99 = vmul.f32 %v95, 0.7978846
  %v100 = vmul.f32 %v96, 0.7978846
  %v101 = vmul.f32 %v97, 0.7978846
  %v102 = vmul.f32 %v98, 0.7978846
  %v103 = vtanh.pop %v99
  %v104 = vtanh.pop %v100
  %v105 = vtanh.pop %v101
  %v106 = vtanh.pop %v102
  %v107 = vadd.f32 %v103, 1.0
  %v108 = vadd.f32 %v104, 1.0
  %v109 = vadd.f32 %v105, 1.0
  %v110 = vadd.f32 %v106, 1.0
  %v111 = vmul.f32 %v79, %v107
  %v112 = vmul.f32 %v80, %v108
  %v113 = vmul.f32 %v81, %v109
  %v114 = vmul.f32 %v82, %v110
  %v115 = vld [vmem:[%s3] sm:$0x1]
  %v116 = vld [vmem:[%s4] sm:$0x1]
  %v117 = vsel %vm53, %v111, 0.0
  %118 = vadd.xlane.f32.xlu0 %v117
  %v119 = vpop.xlane.xlu0 %118
  %v120 = vsel %vm53, %v112, 0.0
  %121 = vadd.xlane.f32.xlu0 %v120
  %v122 = vpop.xlane.xlu0 %121
  %v123 = vsel %vm53, %v113, 0.0
  %124 = vadd.xlane.f32.xlu0 %v123
  %v125 = vpop.xlane.xlu0 %124
  %v126 = vsel %vm53, %v114, 0.0
  %127 = vadd.xlane.f32.xlu0 %v126
  %v128 = vpop.xlane.xlu0 %127
  %v129 = vrcp.pop 32.0
  %v130 = vmul.f32 32.0, %v129
  %v131 = vsub.f32 1.0, %v130
  %v132 = vmul.f32 %v129, %v131
  %v133 = vadd.f32 %v129, %v132
  %vm134 = vweird.f32 %v129
  %v135 = vsel %vm134, %v129, %v133
  %v136 = vmul.f32 %v119, %v135
  %v137 = vmul.f32 %v122, %v135
  %v138 = vmul.f32 %v125, %v135
  %v139 = vmul.f32 %v128, %v135
  %v140 = vsub.f32 %v111, %v136
  %v141 = vsub.f32 %v112, %v137
  %v142 = vsub.f32 %v113, %v138
  %v143 = vsub.f32 %v114, %v139
  %v144 = vmul.f32 %v140, %v140
  %v145 = vmul.f32 %v141, %v141
  %v146 = vmul.f32 %v142, %v142
  %v147 = vmul.f32 %v143, %v143
  %v148 = vsel %vm53, %v144, 0.0
  %149 = vadd.xlane.f32.xlu0 %v148
  %v150 = vpop.xlane.xlu0 %149
  %v151 = vsel %vm53, %v145, 0.0
  %152 = vadd.xlane.f32.xlu0 %v151
  %v153 = vpop.xlane.xlu0 %152
  %v154 = vsel %vm53, %v146, 0.0
  %155 = vadd.xlane.f32.xlu0 %v154
  %v156 = vpop.xlane.xlu0 %155
  %v157 = vsel %vm53, %v147, 0.0
  %158 = vadd.xlane.f32.xlu0 %v157
  %v159 = vpop.xlane.xlu0 %158
  %v160 = vmul.f32 %v150, %v135
  %v161 = vmul.f32 %v153, %v135
  %v162 = vmul.f32 %v156, %v135
  %v163 = vmul.f32 %v159, %v135
  %v164 = vadd.f32 %v160, 1e-05
  %v165 = vadd.f32 %v161, 1e-05
  %v166 = vadd.f32 %v162, 1e-05
  %v167 = vadd.f32 %v163, 1e-05
  %v168 = vrsqrt.pop %v164
  %v169 = vmul.f32 %v168, %v164
  %v170 = vmul.f32 %v169, %v168
  %v171 = vmul.f32 0.5, %v170
  %v172 = vsub.f32 1.5, %v171
  %v173 = vmul.f32 %v168, %v172
  %vm174 = vweird.f32 %v164
  %vm175 = vweird.f32 %v168
  %vm176 = vmor %vm174, %vm175
  %v177 = vsel %vm176, %v168, %v173
  %v178 = vrsqrt.pop %v165
  %v179 = vmul.f32 %v178, %v165
  %v180 = vmul.f32 %v179, %v178
  %v181 = vmul.f32 0.5, %v180
  %v182 = vsub.f32 1.5, %v181
  %v183 = vmul.f32 %v178, %v182
  %vm184 = vweird.f32 %v165
  %vm185 = vweird.f32 %v178
  %vm186 = vmor %vm184, %vm185
  %v187 = vsel %vm186, %v178, %v183
  %v188 = vrsqrt.pop %v166
  %v189 = vmul.f32 %v188, %v166
  %v190 = vmul.f32 %v189, %v188
  %v191 = vmul.f32 0.5, %v190
  %v192 = vsub.f32 1.5, %v191
  %v193 = vmul.f32 %v188, %v192
  %vm194 = vweird.f32 %v166
  %vm195 = vweird.f32 %v188
  %vm196 = vmor %vm194, %vm195
  %v197 = vsel %vm196, %v188, %v193
  %v198 = vrsqrt.pop %v167
  %v199 = vmul.f32 %v198, %v167
  %v200 = vmul.f32 %v199, %v198
  %v201 = vmul.f32 0.5, %v200
  %v202 = vsub.f32 1.5, %v201
  %v203 = vmul.f32 %v198, %v202
  %vm204 = vweird.f32 %v167
  %vm205 = vweird.f32 %v198
  %vm206 = vmor %vm204, %vm205
  %v207 = vsel %vm206, %v198, %v203
  %v208 = vmul.f32 %v140, %v177
  %v209 = vmul.f32 %v141, %v187
  %v210 = vmul.f32 %v142, %v197
  %v211 = vmul.f32 %v143, %v207
  %v213 = vperm.slane %v115, 0
  %v215 = vmul.f32 %v208, %v213
  %v216 = vmul.f32 %v209, %v213
  %v217 = vmul.f32 %v210, %v213
  %v218 = vmul.f32 %v211, %v213
  %v220 = vperm.slane %v116, 0
  %v222 = vadd.f32 %v215, %v220
  %v223 = vadd.f32 %v216, %v220
  %v224 = vadd.f32 %v217, %v220
  %v225 = vadd.f32 %v218, %v220
  %v226 = vld [vmem:[%s5] sm:$0xf]
  %v227 = vld [vmem:[%s5 + $0x4] sm:$0xf]
  %v228 = vld [vmem:[%s5 + $0x8] sm:$0xf]
  %v229 = vld [vmem:[%s5 + $0xc] sm:$0xf]
  %v230 = vpack.c.bf16 %v223, %v222
  %v231 = vpack.c.bf16 %v225, %v224
  %v232 = vld [vmem:[%s6] sm:$0x1]
  %v234 = vperm.slane %v232, 0
  %v240 = vunpack.c.l.b16 %v226
  %v241 = vunpack.c.l.b16 %v227
  %v242 = vunpack.c.l.b16 %v228
  %v243 = vunpack.c.l.b16 %v229
  %v244 = vpack.c.b16 %v241, %v240
  %v245 = vpack.c.b16 %v243, %v242
  %v249 = vsel %vm53, %v230, 0
  %v252 = vsel %vm53, %v231, 0
  %254 = vmatpush.bf16.msra.mxu0 0
  %255 = vmatpush.bf16.msra.mxu0 0
  %256 = vmatpush.bf16.msra.mxu0 0
  %257 = vmatpush.bf16.msra.mxu0 0
  %258 = vmatpush.bf16.msra.mxu0 0
  %259 = vmatpush.bf16.msra.mxu0 0
  %260 = vmatpush.bf16.msra.mxu0 %v245
  %261 = vmatpush.bf16.msra.mxu0 %v244
  %262 = vmatmul.bf16.gmra.mxu0 %v249
  %v263 = vpop.f32.mrf.mxu0
  %v264 = vadd.f32 %v234, %v263
  %v265 = vpop.f32.mrf.mxu0
  %v266 = vadd.f32 %v234, %v265
  %267 = vmatmul.bf16.gmra.mxu0 %v252
  %v268 = vpop.f32.mrf.mxu0
  %v269 = vadd.f32 %v234, %v268
  %v270 = vpop.f32.mrf.mxu0
  %v271 = vadd.f32 %v234, %v270
  %272 = vdwg.mxu0
  %273 = vst [vmem:[%s7] sm:$0xff] %v264
  %274 = vst [vmem:[%s7 + $0x8] sm:$0xff] %v266
  %275 = vst [vmem:[%s7 + $0x10] sm:$0xff] %v269
  %276 = vst [vmem:[%s7 + $0x18] sm:$0xff] %v271
  // Predicated region
  $region30: #{forward.9} parent=0 // pred_check
    _
  $region31: #{forward.9} parent=0 // pred_check_branch
    %278 = sbr.rel (0) target = $region33
  $region32: #{forward.9} parent=0 // pred_region
    _
  $region33: #{forward.9} parent=0 // pred_fallthru
    _
  // Predicated region
  $region34: #{forward.9} parent=0 // pred_check
    _
  $region35: #{forward.9} parent=0 // pred_check_branch
    %280 = sbr.rel (0) target = $region37
  $region36: #{forward.9} parent=0 // pred_region
    _
  $region37: #{forward.9} parent=0 // pred_fallthru
    _

</llo_original>
